<compile_context>
chip_gen: v7x
topology: tpu7x:2x2x1
jax: 0.10.0
libtpu: 0.0.40
codegen_flags: <defaults>
</compile_context>

<pallas_src>
import jax
import jax.numpy as jnp
from jax.experimental import pallas as pl
from jax.experimental.pallas import tpu as pltpu


def _round_up(x, m):
    return ((x + m - 1) // m) * m


_COMPILER_PARAMS = pltpu.CompilerParams(
    dimension_semantics=("parallel",),        # M tiles are independent
    vmem_limit_bytes=32 * 1024 * 1024,        # explicit; safe on v5e/v6e/v7x
)


def _plan_m(M):
    """Pick (TM, Mp): M tile size and padded M, minimizing pad waste.

    Small layers run in a single grid step (no per-step overhead); large
    layers use the candidate tile that wastes the least padding while keeping
    double-buffered tiles far below VMEM limits (worst case ~7 MiB at TM=512
    for the fc layer's K=1664).
    """
    Mp128 = _round_up(max(M, 8), 128)
    if Mp128 <= 1024:
        return Mp128, Mp128                   # one grid step, no extra pad
    best = None
    for tm in (512, 384, 256):                # all multiples of 8 sublanes
        mp = _round_up(M, tm)
        key = (mp - M, mp // tm)              # least padding, then fewest steps
        if best is None or key < best[0]:
            best = (key, tm, mp)
    return best[1], best[2]


# --------------------------------------------------------------------------
# Pallas kernel: bf16 GEMM -> f32 accumulate -> +bias -> ReLU -> cast
# --------------------------------------------------------------------------
def _gemm_bias_relu_kernel(x_ref, w_ref, b_ref, o_ref):
    acc = jnp.dot(x_ref[...], w_ref[...], preferred_element_type=jnp.float32)
    acc = jnp.maximum(acc + b_ref[...], 0.0)      # bias (1, Np) broadcasts
    o_ref[...] = acc.astype(o_ref.dtype)


def gemm_bias_relu(x, w, b, n_out, *, out_dtype=jnp.bfloat16):
    """relu(x @ w + b). x:(M,K), w:(Kp,Np) bf16 pre-padded, b:(1,Np) f32."""
    M, K = x.shape
    Kp, Np = w.shape
    TM, Mp = _plan_m(M)
    xp = jnp.pad(x.astype(jnp.bfloat16), ((0, Mp - M), (0, Kp - K)))
    cost = pl.CostEstimate(
        flops=2 * Mp * Kp * Np,
        transcendentals=0,
        bytes_accessed=(Mp * Kp + Kp * Np + Mp * Np) * 2 + Np * 4,
    )
    out = pl.pallas_call(
        _gemm_bias_relu_kernel,
        out_shape=jax.ShapeDtypeStruct((Mp, Np), out_dtype),
        grid=(Mp // TM,),
        in_specs=[
            pl.BlockSpec((TM, Kp), lambda i: (i, 0)),   # activation tile
            pl.BlockSpec((Kp, Np), lambda i: (0, 0)),   # weights, VMEM-resident
            pl.BlockSpec((1, Np), lambda i: (0, 0)),    # bias, VMEM-resident
        ],
        out_specs=pl.BlockSpec((TM, Np), lambda i: (i, 0)),
        compiler_params=_COMPILER_PARAMS,
        cost_estimate=cost,
    )(xp, w, b)
    return out[:M, :n_out]


# --------------------------------------------------------------------------
# Pallas kernel: fused FC (+ReLU) + critic head. The hidden activation stays
# in VMEM for the critic matmul; both outputs are written back once.
# --------------------------------------------------------------------------
def _fc_critic_kernel(h_ref, wf_ref, bf_ref, wc_ref, bc_ref, x_ref, v_ref):
    x = jnp.dot(h_ref[...], wf_ref[...], preferred_element_type=jnp.float32)
    x = jnp.maximum(x + bf_ref[...], 0.0)
    x_ref[...] = x
    v = jnp.dot(x, wc_ref[...], preferred_element_type=jnp.float32)
    v_ref[...] = v + bc_ref[...]


def fc_critic(h, wf, bf, wc, bc):
    """x = relu(h @ wf + bf); value = x @ wc + bc. Returns (x, value)."""
    M, K = h.shape
    Kp, Nf = wf.shape          # (1664, 512)
    Nc = wc.shape[1]           # 128 (critic N=1 padded to a lane-dense 128)
    TM, Mp = _plan_m(M)
    hp = jnp.pad(h.astype(jnp.bfloat16), ((0, Mp - M), (0, Kp - K)))
    cost = pl.CostEstimate(
        flops=2 * Mp * Kp * Nf + 2 * Mp * Nf * Nc,
        transcendentals=0,
        bytes_accessed=(Mp * Kp + Kp * Nf) * 2
                       + (Nf * Nc + Mp * Nf + Mp * Nc) * 4,
    )
    x_pad, v_pad = pl.pallas_call(
        _fc_critic_kernel,
        out_shape=(
            jax.ShapeDtypeStruct((Mp, Nf), jnp.float32),
            jax.ShapeDtypeStruct((Mp, Nc), jnp.float32),
        ),
        grid=(Mp // TM,),
        in_specs=[
            pl.BlockSpec((TM, Kp), lambda i: (i, 0)),   # hidden tile
            pl.BlockSpec((Kp, Nf), lambda i: (0, 0)),   # fc weights (bf16)
            pl.BlockSpec((1, Nf), lambda i: (0, 0)),    # fc bias (f32)
            pl.BlockSpec((Nf, Nc), lambda i: (0, 0)),   # critic weights (f32)
            pl.BlockSpec((1, Nc), lambda i: (0, 0)),    # critic bias (f32)
        ],
        out_specs=(
            pl.BlockSpec((TM, Nf), lambda i: (i, 0)),
            pl.BlockSpec((TM, Nc), lambda i: (i, 0)),
        ),
        compiler_params=_COMPILER_PARAMS,
        cost_estimate=cost,
    )(hp, wf, bf, wc, bc)
    return x_pad[:M, :Nf], v_pad[:M, :1]


# --------------------------------------------------------------------------
# NHWC im2col (XLA glue: strided slices + stack + reshape only, bf16, no
# transposes)
# --------------------------------------------------------------------------
def _im2col_nhwc(x, kh, kw, stride):
    B, H, W, C = x.shape
    Ho = (H - kh) // stride + 1
    Wo = (W - kw) // stride + 1
    taps = []
    for i in range(kh):
        for j in range(kw):
            taps.append(
                x[:, i: i + stride * (Ho - 1) + 1: stride,
                     j: j + stride * (Wo - 1) + 1: stride, :]
            )
    p = jnp.stack(taps, axis=3)                        # (B, Ho, Wo, kh*kw, C)
    return p.reshape(B * Ho * Wo, kh * kw * C), Ho, Wo  # K = (i*kw+j)*C + c


def conv2d_bias_relu_nhwc(x, w_packed, b_packed, cout, kh, kw, stride):
    """x:(B,H,W,Cin) bf16 -> (B,Ho,Wo,cout) bf16. Weights/bias pre-packed."""
    B = x.shape[0]
    p, Ho, Wo = _im2col_nhwc(x, kh, kw, stride)
    out = gemm_bias_relu(p, w_packed, b_packed, cout)   # (B*Ho*Wo, cout) bf16
    return out.reshape(B, Ho, Wo, cout)


# --------------------------------------------------------------------------
# Parameter init (PyTorch layout: orthogonal with relu gain, bias=0)
# --------------------------------------------------------------------------
def init_cnnbase_params(key, num_inputs, hidden_size=512):
    ks = jax.random.split(key, 5)
    orth_relu = jax.nn.initializers.orthogonal(scale=jnp.sqrt(2.0))
    orth_1 = jax.nn.initializers.orthogonal(scale=1.0)

    def conv_w(k, cout, cin, kh, kw):
        return orth_relu(k, (cout, cin * kh * kw), jnp.float32).reshape(cout, cin, kh, kw)

    return {
        "conv1_w": conv_w(ks[0], 32, num_inputs, 8, 8),
        "conv1_b": jnp.zeros((32,), jnp.float32),
        "conv2_w": conv_w(ks[1], 64, 32, 4, 4),
        "conv2_b": jnp.zeros((64,), jnp.float32),
        "conv3_w": conv_w(ks[2], 32, 64, 3, 3),
        "conv3_b": jnp.zeros((32,), jnp.float32),
        "fc_w": orth_relu(ks[3], (hidden_size, 32 * 7 * 7), jnp.float32),   # (out, in)
        "fc_b": jnp.zeros((hidden_size,), jnp.float32),
        "critic_w": orth_1(ks[4], (1, hidden_size), jnp.float32),           # (out, in)
        "critic_b": jnp.zeros((1,), jnp.float32),
    }


# --------------------------------------------------------------------------
# One-time packing: transpose / permute / pad / cast weights for the kernels
# --------------------------------------------------------------------------
def pack_params(params):
    def pack_conv(w, b, scale=1.0):
        cout, cin, kh, kw = w.shape
        K = cin * kh * kw
        Kp = _round_up(K, 128)
        Np = _round_up(cout, 128)
        # (cout, cin, kh, kw) -> (kh, kw, cin, cout) -> (K, cout); matches
        # NHWC im2col K ordering (i*kw+j)*cin + c. Scale folded here.
        wm = (w * scale).transpose(2, 3, 1, 0).reshape(K, cout)
        wm = jnp.pad(wm, ((0, Kp - K), (0, Np - cout))).astype(jnp.bfloat16)
        bm = jnp.pad(b, (0, Np - cout)).astype(jnp.float32).reshape(1, Np)
        return wm, bm

    c1w, c1b = pack_conv(params["conv1_w"], params["conv1_b"], scale=1.0 / 255.0)
    c2w, c2b = pack_conv(params["conv2_w"], params["conv2_b"])
    c3w, c3b = pack_conv(params["conv3_w"], params["conv3_b"])

    # fc_w is (hidden, 32*7*7) with PyTorch NCHW flatten order (c, h, w).
    # Permute its input axis to NHWC flatten order (h, w, c) so the conv3
    # output can be flattened directly, then transpose to (in, out) and pad K.
    hid, K = params["fc_w"].shape
    fc = params["fc_w"].reshape(hid, 32, 7, 7).transpose(0, 2, 3, 1).reshape(hid, K)
    Kp = _round_up(K, 128)
    fcw = jnp.pad(fc.T, ((0, Kp - K), (0, 0))).astype(jnp.bfloat16)       # (1664, 512)
    fcb = params["fc_b"].astype(jnp.float32).reshape(1, hid)

    # Critic head kept in f32 (tiny matmul, better value-head precision).
    Nc = 128
    cw = jnp.pad(params["critic_w"].T, ((0, 0), (0, Nc - 1))).astype(jnp.float32)  # (512, 128)
    cb = jnp.pad(params["critic_b"], (0, Nc - 1)).astype(jnp.float32).reshape(1, Nc)

    return {"c1w": c1w, "c1b": c1b, "c2w": c2w, "c2b": c2b,
            "c3w": c3w, "c3b": c3b, "fcw": fcw, "fcb": fcb,
            "cw": cw, "cb": cb}


# --------------------------------------------------------------------------
# Forward pass: CNNBase.forward(inputs, rnn_hxs, masks) with recurrent=False
# --------------------------------------------------------------------------
def cnnbase_forward(packed, inputs, rnn_hxs, masks):
    # inputs: (B, num_inputs, 84, 84) f32 in [0, 255]. /255 is folded into c1w.
    B = inputs.shape[0]
    # Single NCHW -> NHWC transpose + bf16 cast at entry: all im2col glue and
    # Pallas activation DMAs downstream move bf16 (half the HBM traffic).
    x = jnp.transpose(inputs, (0, 2, 3, 1)).astype(jnp.bfloat16)
    h = conv2d_bias_relu_nhwc(x, packed["c1w"], packed["c1b"], 32, 8, 8, 4)   # (B,20,20,32)
    h = conv2d_bias_relu_nhwc(h, packed["c2w"], packed["c2b"], 64, 4, 4, 2)   # (B, 9, 9,64)
    h = conv2d_bias_relu_nhwc(h, packed["c3w"], packed["c3b"], 32, 3, 3, 1)   # (B, 7, 7,32)
    h = h.reshape(B, -1)                        # NHWC flatten; fc weights pre-permuted to match
    x_hidden, value = fc_critic(h, packed["fcw"], packed["fcb"],
                                packed["cw"], packed["cb"])               # (B,512), (B,1)
    # recurrent=False: GRU branch never taken; rnn_hxs returned unchanged.
    # TODO(synk): GRU (_forward_gru) path not implemented since recurrent defaults to False.
    return value, x_hidden, rnn_hxs


if __name__ == "__main__":
    key = jax.random.PRNGKey(0)
    k_param, k_in = jax.random.split(key, 2)

    num_inputs = 4          # stacked Atari frames
    hidden_size = 512
    B = 2
    # The Linear(32*7*7, ...) in CNNBase hard-codes 84x84 spatial input.
    inputs = jax.random.uniform(k_in, (B, num_inputs, 84, 84),
                                dtype=jnp.float32, minval=0.0, maxval=255.0)
    rnn_hxs = jnp.zeros((B, 1), jnp.float32)    # recurrent_hidden_state_size == 1
    masks = jnp.ones((B, 1), jnp.float32)

    params = init_cnnbase_params(k_param, num_inputs, hidden_size)
    packed = pack_params(params)                # one-time transpose/pad/cast

    forward = jax.jit(cnnbase_forward)
    value, x, out_hxs = forward(packed, inputs, rnn_hxs, masks)
    jax.block_until_ready((value, x, out_hxs))

    assert value.shape == (B, 1)
    assert x.shape == (B, hidden_size)
    assert out_hxs.shape == rnn_hxs.shape
    assert bool(jnp.all(jnp.isfinite(value))) and bool(jnp.all(jnp.isfinite(x)))
    print("KERNEL_OK")
</pallas_src>

<mosaic_0001>
module attributes {stable_mosaic.version = 11 : i64} {
  func.func @_gemm_bias_relu_kernel(%arg0: i32, %arg1: memref<896x256xbf16, #tpu.memory_space<vmem>>, %arg2: memref<256x128xbf16, #tpu.memory_space<vmem>>, %arg3: memref<1x128xf32, #tpu.memory_space<vmem>>, %arg4: memref<896x128xbf16, #tpu.memory_space<vmem>>) attributes {dimension_semantics = [#tpu.dimension_semantics<parallel>], iteration_bounds = array<i64: 1>, scalar_prefetch = 0 : i64, scratch_operands = 0 : i64, tpu.core_type = #tpu.core_type<tc>, window_params = [{transform_indices = @transform_0, window_bounds = array<i64: 896, 256>}, {pipeline_mode = #tpu.pipeline_mode<synchronous>, transform_indices = @transform_1, window_bounds = array<i64: 256, 128>}, {pipeline_mode = #tpu.pipeline_mode<synchronous>, transform_indices = @transform_2, window_bounds = array<i64: 1, 128>}, {transform_indices = @transform_3, window_bounds = array<i64: 896, 128>}]} {
    %c0 = arith.constant 0 : index
    %c0_0 = arith.constant 0 : index
    %0 = vector.load %arg1[%c0, %c0_0] : memref<896x256xbf16, #tpu.memory_space<vmem>>, vector<896x256xbf16>
    %c0_1 = arith.constant 0 : index
    %c0_2 = arith.constant 0 : index
    %1 = vector.load %arg2[%c0_1, %c0_2] : memref<256x128xbf16, #tpu.memory_space<vmem>>, vector<256x128xbf16>
    %cst = arith.constant dense<0.000000e+00> : vector<896x128xf32>
    %2 = tpu.matmul %0, %1, %cst {dimension_numbers = #tpu.dot_dimension_numbers<[1], [0], [0], [1], [0, 0, 1, 1], [], []>} : vector<896x256xbf16>, vector<256x128xbf16>, vector<896x128xf32> -> vector<896x128xf32>
    %c0_3 = arith.constant 0 : index
    %c0_4 = arith.constant 0 : index
    %3 = vector.load %arg3[%c0_3, %c0_4] : memref<1x128xf32, #tpu.memory_space<vmem>>, vector<1x128xf32>
    %4 = vector.broadcast %3 : vector<1x128xf32> to vector<896x128xf32>
    %5 = arith.addf %2, %4 : vector<896x128xf32>
    %cst_5 = arith.constant 0.000000e+00 : f32
    %6 = vector.broadcast %cst_5 : f32 to vector<896x128xf32>
    %7 = arith.maximumf %5, %6 : vector<896x128xf32>
    %8 = arith.truncf %7 : vector<896x128xf32> to vector<896x128xbf16>
    %c0_6 = arith.constant 0 : index
    %c0_7 = arith.constant 0 : index
    %9 = vector.load %arg4[%c0_6, %c0_7] : memref<896x128xbf16, #tpu.memory_space<vmem>>, vector<896x128xbf16>
    tpu.vector_store %arg4[%c0_6, %c0_7], %8 {strides = array<i32>} : memref<896x128xbf16, #tpu.memory_space<vmem>>, vector<896x128xbf16>,
    return
  }
  func.func @transform_0(%arg0: i32) -> (i32, i32) {
    %c0_i32 = arith.constant 0 : i32
    %c0_i32_0 = arith.constant 0 : i32
    return %arg0, %c0_i32 : i32, i32
  }
  func.func @transform_1(%arg0: i32) -> (i32, i32) {
    %c0_i32 = arith.constant 0 : i32
    %c0_i32_0 = arith.constant 0 : i32
    %c0_i32_1 = arith.constant 0 : i32
    return %c0_i32, %c0_i32_0 : i32, i32
  }
  func.func @transform_2(%arg0: i32) -> (i32, i32) {
    %c0_i32 = arith.constant 0 : i32
    %c0_i32_0 = arith.constant 0 : i32
    %c0_i32_1 = arith.constant 0 : i32
    return %c0_i32, %c0_i32_0 : i32, i32
  }
  func.func @transform_3(%arg0: i32) -> (i32, i32) {
    %c0_i32 = arith.constant 0 : i32
    %c0_i32_0 = arith.constant 0 : i32
    return %arg0, %c0_i32 : i32, i32
  }
}

module attributes {stable_mosaic.version = 11 : i64} {
  func.func @_gemm_bias_relu_kernel(%arg0: i32, %arg1: memref<256x512xbf16, #tpu.memory_space<vmem>>, %arg2: memref<512x128xbf16, #tpu.memory_space<vmem>>, %arg3: memref<1x128xf32, #tpu.memory_space<vmem>>, %arg4: memref<256x128xbf16, #tpu.memory_space<vmem>>) attributes {dimension_semantics = [#tpu.dimension_semantics<parallel>], iteration_bounds = array<i64: 1>, scalar_prefetch = 0 : i64, scratch_operands = 0 : i64, tpu.core_type = #tpu.core_type<tc>, window_params = [{transform_indices = @transform_0, window_bounds = array<i64: 256, 512>}, {pipeline_mode = #tpu.pipeline_mode<synchronous>, transform_indices = @transform_1, window_bounds = array<i64: 512, 128>}, {pipeline_mode = #tpu.pipeline_mode<synchronous>, transform_indices = @transform_2, window_bounds = array<i64: 1, 128>}, {transform_indices = @transform_3, window_bounds = array<i64: 256, 128>}]} {
    %c0 = arith.constant 0 : index
    %c0_0 = arith.constant 0 : index
    %0 = vector.load %arg1[%c0, %c0_0] : memref<256x512xbf16, #tpu.memory_space<vmem>>, vector<256x512xbf16>
    %c0_1 = arith.constant 0 : index
    %c0_2 = arith.constant 0 : index
    %1 = vector.load %arg2[%c0_1, %c0_2] : memref<512x128xbf16, #tpu.memory_space<vmem>>, vector<512x128xbf16>
    %cst = arith.constant dense<0.000000e+00> : vector<256x128xf32>
    %2 = tpu.matmul %0, %1, %cst {dimension_numbers = #tpu.dot_dimension_numbers<[1], [0], [0], [1], [0, 0, 1, 1], [], []>} : vector<256x512xbf16>, vector<512x128xbf16>, vector<256x128xf32> -> vector<256x128xf32>
    %c0_3 = arith.constant 0 : index
    %c0_4 = arith.constant 0 : index
    %3 = vector.load %arg3[%c0_3, %c0_4] : memref<1x128xf32, #tpu.memory_space<vmem>>, vector<1x128xf32>
    %4 = vector.broadcast %3 : vector<1x128xf32> to vector<256x128xf32>
    %5 = arith.addf %2, %4 : vector<256x128xf32>
    %cst_5 = arith.constant 0.000000e+00 : f32
    %6 = vector.broadcast %cst_5 : f32 to vector<256x128xf32>
    %7 = arith.maximumf %5, %6 : vector<256x128xf32>
    %8 = arith.truncf %7 : vector<256x128xf32> to vector<256x128xbf16>
    %c0_6 = arith.constant 0 : index
    %c0_7 = arith.constant 0 : index
    %9 = vector.load %arg4[%c0_6, %c0_7] : memref<256x128xbf16, #tpu.memory_space<vmem>>, vector<256x128xbf16>
    tpu.vector_store %arg4[%c0_6, %c0_7], %8 {strides = array<i32>} : memref<256x128xbf16, #tpu.memory_space<vmem>>, vector<256x128xbf16>,
    return
  }
  func.func @transform_0(%arg0: i32) -> (i32, i32) {
    %c0_i32 = arith.constant 0 : i32
    %c0_i32_0 = arith.constant 0 : i32
    return %arg0, %c0_i32 : i32, i32
  }
  func.func @transform_1(%arg0: i32) -> (i32, i32) {
    %c0_i32 = arith.constant 0 : i32
    %c0_i32_0 = arith.constant 0 : i32
    %c0_i32_1 = arith.constant 0 : i32
    return %c0_i32, %c0_i32_0 : i32, i32
  }
  func.func @transform_2(%arg0: i32) -> (i32, i32) {
    %c0_i32 = arith.constant 0 : i32
    %c0_i32_0 = arith.constant 0 : i32
    %c0_i32_1 = arith.constant 0 : i32
    return %c0_i32, %c0_i32_0 : i32, i32
  }
  func.func @transform_3(%arg0: i32) -> (i32, i32) {
    %c0_i32 = arith.constant 0 : i32
    %c0_i32_0 = arith.constant 0 : i32
    return %arg0, %c0_i32 : i32, i32
  }
}

module attributes {stable_mosaic.version = 11 : i64} {
  func.func @_gemm_bias_relu_kernel(%arg0: i32, %arg1: memref<128x640xbf16, #tpu.memory_space<vmem>>, %arg2: memref<640x128xbf16, #tpu.memory_space<vmem>>, %arg3: memref<1x128xf32, #tpu.memory_space<vmem>>, %arg4: memref<128x128xbf16, #tpu.memory_space<vmem>>) attributes {dimension_semantics = [#tpu.dimension_semantics<parallel>], iteration_bounds = array<i64: 1>, scalar_prefetch = 0 : i64, scratch_operands = 0 : i64, tpu.core_type = #tpu.core_type<tc>, window_params = [{transform_indices = @transform_0, window_bounds = array<i64: 128, 640>}, {pipeline_mode = #tpu.pipeline_mode<synchronous>, transform_indices = @transform_1, window_bounds = array<i64: 640, 128>}, {pipeline_mode = #tpu.pipeline_mode<synchronous>, transform_indices = @transform_2, window_bounds = array<i64: 1, 128>}, {transform_indices = @transform_3, window_bounds = array<i64: 128, 128>}]} {
    %c0 = arith.constant 0 : index
    %c0_0 = arith.constant 0 : index
    %0 = vector.load %arg1[%c0, %c0_0] : memref<128x640xbf16, #tpu.memory_space<vmem>>, vector<128x640xbf16>
    %c0_1 = arith.constant 0 : index
    %c0_2 = arith.constant 0 : index
    %1 = vector.load %arg2[%c0_1, %c0_2] : memref<640x128xbf16, #tpu.memory_space<vmem>>, vector<640x128xbf16>
    %cst = arith.constant dense<0.000000e+00> : vector<128x128xf32>
    %2 = tpu.matmul %0, %1, %cst {dimension_numbers = #tpu.dot_dimension_numbers<[1], [0], [0], [1], [0, 0, 1, 1], [], []>} : vector<128x640xbf16>, vector<640x128xbf16>, vector<128x128xf32> -> vector<128x128xf32>
    %c0_3 = arith.constant 0 : index
    %c0_4 = arith.constant 0 : index
    %3 = vector.load %arg3[%c0_3, %c0_4] : memref<1x128xf32, #tpu.memory_space<vmem>>, vector<1x128xf32>
    %4 = vector.broadcast %3 : vector<1x128xf32> to vector<128x128xf32>
    %5 = arith.addf %2, %4 : vector<128x128xf32>
    %cst_5 = arith.constant 0.000000e+00 : f32
    %6 = vector.broadcast %cst_5 : f32 to vector<128x128xf32>
    %7 = arith.maximumf %5, %6 : vector<128x128xf32>
    %8 = arith.truncf %7 : vector<128x128xf32> to vector<128x128xbf16>
    %c0_6 = arith.constant 0 : index
    %c0_7 = arith.constant 0 : index
    %9 = vector.load %arg4[%c0_6, %c0_7] : memref<128x128xbf16, #tpu.memory_space<vmem>>, vector<128x128xbf16>
    tpu.vector_store %arg4[%c0_6, %c0_7], %8 {strides = array<i32>} : memref<128x128xbf16, #tpu.memory_space<vmem>>, vector<128x128xbf16>,
    return
  }
  func.func @transform_0(%arg0: i32) -> (i32, i32) {
    %c0_i32 = arith.constant 0 : i32
    %c0_i32_0 = arith.constant 0 : i32
    return %arg0, %c0_i32 : i32, i32
  }
  func.func @transform_1(%arg0: i32) -> (i32, i32) {
    %c0_i32 = arith.constant 0 : i32
    %c0_i32_0 = arith.constant 0 : i32
    %c0_i32_1 = arith.constant 0 : i32
    return %c0_i32, %c0_i32_0 : i32, i32
  }
  func.func @transform_2(%arg0: i32) -> (i32, i32) {
    %c0_i32 = arith.constant 0 : i32
    %c0_i32_0 = arith.constant 0 : i32
    %c0_i32_1 = arith.constant 0 : i32
    return %c0_i32, %c0_i32_0 : i32, i32
  }
  func.func @transform_3(%arg0: i32) -> (i32, i32) {
    %c0_i32 = arith.constant 0 : i32
    %c0_i32_0 = arith.constant 0 : i32
    return %arg0, %c0_i32 : i32, i32
  }
}

module attributes {stable_mosaic.version = 11 : i64} {
  func.func @_fc_critic_kernel(%arg0: i32, %arg1: memref<128x1664xbf16, #tpu.memory_space<vmem>>, %arg2: memref<1664x512xbf16, #tpu.memory_space<vmem>>, %arg3: memref<1x512xf32, #tpu.memory_space<vmem>>, %arg4: memref<512x128xf32, #tpu.memory_space<vmem>>, %arg5: memref<1x128xf32, #tpu.memory_space<vmem>>, %arg6: memref<128x512xf32, #tpu.memory_space<vmem>>, %arg7: memref<128x128xf32, #tpu.memory_space<vmem>>) attributes {dimension_semantics = [#tpu.dimension_semantics<parallel>], iteration_bounds = array<i64: 1>, scalar_prefetch = 0 : i64, scratch_operands = 0 : i64, tpu.core_type = #tpu.core_type<tc>, window_params = [{transform_indices = @transform_0, window_bounds = array<i64: 128, 1664>}, {pipeline_mode = #tpu.pipeline_mode<synchronous>, transform_indices = @transform_1, window_bounds = array<i64: 1664, 512>}, {pipeline_mode = #tpu.pipeline_mode<synchronous>, transform_indices = @transform_2, window_bounds = array<i64: 1, 512>}, {pipeline_mode = #tpu.pipeline_mode<synchronous>, transform_indices = @transform_3, window_bounds = array<i64: 512, 128>}, {pipeline_mode = #tpu.pipeline_mode<synchronous>, transform_indices = @transform_4, window_bounds = array<i64: 1, 128>}, {transform_indices = @transform_5, window_bounds = array<i64: 128, 512>}, {transform_indices = @transform_6, window_bounds = array<i64: 128, 128>}]} {
    %c0 = arith.constant 0 : index
    %c0_0 = arith.constant 0 : index
    %0 = vector.load %arg1[%c0, %c0_0] : memref<128x1664xbf16, #tpu.memory_space<vmem>>, vector<128x1664xbf16>
    %c0_1 = arith.constant 0 : index
    %c0_2 = arith.constant 0 : index
    %1 = vector.load %arg2[%c0_1, %c0_2] : memref<1664x512xbf16, #tpu.memory_space<vmem>>, vector<1664x512xbf16>
    %cst = arith.constant dense<0.000000e+00> : vector<128x512xf32>
    %2 = tpu.matmul %0, %1, %cst {dimension_numbers = #tpu.dot_dimension_numbers<[1], [0], [0], [1], [0, 0, 1, 1], [], []>} : vector<128x1664xbf16>, vector<1664x512xbf16>, vector<128x512xf32> -> vector<128x512xf32>
    %c0_3 = arith.constant 0 : index
    %c0_4 = arith.constant 0 : index
    %3 = vector.load %arg3[%c0_3, %c0_4] : memref<1x512xf32, #tpu.memory_space<vmem>>, vector<1x512xf32>
    %4 = vector.broadcast %3 : vector<1x512xf32> to vector<128x512xf32>
    %5 = arith.addf %2, %4 : vector<128x512xf32>
    %cst_5 = arith.constant 0.000000e+00 : f32
    %6 = vector.broadcast %cst_5 : f32 to vector<128x512xf32>
    %7 = arith.maximumf %5, %6 : vector<128x512xf32>
    %c0_6 = arith.constant 0 : index
    %c0_7 = arith.constant 0 : index
    %8 = vector.load %arg6[%c0_6, %c0_7] : memref<128x512xf32, #tpu.memory_space<vmem>>, vector<128x512xf32>
    tpu.vector_store %arg6[%c0_6, %c0_7], %7 {strides = array<i32>} : memref<128x512xf32, #tpu.memory_space<vmem>>, vector<128x512xf32>,
    %c0_8 = arith.constant 0 : index
    %c0_9 = arith.constant 0 : index
    %9 = vector.load %arg4[%c0_8, %c0_9] : memref<512x128xf32, #tpu.memory_space<vmem>>, vector<512x128xf32>
    %cst_10 = arith.constant dense<0.000000e+00> : vector<128x128xf32>
    %10 = tpu.matmul %7, %9, %cst_10 {dimension_numbers = #tpu.dot_dimension_numbers<[1], [0], [0], [1], [0, 0, 1, 1], [], []>} : vector<128x512xf32>, vector<512x128xf32>, vector<128x128xf32> -> vector<128x128xf32>
    %c0_11 = arith.constant 0 : index
    %c0_12 = arith.constant 0 : index
    %11 = vector.load %arg5[%c0_11, %c0_12] : memref<1x128xf32, #tpu.memory_space<vmem>>, vector<1x128xf32>
    %12 = vector.broadcast %11 : vector<1x128xf32> to vector<128x128xf32>
    %13 = arith.addf %10, %12 : vector<128x128xf32>
    %c0_13 = arith.constant 0 : index
    %c0_14 = arith.constant 0 : index
    %14 = vector.load %arg7[%c0_13, %c0_14] : memref<128x128xf32, #tpu.memory_space<vmem>>, vector<128x128xf32>
    tpu.vector_store %arg7[%c0_13, %c0_14], %13 {strides = array<i32>} : memref<128x128xf32, #tpu.memory_space<vmem>>, vector<128x128xf32>,
    return
  }
  func.func @transform_0(%arg0: i32) -> (i32, i32) {
    %c0_i32 = arith.constant 0 : i32
    %c0_i32_0 = arith.constant 0 : i32
    return %arg0, %c0_i32 : i32, i32
  }
  func.func @transform_1(%arg0: i32) -> (i32, i32) {
    %c0_i32 = arith.constant 0 : i32
    %c0_i32_0 = arith.constant 0 : i32
    %c0_i32_1 = arith.constant 0 : i32
    return %c0_i32, %c0_i32_0 : i32, i32
  }
  func.func @transform_2(%arg0: i32) -> (i32, i32) {
    %c0_i32 = arith.constant 0 : i32
    %c0_i32_0 = arith.constant 0 : i32
    %c0_i32_1 = arith.constant 0 : i32
    return %c0_i32, %c0_i32_0 : i32, i32
  }
  func.func @transform_3(%arg0: i32) -> (i32, i32) {
    %c0_i32 = arith.constant 0 : i32
    %c0_i32_0 = arith.constant 0 : i32
    %c0_i32_1 = arith.constant 0 : i32
    return %c0_i32, %c0_i32_0 : i32, i32
  }
  func.func @transform_4(%arg0: i32) -> (i32, i32) {
    %c0_i32 = arith.constant 0 : i32
    %c0_i32_0 = arith.constant 0 : i32
    %c0_i32_1 = arith.constant 0 : i32
    return %c0_i32, %c0_i32_0 : i32, i32
  }
  func.func @transform_5(%arg0: i32) -> (i32, i32) {
    %c0_i32 = arith.constant 0 : i32
    %c0_i32_0 = arith.constant 0 : i32
    return %arg0, %c0_i32 : i32, i32
  }
  func.func @transform_6(%arg0: i32) -> (i32, i32) {
    %c0_i32 = arith.constant 0 : i32
    %c0_i32_0 = arith.constant 0 : i32
    return %arg0, %c0_i32 : i32, i32
  }
}

</mosaic_0001>

<llo_original>
// kernel: cnnbase_forward.4
$region0: #{cnnbase_forward.4}
  #allocation0 [shape = 'u32[]', space=smem, size = 0x4, offset = 0x4, fixed_abs, tag = 'smem constant byte address 0x4 - core index']
  #allocation1 [shape = 'u32[144,128]{1,0:T(1,128)}', space=vmem, size = 0x12000, scoped, tag = 'internal scratch']
  %s0 = inlined_call_operand.vmem [shape: bf16[896,256], index: 0, kind: input, shape index: {}]
  %s1 = inlined_call_operand.vmem [shape: bf16[256,128], index: 1, kind: input, shape index: {}]
  %s2 = inlined_call_operand.vmem [shape: f32[1,128], index: 2, kind: input, shape index: {}]
  %s3 = inlined_call_operand.vmem [shape: bf16[896,128], index: 3, kind: output, shape index: {}]
  %s4 = sld [smem:[#allocation0]]
  $region22: #{cnnbase_forward.4} parent=0
    _
  %s6 = ssub.s32 1, %s4
  %s7 = scalar_select 0, %s6, %s4
  // Predicated region
  $region2: #{cnnbase_forward.4} parent=0 // pred_check
    _
  $region3: #{cnnbase_forward.4} parent=0 // pred_check_branch
    %9 = sbr.rel (0) target = $region5
  $region4: #{cnnbase_forward.4} parent=0 // pred_region
    _
  $region5: #{cnnbase_forward.4} parent=0 // pred_fallthru
    _
  // Predicated region
  $region6: #{cnnbase_forward.4} parent=0 // pred_check
    _
  $region7: #{cnnbase_forward.4} parent=0 // pred_check_branch
    %11 = sbr.rel (0) target = $region9
  $region8: #{cnnbase_forward.4} parent=0 // pred_region
    _
  $region9: #{cnnbase_forward.4} parent=0 // pred_fallthru
    _
  // Predicated region
  $region10: #{cnnbase_forward.4} parent=0 // pred_check
    _
  $region11: #{cnnbase_forward.4} parent=0 // pred_check_branch
    %13 = sbr.rel (0) target = $region13
  $region12: #{cnnbase_forward.4} parent=0 // pred_region
    _
  $region13: #{cnnbase_forward.4} parent=0 // pred_fallthru
    _
  %v15 = vld [vmem:[%s0] sm:$0xff]
  %v16 = vld [vmem:[%s0 + $0x8] sm:$0xff]
  %v17 = vld [vmem:[%s0 + $0x10] sm:$0xff]
  %v18 = vld [vmem:[%s0 + $0x18] sm:$0xff]
  %v19 = vld [vmem:[%s0 + $0x20] sm:$0xff]
  %v20 = vld [vmem:[%s0 + $0x28] sm:$0xff]
  %v21 = vld [vmem:[%s0 + $0x30] sm:$0xff]
  %v22 = vld [vmem:[%s0 + $0x38] sm:$0xff]
  %v23 = vld [vmem:[%s0 + $0x40] sm:$0xff]
  %v24 = vld [vmem:[%s0 + $0x48] sm:$0xff]
  %v25 = vld [vmem:[%s0 + $0x50] sm:$0xff]
  %v26 = vld [vmem:[%s0 + $0x58] sm:$0xff]
  %v27 = vld [vmem:[%s0 + $0x60] sm:$0xff]
  %v28 = vld [vmem:[%s0 + $0x68] sm:$0xff]
  %v29 = vld [vmem:[%s0 + $0x70] sm:$0xff]
  %v30 = vld [vmem:[%s0 + $0x78] sm:$0xff]
  %v31 = vld [vmem:[%s0 + $0x80] sm:$0xff]
  %v32 = vld [vmem:[%s0 + $0x88] sm:$0xff]
  %v33 = vld [vmem:[%s0 + $0x90] sm:$0xff]
  %v34 = vld [vmem:[%s0 + $0x98] sm:$0xff]
  %v35 = vld [vmem:[%s0 + $0xa0] sm:$0xff]
  %v36 = vld [vmem:[%s0 + $0xa8] sm:$0xff]
  %v37 = vld [vmem:[%s0 + $0xb0] sm:$0xff]
  %v38 = vld [vmem:[%s0 + $0xb8] sm:$0xff]
  %v39 = vld [vmem:[%s0 + $0xc0] sm:$0xff]
  %v40 = vld [vmem:[%s0 + $0xc8] sm:$0xff]
  %v41 = vld [vmem:[%s0 + $0xd0] sm:$0xff]
  %v42 = vld [vmem:[%s0 + $0xd8] sm:$0xff]
  %v43 = vld [vmem:[%s0 + $0xe0] sm:$0xff]
  %v44 = vld [vmem:[%s0 + $0xe8] sm:$0xff]
  %v45 = vld [vmem:[%s0 + $0xf0] sm:$0xff]
  %v46 = vld [vmem:[%s0 + $0xf8] sm:$0xff]
  %v47 = vld [vmem:[%s0 + $0x100] sm:$0xff]
  %v48 = vld [vmem:[%s0 + $0x108] sm:$0xff]
  %v49 = vld [vmem:[%s0 + $0x110] sm:$0xff]
  %v50 = vld [vmem:[%s0 + $0x118] sm:$0xff]
  %v51 = vld [vmem:[%s0 + $0x120] sm:$0xff]
  %v52 = vld [vmem:[%s0 + $0x128] sm:$0xff]
  %v53 = vld [vmem:[%s0 + $0x130] sm:$0xff]
  %v54 = vld [vmem:[%s0 + $0x138] sm:$0xff]
  %v55 = vld [vmem:[%s0 + $0x140] sm:$0xff]
  %v56 = vld [vmem:[%s0 + $0x148] sm:$0xff]
  %v57 = vld [vmem:[%s0 + $0x150] sm:$0xff]
  %v58 = vld [vmem:[%s0 + $0x158] sm:$0xff]
  %v59 = vld [vmem:[%s0 + $0x160] sm:$0xff]
  %v60 = vld [vmem:[%s0 + $0x168] sm:$0xff]
  %v61 = vld [vmem:[%s0 + $0x170] sm:$0xff]
  %v62 = vld [vmem:[%s0 + $0x178] sm:$0xff]
  %v63 = vld [vmem:[%s0 + $0x180] sm:$0xff]
  %v64 = vld [vmem:[%s0 + $0x188] sm:$0xff]
  %v65 = vld [vmem:[%s0 + $0x190] sm:$0xff]
  %v66 = vld [vmem:[%s0 + $0x198] sm:$0xff]
  %v67 = vld [vmem:[%s0 + $0x1a0] sm:$0xff]
  %v68 = vld [vmem:[%s0 + $0x1a8] sm:$0xff]
  %v69 = vld [vmem:[%s0 + $0x1b0] sm:$0xff]
  %v70 = vld [vmem:[%s0 + $0x1b8] sm:$0xff]
  %v71 = vld [vmem:[%s0 + $0x1c0] sm:$0xff]
  %v72 = vld [vmem:[%s0 + $0x1c8] sm:$0xff]
  %v73 = vld [vmem:[%s0 + $0x1d0] sm:$0xff]
  %v74 = vld [vmem:[%s0 + $0x1d8] sm:$0xff]
  %v75 = vld [vmem:[%s0 + $0x1e0] sm:$0xff]
  %v76 = vld [vmem:[%s0 + $0x1e8] sm:$0xff]
  %v77 = vld [vmem:[%s0 + $0x1f0] sm:$0xff]
  %v78 = vld [vmem:[%s0 + $0x1f8] sm:$0xff]
  %v79 = vld [vmem:[%s0 + $0x200] sm:$0xff]
  %v80 = vld [vmem:[%s0 + $0x208] sm:$0xff]
  %v81 = vld [vmem:[%s0 + $0x210] sm:$0xff]
  %v82 = vld [vmem:[%s0 + $0x218] sm:$0xff]
  %v83 = vld [vmem:[%s0 + $0x220] sm:$0xff]
  %v84 = vld [vmem:[%s0 + $0x228] sm:$0xff]
  %v85 = vld [vmem:[%s0 + $0x230] sm:$0xff]
  %v86 = vld [vmem:[%s0 + $0x238] sm:$0xff]
  %v87 = vld [vmem:[%s0 + $0x240] sm:$0xff]
  %v88 = vld [vmem:[%s0 + $0x248] sm:$0xff]
  %v89 = vld [vmem:[%s0 + $0x250] sm:$0xff]
  %v90 = vld [vmem:[%s0 + $0x258] sm:$0xff]
  %v91 = vld [vmem:[%s0 + $0x260] sm:$0xff]
  %v92 = vld [vmem:[%s0 + $0x268] sm:$0xff]
  %v93 = vld [vmem:[%s0 + $0x270] sm:$0xff]
  %v94 = vld [vmem:[%s0 + $0x278] sm:$0xff]
  %v95 = vld [vmem:[%s0 + $0x280] sm:$0xff]
  %v96 = vld [vmem:[%s0 + $0x288] sm:$0xff]
  %v97 = vld [vmem:[%s0 + $0x290] sm:$0xff]
  %v98 = vld [vmem:[%s0 + $0x298] sm:$0xff]
  %v99 = vld [vmem:[%s0 + $0x2a0] sm:$0xff]
  %v100 = vld [vmem:[%s0 + $0x2a8] sm:$0xff]
  %v101 = vld [vmem:[%s0 + $0x2b0] sm:$0xff]
  %v102 = vld [vmem:[%s0 + $0x2b8] sm:$0xff]
  %v103 = vld [vmem:[%s0 + $0x2c0] sm:$0xff]
  %v104 = vld [vmem:[%s0 + $0x2c8] sm:$0xff]
  %v105 = vld [vmem:[%s0 + $0x2d0] sm:$0xff]
  %v106 = vld [vmem:[%s0 + $0x2d8] sm:$0xff]
  %v107 = vld [vmem:[%s0 + $0x2e0] sm:$0xff]
  %v108 = vld [vmem:[%s0 + $0x2e8] sm:$0xff]
  %v109 = vld [vmem:[%s0 + $0x2f0] sm:$0xff]
  %v110 = vld [vmem:[%s0 + $0x2f8] sm:$0xff]
  %v111 = vld [vmem:[%s0 + $0x300] sm:$0xff]
  %v112 = vld [vmem:[%s0 + $0x308] sm:$0xff]
  %v113 = vld [vmem:[%s0 + $0x310] sm:$0xff]
  %v114 = vld [vmem:[%s0 + $0x318] sm:$0xff]
  %v115 = vld [vmem:[%s0 + $0x320] sm:$0xff]
  %v116 = vld [vmem:[%s0 + $0x328] sm:$0xff]
  %v117 = vld [vmem:[%s0 + $0x330] sm:$0xff]
  %v118 = vld [vmem:[%s0 + $0x338] sm:$0xff]
  %v119 = vld [vmem:[%s0 + $0x340] sm:$0xff]
  %v120 = vld [vmem:[%s0 + $0x348] sm:$0xff]
  %v121 = vld [vmem:[%s0 + $0x350] sm:$0xff]
  %v122 = vld [vmem:[%s0 + $0x358] sm:$0xff]
  %v123 = vld [vmem:[%s0 + $0x360] sm:$0xff]
  %v124 = vld [vmem:[%s0 + $0x368] sm:$0xff]
  %v125 = vld [vmem:[%s0 + $0x370] sm:$0xff]
  %v126 = vld [vmem:[%s0 + $0x378] sm:$0xff]
  %v127 = vld [vmem:[%s1] sm:$0xf]
  %v128 = vld [vmem:[%s1 + $0x4] sm:$0xf]
  %v129 = vld [vmem:[%s1 + $0x8] sm:$0xf]
  %v130 = vld [vmem:[%s1 + $0xc] sm:$0xf]
  %v131 = vld [vmem:[%s1 + $0x10] sm:$0xf]
  %v132 = vld [vmem:[%s1 + $0x14] sm:$0xf]
  %v133 = vld [vmem:[%s1 + $0x18] sm:$0xf]
  %v134 = vld [vmem:[%s1 + $0x1c] sm:$0xf]
  %v135 = vld [vmem:[%s1 + $0x20] sm:$0xf]
  %v136 = vld [vmem:[%s1 + $0x24] sm:$0xf]
  %v137 = vld [vmem:[%s1 + $0x28] sm:$0xf]
  %v138 = vld [vmem:[%s1 + $0x2c] sm:$0xf]
  %v139 = vld [vmem:[%s1 + $0x30] sm:$0xf]
  %v140 = vld [vmem:[%s1 + $0x34] sm:$0xf]
  %v141 = vld [vmem:[%s1 + $0x38] sm:$0xf]
  %v142 = vld [vmem:[%s1 + $0x3c] sm:$0xf]
  %v143 = vld [vmem:[%s1 + $0x40] sm:$0xf]
  %v144 = vld [vmem:[%s1 + $0x44] sm:$0xf]
  %v145 = vld [vmem:[%s1 + $0x48] sm:$0xf]
  %v146 = vld [vmem:[%s1 + $0x4c] sm:$0xf]
  %v147 = vld [vmem:[%s1 + $0x50] sm:$0xf]
  %v148 = vld [vmem:[%s1 + $0x54] sm:$0xf]
  %v149 = vld [vmem:[%s1 + $0x58] sm:$0xf]
  %v150 = vld [vmem:[%s1 + $0x5c] sm:$0xf]
  %v151 = vld [vmem:[%s1 + $0x60] sm:$0xf]
  %v152 = vld [vmem:[%s1 + $0x64] sm:$0xf]
  %v153 = vld [vmem:[%s1 + $0x68] sm:$0xf]
  %v154 = vld [vmem:[%s1 + $0x6c] sm:$0xf]
  %v155 = vld [vmem:[%s1 + $0x70] sm:$0xf]
  %v156 = vld [vmem:[%s1 + $0x74] sm:$0xf]
  %v157 = vld [vmem:[%s1 + $0x78] sm:$0xf]
  %v158 = vld [vmem:[%s1 + $0x7c] sm:$0xf]
  %v159 = vld [vmem:[%s2] sm:$0x1]
  %v161 = vlaneseq
  %v162 = vshrl.u32 %v161, 7
  %v163 = vsub.s32 0, %v162
  %v164 = vrot.slane %v159, %v163
  %v278 = vunpack.c.l.b16 %v15
  %v279 = vunpack.c.h.b16 %v15
  %v280 = vunpack.c.l.b16 %v16
  %v281 = vunpack.c.h.b16 %v16
  %v282 = vunpack.c.l.b16 %v17
  %v283 = vunpack.c.h.b16 %v17
  %v284 = vunpack.c.l.b16 %v18
  %v285 = vunpack.c.h.b16 %v18
  %v286 = vunpack.c.l.b16 %v19
  %v287 = vunpack.c.h.b16 %v19
  %v288 = vunpack.c.l.b16 %v20
  %v289 = vunpack.c.h.b16 %v20
  %v290 = vunpack.c.l.b16 %v21
  %v291 = vunpack.c.h.b16 %v21
  %v292 = vunpack.c.l.b16 %v22
  %v293 = vunpack.c.h.b16 %v22
  %v294 = vunpack.c.l.b16 %v23
  %v295 = vunpack.c.h.b16 %v23
  %v296 = vunpack.c.l.b16 %v24
  %v297 = vunpack.c.h.b16 %v24
  %v298 = vunpack.c.l.b16 %v25
  %v299 = vunpack.c.h.b16 %v25
  %v300 = vunpack.c.l.b16 %v26
  %v301 = vunpack.c.h.b16 %v26
  %v302 = vunpack.c.l.b16 %v27
  %v303 = vunpack.c.h.b16 %v27
  %v304 = vunpack.c.l.b16 %v28
  %v305 = vunpack.c.h.b16 %v28
  %v306 = vunpack.c.l.b16 %v29
  %v307 = vunpack.c.h.b16 %v29
  %v308 = vunpack.c.l.b16 %v30
  %v309 = vunpack.c.h.b16 %v30
  %v310 = vunpack.c.l.b16 %v31
  %v311 = vunpack.c.h.b16 %v31
  %v312 = vunpack.c.l.b16 %v32
  %v313 = vunpack.c.h.b16 %v32
  %v314 = vunpack.c.l.b16 %v33
  %v315 = vunpack.c.h.b16 %v33
  %v316 = vunpack.c.l.b16 %v34
  %v317 = vunpack.c.h.b16 %v34
  %v318 = vunpack.c.l.b16 %v35
  %v319 = vunpack.c.h.b16 %v35
  %v320 = vunpack.c.l.b16 %v36
  %v321 = vunpack.c.h.b16 %v36
  %v322 = vunpack.c.l.b16 %v37
  %v323 = vunpack.c.h.b16 %v37
  %v324 = vunpack.c.l.b16 %v38
  %v325 = vunpack.c.h.b16 %v38
  %v326 = vunpack.c.l.b16 %v39
  %v327 = vunpack.c.h.b16 %v39
  %v328 = vunpack.c.l.b16 %v40
  %v329 = vunpack.c.h.b16 %v40
  %v330 = vunpack.c.l.b16 %v41
  %v331 = vunpack.c.h.b16 %v41
  %v332 = vunpack.c.l.b16 %v42
  %v333 = vunpack.c.h.b16 %v42
  %v334 = vunpack.c.l.b16 %v43
  %v335 = vunpack.c.h.b16 %v43
  %v336 = vunpack.c.l.b16 %v44
  %v337 = vunpack.c.h.b16 %v44
  %v338 = vunpack.c.l.b16 %v45
  %v339 = vunpack.c.h.b16 %v45
  %v340 = vunpack.c.l.b16 %v46
  %v341 = vunpack.c.h.b16 %v46
  %v342 = vunpack.c.l.b16 %v47
  %v343 = vunpack.c.h.b16 %v47
  %v344 = vunpack.c.l.b16 %v48
  %v345 = vunpack.c.h.b16 %v48
  %v346 = vunpack.c.l.b16 %v49
  %v347 = vunpack.c.h.b16 %v49
  %v348 = vunpack.c.l.b16 %v50
  %v349 = vunpack.c.h.b16 %v50
  %v350 = vunpack.c.l.b16 %v51
  %v351 = vunpack.c.h.b16 %v51
  %v352 = vunpack.c.l.b16 %v52
  %v353 = vunpack.c.h.b16 %v52
  %v354 = vunpack.c.l.b16 %v53
  %v355 = vunpack.c.h.b16 %v53
  %v356 = vunpack.c.l.b16 %v54
  %v357 = vunpack.c.h.b16 %v54
  %v358 = vunpack.c.l.b16 %v55
  %v359 = vunpack.c.h.b16 %v55
  %v360 = vunpack.c.l.b16 %v56
  %v361 = vunpack.c.h.b16 %v56
  %v362 = vunpack.c.l.b16 %v57
  %v363 = vunpack.c.h.b16 %v57
  %v364 = vunpack.c.l.b16 %v58
  %v365 = vunpack.c.h.b16 %v58
  %v366 = vunpack.c.l.b16 %v59
  %v367 = vunpack.c.h.b16 %v59
  %v368 = vunpack.c.l.b16 %v60
  %v369 = vunpack.c.h.b16 %v60
  %v370 = vunpack.c.l.b16 %v61
  %v371 = vunpack.c.h.b16 %v61
  %v372 = vunpack.c.l.b16 %v62
  %v373 = vunpack.c.h.b16 %v62
  %v374 = vunpack.c.l.b16 %v63
  %v375 = vunpack.c.h.b16 %v63
  %v376 = vunpack.c.l.b16 %v64
  %v377 = vunpack.c.h.b16 %v64
  %v378 = vunpack.c.l.b16 %v65
  %v379 = vunpack.c.h.b16 %v65
  %v380 = vunpack.c.l.b16 %v66
  %v381 = vunpack.c.h.b16 %v66
  %v382 = vunpack.c.l.b16 %v67
  %v383 = vunpack.c.h.b16 %v67
  %v384 = vunpack.c.l.b16 %v68
  %v385 = vunpack.c.h.b16 %v68
  %v386 = vunpack.c.l.b16 %v69
  %v387 = vunpack.c.h.b16 %v69
  %v388 = vunpack.c.l.b16 %v70
  %v389 = vunpack.c.h.b16 %v70
  %v390 = vunpack.c.l.b16 %v71
  %v391 = vunpack.c.h.b16 %v71
  %v392 = vunpack.c.l.b16 %v72
  %v393 = vunpack.c.h.b16 %v72
  %v394 = vunpack.c.l.b16 %v73
  %v395 = vunpack.c.h.b16 %v73
  %v396 = vunpack.c.l.b16 %v74
  %v397 = vunpack.c.h.b16 %v74
  %v398 = vunpack.c.l.b16 %v75
  %v399 = vunpack.c.h.b16 %v75
  %v400 = vunpack.c.l.b16 %v76
  %v401 = vunpack.c.h.b16 %v76
  %v402 = vunpack.c.l.b16 %v77
  %v403 = vunpack.c.h.b16 %v77
  %v404 = vunpack.c.l.b16 %v78
  %v405 = vunpack.c.h.b16 %v78
  %v406 = vunpack.c.l.b16 %v79
  %v407 = vunpack.c.h.b16 %v79
  %v408 = vunpack.c.l.b16 %v80
  %v409 = vunpack.c.h.b16 %v80
  %v410 = vunpack.c.l.b16 %v81
  %v411 = vunpack.c.h.b16 %v81
  %v412 = vunpack.c.l.b16 %v82
  %v413 = vunpack.c.h.b16 %v82
  %v414 = vunpack.c.l.b16 %v83
  %v415 = vunpack.c.h.b16 %v83
  %v416 = vunpack.c.l.b16 %v84
  %v417 = vunpack.c.h.b16 %v84
  %v418 = vunpack.c.l.b16 %v85
  %v419 = vunpack.c.h.b16 %v85
  %v420 = vunpack.c.l.b16 %v86
  %v421 = vunpack.c.h.b16 %v86
  %v422 = vunpack.c.l.b16 %v87
  %v423 = vunpack.c.h.b16 %v87
  %v424 = vunpack.c.l.b16 %v88
  %v425 = vunpack.c.h.b16 %v88
  %v426 = vunpack.c.l.b16 %v89
  %v427 = vunpack.c.h.b16 %v89
  %v428 = vunpack.c.l.b16 %v90
  %v429 = vunpack.c.h.b16 %v90
  %v430 = vunpack.c.l.b16 %v91
  %v431 = vunpack.c.h.b16 %v91
  %v432 = vunpack.c.l.b16 %v92
  %v433 = vunpack.c.h.b16 %v92
  %v434 = vunpack.c.l.b16 %v93
  %v435 = vunpack.c.h.b16 %v93
  %v436 = vunpack.c.l.b16 %v94
  %v437 = vunpack.c.h.b16 %v94
  %v438 = vunpack.c.l.b16 %v95
  %v439 = vunpack.c.h.b16 %v95
  %v440 = vunpack.c.l.b16 %v96
  %v441 = vunpack.c.h.b16 %v96
  %v442 = vunpack.c.l.b16 %v97
  %v443 = vunpack.c.h.b16 %v97
  %v444 = vunpack.c.l.b16 %v98
  %v445 = vunpack.c.h.b16 %v98
  %v446 = vunpack.c.l.b16 %v99
  %v447 = vunpack.c.h.b16 %v99
  %v448 = vunpack.c.l.b16 %v100
  %v449 = vunpack.c.h.b16 %v100
  %v450 = vunpack.c.l.b16 %v101
  %v451 = vunpack.c.h.b16 %v101
  %v452 = vunpack.c.l.b16 %v102
  %v453 = vunpack.c.h.b16 %v102
  %v454 = vunpack.c.l.b16 %v103
  %v455 = vunpack.c.h.b16 %v103
  %v456 = vunpack.c.l.b16 %v104
  %v457 = vunpack.c.h.b16 %v104
  %v458 = vunpack.c.l.b16 %v105
  %v459 = vunpack.c.h.b16 %v105
  %v460 = vunpack.c.l.b16 %v106
  %v461 = vunpack.c.h.b16 %v106
  %v462 = vunpack.c.l.b16 %v107
  %v463 = vunpack.c.h.b16 %v107
  %v464 = vunpack.c.l.b16 %v108
  %v465 = vunpack.c.h.b16 %v108
  %v466 = vunpack.c.l.b16 %v109
  %v467 = vunpack.c.h.b16 %v109
  %v468 = vunpack.c.l.b16 %v110
  %v469 = vunpack.c.h.b16 %v110
  %v470 = vunpack.c.l.b16 %v111
  %v471 = vunpack.c.h.b16 %v111
  %v472 = vunpack.c.l.b16 %v112
  %v473 = vunpack.c.h.b16 %v112
  %v474 = vunpack.c.l.b16 %v113
  %v475 = vunpack.c.h.b16 %v113
  %v476 = vunpack.c.l.b16 %v114
  %v477 = vunpack.c.h.b16 %v114
  %v478 = vunpack.c.l.b16 %v115
  %v479 = vunpack.c.h.b16 %v115
  %v480 = vunpack.c.l.b16 %v116
  %v481 = vunpack.c.h.b16 %v116
  %v482 = vunpack.c.l.b16 %v117
  %v483 = vunpack.c.h.b16 %v117
  %v484 = vunpack.c.l.b16 %v118
  %v485 = vunpack.c.h.b16 %v118
  %v486 = vunpack.c.l.b16 %v119
  %v487 = vunpack.c.h.b16 %v119
  %v488 = vunpack.c.l.b16 %v120
  %v489 = vunpack.c.h.b16 %v120
  %v490 = vunpack.c.l.b16 %v121
  %v491 = vunpack.c.h.b16 %v121
  %v492 = vunpack.c.l.b16 %v122
  %v493 = vunpack.c.h.b16 %v122
  %v494 = vunpack.c.l.b16 %v123
  %v495 = vunpack.c.h.b16 %v123
  %v496 = vunpack.c.l.b16 %v124
  %v497 = vunpack.c.h.b16 %v124
  %v498 = vunpack.c.l.b16 %v125
  %v499 = vunpack.c.h.b16 %v125
  %v500 = vunpack.c.l.b16 %v126
  %v501 = vunpack.c.h.b16 %v126
  %v502 = vpack.c.b16 %v280, %v278
  %v503 = vpack.c.b16 %v281, %v279
  %v504 = vpack.c.b16 %v284, %v282
  %v505 = vpack.c.b16 %v285, %v283
  %v506 = vpack.c.b16 %v288, %v286
  %v507 = vpack.c.b16 %v289, %v287
  %v508 = vpack.c.b16 %v292, %v290
  %v509 = vpack.c.b16 %v293, %v291
  %v510 = vpack.c.b16 %v296, %v294
  %v511 = vpack.c.b16 %v297, %v295
  %v512 = vpack.c.b16 %v300, %v298
  %v513 = vpack.c.b16 %v301, %v299
  %v514 = vpack.c.b16 %v304, %v302
  %v515 = vpack.c.b16 %v305, %v303
  %v516 = vpack.c.b16 %v308, %v306
  %v517 = vpack.c.b16 %v309, %v307
  %v518 = vpack.c.b16 %v312, %v310
  %v519 = vpack.c.b16 %v313, %v311
  %v520 = vpack.c.b16 %v316, %v314
  %v521 = vpack.c.b16 %v317, %v315
  %v522 = vpack.c.b16 %v320, %v318
  %v523 = vpack.c.b16 %v321, %v319
  %v524 = vpack.c.b16 %v324, %v322
  %v525 = vpack.c.b16 %v325, %v323
  %v526 = vpack.c.b16 %v328, %v326
  %v527 = vpack.c.b16 %v329, %v327
  %v528 = vpack.c.b16 %v332, %v330
  %v529 = vpack.c.b16 %v333, %v331
  %v530 = vpack.c.b16 %v336, %v334
  %v531 = vpack.c.b16 %v337, %v335
  %v532 = vpack.c.b16 %v340, %v338
  %v533 = vpack.c.b16 %v341, %v339
  %v534 = vpack.c.b16 %v344, %v342
  %v535 = vpack.c.b16 %v345, %v343
  %v536 = vpack.c.b16 %v348, %v346
  %v537 = vpack.c.b16 %v349, %v347
  %v538 = vpack.c.b16 %v352, %v350
  %v539 = vpack.c.b16 %v353, %v351
  %v540 = vpack.c.b16 %v356, %v354
  %v541 = vpack.c.b16 %v357, %v355
  %v542 = vpack.c.b16 %v360, %v358
  %v543 = vpack.c.b16 %v361, %v359
  %v544 = vpack.c.b16 %v364, %v362
  %v545 = vpack.c.b16 %v365, %v363
  %v546 = vpack.c.b16 %v368, %v366
  %v547 = vpack.c.b16 %v369, %v367
  %v548 = vpack.c.b16 %v372, %v370
  %v549 = vpack.c.b16 %v373, %v371
  %v550 = vpack.c.b16 %v376, %v374
  %v551 = vpack.c.b16 %v377, %v375
  %v552 = vpack.c.b16 %v380, %v378
  %v553 = vpack.c.b16 %v381, %v379
  %v554 = vpack.c.b16 %v384, %v382
  %v555 = vpack.c.b16 %v385, %v383
  %v556 = vpack.c.b16 %v388, %v386
  %v557 = vpack.c.b16 %v389, %v387
  %v558 = vpack.c.b16 %v392, %v390
  %v559 = vpack.c.b16 %v393, %v391
  %v560 = vpack.c.b16 %v396, %v394
  %v561 = vpack.c.b16 %v397, %v395
  %v562 = vpack.c.b16 %v400, %v398
  %v563 = vpack.c.b16 %v401, %v399
  %v564 = vpack.c.b16 %v404, %v402
  %v565 = vpack.c.b16 %v405, %v403
  %v566 = vpack.c.b16 %v408, %v406
  %v567 = vpack.c.b16 %v409, %v407
  %v568 = vpack.c.b16 %v412, %v410
  %v569 = vpack.c.b16 %v413, %v411
  %v570 = vpack.c.b16 %v416, %v414
  %v571 = vpack.c.b16 %v417, %v415
  %v572 = vpack.c.b16 %v420, %v418
  %v573 = vpack.c.b16 %v421, %v419
  %v574 = vpack.c.b16 %v424, %v422
  %v575 = vpack.c.b16 %v425, %v423
  %v576 = vpack.c.b16 %v428, %v426
  %v577 = vpack.c.b16 %v429, %v427
  %v578 = vpack.c.b16 %v432, %v430
  %v579 = vpack.c.b16 %v433, %v431
  %v580 = vpack.c.b16 %v436, %v434
  %v581 = vpack.c.b16 %v437, %v435
  %v582 = vpack.c.b16 %v440, %v438
  %v583 = vpack.c.b16 %v441, %v439
  %v584 = vpack.c.b16 %v444, %v442
  %v585 = vpack.c.b16 %v445, %v443
  %v586 = vpack.c.b16 %v448, %v446
  %v587 = vpack.c.b16 %v449, %v447
  %v588 = vpack.c.b16 %v452, %v450
  %v589 = vpack.c.b16 %v453, %v451
  %v590 = vpack.c.b16 %v456, %v454
  %v591 = vpack.c.b16 %v457, %v455
  %v592 = vpack.c.b16 %v460, %v458
  %v593 = vpack.c.b16 %v461, %v459
  %v594 = vpack.c.b16 %v464, %v462
  %v595 = vpack.c.b16 %v465, %v463
  %v596 = vpack.c.b16 %v468, %v466
  %v597 = vpack.c.b16 %v469, %v467
  %v598 = vpack.c.b16 %v472, %v470
  %v599 = vpack.c.b16 %v473, %v471
  %v600 = vpack.c.b16 %v476, %v474
  %v601 = vpack.c.b16 %v477, %v475
  %v602 = vpack.c.b16 %v480, %v478
  %v603 = vpack.c.b16 %v481, %v479
  %v604 = vpack.c.b16 %v484, %v482
  %v605 = vpack.c.b16 %v485, %v483
  %v606 = vpack.c.b16 %v488, %v486
  %v607 = vpack.c.b16 %v489, %v487
  %v608 = vpack.c.b16 %v492, %v490
  %v609 = vpack.c.b16 %v493, %v491
  %v610 = vpack.c.b16 %v496, %v494
  %v611 = vpack.c.b16 %v497, %v495
  %v612 = vpack.c.b16 %v500, %v498
  %v613 = vpack.c.b16 %v501, %v499
  %v758 = vunpack.c.l.b16 %v127
  %v759 = vunpack.c.l.b16 %v128
  %v760 = vunpack.c.l.b16 %v129
  %v761 = vunpack.c.l.b16 %v130
  %v762 = vunpack.c.l.b16 %v131
  %v763 = vunpack.c.l.b16 %v132
  %v764 = vunpack.c.l.b16 %v133
  %v765 = vunpack.c.l.b16 %v134
  %v766 = vunpack.c.l.b16 %v135
  %v767 = vunpack.c.l.b16 %v136
  %v768 = vunpack.c.l.b16 %v137
  %v769 = vunpack.c.l.b16 %v138
  %v770 = vunpack.c.l.b16 %v139
  %v771 = vunpack.c.l.b16 %v140
  %v772 = vunpack.c.l.b16 %v141
  %v773 = vunpack.c.l.b16 %v142
  %v774 = vunpack.c.l.b16 %v143
  %v775 = vunpack.c.l.b16 %v144
  %v776 = vunpack.c.l.b16 %v145
  %v777 = vunpack.c.l.b16 %v146
  %v778 = vunpack.c.l.b16 %v147
  %v779 = vunpack.c.l.b16 %v148
  %v780 = vunpack.c.l.b16 %v149
  %v781 = vunpack.c.l.b16 %v150
  %v782 = vunpack.c.l.b16 %v151
  %v783 = vunpack.c.l.b16 %v152
  %v784 = vunpack.c.l.b16 %v153
  %v785 = vunpack.c.l.b16 %v154
  %v786 = vunpack.c.l.b16 %v155
  %v787 = vunpack.c.l.b16 %v156
  %v788 = vunpack.c.l.b16 %v157
  %v789 = vunpack.c.l.b16 %v158
  %v790 = vpack.c.b16 %v759, %v758
  %v791 = vpack.c.b16 %v761, %v760
  %v792 = vpack.c.b16 %v763, %v762
  %v793 = vpack.c.b16 %v765, %v764
  %v794 = vpack.c.b16 %v767, %v766
  %v795 = vpack.c.b16 %v769, %v768
  %v796 = vpack.c.b16 %v771, %v770
  %v797 = vpack.c.b16 %v773, %v772
  %v798 = vpack.c.b16 %v775, %v774
  %v799 = vpack.c.b16 %v777, %v776
  %v800 = vpack.c.b16 %v779, %v778
  %v801 = vpack.c.b16 %v781, %v780
  %v802 = vpack.c.b16 %v783, %v782
  %v803 = vpack.c.b16 %v785, %v784
  %v804 = vpack.c.b16 %v787, %v786
  %v805 = vpack.c.b16 %v789, %v788
  %822 = vmatprep.subr.bf16.mxu0 0
  %823 = vmatpush1.bf16.msra.mxu0 %v790
  %824 = vmatprep.subr.bf16.mxu0 0
  %825 = vmatpush1.bf16.msra.mxu0 %v791
  %826 = vmatprep.subr.bf16.mxu0 0
  %827 = vmatpush1.bf16.msra.mxu0 %v792
  %828 = vmatprep.subr.bf16.mxu0 0
  %829 = vmatpush1.bf16.msra.mxu0 %v793
  %830 = vmatprep.subr.bf16.mxu0 0
  %831 = vmatpush1.bf16.msra.mxu0 %v794
  %832 = vmatprep.subr.bf16.mxu0 0
  %833 = vmatpush1.bf16.msra.mxu0 %v795
  %834 = vmatprep.subr.bf16.mxu0 0
  %835 = vmatpush1.bf16.msra.mxu0 %v796
  %836 = vmatprep.subr.bf16.mxu0 0
  %837 = vmatpush1.bf16.msra.mxu0 %v797
  %838 = vmatprep.subr.bf16.mxu0 0
  %839 = vmatpush1.bf16.msra.mxu0 %v798
  %840 = vmatprep.subr.bf16.mxu0 0
  %841 = vmatpush1.bf16.msra.mxu0 %v799
  %842 = vmatprep.subr.bf16.mxu0 0
  %843 = vmatpush1.bf16.msra.mxu0 %v800
  %844 = vmatprep.subr.bf16.mxu0 0
  %845 = vmatpush1.bf16.msra.mxu0 %v801
  %846 = vmatprep.subr.bf16.mxu0 0
  %847 = vmatpush1.bf16.msra.mxu0 %v802
  %848 = vmatprep.subr.bf16.mxu0 0
  %849 = vmatpush1.bf16.msra.mxu0 %v803
  %850 = vmatprep.subr.bf16.mxu0 0
  %851 = vmatpush1.bf16.msra.mxu0 %v804
  %852 = vmatprep.subr.bf16.mxu0 0
  %853 = vmatpush1.bf16.msra.mxu0 %v805
  %854 = vmatprep.mubr.bf16.mxu0 %v503
  %855 = vmatmul.mubr.bf16.gmra.mrb[0].mxu0 %v502
  %v856 = vpop.f32.mrb[0].mxu0
  %v857 = vadd.f32 %v164, %v856
  %v858 = vpop.f32.mrb[0].mxu0
  %v859 = vpop.f32.mrb[0].mxu0
  %v860 = vadd.f32 %v164, %v859
  %v861 = vpop.f32.mrb[0].mxu0
  %862 = vmatprep.mubr.bf16.mxu0 %v505
  %863 = vmatmul.mubr.bf16.gmra.mrb[0].mxu0 %v504
  %v864 = vpop.f32.mrb[0].mxu0
  %v865 = vadd.f32 %v164, %v864
  %v866 = vpop.f32.mrb[0].mxu0
  %v867 = vpop.f32.mrb[0].mxu0
  %v868 = vadd.f32 %v164, %v867
  %v869 = vpop.f32.mrb[0].mxu0
  %870 = vmatprep.mubr.bf16.mxu0 %v507
  %871 = vmatmul.mubr.bf16.gmra.mrb[0].mxu0 %v506
  %v872 = vpop.f32.mrb[0].mxu0
  %v873 = vadd.f32 %v164, %v872
  %v874 = vpop.f32.mrb[0].mxu0
  %v875 = vpop.f32.mrb[0].mxu0
  %v876 = vadd.f32 %v164, %v875
  %v877 = vpop.f32.mrb[0].mxu0
  %878 = vmatprep.mubr.bf16.mxu0 %v509
  %879 = vmatmul.mubr.bf16.gmra.mrb[0].mxu0 %v508
  %v880 = vpop.f32.mrb[0].mxu0
  %v881 = vadd.f32 %v164, %v880
  %v882 = vpop.f32.mrb[0].mxu0
  %v883 = vpop.f32.mrb[0].mxu0
  %v884 = vadd.f32 %v164, %v883
  %v885 = vpop.f32.mrb[0].mxu0
  %886 = vmatprep.mubr.bf16.mxu0 %v511
  %887 = vmatmul.mubr.bf16.gmra.mrb[0].mxu0 %v510
  %v888 = vpop.f32.mrb[0].mxu0
  %v889 = vadd.f32 %v164, %v888
  %v890 = vpop.f32.mrb[0].mxu0
  %v891 = vpop.f32.mrb[0].mxu0
  %v892 = vadd.f32 %v164, %v891
  %v893 = vpop.f32.mrb[0].mxu0
  %894 = vmatprep.mubr.bf16.mxu0 %v513
  %895 = vmatmul.mubr.bf16.gmra.mrb[0].mxu0 %v512
  %v896 = vpop.f32.mrb[0].mxu0
  %v897 = vadd.f32 %v164, %v896
  %v898 = vpop.f32.mrb[0].mxu0
  %v899 = vpop.f32.mrb[0].mxu0
  %v900 = vadd.f32 %v164, %v899
  %v901 = vpop.f32.mrb[0].mxu0
  %902 = vmatprep.mubr.bf16.mxu0 %v515
  %903 = vmatmul.mubr.bf16.gmra.mrb[0].mxu0 %v514
  %v904 = vpop.f32.mrb[0].mxu0
  %v905 = vadd.f32 %v164, %v904
  %v906 = vpop.f32.mrb[0].mxu0
  %v907 = vpop.f32.mrb[0].mxu0
  %v908 = vadd.f32 %v164, %v907
  %v909 = vpop.f32.mrb[0].mxu0
  %910 = vmatprep.mubr.bf16.mxu0 %v517
  %911 = vmatmul.mubr.bf16.gmra.mrb[0].mxu0 %v516
  %v912 = vpop.f32.mrb[0].mxu0
  %v913 = vadd.f32 %v164, %v912
  %v914 = vpop.f32.mrb[0].mxu0
  %v915 = vpop.f32.mrb[0].mxu0
  %v916 = vadd.f32 %v164, %v915
  %v917 = vpop.f32.mrb[0].mxu0
  %918 = vmatprep.mubr.bf16.mxu0 %v519
  %919 = vmatmul.mubr.bf16.gmra.mrb[0].mxu0 %v518
  %v920 = vpop.f32.mrb[0].mxu0
  %v921 = vadd.f32 %v164, %v920
  %v922 = vpop.f32.mrb[0].mxu0
  %v923 = vpop.f32.mrb[0].mxu0
  %v924 = vadd.f32 %v164, %v923
  %v925 = vpop.f32.mrb[0].mxu0
  %926 = vmatprep.mubr.bf16.mxu0 %v521
  %927 = vmatmul.mubr.bf16.gmra.mrb[0].mxu0 %v520
  %v928 = vpop.f32.mrb[0].mxu0
  %v929 = vadd.f32 %v164, %v928
  %v930 = vpop.f32.mrb[0].mxu0
  %v931 = vpop.f32.mrb[0].mxu0
  %v932 = vadd.f32 %v164, %v931
  %v933 = vpop.f32.mrb[0].mxu0
  %934 = vmatprep.mubr.bf16.mxu0 %v523
  %935 = vmatmul.mubr.bf16.gmra.mrb[0].mxu0 %v522
  %v936 = vpop.f32.mrb[0].mxu0
  %v937 = vadd.f32 %v164, %v936
  %v938 = vpop.f32.mrb[0].mxu0
  %v939 = vpop.f32.mrb[0].mxu0
  %v940 = vadd.f32 %v164, %v939
  %v941 = vpop.f32.mrb[0].mxu0
  %942 = vmatprep.mubr.bf16.mxu0 %v525
  %943 = vmatmul.mubr.bf16.gmra.mrb[0].mxu0 %v524
  %v944 = vpop.f32.mrb[0].mxu0
  %v945 = vadd.f32 %v164, %v944
  %v946 = vpop.f32.mrb[0].mxu0
  %v947 = vpop.f32.mrb[0].mxu0
  %v948 = vadd.f32 %v164, %v947
  %v949 = vpop.f32.mrb[0].mxu0
  %950 = vmatprep.mubr.bf16.mxu0 %v527
  %951 = vmatmul.mubr.bf16.gmra.mrb[0].mxu0 %v526
  %v952 = vpop.f32.mrb[0].mxu0
  %v953 = vadd.f32 %v164, %v952
  %v954 = vpop.f32.mrb[0].mxu0
  %v955 = vpop.f32.mrb[0].mxu0
  %v956 = vadd.f32 %v164, %v955
  %v957 = vpop.f32.mrb[0].mxu0
  %958 = vmatprep.mubr.bf16.mxu0 %v529
  %959 = vmatmul.mubr.bf16.gmra.mrb[0].mxu0 %v528
  %v960 = vpop.f32.mrb[0].mxu0
  %v961 = vadd.f32 %v164, %v960
  %v962 = vpop.f32.mrb[0].mxu0
  %v963 = vpop.f32.mrb[0].mxu0
  %v964 = vadd.f32 %v164, %v963
  %v965 = vpop.f32.mrb[0].mxu0
  %966 = vmatprep.mubr.bf16.mxu0 %v531
  %967 = vmatmul.mubr.bf16.gmra.mrb[0].mxu0 %v530
  %v968 = vpop.f32.mrb[0].mxu0
  %v969 = vadd.f32 %v164, %v968
  %v970 = vpop.f32.mrb[0].mxu0
  %v971 = vpop.f32.mrb[0].mxu0
  %v972 = vadd.f32 %v164, %v971
  %v973 = vpop.f32.mrb[0].mxu0
  %974 = vmatprep.mubr.bf16.mxu0 %v533
  %975 = vmatmul.mubr.bf16.gmra.mrb[0].mxu0 %v532
  %v976 = vpop.f32.mrb[0].mxu0
  %v977 = vadd.f32 %v164, %v976
  %v978 = vpop.f32.mrb[0].mxu0
  %v979 = vpop.f32.mrb[0].mxu0
  %v980 = vadd.f32 %v164, %v979
  %v981 = vpop.f32.mrb[0].mxu0
  %982 = vmatprep.mubr.bf16.mxu0 %v535
  %983 = vmatmul.mubr.bf16.gmra.mrb[0].mxu0 %v534
  %v984 = vpop.f32.mrb[0].mxu0
  %v985 = vadd.f32 %v164, %v984
  %v986 = vpop.f32.mrb[0].mxu0
  %v987 = vpop.f32.mrb[0].mxu0
  %v988 = vadd.f32 %v164, %v987
  %v989 = vpop.f32.mrb[0].mxu0
  %990 = vmatprep.mubr.bf16.mxu0 %v537
  %991 = vmatmul.mubr.bf16.gmra.mrb[0].mxu0 %v536
  %v992 = vpop.f32.mrb[0].mxu0
  %v993 = vadd.f32 %v164, %v992
  %v994 = vpop.f32.mrb[0].mxu0
  %v995 = vpop.f32.mrb[0].mxu0
  %v996 = vadd.f32 %v164, %v995
  %v997 = vpop.f32.mrb[0].mxu0
  %998 = vmatprep.mubr.bf16.mxu0 %v539
  %999 = vmatmul.mubr.bf16.gmra.mrb[0].mxu0 %v538
  %v1000 = vpop.f32.mrb[0].mxu0
  %v1001 = vadd.f32 %v164, %v1000
  %v1002 = vpop.f32.mrb[0].mxu0
  %v1003 = vpop.f32.mrb[0].mxu0
  %v1004 = vadd.f32 %v164, %v1003
  %v1005 = vpop.f32.mrb[0].mxu0
  %1006 = vmatprep.mubr.bf16.mxu0 %v541
  %1007 = vmatmul.mubr.bf16.gmra.mrb[0].mxu0 %v540
  %v1008 = vpop.f32.mrb[0].mxu0
  %v1009 = vadd.f32 %v164, %v1008
  %v1010 = vpop.f32.mrb[0].mxu0
  %v1011 = vpop.f32.mrb[0].mxu0
  %v1012 = vadd.f32 %v164, %v1011
  %v1013 = vpop.f32.mrb[0].mxu0
  %1014 = vmatprep.mubr.bf16.mxu0 %v543
  %1015 = vmatmul.mubr.bf16.gmra.mrb[0].mxu0 %v542
  %v1016 = vpop.f32.mrb[0].mxu0
  %v1017 = vadd.f32 %v164, %v1016
  %v1018 = vpop.f32.mrb[0].mxu0
  %v1019 = vpop.f32.mrb[0].mxu0
  %v1020 = vadd.f32 %v164, %v1019
  %v1021 = vpop.f32.mrb[0].mxu0
  %1022 = vmatprep.mubr.bf16.mxu0 %v545
  %1023 = vmatmul.mubr.bf16.gmra.mrb[0].mxu0 %v544
  %v1024 = vpop.f32.mrb[0].mxu0
  %v1025 = vadd.f32 %v164, %v1024
  %v1026 = vpop.f32.mrb[0].mxu0
  %v1027 = vpop.f32.mrb[0].mxu0
  %v1028 = vadd.f32 %v164, %v1027
  %v1029 = vpop.f32.mrb[0].mxu0
  %1030 = vmatprep.mubr.bf16.mxu0 %v547
  %1031 = vmatmul.mubr.bf16.gmra.mrb[0].mxu0 %v546
  %v1032 = vpop.f32.mrb[0].mxu0
  %v1033 = vadd.f32 %v164, %v1032
  %v1034 = vpop.f32.mrb[0].mxu0
  %v1035 = vpop.f32.mrb[0].mxu0
  %v1036 = vadd.f32 %v164, %v1035
  %v1037 = vpop.f32.mrb[0].mxu0
  %1038 = vmatprep.mubr.bf16.mxu0 %v549
  %1039 = vmatmul.mubr.bf16.gmra.mrb[0].mxu0 %v548
  %v1040 = vpop.f32.mrb[0].mxu0
  %v1041 = vadd.f32 %v164, %v1040
  %v1042 = vpop.f32.mrb[0].mxu0
  %v1043 = vpop.f32.mrb[0].mxu0
  %v1044 = vadd.f32 %v164, %v1043
  %v1045 = vpop.f32.mrb[0].mxu0
  %1046 = vmatprep.mubr.bf16.mxu0 %v551
  %1047 = vmatmul.mubr.bf16.gmra.mrb[0].mxu0 %v550
  %v1048 = vpop.f32.mrb[0].mxu0
  %v1049 = vadd.f32 %v164, %v1048
  %v1050 = vpop.f32.mrb[0].mxu0
  %v1051 = vpop.f32.mrb[0].mxu0
  %v1052 = vadd.f32 %v164, %v1051
  %v1053 = vpop.f32.mrb[0].mxu0
  %1054 = vmatprep.mubr.bf16.mxu0 %v553
  %1055 = vmatmul.mubr.bf16.gmra.mrb[0].mxu0 %v552
  %v1056 = vpop.f32.mrb[0].mxu0
  %v1057 = vadd.f32 %v164, %v1056
  %v1058 = vpop.f32.mrb[0].mxu0
  %v1059 = vpop.f32.mrb[0].mxu0
  %v1060 = vadd.f32 %v164, %v1059
  %v1061 = vpop.f32.mrb[0].mxu0
  %1062 = vmatprep.mubr.bf16.mxu0 %v555
  %1063 = vmatmul.mubr.bf16.gmra.mrb[0].mxu0 %v554
  %v1064 = vpop.f32.mrb[0].mxu0
  %v1065 = vadd.f32 %v164, %v1064
  %v1066 = vpop.f32.mrb[0].mxu0
  %v1067 = vpop.f32.mrb[0].mxu0
  %v1068 = vadd.f32 %v164, %v1067
  %v1069 = vpop.f32.mrb[0].mxu0
  %1070 = vmatprep.mubr.bf16.mxu0 %v557
  %1071 = vmatmul.mubr.bf16.gmra.mrb[0].mxu0 %v556
  %v1072 = vpop.f32.mrb[0].mxu0
  %v1073 = vadd.f32 %v164, %v1072
  %v1074 = vpop.f32.mrb[0].mxu0
  %v1075 = vpop.f32.mrb[0].mxu0
  %v1076 = vadd.f32 %v164, %v1075
  %v1077 = vpop.f32.mrb[0].mxu0
  %1078 = vmatprep.mubr.bf16.mxu0 %v559
  %1079 = vmatmul.mubr.bf16.gmra.mrb[0].mxu0 %v558
  %v1080 = vpop.f32.mrb[0].mxu0
  %v1081 = vadd.f32 %v164, %v1080
  %v1082 = vpop.f32.mrb[0].mxu0
  %v1083 = vpop.f32.mrb[0].mxu0
  %v1084 = vadd.f32 %v164, %v1083
  %v1085 = vpop.f32.mrb[0].mxu0
  %1086 = vmatprep.mubr.bf16.mxu0 %v561
  %1087 = vmatmul.mubr.bf16.gmra.mrb[0].mxu0 %v560
  %v1088 = vpop.f32.mrb[0].mxu0
  %v1089 = vadd.f32 %v164, %v1088
  %v1090 = vpop.f32.mrb[0].mxu0
  %v1091 = vpop.f32.mrb[0].mxu0
  %v1092 = vadd.f32 %v164, %v1091
  %v1093 = vpop.f32.mrb[0].mxu0
  %1094 = vmatprep.mubr.bf16.mxu0 %v563
  %1095 = vmatmul.mubr.bf16.gmra.mrb[0].mxu0 %v562
  %v1096 = vpop.f32.mrb[0].mxu0
  %v1097 = vadd.f32 %v164, %v1096
  %v1098 = vpop.f32.mrb[0].mxu0
  %v1099 = vpop.f32.mrb[0].mxu0
  %v1100 = vadd.f32 %v164, %v1099
  %v1101 = vpop.f32.mrb[0].mxu0
  %1102 = vmatprep.mubr.bf16.mxu0 %v565
  %1103 = vmatmul.mubr.bf16.gmra.mrb[0].mxu0 %v564
  %v1104 = vpop.f32.mrb[0].mxu0
  %v1105 = vadd.f32 %v164, %v1104
  %v1106 = vpop.f32.mrb[0].mxu0
  %v1107 = vpop.f32.mrb[0].mxu0
  %v1108 = vadd.f32 %v164, %v1107
  %v1109 = vpop.f32.mrb[0].mxu0
  %1110 = vmatprep.mubr.bf16.mxu0 %v567
  %1111 = vmatmul.mubr.bf16.gmra.mrb[0].mxu0 %v566
  %v1112 = vpop.f32.mrb[0].mxu0
  %v1113 = vadd.f32 %v164, %v1112
  %v1114 = vpop.f32.mrb[0].mxu0
  %v1115 = vpop.f32.mrb[0].mxu0
  %v1116 = vadd.f32 %v164, %v1115
  %v1117 = vpop.f32.mrb[0].mxu0
  %1118 = vmatprep.mubr.bf16.mxu0 %v569
  %1119 = vmatmul.mubr.bf16.gmra.mrb[0].mxu0 %v568
  %v1120 = vpop.f32.mrb[0].mxu0
  %v1121 = vadd.f32 %v164, %v1120
  %v1122 = vpop.f32.mrb[0].mxu0
  %v1123 = vpop.f32.mrb[0].mxu0
  %v1124 = vadd.f32 %v164, %v1123
  %v1125 = vpop.f32.mrb[0].mxu0
  %1126 = vmatprep.mubr.bf16.mxu0 %v571
  %1127 = vmatmul.mubr.bf16.gmra.mrb[0].mxu0 %v570
  %v1128 = vpop.f32.mrb[0].mxu0
  %v1129 = vadd.f32 %v164, %v1128
  %v1130 = vpop.f32.mrb[0].mxu0
  %v1131 = vpop.f32.mrb[0].mxu0
  %v1132 = vadd.f32 %v164, %v1131
  %v1133 = vpop.f32.mrb[0].mxu0
  %1134 = vmatprep.mubr.bf16.mxu0 %v573
  %1135 = vmatmul.mubr.bf16.gmra.mrb[0].mxu0 %v572
  %v1136 = vpop.f32.mrb[0].mxu0
  %v1137 = vadd.f32 %v164, %v1136
  %v1138 = vpop.f32.mrb[0].mxu0
  %v1139 = vpop.f32.mrb[0].mxu0
  %v1140 = vadd.f32 %v164, %v1139
  %v1141 = vpop.f32.mrb[0].mxu0
  %1142 = vmatprep.mubr.bf16.mxu0 %v575
  %1143 = vmatmul.mubr.bf16.gmra.mrb[0].mxu0 %v574
  %v1144 = vpop.f32.mrb[0].mxu0
  %v1145 = vadd.f32 %v164, %v1144
  %v1146 = vpop.f32.mrb[0].mxu0
  %v1147 = vpop.f32.mrb[0].mxu0
  %v1148 = vadd.f32 %v164, %v1147
  %v1149 = vpop.f32.mrb[0].mxu0
  %1150 = vmatprep.mubr.bf16.mxu0 %v577
  %1151 = vmatmul.mubr.bf16.gmra.mrb[0].mxu0 %v576
  %v1152 = vpop.f32.mrb[0].mxu0
  %v1153 = vadd.f32 %v164, %v1152
  %v1154 = vpop.f32.mrb[0].mxu0
  %v1155 = vpop.f32.mrb[0].mxu0
  %v1156 = vadd.f32 %v164, %v1155
  %v1157 = vpop.f32.mrb[0].mxu0
  %1158 = vmatprep.mubr.bf16.mxu0 %v579
  %1159 = vmatmul.mubr.bf16.gmra.mrb[0].mxu0 %v578
  %v1160 = vpop.f32.mrb[0].mxu0
  %v1161 = vadd.f32 %v164, %v1160
  %v1162 = vpop.f32.mrb[0].mxu0
  %v1163 = vpop.f32.mrb[0].mxu0
  %v1164 = vadd.f32 %v164, %v1163
  %v1165 = vpop.f32.mrb[0].mxu0
  %1166 = vmatprep.mubr.bf16.mxu0 %v581
  %1167 = vmatmul.mubr.bf16.gmra.mrb[0].mxu0 %v580
  %v1168 = vpop.f32.mrb[0].mxu0
  %v1169 = vadd.f32 %v164, %v1168
  %v1170 = vpop.f32.mrb[0].mxu0
  %v1171 = vpop.f32.mrb[0].mxu0
  %v1172 = vadd.f32 %v164, %v1171
  %v1173 = vpop.f32.mrb[0].mxu0
  %1174 = vmatprep.mubr.bf16.mxu0 %v583
  %1175 = vmatmul.mubr.bf16.gmra.mrb[0].mxu0 %v582
  %v1176 = vpop.f32.mrb[0].mxu0
  %v1177 = vadd.f32 %v164, %v1176
  %v1178 = vpop.f32.mrb[0].mxu0
  %v1179 = vpop.f32.mrb[0].mxu0
  %v1180 = vadd.f32 %v164, %v1179
  %v1181 = vpop.f32.mrb[0].mxu0
  %1182 = vmatprep.mubr.bf16.mxu0 %v585
  %1183 = vmatmul.mubr.bf16.gmra.mrb[0].mxu0 %v584
  %v1184 = vpop.f32.mrb[0].mxu0
  %v1185 = vadd.f32 %v164, %v1184
  %v1186 = vpop.f32.mrb[0].mxu0
  %v1187 = vpop.f32.mrb[0].mxu0
  %v1188 = vadd.f32 %v164, %v1187
  %v1189 = vpop.f32.mrb[0].mxu0
  %1190 = vmatprep.mubr.bf16.mxu0 %v587
  %1191 = vmatmul.mubr.bf16.gmra.mrb[0].mxu0 %v586
  %v1192 = vpop.f32.mrb[0].mxu0
  %v1193 = vadd.f32 %v164, %v1192
  %v1194 = vpop.f32.mrb[0].mxu0
  %v1195 = vpop.f32.mrb[0].mxu0
  %v1196 = vadd.f32 %v164, %v1195
  %v1197 = vpop.f32.mrb[0].mxu0
  %1198 = vmatprep.mubr.bf16.mxu0 %v589
  %1199 = vmatmul.mubr.bf16.gmra.mrb[0].mxu0 %v588
  %v1200 = vpop.f32.mrb[0].mxu0
  %v1201 = vadd.f32 %v164, %v1200
  %v1202 = vpop.f32.mrb[0].mxu0
  %v1203 = vpop.f32.mrb[0].mxu0
  %v1204 = vadd.f32 %v164, %v1203
  %v1205 = vpop.f32.mrb[0].mxu0
  %1206 = vmatprep.mubr.bf16.mxu0 %v591
  %1207 = vmatmul.mubr.bf16.gmra.mrb[0].mxu0 %v590
  %v1208 = vpop.f32.mrb[0].mxu0
  %v1209 = vadd.f32 %v164, %v1208
  %v1210 = vpop.f32.mrb[0].mxu0
  %v1211 = vpop.f32.mrb[0].mxu0
  %v1212 = vadd.f32 %v164, %v1211
  %v1213 = vpop.f32.mrb[0].mxu0
  %1214 = vmatprep.mubr.bf16.mxu0 %v593
  %1215 = vmatmul.mubr.bf16.gmra.mrb[0].mxu0 %v592
  %v1216 = vpop.f32.mrb[0].mxu0
  %v1217 = vadd.f32 %v164, %v1216
  %v1218 = vpop.f32.mrb[0].mxu0
  %v1219 = vpop.f32.mrb[0].mxu0
  %v1220 = vadd.f32 %v164, %v1219
  %v1221 = vpop.f32.mrb[0].mxu0
  %1222 = vmatprep.mubr.bf16.mxu0 %v595
  %1223 = vmatmul.mubr.bf16.gmra.mrb[0].mxu0 %v594
  %v1224 = vpop.f32.mrb[0].mxu0
  %v1225 = vadd.f32 %v164, %v1224
  %v1226 = vpop.f32.mrb[0].mxu0
  %v1227 = vpop.f32.mrb[0].mxu0
  %v1228 = vadd.f32 %v164, %v1227
  %v1229 = vpop.f32.mrb[0].mxu0
  %1230 = vmatprep.mubr.bf16.mxu0 %v597
  %1231 = vmatmul.mubr.bf16.gmra.mrb[0].mxu0 %v596
  %v1232 = vpop.f32.mrb[0].mxu0
  %v1233 = vadd.f32 %v164, %v1232
  %v1234 = vpop.f32.mrb[0].mxu0
  %v1235 = vpop.f32.mrb[0].mxu0
  %v1236 = vadd.f32 %v164, %v1235
  %v1237 = vpop.f32.mrb[0].mxu0
  %1238 = vmatprep.mubr.bf16.mxu0 %v599
  %1239 = vmatmul.mubr.bf16.gmra.mrb[0].mxu0 %v598
  %v1240 = vpop.f32.mrb[0].mxu0
  %v1241 = vadd.f32 %v164, %v1240
  %v1242 = vpop.f32.mrb[0].mxu0
  %v1243 = vpop.f32.mrb[0].mxu0
  %v1244 = vadd.f32 %v164, %v1243
  %v1245 = vpop.f32.mrb[0].mxu0
  %1246 = vmatprep.mubr.bf16.mxu0 %v601
  %1247 = vmatmul.mubr.bf16.gmra.mrb[0].mxu0 %v600
  %v1248 = vpop.f32.mrb[0].mxu0
  %v1249 = vadd.f32 %v164, %v1248
  %v1250 = vpop.f32.mrb[0].mxu0
  %v1251 = vpop.f32.mrb[0].mxu0
  %v1252 = vadd.f32 %v164, %v1251
  %v1253 = vpop.f32.mrb[0].mxu0
  %1254 = vmatprep.mubr.bf16.mxu0 %v603
  %1255 = vmatmul.mubr.bf16.gmra.mrb[0].mxu0 %v602
  %v1256 = vpop.f32.mrb[0].mxu0
  %v1257 = vadd.f32 %v164, %v1256
  %v1258 = vpop.f32.mrb[0].mxu0
  %v1259 = vpop.f32.mrb[0].mxu0
  %v1260 = vadd.f32 %v164, %v1259
  %v1261 = vpop.f32.mrb[0].mxu0
  %1262 = vmatprep.mubr.bf16.mxu0 %v605
  %1263 = vmatmul.mubr.bf16.gmra.mrb[0].mxu0 %v604
  %v1264 = vpop.f32.mrb[0].mxu0
  %v1265 = vadd.f32 %v164, %v1264
  %v1266 = vpop.f32.mrb[0].mxu0
  %v1267 = vpop.f32.mrb[0].mxu0
  %v1268 = vadd.f32 %v164, %v1267
  %v1269 = vpop.f32.mrb[0].mxu0
  %1270 = vmatprep.mubr.bf16.mxu0 %v607
  %1271 = vmatmul.mubr.bf16.gmra.mrb[0].mxu0 %v606
  %v1272 = vpop.f32.mrb[0].mxu0
  %v1273 = vadd.f32 %v164, %v1272
  %v1274 = vpop.f32.mrb[0].mxu0
  %v1275 = vpop.f32.mrb[0].mxu0
  %v1276 = vadd.f32 %v164, %v1275
  %v1277 = vpop.f32.mrb[0].mxu0
  %1278 = vmatprep.mubr.bf16.mxu0 %v609
  %1279 = vmatmul.mubr.bf16.gmra.mrb[0].mxu0 %v608
  %v1280 = vpop.f32.mrb[0].mxu0
  %v1281 = vadd.f32 %v164, %v1280
  %v1282 = vpop.f32.mrb[0].mxu0
  %v1283 = vpop.f32.mrb[0].mxu0
  %v1284 = vadd.f32 %v164, %v1283
  %v1285 = vpop.f32.mrb[0].mxu0
  %1286 = vmatprep.mubr.bf16.mxu0 %v611
  %1287 = vmatmul.mubr.bf16.gmra.mrb[0].mxu0 %v610
  %v1288 = vpop.f32.mrb[0].mxu0
  %v1289 = vadd.f32 %v164, %v1288
  %v1290 = vpop.f32.mrb[0].mxu0
  %v1291 = vpop.f32.mrb[0].mxu0
  %v1292 = vadd.f32 %v164, %v1291
  %v1293 = vpop.f32.mrb[0].mxu0
  %1294 = vmatprep.mubr.bf16.mxu0 %v613
  %1295 = vmatmul.mubr.bf16.gmra.mrb[0].mxu0 %v612
  %v1296 = vpop.f32.mrb[0].mxu0
  %v1297 = vadd.f32 %v164, %v1296
  %v1298 = vpop.f32.mrb[0].mxu0
  %v1299 = vpop.f32.mrb[0].mxu0
  %v1300 = vadd.f32 %v164, %v1299
  %v1301 = vpop.f32.mrb[0].mxu0
  %1302 = vdwg.mxu0
  %v1303 = vmax.f32 %v857, 0.0
  %v1304 = vmax.f32 %v860, 0.0
  %v1305 = vmax.f32 %v865, 0.0
  %v1306 = vmax.f32 %v868, 0.0
  %v1307 = vmax.f32 %v873, 0.0
  %v1308 = vmax.f32 %v876, 0.0
  %v1309 = vmax.f32 %v881, 0.0
  %v1310 = vmax.f32 %v884, 0.0
  %v1311 = vmax.f32 %v889, 0.0
  %v1312 = vmax.f32 %v892, 0.0
  %v1313 = vmax.f32 %v897, 0.0
  %v1314 = vmax.f32 %v900, 0.0
  %v1315 = vmax.f32 %v905, 0.0
  %v1316 = vmax.f32 %v908, 0.0
  %v1317 = vmax.f32 %v913, 0.0
  %v1318 = vmax.f32 %v916, 0.0
  %v1319 = vmax.f32 %v921, 0.0
  %v1320 = vmax.f32 %v924, 0.0
  %v1321 = vmax.f32 %v929, 0.0
  %v1322 = vmax.f32 %v932, 0.0
  %v1323 = vmax.f32 %v937, 0.0
  %v1324 = vmax.f32 %v940, 0.0
  %v1325 = vmax.f32 %v945, 0.0
  %v1326 = vmax.f32 %v948, 0.0
  %v1327 = vmax.f32 %v953, 0.0
  %v1328 = vmax.f32 %v956, 0.0
  %v1329 = vmax.f32 %v961, 0.0
  %v1330 = vmax.f32 %v964, 0.0
  %v1331 = vmax.f32 %v969, 0.0
  %v1332 = vmax.f32 %v972, 0.0
  %v1333 = vmax.f32 %v977, 0.0
  %v1334 = vmax.f32 %v980, 0.0
  %v1335 = vmax.f32 %v985, 0.0
  %v1336 = vmax.f32 %v988, 0.0
  %v1337 = vmax.f32 %v993, 0.0
  %v1338 = vmax.f32 %v996, 0.0
  %v1339 = vmax.f32 %v1001, 0.0
  %v1340 = vmax.f32 %v1004, 0.0
  %v1341 = vmax.f32 %v1009, 0.0
  %v1342 = vmax.f32 %v1012, 0.0
  %v1343 = vmax.f32 %v1017, 0.0
  %v1344 = vmax.f32 %v1020, 0.0
  %v1345 = vmax.f32 %v1025, 0.0
  %v1346 = vmax.f32 %v1028, 0.0
  %v1347 = vmax.f32 %v1033, 0.0
  %v1348 = vmax.f32 %v1036, 0.0
  %v1349 = vmax.f32 %v1041, 0.0
  %v1350 = vmax.f32 %v1044, 0.0
  %v1351 = vmax.f32 %v1049, 0.0
  %v1352 = vmax.f32 %v1052, 0.0
  %v1353 = vmax.f32 %v1057, 0.0
  %v1354 = vmax.f32 %v1060, 0.0
  %v1355 = vmax.f32 %v1065, 0.0
  %v1356 = vmax.f32 %v1068, 0.0
  %v1357 = vmax.f32 %v1073, 0.0
  %v1358 = vmax.f32 %v1076, 0.0
  %v1359 = vmax.f32 %v1081, 0.0
  %v1360 = vmax.f32 %v1084, 0.0
  %v1361 = vmax.f32 %v1089, 0.0
  %v1362 = vmax.f32 %v1092, 0.0
  %v1363 = vmax.f32 %v1097, 0.0
  %v1364 = vmax.f32 %v1100, 0.0
  %v1365 = vmax.f32 %v1105, 0.0
  %v1366 = vmax.f32 %v1108, 0.0
  %v1367 = vmax.f32 %v1113, 0.0
  %v1368 = vmax.f32 %v1116, 0.0
  %v1369 = vmax.f32 %v1121, 0.0
  %v1370 = vmax.f32 %v1124, 0.0
  %v1371 = vmax.f32 %v1129, 0.0
  %v1372 = vmax.f32 %v1132, 0.0
  %v1373 = vmax.f32 %v1137, 0.0
  %v1374 = vmax.f32 %v1140, 0.0
  %v1375 = vmax.f32 %v1145, 0.0
  %v1376 = vmax.f32 %v1148, 0.0
  %v1377 = vmax.f32 %v1153, 0.0
  %v1378 = vmax.f32 %v1156, 0.0
  %v1379 = vmax.f32 %v1161, 0.0
  %v1380 = vmax.f32 %v1164, 0.0
  %v1381 = vmax.f32 %v1169, 0.0
  %v1382 = vmax.f32 %v1172, 0.0
  %v1383 = vmax.f32 %v1177, 0.0
  %v1384 = vmax.f32 %v1180, 0.0
  %v1385 = vmax.f32 %v1185, 0.0
  %v1386 = vmax.f32 %v1188, 0.0
  %v1387 = vmax.f32 %v1193, 0.0
  %v1388 = vmax.f32 %v1196, 0.0
  %v1389 = vmax.f32 %v1201, 0.0
  %v1390 = vmax.f32 %v1204, 0.0
  %v1391 = vmax.f32 %v1209, 0.0
  %v1392 = vmax.f32 %v1212, 0.0
  %v1393 = vmax.f32 %v1217, 0.0
  %v1394 = vmax.f32 %v1220, 0.0
  %v1395 = vmax.f32 %v1225, 0.0
  %v1396 = vmax.f32 %v1228, 0.0
  %v1397 = vmax.f32 %v1233, 0.0
  %v1398 = vmax.f32 %v1236, 0.0
  %v1399 = vmax.f32 %v1241, 0.0
  %v1400 = vmax.f32 %v1244, 0.0
  %v1401 = vmax.f32 %v1249, 0.0
  %v1402 = vmax.f32 %v1252, 0.0
  %v1403 = vmax.f32 %v1257, 0.0
  %v1404 = vmax.f32 %v1260, 0.0
  %v1405 = vmax.f32 %v1265, 0.0
  %v1406 = vmax.f32 %v1268, 0.0
  %v1407 = vmax.f32 %v1273, 0.0
  %v1408 = vmax.f32 %v1276, 0.0
  %v1409 = vmax.f32 %v1281, 0.0
  %v1410 = vmax.f32 %v1284, 0.0
  %v1411 = vmax.f32 %v1289, 0.0
  %v1412 = vmax.f32 %v1292, 0.0
  %v1413 = vmax.f32 %v1297, 0.0
  %v1414 = vmax.f32 %v1300, 0.0
  %v1415 = vpack.c.bf16 %v1304, %v1303
  %v1416 = vpack.c.bf16 %v1306, %v1305
  %v1417 = vpack.c.bf16 %v1308, %v1307
  %v1418 = vpack.c.bf16 %v1310, %v1309
  %v1419 = vpack.c.bf16 %v1312, %v1311
  %v1420 = vpack.c.bf16 %v1314, %v1313
  %v1421 = vpack.c.bf16 %v1316, %v1315
  %v1422 = vpack.c.bf16 %v1318, %v1317
  %v1423 = vpack.c.bf16 %v1320, %v1319
  %v1424 = vpack.c.bf16 %v1322, %v1321
  %v1425 = vpack.c.bf16 %v1324, %v1323
  %v1426 = vpack.c.bf16 %v1326, %v1325
  %v1427 = vpack.c.bf16 %v1328, %v1327
  %v1428 = vpack.c.bf16 %v1330, %v1329
  %v1429 = vpack.c.bf16 %v1332, %v1331
  %v1430 = vpack.c.bf16 %v1334, %v1333
  %v1431 = vpack.c.bf16 %v1336, %v1335
  %v1432 = vpack.c.bf16 %v1338, %v1337
  %v1433 = vpack.c.bf16 %v1340, %v1339
  %v1434 = vpack.c.bf16 %v1342, %v1341
  %v1435 = vpack.c.bf16 %v1344, %v1343
  %v1436 = vpack.c.bf16 %v1346, %v1345
  %v1437 = vpack.c.bf16 %v1348, %v1347
  %v1438 = vpack.c.bf16 %v1350, %v1349
  %v1439 = vpack.c.bf16 %v1352, %v1351
  %v1440 = vpack.c.bf16 %v1354, %v1353
  %v1441 = vpack.c.bf16 %v1356, %v1355
  %v1442 = vpack.c.bf16 %v1358, %v1357
  %v1443 = vpack.c.bf16 %v1360, %v1359
  %v1444 = vpack.c.bf16 %v1362, %v1361
  %v1445 = vpack.c.bf16 %v1364, %v1363
  %v1446 = vpack.c.bf16 %v1366, %v1365
  %v1447 = vpack.c.bf16 %v1368, %v1367
  %v1448 = vpack.c.bf16 %v1370, %v1369
  %v1449 = vpack.c.bf16 %v1372, %v1371
  %v1450 = vpack.c.bf16 %v1374, %v1373
  %v1451 = vpack.c.bf16 %v1376, %v1375
  %v1452 = vpack.c.bf16 %v1378, %v1377
  %v1453 = vpack.c.bf16 %v1380, %v1379
  %v1454 = vpack.c.bf16 %v1382, %v1381
  %v1455 = vpack.c.bf16 %v1384, %v1383
  %v1456 = vpack.c.bf16 %v1386, %v1385
  %v1457 = vpack.c.bf16 %v1388, %v1387
  %v1458 = vpack.c.bf16 %v1390, %v1389
  %v1459 = vpack.c.bf16 %v1392, %v1391
  %v1460 = vpack.c.bf16 %v1394, %v1393
  %v1461 = vpack.c.bf16 %v1396, %v1395
  %v1462 = vpack.c.bf16 %v1398, %v1397
  %v1463 = vpack.c.bf16 %v1400, %v1399
  %v1464 = vpack.c.bf16 %v1402, %v1401
  %v1465 = vpack.c.bf16 %v1404, %v1403
  %v1466 = vpack.c.bf16 %v1406, %v1405
  %v1467 = vpack.c.bf16 %v1408, %v1407
  %v1468 = vpack.c.bf16 %v1410, %v1409
  %v1469 = vpack.c.bf16 %v1412, %v1411
  %v1470 = vpack.c.bf16 %v1414, %v1413
  %v1527 = vunpack.c.l.b16 %v1415
  %v1528 = vunpack.c.h.b16 %v1415
  %v1529 = vunpack.c.l.b16 %v1416
  %v1530 = vunpack.c.h.b16 %v1416
  %v1531 = vunpack.c.l.b16 %v1417
  %v1532 = vunpack.c.h.b16 %v1417
  %v1533 = vunpack.c.l.b16 %v1418
  %v1534 = vunpack.c.h.b16 %v1418
  %v1535 = vunpack.c.l.b16 %v1419
  %v1536 = vunpack.c.h.b16 %v1419
  %v1537 = vunpack.c.l.b16 %v1420
  %v1538 = vunpack.c.h.b16 %v1420
  %v1539 = vunpack.c.l.b16 %v1421
  %v1540 = vunpack.c.h.b16 %v1421
  %v1541 = vunpack.c.l.b16 %v1422
  %v1542 = vunpack.c.h.b16 %v1422
  %v1543 = vunpack.c.l.b16 %v1423
  %v1544 = vunpack.c.h.b16 %v1423
  %v1545 = vunpack.c.l.b16 %v1424
  %v1546 = vunpack.c.h.b16 %v1424
  %v1547 = vunpack.c.l.b16 %v1425
  %v1548 = vunpack.c.h.b16 %v1425
  %v1549 = vunpack.c.l.b16 %v1426
  %v1550 = vunpack.c.h.b16 %v1426
  %v1551 = vunpack.c.l.b16 %v1427
  %v1552 = vunpack.c.h.b16 %v1427
  %v1553 = vunpack.c.l.b16 %v1428
  %v1554 = vunpack.c.h.b16 %v1428
  %v1555 = vunpack.c.l.b16 %v1429
  %v1556 = vunpack.c.h.b16 %v1429
  %v1557 = vunpack.c.l.b16 %v1430
  %v1558 = vunpack.c.h.b16 %v1430
  %v1559 = vunpack.c.l.b16 %v1431
  %v1560 = vunpack.c.h.b16 %v1431
  %v1561 = vunpack.c.l.b16 %v1432
  %v1562 = vunpack.c.h.b16 %v1432
  %v1563 = vunpack.c.l.b16 %v1433
  %v1564 = vunpack.c.h.b16 %v1433
  %v1565 = vunpack.c.l.b16 %v1434
  %v1566 = vunpack.c.h.b16 %v1434
  %v1567 = vunpack.c.l.b16 %v1435
  %v1568 = vunpack.c.h.b16 %v1435
  %v1569 = vunpack.c.l.b16 %v1436
  %v1570 = vunpack.c.h.b16 %v1436
  %v1571 = vunpack.c.l.b16 %v1437
  %v1572 = vunpack.c.h.b16 %v1437
  %v1573 = vunpack.c.l.b16 %v1438
  %v1574 = vunpack.c.h.b16 %v1438
  %v1575 = vunpack.c.l.b16 %v1439
  %v1576 = vunpack.c.h.b16 %v1439
  %v1577 = vunpack.c.l.b16 %v1440
  %v1578 = vunpack.c.h.b16 %v1440
  %v1579 = vunpack.c.l.b16 %v1441
  %v1580 = vunpack.c.h.b16 %v1441
  %v1581 = vunpack.c.l.b16 %v1442
  %v1582 = vunpack.c.h.b16 %v1442
  %v1583 = vunpack.c.l.b16 %v1443
  %v1584 = vunpack.c.h.b16 %v1443
  %v1585 = vunpack.c.l.b16 %v1444
  %v1586 = vunpack.c.h.b16 %v1444
  %v1587 = vunpack.c.l.b16 %v1445
  %v1588 = vunpack.c.h.b16 %v1445
  %v1589 = vunpack.c.l.b16 %v1446
  %v1590 = vunpack.c.h.b16 %v1446
  %v1591 = vunpack.c.l.b16 %v1447
  %v1592 = vunpack.c.h.b16 %v1447
  %v1593 = vunpack.c.l.b16 %v1448
  %v1594 = vunpack.c.h.b16 %v1448
  %v1595 = vunpack.c.l.b16 %v1449
  %v1596 = vunpack.c.h.b16 %v1449
  %v1597 = vunpack.c.l.b16 %v1450
  %v1598 = vunpack.c.h.b16 %v1450
  %v1599 = vunpack.c.l.b16 %v1451
  %v1600 = vunpack.c.h.b16 %v1451
  %v1601 = vunpack.c.l.b16 %v1452
  %v1602 = vunpack.c.h.b16 %v1452
  %v1603 = vunpack.c.l.b16 %v1453
  %v1604 = vunpack.c.h.b16 %v1453
  %v1605 = vunpack.c.l.b16 %v1454
  %v1606 = vunpack.c.h.b16 %v1454
  %v1607 = vunpack.c.l.b16 %v1455
  %v1608 = vunpack.c.h.b16 %v1455
  %v1609 = vunpack.c.l.b16 %v1456
  %v1610 = vunpack.c.h.b16 %v1456
  %v1611 = vunpack.c.l.b16 %v1457
  %v1612 = vunpack.c.h.b16 %v1457
  %v1613 = vunpack.c.l.b16 %v1458
  %v1614 = vunpack.c.h.b16 %v1458
  %v1615 = vunpack.c.l.b16 %v1459
  %v1616 = vunpack.c.h.b16 %v1459
  %v1617 = vunpack.c.l.b16 %v1460
  %v1618 = vunpack.c.h.b16 %v1460
  %v1619 = vunpack.c.l.b16 %v1461
  %v1620 = vunpack.c.h.b16 %v1461
  %v1621 = vunpack.c.l.b16 %v1462
  %v1622 = vunpack.c.h.b16 %v1462
  %v1623 = vunpack.c.l.b16 %v1463
  %v1624 = vunpack.c.h.b16 %v1463
  %v1625 = vunpack.c.l.b16 %v1464
  %v1626 = vunpack.c.h.b16 %v1464
  %v1627 = vunpack.c.l.b16 %v1465
  %v1628 = vunpack.c.h.b16 %v1465
  %v1629 = vunpack.c.l.b16 %v1466
  %v1630 = vunpack.c.h.b16 %v1466
  %v1631 = vunpack.c.l.b16 %v1467
  %v1632 = vunpack.c.h.b16 %v1467
  %v1633 = vunpack.c.l.b16 %v1468
  %v1634 = vunpack.c.h.b16 %v1468
  %v1635 = vunpack.c.l.b16 %v1469
  %v1636 = vunpack.c.h.b16 %v1469
  %v1637 = vunpack.c.l.b16 %v1470
  %v1638 = vunpack.c.h.b16 %v1470
  %v1639 = vpack.c.b16 %v1527, %v1527
  %v1640 = vpack.c.b16 %v1528, %v1528
  %v1641 = vpack.c.b16 %v1529, %v1529
  %v1642 = vpack.c.b16 %v1530, %v1530
  %v1643 = vpack.c.b16 %v1531, %v1531
  %v1644 = vpack.c.b16 %v1532, %v1532
  %v1645 = vpack.c.b16 %v1533, %v1533
  %v1646 = vpack.c.b16 %v1534, %v1534
  %v1647 = vpack.c.b16 %v1535, %v1535
  %v1648 = vpack.c.b16 %v1536, %v1536
  %v1649 = vpack.c.b16 %v1537, %v1537
  %v1650 = vpack.c.b16 %v1538, %v1538
  %v1651 = vpack.c.b16 %v1539, %v1539
  %v1652 = vpack.c.b16 %v1540, %v1540
  %v1653 = vpack.c.b16 %v1541, %v1541
  %v1654 = vpack.c.b16 %v1542, %v1542
  %v1655 = vpack.c.b16 %v1543, %v1543
  %v1656 = vpack.c.b16 %v1544, %v1544
  %v1657 = vpack.c.b16 %v1545, %v1545
  %v1658 = vpack.c.b16 %v1546, %v1546
  %v1659 = vpack.c.b16 %v1547, %v1547
  %v1660 = vpack.c.b16 %v1548, %v1548
  %v1661 = vpack.c.b16 %v1549, %v1549
  %v1662 = vpack.c.b16 %v1550, %v1550
  %v1663 = vpack.c.b16 %v1551, %v1551
  %v1664 = vpack.c.b16 %v1552, %v1552
  %v1665 = vpack.c.b16 %v1553, %v1553
  %v1666 = vpack.c.b16 %v1554, %v1554
  %v1667 = vpack.c.b16 %v1555, %v1555
  %v1668 = vpack.c.b16 %v1556, %v1556
  %v1669 = vpack.c.b16 %v1557, %v1557
  %v1670 = vpack.c.b16 %v1558, %v1558
  %v1671 = vpack.c.b16 %v1559, %v1559
  %v1672 = vpack.c.b16 %v1560, %v1560
  %v1673 = vpack.c.b16 %v1561, %v1561
  %v1674 = vpack.c.b16 %v1562, %v1562
  %v1675 = vpack.c.b16 %v1563, %v1563
  %v1676 = vpack.c.b16 %v1564, %v1564
  %v1677 = vpack.c.b16 %v1565, %v1565
  %v1678 = vpack.c.b16 %v1566, %v1566
  %v1679 = vpack.c.b16 %v1567, %v1567
  %v1680 = vpack.c.b16 %v1568, %v1568
  %v1681 = vpack.c.b16 %v1569, %v1569
  %v1682 = vpack.c.b16 %v1570, %v1570
  %v1683 = vpack.c.b16 %v1571, %v1571
  %v1684 = vpack.c.b16 %v1572, %v1572
  %v1685 = vpack.c.b16 %v1573, %v1573
  %v1686 = vpack.c.b16 %v1574, %v1574
  %v1687 = vpack.c.b16 %v1575, %v1575
  %v1688 = vpack.c.b16 %v1576, %v1576
  %v1689 = vpack.c.b16 %v1577, %v1577
  %v1690 = vpack.c.b16 %v1578, %v1578
  %v1691 = vpack.c.b16 %v1579, %v1579
  %v1692 = vpack.c.b16 %v1580, %v1580
  %v1693 = vpack.c.b16 %v1581, %v1581
  %v1694 = vpack.c.b16 %v1582, %v1582
  %v1695 = vpack.c.b16 %v1583, %v1583
  %v1696 = vpack.c.b16 %v1584, %v1584
  %v1697 = vpack.c.b16 %v1585, %v1585
  %v1698 = vpack.c.b16 %v1586, %v1586
  %v1699 = vpack.c.b16 %v1587, %v1587
  %v1700 = vpack.c.b16 %v1588, %v1588
  %v1701 = vpack.c.b16 %v1589, %v1589
  %v1702 = vpack.c.b16 %v1590, %v1590
  %v1703 = vpack.c.b16 %v1591, %v1591
  %v1704 = vpack.c.b16 %v1592, %v1592
  %v1705 = vpack.c.b16 %v1593, %v1593
  %v1706 = vpack.c.b16 %v1594, %v1594
  %v1707 = vpack.c.b16 %v1595, %v1595
  %v1708 = vpack.c.b16 %v1596, %v1596
  %v1709 = vpack.c.b16 %v1597, %v1597
  %v1710 = vpack.c.b16 %v1598, %v1598
  %v1711 = vpack.c.b16 %v1599, %v1599
  %v1712 = vpack.c.b16 %v1600, %v1600
  %v1713 = vpack.c.b16 %v1601, %v1601
  %v1714 = vpack.c.b16 %v1602, %v1602
  %v1715 = vpack.c.b16 %v1603, %v1603
  %v1716 = vpack.c.b16 %v1604, %v1604
  %v1717 = vpack.c.b16 %v1605, %v1605
  %v1718 = vpack.c.b16 %v1606, %v1606
  %v1719 = vpack.c.b16 %v1607, %v1607
  %v1720 = vpack.c.b16 %v1608, %v1608
  %v1721 = vpack.c.b16 %v1609, %v1609
  %v1722 = vpack.c.b16 %v1610, %v1610
  %v1723 = vpack.c.b16 %v1611, %v1611
  %v1724 = vpack.c.b16 %v1612, %v1612
  %v1725 = vpack.c.b16 %v1613, %v1613
  %v1726 = vpack.c.b16 %v1614, %v1614
  %v1727 = vpack.c.b16 %v1615, %v1615
  %v1728 = vpack.c.b16 %v1616, %v1616
  %v1729 = vpack.c.b16 %v1617, %v1617
  %v1730 = vpack.c.b16 %v1618, %v1618
  %v1731 = vpack.c.b16 %v1619, %v1619
  %v1732 = vpack.c.b16 %v1620, %v1620
  %v1733 = vpack.c.b16 %v1621, %v1621
  %v1734 = vpack.c.b16 %v1622, %v1622
  %v1735 = vpack.c.b16 %v1623, %v1623
  %v1736 = vpack.c.b16 %v1624, %v1624
  %v1737 = vpack.c.b16 %v1625, %v1625
  %v1738 = vpack.c.b16 %v1626, %v1626
  %v1739 = vpack.c.b16 %v1627, %v1627
  %v1740 = vpack.c.b16 %v1628, %v1628
  %v1741 = vpack.c.b16 %v1629, %v1629
  %v1742 = vpack.c.b16 %v1630, %v1630
  %v1743 = vpack.c.b16 %v1631, %v1631
  %v1744 = vpack.c.b16 %v1632, %v1632
  %v1745 = vpack.c.b16 %v1633, %v1633
  %v1746 = vpack.c.b16 %v1634, %v1634
  %v1747 = vpack.c.b16 %v1635, %v1635
  %v1748 = vpack.c.b16 %v1636, %v1636
  %v1749 = vpack.c.b16 %v1637, %v1637
  %v1750 = vpack.c.b16 %v1638, %v1638
  %1863 = vst [vmem:[%s3] sm:$0xf] %v1639
  %1864 = vst [vmem:[%s3 + $0x4] sm:$0xf] %v1640
  %1865 = vst [vmem:[%s3 + $0x8] sm:$0xf] %v1641
  %1866 = vst [vmem:[%s3 + $0xc] sm:$0xf] %v1642
  %1867 = vst [vmem:[%s3 + $0x10] sm:$0xf] %v1643
  %1868 = vst [vmem:[%s3 + $0x14] sm:$0xf] %v1644
  %1869 = vst [vmem:[%s3 + $0x18] sm:$0xf] %v1645
  %1870 = vst [vmem:[%s3 + $0x1c] sm:$0xf] %v1646
  %1871 = vst [vmem:[%s3 + $0x20] sm:$0xf] %v1647
  %1872 = vst [vmem:[%s3 + $0x24] sm:$0xf] %v1648
  %1873 = vst [vmem:[%s3 + $0x28] sm:$0xf] %v1649
  %1874 = vst [vmem:[%s3 + $0x2c] sm:$0xf] %v1650
  %1875 = vst [vmem:[%s3 + $0x30] sm:$0xf] %v1651
  %1876 = vst [vmem:[%s3 + $0x34] sm:$0xf] %v1652
  %1877 = vst [vmem:[%s3 + $0x38] sm:$0xf] %v1653
  %1878 = vst [vmem:[%s3 + $0x3c] sm:$0xf] %v1654
  %1879 = vst [vmem:[%s3 + $0x40] sm:$0xf] %v1655
  %1880 = vst [vmem:[%s3 + $0x44] sm:$0xf] %v1656
  %1881 = vst [vmem:[%s3 + $0x48] sm:$0xf] %v1657
  %1882 = vst [vmem:[%s3 + $0x4c] sm:$0xf] %v1658
  %1883 = vst [vmem:[%s3 + $0x50] sm:$0xf] %v1659
  %1884 = vst [vmem:[%s3 + $0x54] sm:$0xf] %v1660
  %1885 = vst [vmem:[%s3 + $0x58] sm:$0xf] %v1661
  %1886 = vst [vmem:[%s3 + $0x5c] sm:$0xf] %v1662
  %1887 = vst [vmem:[%s3 + $0x60] sm:$0xf] %v1663
  %1888 = vst [vmem:[%s3 + $0x64] sm:$0xf] %v1664
  %1889 = vst [vmem:[%s3 + $0x68] sm:$0xf] %v1665
  %1890 = vst [vmem:[%s3 + $0x6c] sm:$0xf] %v1666
  %1891 = vst [vmem:[%s3 + $0x70] sm:$0xf] %v1667
  %1892 = vst [vmem:[%s3 + $0x74] sm:$0xf] %v1668
  %1893 = vst [vmem:[%s3 + $0x78] sm:$0xf] %v1669
  %1894 = vst [vmem:[%s3 + $0x7c] sm:$0xf] %v1670
  %1895 = vst [vmem:[%s3 + $0x80] sm:$0xf] %v1671
  %1896 = vst [vmem:[%s3 + $0x84] sm:$0xf] %v1672
  %1897 = vst [vmem:[%s3 + $0x88] sm:$0xf] %v1673
  %1898 = vst [vmem:[%s3 + $0x8c] sm:$0xf] %v1674
  %1899 = vst [vmem:[%s3 + $0x90] sm:$0xf] %v1675
  %1900 = vst [vmem:[%s3 + $0x94] sm:$0xf] %v1676
  %1901 = vst [vmem:[%s3 + $0x98] sm:$0xf] %v1677
  %1902 = vst [vmem:[%s3 + $0x9c] sm:$0xf] %v1678
  %1903 = vst [vmem:[%s3 + $0xa0] sm:$0xf] %v1679
  %1904 = vst [vmem:[%s3 + $0xa4] sm:$0xf] %v1680
  %1905 = vst [vmem:[%s3 + $0xa8] sm:$0xf] %v1681
  %1906 = vst [vmem:[%s3 + $0xac] sm:$0xf] %v1682
  %1907 = vst [vmem:[%s3 + $0xb0] sm:$0xf] %v1683
  %1908 = vst [vmem:[%s3 + $0xb4] sm:$0xf] %v1684
  %1909 = vst [vmem:[%s3 + $0xb8] sm:$0xf] %v1685
  %1910 = vst [vmem:[%s3 + $0xbc] sm:$0xf] %v1686
  %1911 = vst [vmem:[%s3 + $0xc0] sm:$0xf] %v1687
  %1912 = vst [vmem:[%s3 + $0xc4] sm:$0xf] %v1688
  %1913 = vst [vmem:[%s3 + $0xc8] sm:$0xf] %v1689
  %1914 = vst [vmem:[%s3 + $0xcc] sm:$0xf] %v1690
  %1915 = vst [vmem:[%s3 + $0xd0] sm:$0xf] %v1691
  %1916 = vst [vmem:[%s3 + $0xd4] sm:$0xf] %v1692
  %1917 = vst [vmem:[%s3 + $0xd8] sm:$0xf] %v1693
  %1918 = vst [vmem:[%s3 + $0xdc] sm:$0xf] %v1694
  %1919 = vst [vmem:[%s3 + $0xe0] sm:$0xf] %v1695
  %1920 = vst [vmem:[%s3 + $0xe4] sm:$0xf] %v1696
  %1921 = vst [vmem:[%s3 + $0xe8] sm:$0xf] %v1697
  %1922 = vst [vmem:[%s3 + $0xec] sm:$0xf] %v1698
  %1923 = vst [vmem:[%s3 + $0xf0] sm:$0xf] %v1699
  %1924 = vst [vmem:[%s3 + $0xf4] sm:$0xf] %v1700
  %1925 = vst [vmem:[%s3 + $0xf8] sm:$0xf] %v1701
  %1926 = vst [vmem:[%s3 + $0xfc] sm:$0xf] %v1702
  %1927 = vst [vmem:[%s3 + $0x100] sm:$0xf] %v1703
  %1928 = vst [vmem:[%s3 + $0x104] sm:$0xf] %v1704
  %1929 = vst [vmem:[%s3 + $0x108] sm:$0xf] %v1705
  %1930 = vst [vmem:[%s3 + $0x10c] sm:$0xf] %v1706
  %1931 = vst [vmem:[%s3 + $0x110] sm:$0xf] %v1707
  %1932 = vst [vmem:[%s3 + $0x114] sm:$0xf] %v1708
  %1933 = vst [vmem:[%s3 + $0x118] sm:$0xf] %v1709
  %1934 = vst [vmem:[%s3 + $0x11c] sm:$0xf] %v1710
  %1935 = vst [vmem:[%s3 + $0x120] sm:$0xf] %v1711
  %1936 = vst [vmem:[%s3 + $0x124] sm:$0xf] %v1712
  %1937 = vst [vmem:[%s3 + $0x128] sm:$0xf] %v1713
  %1938 = vst [vmem:[%s3 + $0x12c] sm:$0xf] %v1714
  %1939 = vst [vmem:[%s3 + $0x130] sm:$0xf] %v1715
  %1940 = vst [vmem:[%s3 + $0x134] sm:$0xf] %v1716
  %1941 = vst [vmem:[%s3 + $0x138] sm:$0xf] %v1717
  %1942 = vst [vmem:[%s3 + $0x13c] sm:$0xf] %v1718
  %1943 = vst [vmem:[%s3 + $0x140] sm:$0xf] %v1719
  %1944 = vst [vmem:[%s3 + $0x144] sm:$0xf] %v1720
  %1945 = vst [vmem:[%s3 + $0x148] sm:$0xf] %v1721
  %1946 = vst [vmem:[%s3 + $0x14c] sm:$0xf] %v1722
  %1947 = vst [vmem:[%s3 + $0x150] sm:$0xf] %v1723
  %1948 = vst [vmem:[%s3 + $0x154] sm:$0xf] %v1724
  %1949 = vst [vmem:[%s3 + $0x158] sm:$0xf] %v1725
  %1950 = vst [vmem:[%s3 + $0x15c] sm:$0xf] %v1726
  %1951 = vst [vmem:[%s3 + $0x160] sm:$0xf] %v1727
  %1952 = vst [vmem:[%s3 + $0x164] sm:$0xf] %v1728
  %1953 = vst [vmem:[%s3 + $0x168] sm:$0xf] %v1729
  %1954 = vst [vmem:[%s3 + $0x16c] sm:$0xf] %v1730
  %1955 = vst [vmem:[%s3 + $0x170] sm:$0xf] %v1731
  %1956 = vst [vmem:[%s3 + $0x174] sm:$0xf] %v1732
  %1957 = vst [vmem:[%s3 + $0x178] sm:$0xf] %v1733
  %1958 = vst [vmem:[%s3 + $0x17c] sm:$0xf] %v1734
  %1959 = vst [vmem:[%s3 + $0x180] sm:$0xf] %v1735
  %1960 = vst [vmem:[%s3 + $0x184] sm:$0xf] %v1736
  %1961 = vst [vmem:[%s3 + $0x188] sm:$0xf] %v1737
  %1962 = vst [vmem:[%s3 + $0x18c] sm:$0xf] %v1738
  %1963 = vst [vmem:[%s3 + $0x190] sm:$0xf] %v1739
  %1964 = vst [vmem:[%s3 + $0x194] sm:$0xf] %v1740
  %1965 = vst [vmem:[%s3 + $0x198] sm:$0xf] %v1741
  %1966 = vst [vmem:[%s3 + $0x19c] sm:$0xf] %v1742
  %1967 = vst [vmem:[%s3 + $0x1a0] sm:$0xf] %v1743
  %1968 = vst [vmem:[%s3 + $0x1a4] sm:$0xf] %v1744
  %1969 = vst [vmem:[%s3 + $0x1a8] sm:$0xf] %v1745
  %1970 = vst [vmem:[%s3 + $0x1ac] sm:$0xf] %v1746
  %1971 = vst [vmem:[%s3 + $0x1b0] sm:$0xf] %v1747
  %1972 = vst [vmem:[%s3 + $0x1b4] sm:$0xf] %v1748
  %1973 = vst [vmem:[%s3 + $0x1b8] sm:$0xf] %v1749
  %1974 = vst [vmem:[%s3 + $0x1bc] sm:$0xf] %v1750
  // Predicated region
  $region14: #{cnnbase_forward.4} parent=0 // pred_check
    _
  $region15: #{cnnbase_forward.4} parent=0 // pred_check_branch
    %1976 = sbr.rel (0) target = $region17
  $region16: #{cnnbase_forward.4} parent=0 // pred_region
    _
  $region17: #{cnnbase_forward.4} parent=0 // pred_fallthru
    _
  // Predicated region
  $region18: #{cnnbase_forward.4} parent=0 // pred_check
    _
  $region19: #{cnnbase_forward.4} parent=0 // pred_check_branch
    %1978 = sbr.rel (0) target = $region21
  $region20: #{cnnbase_forward.4} parent=0 // pred_region
    _
  $region21: #{cnnbase_forward.4} parent=0 // pred_fallthru
    _

// kernel: cnnbase_forward.5
$region0: #{cnnbase_forward.5}
  #allocation0 [shape = 'u32[]', space=smem, size = 0x4, offset = 0x4, fixed_abs, tag = 'smem constant byte address 0x4 - core index']
  #allocation1 [shape = 'u32[144,128]{1,0:T(1,128)}', space=vmem, size = 0x12000, scoped, tag = 'internal scratch']
  %s0 = inlined_call_operand.vmem [shape: bf16[256,512], index: 0, kind: input, shape index: {}]
  %s1 = inlined_call_operand.vmem [shape: bf16[512,128], index: 1, kind: input, shape index: {}]
  %s2 = inlined_call_operand.vmem [shape: f32[1,128], index: 2, kind: input, shape index: {}]
  %s3 = inlined_call_operand.vmem [shape: bf16[256,128], index: 3, kind: output, shape index: {}]
  %s4 = sld [smem:[#allocation0]]
  $region22: #{cnnbase_forward.5} parent=0
    _
  %s6 = ssub.s32 1, %s4
  %s7 = scalar_select 0, %s6, %s4
  // Predicated region
  $region2: #{cnnbase_forward.5} parent=0 // pred_check
    _
  $region3: #{cnnbase_forward.5} parent=0 // pred_check_branch
    %9 = sbr.rel (0) target = $region5
  $region4: #{cnnbase_forward.5} parent=0 // pred_region
    _
  $region5: #{cnnbase_forward.5} parent=0 // pred_fallthru
    _
  // Predicated region
  $region6: #{cnnbase_forward.5} parent=0 // pred_check
    _
  $region7: #{cnnbase_forward.5} parent=0 // pred_check_branch
    %11 = sbr.rel (0) target = $region9
  $region8: #{cnnbase_forward.5} parent=0 // pred_region
    _
  $region9: #{cnnbase_forward.5} parent=0 // pred_fallthru
    _
  // Predicated region
  $region10: #{cnnbase_forward.5} parent=0 // pred_check
    _
  $region11: #{cnnbase_forward.5} parent=0 // pred_check_branch
    %13 = sbr.rel (0) target = $region13
  $region12: #{cnnbase_forward.5} parent=0 // pred_region
    _
  $region13: #{cnnbase_forward.5} parent=0 // pred_fallthru
    _
  %v15 = vld [vmem:[%s0] sm:$0xff]
  %v16 = vld [vmem:[%s0 + $0x8] sm:$0xff]
  %v17 = vld [vmem:[%s0 + $0x10] sm:$0xff]
  %v18 = vld [vmem:[%s0 + $0x18] sm:$0xff]
  %v19 = vld [vmem:[%s0 + $0x20] sm:$0xff]
  %v20 = vld [vmem:[%s0 + $0x28] sm:$0xff]
  %v21 = vld [vmem:[%s0 + $0x30] sm:$0xff]
  %v22 = vld [vmem:[%s0 + $0x38] sm:$0xff]
  %v23 = vld [vmem:[%s0 + $0x40] sm:$0xff]
  %v24 = vld [vmem:[%s0 + $0x48] sm:$0xff]
  %v25 = vld [vmem:[%s0 + $0x50] sm:$0xff]
  %v26 = vld [vmem:[%s0 + $0x58] sm:$0xff]
  %v27 = vld [vmem:[%s0 + $0x60] sm:$0xff]
  %v28 = vld [vmem:[%s0 + $0x68] sm:$0xff]
  %v29 = vld [vmem:[%s0 + $0x70] sm:$0xff]
  %v30 = vld [vmem:[%s0 + $0x78] sm:$0xff]
  %v31 = vld [vmem:[%s0 + $0x80] sm:$0xff]
  %v32 = vld [vmem:[%s0 + $0x88] sm:$0xff]
  %v33 = vld [vmem:[%s0 + $0x90] sm:$0xff]
  %v34 = vld [vmem:[%s0 + $0x98] sm:$0xff]
  %v35 = vld [vmem:[%s0 + $0xa0] sm:$0xff]
  %v36 = vld [vmem:[%s0 + $0xa8] sm:$0xff]
  %v37 = vld [vmem:[%s0 + $0xb0] sm:$0xff]
  %v38 = vld [vmem:[%s0 + $0xb8] sm:$0xff]
  %v39 = vld [vmem:[%s0 + $0xc0] sm:$0xff]
  %v40 = vld [vmem:[%s0 + $0xc8] sm:$0xff]
  %v41 = vld [vmem:[%s0 + $0xd0] sm:$0xff]
  %v42 = vld [vmem:[%s0 + $0xd8] sm:$0xff]
  %v43 = vld [vmem:[%s0 + $0xe0] sm:$0xff]
  %v44 = vld [vmem:[%s0 + $0xe8] sm:$0xff]
  %v45 = vld [vmem:[%s0 + $0xf0] sm:$0xff]
  %v46 = vld [vmem:[%s0 + $0xf8] sm:$0xff]
  %v47 = vld [vmem:[%s0 + $0x100] sm:$0xff]
  %v48 = vld [vmem:[%s0 + $0x108] sm:$0xff]
  %v49 = vld [vmem:[%s0 + $0x110] sm:$0xff]
  %v50 = vld [vmem:[%s0 + $0x118] sm:$0xff]
  %v51 = vld [vmem:[%s0 + $0x120] sm:$0xff]
  %v52 = vld [vmem:[%s0 + $0x128] sm:$0xff]
  %v53 = vld [vmem:[%s0 + $0x130] sm:$0xff]
  %v54 = vld [vmem:[%s0 + $0x138] sm:$0xff]
  %v55 = vld [vmem:[%s0 + $0x140] sm:$0xff]
  %v56 = vld [vmem:[%s0 + $0x148] sm:$0xff]
  %v57 = vld [vmem:[%s0 + $0x150] sm:$0xff]
  %v58 = vld [vmem:[%s0 + $0x158] sm:$0xff]
  %v59 = vld [vmem:[%s0 + $0x160] sm:$0xff]
  %v60 = vld [vmem:[%s0 + $0x168] sm:$0xff]
  %v61 = vld [vmem:[%s0 + $0x170] sm:$0xff]
  %v62 = vld [vmem:[%s0 + $0x178] sm:$0xff]
  %v63 = vld [vmem:[%s0 + $0x180] sm:$0xff]
  %v64 = vld [vmem:[%s0 + $0x188] sm:$0xff]
  %v65 = vld [vmem:[%s0 + $0x190] sm:$0xff]
  %v66 = vld [vmem:[%s0 + $0x198] sm:$0xff]
  %v67 = vld [vmem:[%s0 + $0x1a0] sm:$0xff]
  %v68 = vld [vmem:[%s0 + $0x1a8] sm:$0xff]
  %v69 = vld [vmem:[%s0 + $0x1b0] sm:$0xff]
  %v70 = vld [vmem:[%s0 + $0x1b8] sm:$0xff]
  %v71 = vld [vmem:[%s0 + $0x1c0] sm:$0xff]
  %v72 = vld [vmem:[%s0 + $0x1c8] sm:$0xff]
  %v73 = vld [vmem:[%s0 + $0x1d0] sm:$0xff]
  %v74 = vld [vmem:[%s0 + $0x1d8] sm:$0xff]
  %v75 = vld [vmem:[%s0 + $0x1e0] sm:$0xff]
  %v76 = vld [vmem:[%s0 + $0x1e8] sm:$0xff]
  %v77 = vld [vmem:[%s0 + $0x1f0] sm:$0xff]
  %v78 = vld [vmem:[%s0 + $0x1f8] sm:$0xff]
  %v79 = vld [vmem:[%s1] sm:$0xf]
  %v80 = vld [vmem:[%s1 + $0x4] sm:$0xf]
  %v81 = vld [vmem:[%s1 + $0x8] sm:$0xf]
  %v82 = vld [vmem:[%s1 + $0xc] sm:$0xf]
  %v83 = vld [vmem:[%s1 + $0x10] sm:$0xf]
  %v84 = vld [vmem:[%s1 + $0x14] sm:$0xf]
  %v85 = vld [vmem:[%s1 + $0x18] sm:$0xf]
  %v86 = vld [vmem:[%s1 + $0x1c] sm:$0xf]
  %v87 = vld [vmem:[%s1 + $0x20] sm:$0xf]
  %v88 = vld [vmem:[%s1 + $0x24] sm:$0xf]
  %v89 = vld [vmem:[%s1 + $0x28] sm:$0xf]
  %v90 = vld [vmem:[%s1 + $0x2c] sm:$0xf]
  %v91 = vld [vmem:[%s1 + $0x30] sm:$0xf]
  %v92 = vld [vmem:[%s1 + $0x34] sm:$0xf]
  %v93 = vld [vmem:[%s1 + $0x38] sm:$0xf]
  %v94 = vld [vmem:[%s1 + $0x3c] sm:$0xf]
  %v95 = vld [vmem:[%s1 + $0x40] sm:$0xf]
  %v96 = vld [vmem:[%s1 + $0x44] sm:$0xf]
  %v97 = vld [vmem:[%s1 + $0x48] sm:$0xf]
  %v98 = vld [vmem:[%s1 + $0x4c] sm:$0xf]
  %v99 = vld [vmem:[%s1 + $0x50] sm:$0xf]
  %v100 = vld [vmem:[%s1 + $0x54] sm:$0xf]
  %v101 = vld [vmem:[%s1 + $0x58] sm:$0xf]
  %v102 = vld [vmem:[%s1 + $0x5c] sm:$0xf]
  %v103 = vld [vmem:[%s1 + $0x60] sm:$0xf]
  %v104 = vld [vmem:[%s1 + $0x64] sm:$0xf]
  %v105 = vld [vmem:[%s1 + $0x68] sm:$0xf]
  %v106 = vld [vmem:[%s1 + $0x6c] sm:$0xf]
  %v107 = vld [vmem:[%s1 + $0x70] sm:$0xf]
  %v108 = vld [vmem:[%s1 + $0x74] sm:$0xf]
  %v109 = vld [vmem:[%s1 + $0x78] sm:$0xf]
  %v110 = vld [vmem:[%s1 + $0x7c] sm:$0xf]
  %v111 = vld [vmem:[%s1 + $0x80] sm:$0xf]
  %v112 = vld [vmem:[%s1 + $0x84] sm:$0xf]
  %v113 = vld [vmem:[%s1 + $0x88] sm:$0xf]
  %v114 = vld [vmem:[%s1 + $0x8c] sm:$0xf]
  %v115 = vld [vmem:[%s1 + $0x90] sm:$0xf]
  %v116 = vld [vmem:[%s1 + $0x94] sm:$0xf]
  %v117 = vld [vmem:[%s1 + $0x98] sm:$0xf]
  %v118 = vld [vmem:[%s1 + $0x9c] sm:$0xf]
  %v119 = vld [vmem:[%s1 + $0xa0] sm:$0xf]
  %v120 = vld [vmem:[%s1 + $0xa4] sm:$0xf]
  %v121 = vld [vmem:[%s1 + $0xa8] sm:$0xf]
  %v122 = vld [vmem:[%s1 + $0xac] sm:$0xf]
  %v123 = vld [vmem:[%s1 + $0xb0] sm:$0xf]
  %v124 = vld [vmem:[%s1 + $0xb4] sm:$0xf]
  %v125 = vld [vmem:[%s1 + $0xb8] sm:$0xf]
  %v126 = vld [vmem:[%s1 + $0xbc] sm:$0xf]
  %v127 = vld [vmem:[%s1 + $0xc0] sm:$0xf]
  %v128 = vld [vmem:[%s1 + $0xc4] sm:$0xf]
  %v129 = vld [vmem:[%s1 + $0xc8] sm:$0xf]
  %v130 = vld [vmem:[%s1 + $0xcc] sm:$0xf]
  %v131 = vld [vmem:[%s1 + $0xd0] sm:$0xf]
  %v132 = vld [vmem:[%s1 + $0xd4] sm:$0xf]
  %v133 = vld [vmem:[%s1 + $0xd8] sm:$0xf]
  %v134 = vld [vmem:[%s1 + $0xdc] sm:$0xf]
  %v135 = vld [vmem:[%s1 + $0xe0] sm:$0xf]
  %v136 = vld [vmem:[%s1 + $0xe4] sm:$0xf]
  %v137 = vld [vmem:[%s1 + $0xe8] sm:$0xf]
  %v138 = vld [vmem:[%s1 + $0xec] sm:$0xf]
  %v139 = vld [vmem:[%s1 + $0xf0] sm:$0xf]
  %v140 = vld [vmem:[%s1 + $0xf4] sm:$0xf]
  %v141 = vld [vmem:[%s1 + $0xf8] sm:$0xf]
  %v142 = vld [vmem:[%s1 + $0xfc] sm:$0xf]
  %v143 = vld [vmem:[%s2] sm:$0x1]
  %v145 = vlaneseq
  %v146 = vshrl.u32 %v145, 7
  %v147 = vsub.s32 0, %v146
  %v148 = vrot.slane %v143, %v147
  %v214 = vunpack.c.l.b16 %v15
  %v215 = vunpack.c.h.b16 %v15
  %v216 = vunpack.c.l.b16 %v16
  %v217 = vunpack.c.h.b16 %v16
  %v218 = vunpack.c.l.b16 %v17
  %v219 = vunpack.c.h.b16 %v17
  %v220 = vunpack.c.l.b16 %v18
  %v221 = vunpack.c.h.b16 %v18
  %v222 = vunpack.c.l.b16 %v19
  %v223 = vunpack.c.h.b16 %v19
  %v224 = vunpack.c.l.b16 %v20
  %v225 = vunpack.c.h.b16 %v20
  %v226 = vunpack.c.l.b16 %v21
  %v227 = vunpack.c.h.b16 %v21
  %v228 = vunpack.c.l.b16 %v22
  %v229 = vunpack.c.h.b16 %v22
  %v230 = vunpack.c.l.b16 %v23
  %v231 = vunpack.c.h.b16 %v23
  %v232 = vunpack.c.l.b16 %v24
  %v233 = vunpack.c.h.b16 %v24
  %v234 = vunpack.c.l.b16 %v25
  %v235 = vunpack.c.h.b16 %v25
  %v236 = vunpack.c.l.b16 %v26
  %v237 = vunpack.c.h.b16 %v26
  %v238 = vunpack.c.l.b16 %v27
  %v239 = vunpack.c.h.b16 %v27
  %v240 = vunpack.c.l.b16 %v28
  %v241 = vunpack.c.h.b16 %v28
  %v242 = vunpack.c.l.b16 %v29
  %v243 = vunpack.c.h.b16 %v29
  %v244 = vunpack.c.l.b16 %v30
  %v245 = vunpack.c.h.b16 %v30
  %v246 = vunpack.c.l.b16 %v31
  %v247 = vunpack.c.h.b16 %v31
  %v248 = vunpack.c.l.b16 %v32
  %v249 = vunpack.c.h.b16 %v32
  %v250 = vunpack.c.l.b16 %v33
  %v251 = vunpack.c.h.b16 %v33
  %v252 = vunpack.c.l.b16 %v34
  %v253 = vunpack.c.h.b16 %v34
  %v254 = vunpack.c.l.b16 %v35
  %v255 = vunpack.c.h.b16 %v35
  %v256 = vunpack.c.l.b16 %v36
  %v257 = vunpack.c.h.b16 %v36
  %v258 = vunpack.c.l.b16 %v37
  %v259 = vunpack.c.h.b16 %v37
  %v260 = vunpack.c.l.b16 %v38
  %v261 = vunpack.c.h.b16 %v38
  %v262 = vunpack.c.l.b16 %v39
  %v263 = vunpack.c.h.b16 %v39
  %v264 = vunpack.c.l.b16 %v40
  %v265 = vunpack.c.h.b16 %v40
  %v266 = vunpack.c.l.b16 %v41
  %v267 = vunpack.c.h.b16 %v41
  %v268 = vunpack.c.l.b16 %v42
  %v269 = vunpack.c.h.b16 %v42
  %v270 = vunpack.c.l.b16 %v43
  %v271 = vunpack.c.h.b16 %v43
  %v272 = vunpack.c.l.b16 %v44
  %v273 = vunpack.c.h.b16 %v44
  %v274 = vunpack.c.l.b16 %v45
  %v275 = vunpack.c.h.b16 %v45
  %v276 = vunpack.c.l.b16 %v46
  %v277 = vunpack.c.h.b16 %v46
  %v278 = vunpack.c.l.b16 %v47
  %v279 = vunpack.c.h.b16 %v47
  %v280 = vunpack.c.l.b16 %v48
  %v281 = vunpack.c.h.b16 %v48
  %v282 = vunpack.c.l.b16 %v49
  %v283 = vunpack.c.h.b16 %v49
  %v284 = vunpack.c.l.b16 %v50
  %v285 = vunpack.c.h.b16 %v50
  %v286 = vunpack.c.l.b16 %v51
  %v287 = vunpack.c.h.b16 %v51
  %v288 = vunpack.c.l.b16 %v52
  %v289 = vunpack.c.h.b16 %v52
  %v290 = vunpack.c.l.b16 %v53
  %v291 = vunpack.c.h.b16 %v53
  %v292 = vunpack.c.l.b16 %v54
  %v293 = vunpack.c.h.b16 %v54
  %v294 = vunpack.c.l.b16 %v55
  %v295 = vunpack.c.h.b16 %v55
  %v296 = vunpack.c.l.b16 %v56
  %v297 = vunpack.c.h.b16 %v56
  %v298 = vunpack.c.l.b16 %v57
  %v299 = vunpack.c.h.b16 %v57
  %v300 = vunpack.c.l.b16 %v58
  %v301 = vunpack.c.h.b16 %v58
  %v302 = vunpack.c.l.b16 %v59
  %v303 = vunpack.c.h.b16 %v59
  %v304 = vunpack.c.l.b16 %v60
  %v305 = vunpack.c.h.b16 %v60
  %v306 = vunpack.c.l.b16 %v61
  %v307 = vunpack.c.h.b16 %v61
  %v308 = vunpack.c.l.b16 %v62
  %v309 = vunpack.c.h.b16 %v62
  %v310 = vunpack.c.l.b16 %v63
  %v311 = vunpack.c.h.b16 %v63
  %v312 = vunpack.c.l.b16 %v64
  %v313 = vunpack.c.h.b16 %v64
  %v314 = vunpack.c.l.b16 %v65
  %v315 = vunpack.c.h.b16 %v65
  %v316 = vunpack.c.l.b16 %v66
  %v317 = vunpack.c.h.b16 %v66
  %v318 = vunpack.c.l.b16 %v67
  %v319 = vunpack.c.h.b16 %v67
  %v320 = vunpack.c.l.b16 %v68
  %v321 = vunpack.c.h.b16 %v68
  %v322 = vunpack.c.l.b16 %v69
  %v323 = vunpack.c.h.b16 %v69
  %v324 = vunpack.c.l.b16 %v70
  %v325 = vunpack.c.h.b16 %v70
  %v326 = vunpack.c.l.b16 %v71
  %v327 = vunpack.c.h.b16 %v71
  %v328 = vunpack.c.l.b16 %v72
  %v329 = vunpack.c.h.b16 %v72
  %v330 = vunpack.c.l.b16 %v73
  %v331 = vunpack.c.h.b16 %v73
  %v332 = vunpack.c.l.b16 %v74
  %v333 = vunpack.c.h.b16 %v74
  %v334 = vunpack.c.l.b16 %v75
  %v335 = vunpack.c.h.b16 %v75
  %v336 = vunpack.c.l.b16 %v76
  %v337 = vunpack.c.h.b16 %v76
  %v338 = vunpack.c.l.b16 %v77
  %v339 = vunpack.c.h.b16 %v77
  %v340 = vunpack.c.l.b16 %v78
  %v341 = vunpack.c.h.b16 %v78
  %v342 = vpack.c.b16 %v218, %v214
  %v343 = vpack.c.b16 %v219, %v215
  %v344 = vpack.c.b16 %v220, %v216
  %v345 = vpack.c.b16 %v221, %v217
  %v346 = vpack.c.b16 %v226, %v222
  %v347 = vpack.c.b16 %v227, %v223
  %v348 = vpack.c.b16 %v228, %v224
  %v349 = vpack.c.b16 %v229, %v225
  %v350 = vpack.c.b16 %v234, %v230
  %v351 = vpack.c.b16 %v235, %v231
  %v352 = vpack.c.b16 %v236, %v232
  %v353 = vpack.c.b16 %v237, %v233
  %v354 = vpack.c.b16 %v242, %v238
  %v355 = vpack.c.b16 %v243, %v239
  %v356 = vpack.c.b16 %v244, %v240
  %v357 = vpack.c.b16 %v245, %v241
  %v358 = vpack.c.b16 %v250, %v246
  %v359 = vpack.c.b16 %v251, %v247
  %v360 = vpack.c.b16 %v252, %v248
  %v361 = vpack.c.b16 %v253, %v249
  %v362 = vpack.c.b16 %v258, %v254
  %v363 = vpack.c.b16 %v259, %v255
  %v364 = vpack.c.b16 %v260, %v256
  %v365 = vpack.c.b16 %v261, %v257
  %v366 = vpack.c.b16 %v266, %v262
  %v367 = vpack.c.b16 %v267, %v263
  %v368 = vpack.c.b16 %v268, %v264
  %v369 = vpack.c.b16 %v269, %v265
  %v370 = vpack.c.b16 %v274, %v270
  %v371 = vpack.c.b16 %v275, %v271
  %v372 = vpack.c.b16 %v276, %v272
  %v373 = vpack.c.b16 %v277, %v273
  %v374 = vpack.c.b16 %v282, %v278
  %v375 = vpack.c.b16 %v283, %v279
  %v376 = vpack.c.b16 %v284, %v280
  %v377 = vpack.c.b16 %v285, %v281
  %v378 = vpack.c.b16 %v290, %v286
  %v379 = vpack.c.b16 %v291, %v287
  %v380 = vpack.c.b16 %v292, %v288
  %v381 = vpack.c.b16 %v293, %v289
  %v382 = vpack.c.b16 %v298, %v294
  %v383 = vpack.c.b16 %v299, %v295
  %v384 = vpack.c.b16 %v300, %v296
  %v385 = vpack.c.b16 %v301, %v297
  %v386 = vpack.c.b16 %v306, %v302
  %v387 = vpack.c.b16 %v307, %v303
  %v388 = vpack.c.b16 %v308, %v304
  %v389 = vpack.c.b16 %v309, %v305
  %v390 = vpack.c.b16 %v314, %v310
  %v391 = vpack.c.b16 %v315, %v311
  %v392 = vpack.c.b16 %v316, %v312
  %v393 = vpack.c.b16 %v317, %v313
  %v394 = vpack.c.b16 %v322, %v318
  %v395 = vpack.c.b16 %v323, %v319
  %v396 = vpack.c.b16 %v324, %v320
  %v397 = vpack.c.b16 %v325, %v321
  %v398 = vpack.c.b16 %v330, %v326
  %v399 = vpack.c.b16 %v331, %v327
  %v400 = vpack.c.b16 %v332, %v328
  %v401 = vpack.c.b16 %v333, %v329
  %v402 = vpack.c.b16 %v338, %v334
  %v403 = vpack.c.b16 %v339, %v335
  %v404 = vpack.c.b16 %v340, %v336
  %v405 = vpack.c.b16 %v341, %v337
  %v534 = vunpack.c.l.b16 %v79
  %v535 = vunpack.c.l.b16 %v80
  %v536 = vunpack.c.l.b16 %v81
  %v537 = vunpack.c.l.b16 %v82
  %v538 = vunpack.c.l.b16 %v83
  %v539 = vunpack.c.l.b16 %v84
  %v540 = vunpack.c.l.b16 %v85
  %v541 = vunpack.c.l.b16 %v86
  %v542 = vunpack.c.l.b16 %v87
  %v543 = vunpack.c.l.b16 %v88
  %v544 = vunpack.c.l.b16 %v89
  %v545 = vunpack.c.l.b16 %v90
  %v546 = vunpack.c.l.b16 %v91
  %v547 = vunpack.c.l.b16 %v92
  %v548 = vunpack.c.l.b16 %v93
  %v549 = vunpack.c.l.b16 %v94
  %v550 = vunpack.c.l.b16 %v95
  %v551 = vunpack.c.l.b16 %v96
  %v552 = vunpack.c.l.b16 %v97
  %v553 = vunpack.c.l.b16 %v98
  %v554 = vunpack.c.l.b16 %v99
  %v555 = vunpack.c.l.b16 %v100
  %v556 = vunpack.c.l.b16 %v101
  %v557 = vunpack.c.l.b16 %v102
  %v558 = vunpack.c.l.b16 %v103
  %v559 = vunpack.c.l.b16 %v104
  %v560 = vunpack.c.l.b16 %v105
  %v561 = vunpack.c.l.b16 %v106
  %v562 = vunpack.c.l.b16 %v107
  %v563 = vunpack.c.l.b16 %v108
  %v564 = vunpack.c.l.b16 %v109
  %v565 = vunpack.c.l.b16 %v110
  %v566 = vunpack.c.l.b16 %v111
  %v567 = vunpack.c.l.b16 %v112
  %v568 = vunpack.c.l.b16 %v113
  %v569 = vunpack.c.l.b16 %v114
  %v570 = vunpack.c.l.b16 %v115
  %v571 = vunpack.c.l.b16 %v116
  %v572 = vunpack.c.l.b16 %v117
  %v573 = vunpack.c.l.b16 %v118
  %v574 = vunpack.c.l.b16 %v119
  %v575 = vunpack.c.l.b16 %v120
  %v576 = vunpack.c.l.b16 %v121
  %v577 = vunpack.c.l.b16 %v122
  %v578 = vunpack.c.l.b16 %v123
  %v579 = vunpack.c.l.b16 %v124
  %v580 = vunpack.c.l.b16 %v125
  %v581 = vunpack.c.l.b16 %v126
  %v582 = vunpack.c.l.b16 %v127
  %v583 = vunpack.c.l.b16 %v128
  %v584 = vunpack.c.l.b16 %v129
  %v585 = vunpack.c.l.b16 %v130
  %v586 = vunpack.c.l.b16 %v131
  %v587 = vunpack.c.l.b16 %v132
  %v588 = vunpack.c.l.b16 %v133
  %v589 = vunpack.c.l.b16 %v134
  %v590 = vunpack.c.l.b16 %v135
  %v591 = vunpack.c.l.b16 %v136
  %v592 = vunpack.c.l.b16 %v137
  %v593 = vunpack.c.l.b16 %v138
  %v594 = vunpack.c.l.b16 %v139
  %v595 = vunpack.c.l.b16 %v140
  %v596 = vunpack.c.l.b16 %v141
  %v597 = vunpack.c.l.b16 %v142
  %v598 = vpack.c.b16 %v535, %v534
  %v599 = vpack.c.b16 %v537, %v536
  %v600 = vpack.c.b16 %v539, %v538
  %v601 = vpack.c.b16 %v541, %v540
  %v602 = vpack.c.b16 %v543, %v542
  %v603 = vpack.c.b16 %v545, %v544
  %v604 = vpack.c.b16 %v547, %v546
  %v605 = vpack.c.b16 %v549, %v548
  %v606 = vpack.c.b16 %v551, %v550
  %v607 = vpack.c.b16 %v553, %v552
  %v608 = vpack.c.b16 %v555, %v554
  %v609 = vpack.c.b16 %v557, %v556
  %v610 = vpack.c.b16 %v559, %v558
  %v611 = vpack.c.b16 %v561, %v560
  %v612 = vpack.c.b16 %v563, %v562
  %v613 = vpack.c.b16 %v565, %v564
  %v614 = vpack.c.b16 %v567, %v566
  %v615 = vpack.c.b16 %v569, %v568
  %v616 = vpack.c.b16 %v571, %v570
  %v617 = vpack.c.b16 %v573, %v572
  %v618 = vpack.c.b16 %v575, %v574
  %v619 = vpack.c.b16 %v577, %v576
  %v620 = vpack.c.b16 %v579, %v578
  %v621 = vpack.c.b16 %v581, %v580
  %v622 = vpack.c.b16 %v583, %v582
  %v623 = vpack.c.b16 %v585, %v584
  %v624 = vpack.c.b16 %v587, %v586
  %v625 = vpack.c.b16 %v589, %v588
  %v626 = vpack.c.b16 %v591, %v590
  %v627 = vpack.c.b16 %v593, %v592
  %v628 = vpack.c.b16 %v595, %v594
  %v629 = vpack.c.b16 %v597, %v596
  %662 = vmatprep.subr.bf16.mxu0 0
  %663 = vmatpush1.bf16.msra.mxu0 %v598
  %664 = vmatprep.subr.bf16.mxu0 0
  %665 = vmatpush1.bf16.msra.mxu0 %v599
  %666 = vmatprep.subr.bf16.mxu0 0
  %667 = vmatpush1.bf16.msra.mxu0 %v600
  %668 = vmatprep.subr.bf16.mxu0 0
  %669 = vmatpush1.bf16.msra.mxu0 %v601
  %670 = vmatprep.subr.bf16.mxu0 0
  %671 = vmatpush1.bf16.msra.mxu0 %v602
  %672 = vmatprep.subr.bf16.mxu0 0
  %673 = vmatpush1.bf16.msra.mxu0 %v603
  %674 = vmatprep.subr.bf16.mxu0 0
  %675 = vmatpush1.bf16.msra.mxu0 %v604
  %676 = vmatprep.subr.bf16.mxu0 0
  %677 = vmatpush1.bf16.msra.mxu0 %v605
  %678 = vmatprep.subr.bf16.mxu0 0
  %679 = vmatpush1.bf16.msra.mxu0 %v606
  %680 = vmatprep.subr.bf16.mxu0 0
  %681 = vmatpush1.bf16.msra.mxu0 %v607
  %682 = vmatprep.subr.bf16.mxu0 0
  %683 = vmatpush1.bf16.msra.mxu0 %v608
  %684 = vmatprep.subr.bf16.mxu0 0
  %685 = vmatpush1.bf16.msra.mxu0 %v609
  %686 = vmatprep.subr.bf16.mxu0 0
  %687 = vmatpush1.bf16.msra.mxu0 %v610
  %688 = vmatprep.subr.bf16.mxu0 0
  %689 = vmatpush1.bf16.msra.mxu0 %v611
  %690 = vmatprep.subr.bf16.mxu0 0
  %691 = vmatpush1.bf16.msra.mxu0 %v612
  %692 = vmatprep.subr.bf16.mxu0 0
  %693 = vmatpush1.bf16.msra.mxu0 %v613
  %694 = vmatprep.mubr.bf16.mxu0 %v343
  %695 = vmatmul.mubr.bf16.gmra.mrb[0].mxu0 %v342
  %v696 = vpop.f32.mrb[0].mxu0
  %v697 = vadd.f32 %v148, %v696
  %v698 = vpop.f32.mrb[0].mxu0
  %v699 = vpop.f32.mrb[0].mxu0
  %v700 = vadd.f32 %v148, %v699
  %v701 = vpop.f32.mrb[0].mxu0
  %702 = vmatprep.mubr.bf16.mxu0 %v347
  %703 = vmatmul.mubr.bf16.gmra.mrb[0].mxu0 %v346
  %v704 = vpop.f32.mrb[0].mxu0
  %v705 = vadd.f32 %v148, %v704
  %v706 = vpop.f32.mrb[0].mxu0
  %v707 = vpop.f32.mrb[0].mxu0
  %v708 = vadd.f32 %v148, %v707
  %v709 = vpop.f32.mrb[0].mxu0
  %710 = vmatprep.mubr.bf16.mxu0 %v351
  %711 = vmatmul.mubr.bf16.gmra.mrb[0].mxu0 %v350
  %v712 = vpop.f32.mrb[0].mxu0
  %v713 = vadd.f32 %v148, %v712
  %v714 = vpop.f32.mrb[0].mxu0
  %v715 = vpop.f32.mrb[0].mxu0
  %v716 = vadd.f32 %v148, %v715
  %v717 = vpop.f32.mrb[0].mxu0
  %718 = vmatprep.mubr.bf16.mxu0 %v355
  %719 = vmatmul.mubr.bf16.gmra.mrb[0].mxu0 %v354
  %v720 = vpop.f32.mrb[0].mxu0
  %v721 = vadd.f32 %v148, %v720
  %v722 = vpop.f32.mrb[0].mxu0
  %v723 = vpop.f32.mrb[0].mxu0
  %v724 = vadd.f32 %v148, %v723
  %v725 = vpop.f32.mrb[0].mxu0
  %726 = vmatprep.mubr.bf16.mxu0 %v359
  %727 = vmatmul.mubr.bf16.gmra.mrb[0].mxu0 %v358
  %v728 = vpop.f32.mrb[0].mxu0
  %v729 = vadd.f32 %v148, %v728
  %v730 = vpop.f32.mrb[0].mxu0
  %v731 = vpop.f32.mrb[0].mxu0
  %v732 = vadd.f32 %v148, %v731
  %v733 = vpop.f32.mrb[0].mxu0
  %734 = vmatprep.mubr.bf16.mxu0 %v363
  %735 = vmatmul.mubr.bf16.gmra.mrb[0].mxu0 %v362
  %v736 = vpop.f32.mrb[0].mxu0
  %v737 = vadd.f32 %v148, %v736
  %v738 = vpop.f32.mrb[0].mxu0
  %v739 = vpop.f32.mrb[0].mxu0
  %v740 = vadd.f32 %v148, %v739
  %v741 = vpop.f32.mrb[0].mxu0
  %742 = vmatprep.mubr.bf16.mxu0 %v367
  %743 = vmatmul.mubr.bf16.gmra.mrb[0].mxu0 %v366
  %v744 = vpop.f32.mrb[0].mxu0
  %v745 = vadd.f32 %v148, %v744
  %v746 = vpop.f32.mrb[0].mxu0
  %v747 = vpop.f32.mrb[0].mxu0
  %v748 = vadd.f32 %v148, %v747
  %v749 = vpop.f32.mrb[0].mxu0
  %750 = vmatprep.mubr.bf16.mxu0 %v371
  %751 = vmatmul.mubr.bf16.gmra.mrb[0].mxu0 %v370
  %v752 = vpop.f32.mrb[0].mxu0
  %v753 = vadd.f32 %v148, %v752
  %v754 = vpop.f32.mrb[0].mxu0
  %v755 = vpop.f32.mrb[0].mxu0
  %v756 = vadd.f32 %v148, %v755
  %v757 = vpop.f32.mrb[0].mxu0
  %758 = vmatprep.mubr.bf16.mxu0 %v375
  %759 = vmatmul.mubr.bf16.gmra.mrb[0].mxu0 %v374
  %v760 = vpop.f32.mrb[0].mxu0
  %v761 = vadd.f32 %v148, %v760
  %v762 = vpop.f32.mrb[0].mxu0
  %v763 = vpop.f32.mrb[0].mxu0
  %v764 = vadd.f32 %v148, %v763
  %v765 = vpop.f32.mrb[0].mxu0
  %766 = vmatprep.mubr.bf16.mxu0 %v379
  %767 = vmatmul.mubr.bf16.gmra.mrb[0].mxu0 %v378
  %v768 = vpop.f32.mrb[0].mxu0
  %v769 = vadd.f32 %v148, %v768
  %v770 = vpop.f32.mrb[0].mxu0
  %v771 = vpop.f32.mrb[0].mxu0
  %v772 = vadd.f32 %v148, %v771
  %v773 = vpop.f32.mrb[0].mxu0
  %774 = vmatprep.mubr.bf16.mxu0 %v383
  %775 = vmatmul.mubr.bf16.gmra.mrb[0].mxu0 %v382
  %v776 = vpop.f32.mrb[0].mxu0
  %v777 = vadd.f32 %v148, %v776
  %v778 = vpop.f32.mrb[0].mxu0
  %v779 = vpop.f32.mrb[0].mxu0
  %v780 = vadd.f32 %v148, %v779
  %v781 = vpop.f32.mrb[0].mxu0
  %782 = vmatprep.mubr.bf16.mxu0 %v387
  %783 = vmatmul.mubr.bf16.gmra.mrb[0].mxu0 %v386
  %v784 = vpop.f32.mrb[0].mxu0
  %v785 = vadd.f32 %v148, %v784
  %v786 = vpop.f32.mrb[0].mxu0
  %v787 = vpop.f32.mrb[0].mxu0
  %v788 = vadd.f32 %v148, %v787
  %v789 = vpop.f32.mrb[0].mxu0
  %790 = vmatprep.mubr.bf16.mxu0 %v391
  %791 = vmatmul.mubr.bf16.gmra.mrb[0].mxu0 %v390
  %v792 = vpop.f32.mrb[0].mxu0
  %v793 = vadd.f32 %v148, %v792
  %v794 = vpop.f32.mrb[0].mxu0
  %v795 = vpop.f32.mrb[0].mxu0
  %v796 = vadd.f32 %v148, %v795
  %v797 = vpop.f32.mrb[0].mxu0
  %798 = vmatprep.mubr.bf16.mxu0 %v395
  %799 = vmatmul.mubr.bf16.gmra.mrb[0].mxu0 %v394
  %v800 = vpop.f32.mrb[0].mxu0
  %v801 = vadd.f32 %v148, %v800
  %v802 = vpop.f32.mrb[0].mxu0
  %v803 = vpop.f32.mrb[0].mxu0
  %v804 = vadd.f32 %v148, %v803
  %v805 = vpop.f32.mrb[0].mxu0
  %806 = vmatprep.mubr.bf16.mxu0 %v399
  %807 = vmatmul.mubr.bf16.gmra.mrb[0].mxu0 %v398
  %v808 = vpop.f32.mrb[0].mxu0
  %v809 = vadd.f32 %v148, %v808
  %v810 = vpop.f32.mrb[0].mxu0
  %v811 = vpop.f32.mrb[0].mxu0
  %v812 = vadd.f32 %v148, %v811
  %v813 = vpop.f32.mrb[0].mxu0
  %814 = vmatprep.mubr.bf16.mxu0 %v403
  %815 = vmatmul.mubr.bf16.gmra.mrb[0].mxu0 %v402
  %v816 = vpop.f32.mrb[0].mxu0
  %v817 = vadd.f32 %v148, %v816
  %v818 = vpop.f32.mrb[0].mxu0
  %v819 = vpop.f32.mrb[0].mxu0
  %v820 = vadd.f32 %v148, %v819
  %v821 = vpop.f32.mrb[0].mxu0
  %822 = vdwg.mxu0
  %823 = vmatprep.subr.bf16.mxu0 0
  %824 = vmatpush1.bf16.msra.mxu0 %v614
  %825 = vmatprep.subr.bf16.mxu0 0
  %826 = vmatpush1.bf16.msra.mxu0 %v615
  %827 = vmatprep.subr.bf16.mxu0 0
  %828 = vmatpush1.bf16.msra.mxu0 %v616
  %829 = vmatprep.subr.bf16.mxu0 0
  %830 = vmatpush1.bf16.msra.mxu0 %v617
  %831 = vmatprep.subr.bf16.mxu0 0
  %832 = vmatpush1.bf16.msra.mxu0 %v618
  %833 = vmatprep.subr.bf16.mxu0 0
  %834 = vmatpush1.bf16.msra.mxu0 %v619
  %835 = vmatprep.subr.bf16.mxu0 0
  %836 = vmatpush1.bf16.msra.mxu0 %v620
  %837 = vmatprep.subr.bf16.mxu0 0
  %838 = vmatpush1.bf16.msra.mxu0 %v621
  %839 = vmatprep.subr.bf16.mxu0 0
  %840 = vmatpush1.bf16.msra.mxu0 %v622
  %841 = vmatprep.subr.bf16.mxu0 0
  %842 = vmatpush1.bf16.msra.mxu0 %v623
  %843 = vmatprep.subr.bf16.mxu0 0
  %844 = vmatpush1.bf16.msra.mxu0 %v624
  %845 = vmatprep.subr.bf16.mxu0 0
  %846 = vmatpush1.bf16.msra.mxu0 %v625
  %847 = vmatprep.subr.bf16.mxu0 0
  %848 = vmatpush1.bf16.msra.mxu0 %v626
  %849 = vmatprep.subr.bf16.mxu0 0
  %850 = vmatpush1.bf16.msra.mxu0 %v627
  %851 = vmatprep.subr.bf16.mxu0 0
  %852 = vmatpush1.bf16.msra.mxu0 %v628
  %853 = vmatprep.subr.bf16.mxu0 0
  %854 = vmatpush1.bf16.msra.mxu0 %v629
  %855 = vmatprep.mubr.bf16.mxu0 %v345
  %856 = vmatmul.mubr.bf16.gmra.mrb[0].mxu0 %v344
  %v857 = vpop.f32.mrb[0].mxu0
  %v858 = vadd.f32 %v697, %v857
  %v859 = vpop.f32.mrb[0].mxu0
  %v860 = vpop.f32.mrb[0].mxu0
  %v861 = vadd.f32 %v700, %v860
  %v862 = vpop.f32.mrb[0].mxu0
  %863 = vmatprep.mubr.bf16.mxu0 %v349
  %864 = vmatmul.mubr.bf16.gmra.mrb[0].mxu0 %v348
  %v865 = vpop.f32.mrb[0].mxu0
  %v866 = vadd.f32 %v705, %v865
  %v867 = vpop.f32.mrb[0].mxu0
  %v868 = vpop.f32.mrb[0].mxu0
  %v869 = vadd.f32 %v708, %v868
  %v870 = vpop.f32.mrb[0].mxu0
  %871 = vmatprep.mubr.bf16.mxu0 %v353
  %872 = vmatmul.mubr.bf16.gmra.mrb[0].mxu0 %v352
  %v873 = vpop.f32.mrb[0].mxu0
  %v874 = vadd.f32 %v713, %v873
  %v875 = vpop.f32.mrb[0].mxu0
  %v876 = vpop.f32.mrb[0].mxu0
  %v877 = vadd.f32 %v716, %v876
  %v878 = vpop.f32.mrb[0].mxu0
  %879 = vmatprep.mubr.bf16.mxu0 %v357
  %880 = vmatmul.mubr.bf16.gmra.mrb[0].mxu0 %v356
  %v881 = vpop.f32.mrb[0].mxu0
  %v882 = vadd.f32 %v721, %v881
  %v883 = vpop.f32.mrb[0].mxu0
  %v884 = vpop.f32.mrb[0].mxu0
  %v885 = vadd.f32 %v724, %v884
  %v886 = vpop.f32.mrb[0].mxu0
  %887 = vmatprep.mubr.bf16.mxu0 %v361
  %888 = vmatmul.mubr.bf16.gmra.mrb[0].mxu0 %v360
  %v889 = vpop.f32.mrb[0].mxu0
  %v890 = vadd.f32 %v729, %v889
  %v891 = vpop.f32.mrb[0].mxu0
  %v892 = vpop.f32.mrb[0].mxu0
  %v893 = vadd.f32 %v732, %v892
  %v894 = vpop.f32.mrb[0].mxu0
  %895 = vmatprep.mubr.bf16.mxu0 %v365
  %896 = vmatmul.mubr.bf16.gmra.mrb[0].mxu0 %v364
  %v897 = vpop.f32.mrb[0].mxu0
  %v898 = vadd.f32 %v737, %v897
  %v899 = vpop.f32.mrb[0].mxu0
  %v900 = vpop.f32.mrb[0].mxu0
  %v901 = vadd.f32 %v740, %v900
  %v902 = vpop.f32.mrb[0].mxu0
  %903 = vmatprep.mubr.bf16.mxu0 %v369
  %904 = vmatmul.mubr.bf16.gmra.mrb[0].mxu0 %v368
  %v905 = vpop.f32.mrb[0].mxu0
  %v906 = vadd.f32 %v745, %v905
  %v907 = vpop.f32.mrb[0].mxu0
  %v908 = vpop.f32.mrb[0].mxu0
  %v909 = vadd.f32 %v748, %v908
  %v910 = vpop.f32.mrb[0].mxu0
  %911 = vmatprep.mubr.bf16.mxu0 %v373
  %912 = vmatmul.mubr.bf16.gmra.mrb[0].mxu0 %v372
  %v913 = vpop.f32.mrb[0].mxu0
  %v914 = vadd.f32 %v753, %v913
  %v915 = vpop.f32.mrb[0].mxu0
  %v916 = vpop.f32.mrb[0].mxu0
  %v917 = vadd.f32 %v756, %v916
  %v918 = vpop.f32.mrb[0].mxu0
  %919 = vmatprep.mubr.bf16.mxu0 %v377
  %920 = vmatmul.mubr.bf16.gmra.mrb[0].mxu0 %v376
  %v921 = vpop.f32.mrb[0].mxu0
  %v922 = vadd.f32 %v761, %v921
  %v923 = vpop.f32.mrb[0].mxu0
  %v924 = vpop.f32.mrb[0].mxu0
  %v925 = vadd.f32 %v764, %v924
  %v926 = vpop.f32.mrb[0].mxu0
  %927 = vmatprep.mubr.bf16.mxu0 %v381
  %928 = vmatmul.mubr.bf16.gmra.mrb[0].mxu0 %v380
  %v929 = vpop.f32.mrb[0].mxu0
  %v930 = vadd.f32 %v769, %v929
  %v931 = vpop.f32.mrb[0].mxu0
  %v932 = vpop.f32.mrb[0].mxu0
  %v933 = vadd.f32 %v772, %v932
  %v934 = vpop.f32.mrb[0].mxu0
  %935 = vmatprep.mubr.bf16.mxu0 %v385
  %936 = vmatmul.mubr.bf16.gmra.mrb[0].mxu0 %v384
  %v937 = vpop.f32.mrb[0].mxu0
  %v938 = vadd.f32 %v777, %v937
  %v939 = vpop.f32.mrb[0].mxu0
  %v940 = vpop.f32.mrb[0].mxu0
  %v941 = vadd.f32 %v780, %v940
  %v942 = vpop.f32.mrb[0].mxu0
  %943 = vmatprep.mubr.bf16.mxu0 %v389
  %944 = vmatmul.mubr.bf16.gmra.mrb[0].mxu0 %v388
  %v945 = vpop.f32.mrb[0].mxu0
  %v946 = vadd.f32 %v785, %v945
  %v947 = vpop.f32.mrb[0].mxu0
  %v948 = vpop.f32.mrb[0].mxu0
  %v949 = vadd.f32 %v788, %v948
  %v950 = vpop.f32.mrb[0].mxu0
  %951 = vmatprep.mubr.bf16.mxu0 %v393
  %952 = vmatmul.mubr.bf16.gmra.mrb[0].mxu0 %v392
  %v953 = vpop.f32.mrb[0].mxu0
  %v954 = vadd.f32 %v793, %v953
  %v955 = vpop.f32.mrb[0].mxu0
  %v956 = vpop.f32.mrb[0].mxu0
  %v957 = vadd.f32 %v796, %v956
  %v958 = vpop.f32.mrb[0].mxu0
  %959 = vmatprep.mubr.bf16.mxu0 %v397
  %960 = vmatmul.mubr.bf16.gmra.mrb[0].mxu0 %v396
  %v961 = vpop.f32.mrb[0].mxu0
  %v962 = vadd.f32 %v801, %v961
  %v963 = vpop.f32.mrb[0].mxu0
  %v964 = vpop.f32.mrb[0].mxu0
  %v965 = vadd.f32 %v804, %v964
  %v966 = vpop.f32.mrb[0].mxu0
  %967 = vmatprep.mubr.bf16.mxu0 %v401
  %968 = vmatmul.mubr.bf16.gmra.mrb[0].mxu0 %v400
  %v969 = vpop.f32.mrb[0].mxu0
  %v970 = vadd.f32 %v809, %v969
  %v971 = vpop.f32.mrb[0].mxu0
  %v972 = vpop.f32.mrb[0].mxu0
  %v973 = vadd.f32 %v812, %v972
  %v974 = vpop.f32.mrb[0].mxu0
  %975 = vmatprep.mubr.bf16.mxu0 %v405
  %976 = vmatmul.mubr.bf16.gmra.mrb[0].mxu0 %v404
  %v977 = vpop.f32.mrb[0].mxu0
  %v978 = vadd.f32 %v817, %v977
  %v979 = vpop.f32.mrb[0].mxu0
  %v980 = vpop.f32.mrb[0].mxu0
  %v981 = vadd.f32 %v820, %v980
  %v982 = vpop.f32.mrb[0].mxu0
  %983 = vdwg.mxu0
  %v984 = vmax.f32 %v858, 0.0
  %v985 = vmax.f32 %v861, 0.0
  %v986 = vmax.f32 %v866, 0.0
  %v987 = vmax.f32 %v869, 0.0
  %v988 = vmax.f32 %v874, 0.0
  %v989 = vmax.f32 %v877, 0.0
  %v990 = vmax.f32 %v882, 0.0
  %v991 = vmax.f32 %v885, 0.0
  %v992 = vmax.f32 %v890, 0.0
  %v993 = vmax.f32 %v893, 0.0
  %v994 = vmax.f32 %v898, 0.0
  %v995 = vmax.f32 %v901, 0.0
  %v996 = vmax.f32 %v906, 0.0
  %v997 = vmax.f32 %v909, 0.0
  %v998 = vmax.f32 %v914, 0.0
  %v999 = vmax.f32 %v917, 0.0
  %v1000 = vmax.f32 %v922, 0.0
  %v1001 = vmax.f32 %v925, 0.0
  %v1002 = vmax.f32 %v930, 0.0
  %v1003 = vmax.f32 %v933, 0.0
  %v1004 = vmax.f32 %v938, 0.0
  %v1005 = vmax.f32 %v941, 0.0
  %v1006 = vmax.f32 %v946, 0.0
  %v1007 = vmax.f32 %v949, 0.0
  %v1008 = vmax.f32 %v954, 0.0
  %v1009 = vmax.f32 %v957, 0.0
  %v1010 = vmax.f32 %v962, 0.0
  %v1011 = vmax.f32 %v965, 0.0
  %v1012 = vmax.f32 %v970, 0.0
  %v1013 = vmax.f32 %v973, 0.0
  %v1014 = vmax.f32 %v978, 0.0
  %v1015 = vmax.f32 %v981, 0.0
  %v1016 = vpack.c.bf16 %v985, %v984
  %v1017 = vpack.c.bf16 %v987, %v986
  %v1018 = vpack.c.bf16 %v989, %v988
  %v1019 = vpack.c.bf16 %v991, %v990
  %v1020 = vpack.c.bf16 %v993, %v992
  %v1021 = vpack.c.bf16 %v995, %v994
  %v1022 = vpack.c.bf16 %v997, %v996
  %v1023 = vpack.c.bf16 %v999, %v998
  %v1024 = vpack.c.bf16 %v1001, %v1000
  %v1025 = vpack.c.bf16 %v1003, %v1002
  %v1026 = vpack.c.bf16 %v1005, %v1004
  %v1027 = vpack.c.bf16 %v1007, %v1006
  %v1028 = vpack.c.bf16 %v1009, %v1008
  %v1029 = vpack.c.bf16 %v1011, %v1010
  %v1030 = vpack.c.bf16 %v1013, %v1012
  %v1031 = vpack.c.bf16 %v1015, %v1014
  %v1048 = vunpack.c.l.b16 %v1016
  %v1049 = vunpack.c.h.b16 %v1016
  %v1050 = vunpack.c.l.b16 %v1017
  %v1051 = vunpack.c.h.b16 %v1017
  %v1052 = vunpack.c.l.b16 %v1018
  %v1053 = vunpack.c.h.b16 %v1018
  %v1054 = vunpack.c.l.b16 %v1019
  %v1055 = vunpack.c.h.b16 %v1019
  %v1056 = vunpack.c.l.b16 %v1020
  %v1057 = vunpack.c.h.b16 %v1020
  %v1058 = vunpack.c.l.b16 %v1021
  %v1059 = vunpack.c.h.b16 %v1021
  %v1060 = vunpack.c.l.b16 %v1022
  %v1061 = vunpack.c.h.b16 %v1022
  %v1062 = vunpack.c.l.b16 %v1023
  %v1063 = vunpack.c.h.b16 %v1023
  %v1064 = vunpack.c.l.b16 %v1024
  %v1065 = vunpack.c.h.b16 %v1024
  %v1066 = vunpack.c.l.b16 %v1025
  %v1067 = vunpack.c.h.b16 %v1025
  %v1068 = vunpack.c.l.b16 %v1026
  %v1069 = vunpack.c.h.b16 %v1026
  %v1070 = vunpack.c.l.b16 %v1027
  %v1071 = vunpack.c.h.b16 %v1027
  %v1072 = vunpack.c.l.b16 %v1028
  %v1073 = vunpack.c.h.b16 %v1028
  %v1074 = vunpack.c.l.b16 %v1029
  %v1075 = vunpack.c.h.b16 %v1029
  %v1076 = vunpack.c.l.b16 %v1030
  %v1077 = vunpack.c.h.b16 %v1030
  %v1078 = vunpack.c.l.b16 %v1031
  %v1079 = vunpack.c.h.b16 %v1031
  %v1080 = vpack.c.b16 %v1048, %v1048
  %v1081 = vpack.c.b16 %v1049, %v1049
  %v1082 = vpack.c.b16 %v1050, %v1050
  %v1083 = vpack.c.b16 %v1051, %v1051
  %v1084 = vpack.c.b16 %v1052, %v1052
  %v1085 = vpack.c.b16 %v1053, %v1053
  %v1086 = vpack.c.b16 %v1054, %v1054
  %v1087 = vpack.c.b16 %v1055, %v1055
  %v1088 = vpack.c.b16 %v1056, %v1056
  %v1089 = vpack.c.b16 %v1057, %v1057
  %v1090 = vpack.c.b16 %v1058, %v1058
  %v1091 = vpack.c.b16 %v1059, %v1059
  %v1092 = vpack.c.b16 %v1060, %v1060
  %v1093 = vpack.c.b16 %v1061, %v1061
  %v1094 = vpack.c.b16 %v1062, %v1062
  %v1095 = vpack.c.b16 %v1063, %v1063
  %v1096 = vpack.c.b16 %v1064, %v1064
  %v1097 = vpack.c.b16 %v1065, %v1065
  %v1098 = vpack.c.b16 %v1066, %v1066
  %v1099 = vpack.c.b16 %v1067, %v1067
  %v1100 = vpack.c.b16 %v1068, %v1068
  %v1101 = vpack.c.b16 %v1069, %v1069
  %v1102 = vpack.c.b16 %v1070, %v1070
  %v1103 = vpack.c.b16 %v1071, %v1071
  %v1104 = vpack.c.b16 %v1072, %v1072
  %v1105 = vpack.c.b16 %v1073, %v1073
  %v1106 = vpack.c.b16 %v1074, %v1074
  %v1107 = vpack.c.b16 %v1075, %v1075
  %v1108 = vpack.c.b16 %v1076, %v1076
  %v1109 = vpack.c.b16 %v1077, %v1077
  %v1110 = vpack.c.b16 %v1078, %v1078
  %v1111 = vpack.c.b16 %v1079, %v1079
  %1144 = vst [vmem:[%s3] sm:$0xf] %v1080
  %1145 = vst [vmem:[%s3 + $0x4] sm:$0xf] %v1081
  %1146 = vst [vmem:[%s3 + $0x8] sm:$0xf] %v1082
  %1147 = vst [vmem:[%s3 + $0xc] sm:$0xf] %v1083
  %1148 = vst [vmem:[%s3 + $0x10] sm:$0xf] %v1084
  %1149 = vst [vmem:[%s3 + $0x14] sm:$0xf] %v1085
  %1150 = vst [vmem:[%s3 + $0x18] sm:$0xf] %v1086
  %1151 = vst [vmem:[%s3 + $0x1c] sm:$0xf] %v1087
  %1152 = vst [vmem:[%s3 + $0x20] sm:$0xf] %v1088
  %1153 = vst [vmem:[%s3 + $0x24] sm:$0xf] %v1089
  %1154 = vst [vmem:[%s3 + $0x28] sm:$0xf] %v1090
  %1155 = vst [vmem:[%s3 + $0x2c] sm:$0xf] %v1091
  %1156 = vst [vmem:[%s3 + $0x30] sm:$0xf] %v1092
  %1157 = vst [vmem:[%s3 + $0x34] sm:$0xf] %v1093
  %1158 = vst [vmem:[%s3 + $0x38] sm:$0xf] %v1094
  %1159 = vst [vmem:[%s3 + $0x3c] sm:$0xf] %v1095
  %1160 = vst [vmem:[%s3 + $0x40] sm:$0xf] %v1096
  %1161 = vst [vmem:[%s3 + $0x44] sm:$0xf] %v1097
  %1162 = vst [vmem:[%s3 + $0x48] sm:$0xf] %v1098
  %1163 = vst [vmem:[%s3 + $0x4c] sm:$0xf] %v1099
  %1164 = vst [vmem:[%s3 + $0x50] sm:$0xf] %v1100
  %1165 = vst [vmem:[%s3 + $0x54] sm:$0xf] %v1101
  %1166 = vst [vmem:[%s3 + $0x58] sm:$0xf] %v1102
  %1167 = vst [vmem:[%s3 + $0x5c] sm:$0xf] %v1103
  %1168 = vst [vmem:[%s3 + $0x60] sm:$0xf] %v1104
  %1169 = vst [vmem:[%s3 + $0x64] sm:$0xf] %v1105
  %1170 = vst [vmem:[%s3 + $0x68] sm:$0xf] %v1106
  %1171 = vst [vmem:[%s3 + $0x6c] sm:$0xf] %v1107
  %1172 = vst [vmem:[%s3 + $0x70] sm:$0xf] %v1108
  %1173 = vst [vmem:[%s3 + $0x74] sm:$0xf] %v1109
  %1174 = vst [vmem:[%s3 + $0x78] sm:$0xf] %v1110
  %1175 = vst [vmem:[%s3 + $0x7c] sm:$0xf] %v1111
  // Predicated region
  $region14: #{cnnbase_forward.5} parent=0 // pred_check
    _
  $region15: #{cnnbase_forward.5} parent=0 // pred_check_branch
    %1177 = sbr.rel (0) target = $region17
  $region16: #{cnnbase_forward.5} parent=0 // pred_region
    _
  $region17: #{cnnbase_forward.5} parent=0 // pred_fallthru
    _
  // Predicated region
  $region18: #{cnnbase_forward.5} parent=0 // pred_check
    _
  $region19: #{cnnbase_forward.5} parent=0 // pred_check_branch
    %1179 = sbr.rel (0) target = $region21
  $region20: #{cnnbase_forward.5} parent=0 // pred_region
    _
  $region21: #{cnnbase_forward.5} parent=0 // pred_fallthru
    _

// kernel: cnnbase_forward.6
$region0: #{cnnbase_forward.6}
  #allocation0 [shape = 'u32[]', space=smem, size = 0x4, offset = 0x4, fixed_abs, tag = 'smem constant byte address 0x4 - core index']
  #allocation1 [shape = 'u32[144,128]{1,0:T(1,128)}', space=vmem, size = 0x12000, scoped, tag = 'internal scratch']
  %s0 = inlined_call_operand.vmem [shape: bf16[128,640], index: 0, kind: input, shape index: {}]
  %s1 = inlined_call_operand.vmem [shape: bf16[640,128], index: 1, kind: input, shape index: {}]
  %s2 = inlined_call_operand.vmem [shape: f32[1,128], index: 2, kind: input, shape index: {}]
  %s3 = inlined_call_operand.vmem [shape: bf16[128,128], index: 3, kind: output, shape index: {}]
  %s4 = sld [smem:[#allocation0]]
  $region22: #{cnnbase_forward.6} parent=0
    _
  %s6 = ssub.s32 1, %s4
  %s7 = scalar_select 0, %s6, %s4
  // Predicated region
  $region2: #{cnnbase_forward.6} parent=0 // pred_check
    _
  $region3: #{cnnbase_forward.6} parent=0 // pred_check_branch
    %9 = sbr.rel (0) target = $region5
  $region4: #{cnnbase_forward.6} parent=0 // pred_region
    _
  $region5: #{cnnbase_forward.6} parent=0 // pred_fallthru
    _
  // Predicated region
  $region6: #{cnnbase_forward.6} parent=0 // pred_check
    _
  $region7: #{cnnbase_forward.6} parent=0 // pred_check_branch
    %11 = sbr.rel (0) target = $region9
  $region8: #{cnnbase_forward.6} parent=0 // pred_region
    _
  $region9: #{cnnbase_forward.6} parent=0 // pred_fallthru
    _
  // Predicated region
  $region10: #{cnnbase_forward.6} parent=0 // pred_check
    _
  $region11: #{cnnbase_forward.6} parent=0 // pred_check_branch
    %13 = sbr.rel (0) target = $region13
  $region12: #{cnnbase_forward.6} parent=0 // pred_region
    _
  $region13: #{cnnbase_forward.6} parent=0 // pred_fallthru
    _
  %v15 = vld [vmem:[%s0] sm:$0xff]
  %v16 = vld [vmem:[%s0 + $0x8] sm:$0xff]
  %v17 = vld [vmem:[%s0 + $0x10] sm:$0xf]
  %v18 = vld [vmem:[%s0 + $0x14] sm:$0xff]
  %v19 = vld [vmem:[%s0 + $0x1c] sm:$0xff]
  %v20 = vld [vmem:[%s0 + $0x24] sm:$0xf]
  %v21 = vld [vmem:[%s0 + $0x28] sm:$0xff]
  %v22 = vld [vmem:[%s0 + $0x30] sm:$0xff]
  %v23 = vld [vmem:[%s0 + $0x38] sm:$0xf]
  %v24 = vld [vmem:[%s0 + $0x3c] sm:$0xff]
  %v25 = vld [vmem:[%s0 + $0x44] sm:$0xff]
  %v26 = vld [vmem:[%s0 + $0x4c] sm:$0xf]
  %v27 = vld [vmem:[%s0 + $0x50] sm:$0xff]
  %v28 = vld [vmem:[%s0 + $0x58] sm:$0xff]
  %v29 = vld [vmem:[%s0 + $0x60] sm:$0xf]
  %v30 = vld [vmem:[%s0 + $0x64] sm:$0xff]
  %v31 = vld [vmem:[%s0 + $0x6c] sm:$0xff]
  %v32 = vld [vmem:[%s0 + $0x74] sm:$0xf]
  %v33 = vld [vmem:[%s0 + $0x78] sm:$0xff]
  %v34 = vld [vmem:[%s0 + $0x80] sm:$0xff]
  %v35 = vld [vmem:[%s0 + $0x88] sm:$0xf]
  %v36 = vld [vmem:[%s0 + $0x8c] sm:$0xff]
  %v37 = vld [vmem:[%s0 + $0x94] sm:$0xff]
  %v38 = vld [vmem:[%s0 + $0x9c] sm:$0xf]
  %v39 = vld [vmem:[%s0 + $0xa0] sm:$0xff]
  %v40 = vld [vmem:[%s0 + $0xa8] sm:$0xff]
  %v41 = vld [vmem:[%s0 + $0xb0] sm:$0xf]
  %v42 = vld [vmem:[%s0 + $0xb4] sm:$0xff]
  %v43 = vld [vmem:[%s0 + $0xbc] sm:$0xff]
  %v44 = vld [vmem:[%s0 + $0xc4] sm:$0xf]
  %v45 = vld [vmem:[%s0 + $0xc8] sm:$0xff]
  %v46 = vld [vmem:[%s0 + $0xd0] sm:$0xff]
  %v47 = vld [vmem:[%s0 + $0xd8] sm:$0xf]
  %v48 = vld [vmem:[%s0 + $0xdc] sm:$0xff]
  %v49 = vld [vmem:[%s0 + $0xe4] sm:$0xff]
  %v50 = vld [vmem:[%s0 + $0xec] sm:$0xf]
  %v51 = vld [vmem:[%s0 + $0xf0] sm:$0xff]
  %v52 = vld [vmem:[%s0 + $0xf8] sm:$0xff]
  %v53 = vld [vmem:[%s0 + $0x100] sm:$0xf]
  %v54 = vld [vmem:[%s0 + $0x104] sm:$0xff]
  %v55 = vld [vmem:[%s0 + $0x10c] sm:$0xff]
  %v56 = vld [vmem:[%s0 + $0x114] sm:$0xf]
  %v57 = vld [vmem:[%s0 + $0x118] sm:$0xff]
  %v58 = vld [vmem:[%s0 + $0x120] sm:$0xff]
  %v59 = vld [vmem:[%s0 + $0x128] sm:$0xf]
  %v60 = vld [vmem:[%s0 + $0x12c] sm:$0xff]
  %v61 = vld [vmem:[%s0 + $0x134] sm:$0xff]
  %v62 = vld [vmem:[%s0 + $0x13c] sm:$0xf]
  %v63 = vld [vmem:[%s1] sm:$0xf]
  %v64 = vld [vmem:[%s1 + $0x4] sm:$0xf]
  %v65 = vld [vmem:[%s1 + $0x8] sm:$0xf]
  %v66 = vld [vmem:[%s1 + $0xc] sm:$0xf]
  %v67 = vld [vmem:[%s1 + $0x10] sm:$0xf]
  %v68 = vld [vmem:[%s1 + $0x14] sm:$0xf]
  %v69 = vld [vmem:[%s1 + $0x18] sm:$0xf]
  %v70 = vld [vmem:[%s1 + $0x1c] sm:$0xf]
  %v71 = vld [vmem:[%s1 + $0x20] sm:$0xf]
  %v72 = vld [vmem:[%s1 + $0x24] sm:$0xf]
  %v73 = vld [vmem:[%s1 + $0x28] sm:$0xf]
  %v74 = vld [vmem:[%s1 + $0x2c] sm:$0xf]
  %v75 = vld [vmem:[%s1 + $0x30] sm:$0xf]
  %v76 = vld [vmem:[%s1 + $0x34] sm:$0xf]
  %v77 = vld [vmem:[%s1 + $0x38] sm:$0xf]
  %v78 = vld [vmem:[%s1 + $0x3c] sm:$0xf]
  %v79 = vld [vmem:[%s1 + $0x40] sm:$0xf]
  %v80 = vld [vmem:[%s1 + $0x44] sm:$0xf]
  %v81 = vld [vmem:[%s1 + $0x48] sm:$0xf]
  %v82 = vld [vmem:[%s1 + $0x4c] sm:$0xf]
  %v83 = vld [vmem:[%s1 + $0x50] sm:$0xf]
  %v84 = vld [vmem:[%s1 + $0x54] sm:$0xf]
  %v85 = vld [vmem:[%s1 + $0x58] sm:$0xf]
  %v86 = vld [vmem:[%s1 + $0x5c] sm:$0xf]
  %v87 = vld [vmem:[%s1 + $0x60] sm:$0xf]
  %v88 = vld [vmem:[%s1 + $0x64] sm:$0xf]
  %v89 = vld [vmem:[%s1 + $0x68] sm:$0xf]
  %v90 = vld [vmem:[%s1 + $0x6c] sm:$0xf]
  %v91 = vld [vmem:[%s1 + $0x70] sm:$0xf]
  %v92 = vld [vmem:[%s1 + $0x74] sm:$0xf]
  %v93 = vld [vmem:[%s1 + $0x78] sm:$0xf]
  %v94 = vld [vmem:[%s1 + $0x7c] sm:$0xf]
  %v95 = vld [vmem:[%s1 + $0x80] sm:$0xf]
  %v96 = vld [vmem:[%s1 + $0x84] sm:$0xf]
  %v97 = vld [vmem:[%s1 + $0x88] sm:$0xf]
  %v98 = vld [vmem:[%s1 + $0x8c] sm:$0xf]
  %v99 = vld [vmem:[%s1 + $0x90] sm:$0xf]
  %v100 = vld [vmem:[%s1 + $0x94] sm:$0xf]
  %v101 = vld [vmem:[%s1 + $0x98] sm:$0xf]
  %v102 = vld [vmem:[%s1 + $0x9c] sm:$0xf]
  %v103 = vld [vmem:[%s1 + $0xa0] sm:$0xf]
  %v104 = vld [vmem:[%s1 + $0xa4] sm:$0xf]
  %v105 = vld [vmem:[%s1 + $0xa8] sm:$0xf]
  %v106 = vld [vmem:[%s1 + $0xac] sm:$0xf]
  %v107 = vld [vmem:[%s1 + $0xb0] sm:$0xf]
  %v108 = vld [vmem:[%s1 + $0xb4] sm:$0xf]
  %v109 = vld [vmem:[%s1 + $0xb8] sm:$0xf]
  %v110 = vld [vmem:[%s1 + $0xbc] sm:$0xf]
  %v111 = vld [vmem:[%s1 + $0xc0] sm:$0xf]
  %v112 = vld [vmem:[%s1 + $0xc4] sm:$0xf]
  %v113 = vld [vmem:[%s1 + $0xc8] sm:$0xf]
  %v114 = vld [vmem:[%s1 + $0xcc] sm:$0xf]
  %v115 = vld [vmem:[%s1 + $0xd0] sm:$0xf]
  %v116 = vld [vmem:[%s1 + $0xd4] sm:$0xf]
  %v117 = vld [vmem:[%s1 + $0xd8] sm:$0xf]
  %v118 = vld [vmem:[%s1 + $0xdc] sm:$0xf]
  %v119 = vld [vmem:[%s1 + $0xe0] sm:$0xf]
  %v120 = vld [vmem:[%s1 + $0xe4] sm:$0xf]
  %v121 = vld [vmem:[%s1 + $0xe8] sm:$0xf]
  %v122 = vld [vmem:[%s1 + $0xec] sm:$0xf]
  %v123 = vld [vmem:[%s1 + $0xf0] sm:$0xf]
  %v124 = vld [vmem:[%s1 + $0xf4] sm:$0xf]
  %v125 = vld [vmem:[%s1 + $0xf8] sm:$0xf]
  %v126 = vld [vmem:[%s1 + $0xfc] sm:$0xf]
  %v127 = vld [vmem:[%s1 + $0x100] sm:$0xf]
  %v128 = vld [vmem:[%s1 + $0x104] sm:$0xf]
  %v129 = vld [vmem:[%s1 + $0x108] sm:$0xf]
  %v130 = vld [vmem:[%s1 + $0x10c] sm:$0xf]
  %v131 = vld [vmem:[%s1 + $0x110] sm:$0xf]
  %v132 = vld [vmem:[%s1 + $0x114] sm:$0xf]
  %v133 = vld [vmem:[%s1 + $0x118] sm:$0xf]
  %v134 = vld [vmem:[%s1 + $0x11c] sm:$0xf]
  %v135 = vld [vmem:[%s1 + $0x120] sm:$0xf]
  %v136 = vld [vmem:[%s1 + $0x124] sm:$0xf]
  %v137 = vld [vmem:[%s1 + $0x128] sm:$0xf]
  %v138 = vld [vmem:[%s1 + $0x12c] sm:$0xf]
  %v139 = vld [vmem:[%s1 + $0x130] sm:$0xf]
  %v140 = vld [vmem:[%s1 + $0x134] sm:$0xf]
  %v141 = vld [vmem:[%s1 + $0x138] sm:$0xf]
  %v142 = vld [vmem:[%s1 + $0x13c] sm:$0xf]
  %v143 = vld [vmem:[%s2] sm:$0x1]
  %v145 = vlaneseq
  %v146 = vshrl.u32 %v145, 7
  %v147 = vsub.s32 0, %v146
  %v148 = vrot.slane %v143, %v147
  %v198 = vunpack.c.l.b16 %v15
  %v199 = vunpack.c.h.b16 %v15
  %v200 = vunpack.c.l.b16 %v16
  %v201 = vunpack.c.h.b16 %v16
  %v202 = vunpack.c.l.b16 %v17
  %v203 = vunpack.c.l.b16 %v18
  %v204 = vunpack.c.h.b16 %v18
  %v205 = vunpack.c.l.b16 %v19
  %v206 = vunpack.c.h.b16 %v19
  %v207 = vunpack.c.l.b16 %v20
  %v208 = vunpack.c.l.b16 %v21
  %v209 = vunpack.c.h.b16 %v21
  %v210 = vunpack.c.l.b16 %v22
  %v211 = vunpack.c.h.b16 %v22
  %v212 = vunpack.c.l.b16 %v23
  %v213 = vunpack.c.l.b16 %v24
  %v214 = vunpack.c.h.b16 %v24
  %v215 = vunpack.c.l.b16 %v25
  %v216 = vunpack.c.h.b16 %v25
  %v217 = vunpack.c.l.b16 %v26
  %v218 = vunpack.c.l.b16 %v27
  %v219 = vunpack.c.h.b16 %v27
  %v220 = vunpack.c.l.b16 %v28
  %v221 = vunpack.c.h.b16 %v28
  %v222 = vunpack.c.l.b16 %v29
  %v223 = vunpack.c.l.b16 %v30
  %v224 = vunpack.c.h.b16 %v30
  %v225 = vunpack.c.l.b16 %v31
  %v226 = vunpack.c.h.b16 %v31
  %v227 = vunpack.c.l.b16 %v32
  %v228 = vunpack.c.l.b16 %v33
  %v229 = vunpack.c.h.b16 %v33
  %v230 = vunpack.c.l.b16 %v34
  %v231 = vunpack.c.h.b16 %v34
  %v232 = vunpack.c.l.b16 %v35
  %v233 = vunpack.c.l.b16 %v36
  %v234 = vunpack.c.h.b16 %v36
  %v235 = vunpack.c.l.b16 %v37
  %v236 = vunpack.c.h.b16 %v37
  %v237 = vunpack.c.l.b16 %v38
  %v238 = vunpack.c.l.b16 %v39
  %v239 = vunpack.c.h.b16 %v39
  %v240 = vunpack.c.l.b16 %v40
  %v241 = vunpack.c.h.b16 %v40
  %v242 = vunpack.c.l.b16 %v41
  %v243 = vunpack.c.l.b16 %v42
  %v244 = vunpack.c.h.b16 %v42
  %v245 = vunpack.c.l.b16 %v43
  %v246 = vunpack.c.h.b16 %v43
  %v247 = vunpack.c.l.b16 %v44
  %v248 = vunpack.c.l.b16 %v45
  %v249 = vunpack.c.h.b16 %v45
  %v250 = vunpack.c.l.b16 %v46
  %v251 = vunpack.c.h.b16 %v46
  %v252 = vunpack.c.l.b16 %v47
  %v253 = vunpack.c.l.b16 %v48
  %v254 = vunpack.c.h.b16 %v48
  %v255 = vunpack.c.l.b16 %v49
  %v256 = vunpack.c.h.b16 %v49
  %v257 = vunpack.c.l.b16 %v50
  %v258 = vunpack.c.l.b16 %v51
  %v259 = vunpack.c.h.b16 %v51
  %v260 = vunpack.c.l.b16 %v52
  %v261 = vunpack.c.h.b16 %v52
  %v262 = vunpack.c.l.b16 %v53
  %v263 = vunpack.c.l.b16 %v54
  %v264 = vunpack.c.h.b16 %v54
  %v265 = vunpack.c.l.b16 %v55
  %v266 = vunpack.c.h.b16 %v55
  %v267 = vunpack.c.l.b16 %v56
  %v268 = vunpack.c.l.b16 %v57
  %v269 = vunpack.c.h.b16 %v57
  %v270 = vunpack.c.l.b16 %v58
  %v271 = vunpack.c.h.b16 %v58
  %v272 = vunpack.c.l.b16 %v59
  %v273 = vunpack.c.l.b16 %v60
  %v274 = vunpack.c.h.b16 %v60
  %v275 = vunpack.c.l.b16 %v61
  %v276 = vunpack.c.h.b16 %v61
  %v277 = vunpack.c.l.b16 %v62
  %v278 = vpack.c.b16 %v203, %v198
  %v279 = vpack.c.b16 %v204, %v199
  %v280 = vpack.c.b16 %v205, %v200
  %v281 = vpack.c.b16 %v206, %v201
  %v282 = vpack.c.b16 %v207, %v202
  %v283 = vpack.c.b16 %v213, %v208
  %v284 = vpack.c.b16 %v214, %v209
  %v285 = vpack.c.b16 %v215, %v210
  %v286 = vpack.c.b16 %v216, %v211
  %v287 = vpack.c.b16 %v217, %v212
  %v288 = vpack.c.b16 %v223, %v218
  %v289 = vpack.c.b16 %v224, %v219
  %v290 = vpack.c.b16 %v225, %v220
  %v291 = vpack.c.b16 %v226, %v221
  %v292 = vpack.c.b16 %v227, %v222
  %v293 = vpack.c.b16 %v233, %v228
  %v294 = vpack.c.b16 %v234, %v229
  %v295 = vpack.c.b16 %v235, %v230
  %v296 = vpack.c.b16 %v236, %v231
  %v297 = vpack.c.b16 %v237, %v232
  %v298 = vpack.c.b16 %v243, %v238
  %v299 = vpack.c.b16 %v244, %v239
  %v300 = vpack.c.b16 %v245, %v240
  %v301 = vpack.c.b16 %v246, %v241
  %v302 = vpack.c.b16 %v247, %v242
  %v303 = vpack.c.b16 %v253, %v248
  %v304 = vpack.c.b16 %v254, %v249
  %v305 = vpack.c.b16 %v255, %v250
  %v306 = vpack.c.b16 %v256, %v251
  %v307 = vpack.c.b16 %v257, %v252
  %v308 = vpack.c.b16 %v263, %v258
  %v309 = vpack.c.b16 %v264, %v259
  %v310 = vpack.c.b16 %v265, %v260
  %v311 = vpack.c.b16 %v266, %v261
  %v312 = vpack.c.b16 %v267, %v262
  %v313 = vpack.c.b16 %v273, %v268
  %v314 = vpack.c.b16 %v274, %v269
  %v315 = vpack.c.b16 %v275, %v270
  %v316 = vpack.c.b16 %v276, %v271
  %v317 = vpack.c.b16 %v277, %v272
  %v438 = vunpack.c.l.b16 %v63
  %v439 = vunpack.c.l.b16 %v64
  %v440 = vunpack.c.l.b16 %v65
  %v441 = vunpack.c.l.b16 %v66
  %v442 = vunpack.c.l.b16 %v67
  %v443 = vunpack.c.l.b16 %v68
  %v444 = vunpack.c.l.b16 %v69
  %v445 = vunpack.c.l.b16 %v70
  %v446 = vunpack.c.l.b16 %v71
  %v447 = vunpack.c.l.b16 %v72
  %v448 = vunpack.c.l.b16 %v73
  %v449 = vunpack.c.l.b16 %v74
  %v450 = vunpack.c.l.b16 %v75
  %v451 = vunpack.c.l.b16 %v76
  %v452 = vunpack.c.l.b16 %v77
  %v453 = vunpack.c.l.b16 %v78
  %v454 = vunpack.c.l.b16 %v79
  %v455 = vunpack.c.l.b16 %v80
  %v456 = vunpack.c.l.b16 %v81
  %v457 = vunpack.c.l.b16 %v82
  %v458 = vunpack.c.l.b16 %v83
  %v459 = vunpack.c.l.b16 %v84
  %v460 = vunpack.c.l.b16 %v85
  %v461 = vunpack.c.l.b16 %v86
  %v462 = vunpack.c.l.b16 %v87
  %v463 = vunpack.c.l.b16 %v88
  %v464 = vunpack.c.l.b16 %v89
  %v465 = vunpack.c.l.b16 %v90
  %v466 = vunpack.c.l.b16 %v91
  %v467 = vunpack.c.l.b16 %v92
  %v468 = vunpack.c.l.b16 %v93
  %v469 = vunpack.c.l.b16 %v94
  %v470 = vunpack.c.l.b16 %v95
  %v471 = vunpack.c.l.b16 %v96
  %v472 = vunpack.c.l.b16 %v97
  %v473 = vunpack.c.l.b16 %v98
  %v474 = vunpack.c.l.b16 %v99
  %v475 = vunpack.c.l.b16 %v100
  %v476 = vunpack.c.l.b16 %v101
  %v477 = vunpack.c.l.b16 %v102
  %v478 = vunpack.c.l.b16 %v103
  %v479 = vunpack.c.l.b16 %v104
  %v480 = vunpack.c.l.b16 %v105
  %v481 = vunpack.c.l.b16 %v106
  %v482 = vunpack.c.l.b16 %v107
  %v483 = vunpack.c.l.b16 %v108
  %v484 = vunpack.c.l.b16 %v109
  %v485 = vunpack.c.l.b16 %v110
  %v486 = vunpack.c.l.b16 %v111
  %v487 = vunpack.c.l.b16 %v112
  %v488 = vunpack.c.l.b16 %v113
  %v489 = vunpack.c.l.b16 %v114
  %v490 = vunpack.c.l.b16 %v115
  %v491 = vunpack.c.l.b16 %v116
  %v492 = vunpack.c.l.b16 %v117
  %v493 = vunpack.c.l.b16 %v118
  %v494 = vunpack.c.l.b16 %v119
  %v495 = vunpack.c.l.b16 %v120
  %v496 = vunpack.c.l.b16 %v121
  %v497 = vunpack.c.l.b16 %v122
  %v498 = vunpack.c.l.b16 %v123
  %v499 = vunpack.c.l.b16 %v124
  %v500 = vunpack.c.l.b16 %v125
  %v501 = vunpack.c.l.b16 %v126
  %v502 = vunpack.c.l.b16 %v127
  %v503 = vunpack.c.l.b16 %v128
  %v504 = vunpack.c.l.b16 %v129
  %v505 = vunpack.c.l.b16 %v130
  %v506 = vunpack.c.l.b16 %v131
  %v507 = vunpack.c.l.b16 %v132
  %v508 = vunpack.c.l.b16 %v133
  %v509 = vunpack.c.l.b16 %v134
  %v510 = vunpack.c.l.b16 %v135
  %v511 = vunpack.c.l.b16 %v136
  %v512 = vunpack.c.l.b16 %v137
  %v513 = vunpack.c.l.b16 %v138
  %v514 = vunpack.c.l.b16 %v139
  %v515 = vunpack.c.l.b16 %v140
  %v516 = vunpack.c.l.b16 %v141
  %v517 = vunpack.c.l.b16 %v142
  %v518 = vpack.c.b16 %v439, %v438
  %v519 = vpack.c.b16 %v441, %v440
  %v520 = vpack.c.b16 %v443, %v442
  %v521 = vpack.c.b16 %v445, %v444
  %v522 = vpack.c.b16 %v447, %v446
  %v523 = vpack.c.b16 %v449, %v448
  %v524 = vpack.c.b16 %v451, %v450
  %v525 = vpack.c.b16 %v453, %v452
  %v526 = vpack.c.b16 %v455, %v454
  %v527 = vpack.c.b16 %v457, %v456
  %v528 = vpack.c.b16 %v459, %v458
  %v529 = vpack.c.b16 %v461, %v460
  %v530 = vpack.c.b16 %v463, %v462
  %v531 = vpack.c.b16 %v465, %v464
  %v532 = vpack.c.b16 %v467, %v466
  %v533 = vpack.c.b16 %v469, %v468
  %v534 = vpack.c.b16 %v471, %v470
  %v535 = vpack.c.b16 %v473, %v472
  %v536 = vpack.c.b16 %v475, %v474
  %v537 = vpack.c.b16 %v477, %v476
  %v538 = vpack.c.b16 %v479, %v478
  %v539 = vpack.c.b16 %v481, %v480
  %v540 = vpack.c.b16 %v483, %v482
  %v541 = vpack.c.b16 %v485, %v484
  %v542 = vpack.c.b16 %v487, %v486
  %v543 = vpack.c.b16 %v489, %v488
  %v544 = vpack.c.b16 %v491, %v490
  %v545 = vpack.c.b16 %v493, %v492
  %v546 = vpack.c.b16 %v495, %v494
  %v547 = vpack.c.b16 %v497, %v496
  %v548 = vpack.c.b16 %v499, %v498
  %v549 = vpack.c.b16 %v501, %v500
  %v550 = vpack.c.b16 %v503, %v502
  %v551 = vpack.c.b16 %v505, %v504
  %v552 = vpack.c.b16 %v507, %v506
  %v553 = vpack.c.b16 %v509, %v508
  %v554 = vpack.c.b16 %v511, %v510
  %v555 = vpack.c.b16 %v513, %v512
  %v556 = vpack.c.b16 %v515, %v514
  %v557 = vpack.c.b16 %v517, %v516
  %598 = vmatprep.subr.bf16.mxu0 0
  %599 = vmatpush1.bf16.msra.mxu0 %v518
  %600 = vmatprep.subr.bf16.mxu0 0
  %601 = vmatpush1.bf16.msra.mxu0 %v519
  %602 = vmatprep.subr.bf16.mxu0 0
  %603 = vmatpush1.bf16.msra.mxu0 %v520
  %604 = vmatprep.subr.bf16.mxu0 0
  %605 = vmatpush1.bf16.msra.mxu0 %v521
  %606 = vmatprep.subr.bf16.mxu0 0
  %607 = vmatpush1.bf16.msra.mxu0 %v522
  %608 = vmatprep.subr.bf16.mxu0 0
  %609 = vmatpush1.bf16.msra.mxu0 %v523
  %610 = vmatprep.subr.bf16.mxu0 0
  %611 = vmatpush1.bf16.msra.mxu0 %v524
  %612 = vmatprep.subr.bf16.mxu0 0
  %613 = vmatpush1.bf16.msra.mxu0 %v525
  %614 = vmatprep.subr.bf16.mxu0 0
  %615 = vmatpush1.bf16.msra.mxu0 %v526
  %616 = vmatprep.subr.bf16.mxu0 0
  %617 = vmatpush1.bf16.msra.mxu0 %v527
  %618 = vmatprep.subr.bf16.mxu0 0
  %619 = vmatpush1.bf16.msra.mxu0 %v528
  %620 = vmatprep.subr.bf16.mxu0 0
  %621 = vmatpush1.bf16.msra.mxu0 %v529
  %622 = vmatprep.subr.bf16.mxu0 0
  %623 = vmatpush1.bf16.msra.mxu0 %v530
  %624 = vmatprep.subr.bf16.mxu0 0
  %625 = vmatpush1.bf16.msra.mxu0 %v531
  %626 = vmatprep.subr.bf16.mxu0 0
  %627 = vmatpush1.bf16.msra.mxu0 %v532
  %628 = vmatprep.subr.bf16.mxu0 0
  %629 = vmatpush1.bf16.msra.mxu0 %v533
  %630 = vmatprep.mubr.bf16.mxu0 %v279
  %631 = vmatmul.mubr.bf16.gmra.mrb[0].mxu0 %v278
  %v632 = vpop.f32.mrb[0].mxu0
  %v633 = vadd.f32 %v148, %v632
  %v634 = vpop.f32.mrb[0].mxu0
  %v635 = vpop.f32.mrb[0].mxu0
  %v636 = vadd.f32 %v148, %v635
  %v637 = vpop.f32.mrb[0].mxu0
  %638 = vmatprep.mubr.bf16.mxu0 %v284
  %639 = vmatmul.mubr.bf16.gmra.mrb[0].mxu0 %v283
  %v640 = vpop.f32.mrb[0].mxu0
  %v641 = vadd.f32 %v148, %v640
  %v642 = vpop.f32.mrb[0].mxu0
  %v643 = vpop.f32.mrb[0].mxu0
  %v644 = vadd.f32 %v148, %v643
  %v645 = vpop.f32.mrb[0].mxu0
  %646 = vmatprep.mubr.bf16.mxu0 %v289
  %647 = vmatmul.mubr.bf16.gmra.mrb[0].mxu0 %v288
  %v648 = vpop.f32.mrb[0].mxu0
  %v649 = vadd.f32 %v148, %v648
  %v650 = vpop.f32.mrb[0].mxu0
  %v651 = vpop.f32.mrb[0].mxu0
  %v652 = vadd.f32 %v148, %v651
  %v653 = vpop.f32.mrb[0].mxu0
  %654 = vmatprep.mubr.bf16.mxu0 %v294
  %655 = vmatmul.mubr.bf16.gmra.mrb[0].mxu0 %v293
  %v656 = vpop.f32.mrb[0].mxu0
  %v657 = vadd.f32 %v148, %v656
  %v658 = vpop.f32.mrb[0].mxu0
  %v659 = vpop.f32.mrb[0].mxu0
  %v660 = vadd.f32 %v148, %v659
  %v661 = vpop.f32.mrb[0].mxu0
  %662 = vmatprep.mubr.bf16.mxu0 %v299
  %663 = vmatmul.mubr.bf16.gmra.mrb[0].mxu0 %v298
  %v664 = vpop.f32.mrb[0].mxu0
  %v665 = vadd.f32 %v148, %v664
  %v666 = vpop.f32.mrb[0].mxu0
  %v667 = vpop.f32.mrb[0].mxu0
  %v668 = vadd.f32 %v148, %v667
  %v669 = vpop.f32.mrb[0].mxu0
  %670 = vmatprep.mubr.bf16.mxu0 %v304
  %671 = vmatmul.mubr.bf16.gmra.mrb[0].mxu0 %v303
  %v672 = vpop.f32.mrb[0].mxu0
  %v673 = vadd.f32 %v148, %v672
  %v674 = vpop.f32.mrb[0].mxu0
  %v675 = vpop.f32.mrb[0].mxu0
  %v676 = vadd.f32 %v148, %v675
  %v677 = vpop.f32.mrb[0].mxu0
  %678 = vmatprep.mubr.bf16.mxu0 %v309
  %679 = vmatmul.mubr.bf16.gmra.mrb[0].mxu0 %v308
  %v680 = vpop.f32.mrb[0].mxu0
  %v681 = vadd.f32 %v148, %v680
  %v682 = vpop.f32.mrb[0].mxu0
  %v683 = vpop.f32.mrb[0].mxu0
  %v684 = vadd.f32 %v148, %v683
  %v685 = vpop.f32.mrb[0].mxu0
  %686 = vmatprep.mubr.bf16.mxu0 %v314
  %687 = vmatmul.mubr.bf16.gmra.mrb[0].mxu0 %v313
  %v688 = vpop.f32.mrb[0].mxu0
  %v689 = vadd.f32 %v148, %v688
  %v690 = vpop.f32.mrb[0].mxu0
  %v691 = vpop.f32.mrb[0].mxu0
  %v692 = vadd.f32 %v148, %v691
  %v693 = vpop.f32.mrb[0].mxu0
  %694 = vdwg.mxu0
  %695 = vmatprep.subr.bf16.mxu0 0
  %696 = vmatpush1.bf16.msra.mxu0 %v534
  %697 = vmatprep.subr.bf16.mxu0 0
  %698 = vmatpush1.bf16.msra.mxu0 %v535
  %699 = vmatprep.subr.bf16.mxu0 0
  %700 = vmatpush1.bf16.msra.mxu0 %v536
  %701 = vmatprep.subr.bf16.mxu0 0
  %702 = vmatpush1.bf16.msra.mxu0 %v537
  %703 = vmatprep.subr.bf16.mxu0 0
  %704 = vmatpush1.bf16.msra.mxu0 %v538
  %705 = vmatprep.subr.bf16.mxu0 0
  %706 = vmatpush1.bf16.msra.mxu0 %v539
  %707 = vmatprep.subr.bf16.mxu0 0
  %708 = vmatpush1.bf16.msra.mxu0 %v540
  %709 = vmatprep.subr.bf16.mxu0 0
  %710 = vmatpush1.bf16.msra.mxu0 %v541
  %711 = vmatprep.subr.bf16.mxu0 0
  %712 = vmatpush1.bf16.msra.mxu0 %v542
  %713 = vmatprep.subr.bf16.mxu0 0
  %714 = vmatpush1.bf16.msra.mxu0 %v543
  %715 = vmatprep.subr.bf16.mxu0 0
  %716 = vmatpush1.bf16.msra.mxu0 %v544
  %717 = vmatprep.subr.bf16.mxu0 0
  %718 = vmatpush1.bf16.msra.mxu0 %v545
  %719 = vmatprep.subr.bf16.mxu0 0
  %720 = vmatpush1.bf16.msra.mxu0 %v546
  %721 = vmatprep.subr.bf16.mxu0 0
  %722 = vmatpush1.bf16.msra.mxu0 %v547
  %723 = vmatprep.subr.bf16.mxu0 0
  %724 = vmatpush1.bf16.msra.mxu0 %v548
  %725 = vmatprep.subr.bf16.mxu0 0
  %726 = vmatpush1.bf16.msra.mxu0 %v549
  %727 = vmatprep.mubr.bf16.mxu0 %v281
  %728 = vmatmul.mubr.bf16.gmra.mrb[0].mxu0 %v280
  %v729 = vpop.f32.mrb[0].mxu0
  %v730 = vadd.f32 %v633, %v729
  %v731 = vpop.f32.mrb[0].mxu0
  %v732 = vpop.f32.mrb[0].mxu0
  %v733 = vadd.f32 %v636, %v732
  %v734 = vpop.f32.mrb[0].mxu0
  %735 = vmatprep.mubr.bf16.mxu0 %v286
  %736 = vmatmul.mubr.bf16.gmra.mrb[0].mxu0 %v285
  %v737 = vpop.f32.mrb[0].mxu0
  %v738 = vadd.f32 %v641, %v737
  %v739 = vpop.f32.mrb[0].mxu0
  %v740 = vpop.f32.mrb[0].mxu0
  %v741 = vadd.f32 %v644, %v740
  %v742 = vpop.f32.mrb[0].mxu0
  %743 = vmatprep.mubr.bf16.mxu0 %v291
  %744 = vmatmul.mubr.bf16.gmra.mrb[0].mxu0 %v290
  %v745 = vpop.f32.mrb[0].mxu0
  %v746 = vadd.f32 %v649, %v745
  %v747 = vpop.f32.mrb[0].mxu0
  %v748 = vpop.f32.mrb[0].mxu0
  %v749 = vadd.f32 %v652, %v748
  %v750 = vpop.f32.mrb[0].mxu0
  %751 = vmatprep.mubr.bf16.mxu0 %v296
  %752 = vmatmul.mubr.bf16.gmra.mrb[0].mxu0 %v295
  %v753 = vpop.f32.mrb[0].mxu0
  %v754 = vadd.f32 %v657, %v753
  %v755 = vpop.f32.mrb[0].mxu0
  %v756 = vpop.f32.mrb[0].mxu0
  %v757 = vadd.f32 %v660, %v756
  %v758 = vpop.f32.mrb[0].mxu0
  %759 = vmatprep.mubr.bf16.mxu0 %v301
  %760 = vmatmul.mubr.bf16.gmra.mrb[0].mxu0 %v300
  %v761 = vpop.f32.mrb[0].mxu0
  %v762 = vadd.f32 %v665, %v761
  %v763 = vpop.f32.mrb[0].mxu0
  %v764 = vpop.f32.mrb[0].mxu0
  %v765 = vadd.f32 %v668, %v764
  %v766 = vpop.f32.mrb[0].mxu0
  %767 = vmatprep.mubr.bf16.mxu0 %v306
  %768 = vmatmul.mubr.bf16.gmra.mrb[0].mxu0 %v305
  %v769 = vpop.f32.mrb[0].mxu0
  %v770 = vadd.f32 %v673, %v769
  %v771 = vpop.f32.mrb[0].mxu0
  %v772 = vpop.f32.mrb[0].mxu0
  %v773 = vadd.f32 %v676, %v772
  %v774 = vpop.f32.mrb[0].mxu0
  %775 = vmatprep.mubr.bf16.mxu0 %v311
  %776 = vmatmul.mubr.bf16.gmra.mrb[0].mxu0 %v310
  %v777 = vpop.f32.mrb[0].mxu0
  %v778 = vadd.f32 %v681, %v777
  %v779 = vpop.f32.mrb[0].mxu0
  %v780 = vpop.f32.mrb[0].mxu0
  %v781 = vadd.f32 %v684, %v780
  %v782 = vpop.f32.mrb[0].mxu0
  %783 = vmatprep.mubr.bf16.mxu0 %v316
  %784 = vmatmul.mubr.bf16.gmra.mrb[0].mxu0 %v315
  %v785 = vpop.f32.mrb[0].mxu0
  %v786 = vadd.f32 %v689, %v785
  %v787 = vpop.f32.mrb[0].mxu0
  %v788 = vpop.f32.mrb[0].mxu0
  %v789 = vadd.f32 %v692, %v788
  %v790 = vpop.f32.mrb[0].mxu0
  %791 = vdwg.mxu0
  %792 = vmatprep.subr.bf16.mxu0 0
  %793 = vmatpush1.bf16.msra.mxu0 %v550
  %794 = vmatprep.subr.bf16.mxu0 0
  %795 = vmatpush1.bf16.msra.mxu0 %v551
  %796 = vmatprep.subr.bf16.mxu0 0
  %797 = vmatpush1.bf16.msra.mxu0 %v552
  %798 = vmatprep.subr.bf16.mxu0 0
  %799 = vmatpush1.bf16.msra.mxu0 %v553
  %800 = vmatprep.subr.bf16.mxu0 0
  %801 = vmatpush1.bf16.msra.mxu0 %v554
  %802 = vmatprep.subr.bf16.mxu0 0
  %803 = vmatpush1.bf16.msra.mxu0 %v555
  %804 = vmatprep.subr.bf16.mxu0 0
  %805 = vmatpush1.bf16.msra.mxu0 %v556
  %806 = vmatprep.subr.bf16.mxu0 0
  %807 = vmatpush1.bf16.msra.mxu0 %v557
  %808 = vmatprep.subr.bf16.mxu0 0
  %809 = vmatpush1.bf16.msra.mxu0 0
  %810 = vmatprep.subr.bf16.mxu0 0
  %811 = vmatpush1.bf16.msra.mxu0 0
  %812 = vmatprep.subr.bf16.mxu0 0
  %813 = vmatpush1.bf16.msra.mxu0 0
  %814 = vmatprep.subr.bf16.mxu0 0
  %815 = vmatpush1.bf16.msra.mxu0 0
  %816 = vmatprep.subr.bf16.mxu0 0
  %817 = vmatpush1.bf16.msra.mxu0 0
  %818 = vmatprep.subr.bf16.mxu0 0
  %819 = vmatpush1.bf16.msra.mxu0 0
  %820 = vmatprep.subr.bf16.mxu0 0
  %821 = vmatpush1.bf16.msra.mxu0 0
  %822 = vmatprep.subr.bf16.mxu0 0
  %823 = vmatpush1.bf16.msra.mxu0 0
  %824 = vmatprep.mubr.bf16.mxu0 0
  %825 = vmatmul.mubr.bf16.gmra.mrb[0].mxu0 %v282
  %v826 = vpop.f32.mrb[0].mxu0
  %v827 = vadd.f32 %v730, %v826
  %v828 = vpop.f32.mrb[0].mxu0
  %v829 = vpop.f32.mrb[0].mxu0
  %v830 = vadd.f32 %v733, %v829
  %v831 = vpop.f32.mrb[0].mxu0
  %832 = vmatprep.mubr.bf16.mxu0 0
  %833 = vmatmul.mubr.bf16.gmra.mrb[0].mxu0 %v287
  %v834 = vpop.f32.mrb[0].mxu0
  %v835 = vadd.f32 %v738, %v834
  %v836 = vpop.f32.mrb[0].mxu0
  %v837 = vpop.f32.mrb[0].mxu0
  %v838 = vadd.f32 %v741, %v837
  %v839 = vpop.f32.mrb[0].mxu0
  %840 = vmatprep.mubr.bf16.mxu0 0
  %841 = vmatmul.mubr.bf16.gmra.mrb[0].mxu0 %v292
  %v842 = vpop.f32.mrb[0].mxu0
  %v843 = vadd.f32 %v746, %v842
  %v844 = vpop.f32.mrb[0].mxu0
  %v845 = vpop.f32.mrb[0].mxu0
  %v846 = vadd.f32 %v749, %v845
  %v847 = vpop.f32.mrb[0].mxu0
  %848 = vmatprep.mubr.bf16.mxu0 0
  %849 = vmatmul.mubr.bf16.gmra.mrb[0].mxu0 %v297
  %v850 = vpop.f32.mrb[0].mxu0
  %v851 = vadd.f32 %v754, %v850
  %v852 = vpop.f32.mrb[0].mxu0
  %v853 = vpop.f32.mrb[0].mxu0
  %v854 = vadd.f32 %v757, %v853
  %v855 = vpop.f32.mrb[0].mxu0
  %856 = vmatprep.mubr.bf16.mxu0 0
  %857 = vmatmul.mubr.bf16.gmra.mrb[0].mxu0 %v302
  %v858 = vpop.f32.mrb[0].mxu0
  %v859 = vadd.f32 %v762, %v858
  %v860 = vpop.f32.mrb[0].mxu0
  %v861 = vpop.f32.mrb[0].mxu0
  %v862 = vadd.f32 %v765, %v861
  %v863 = vpop.f32.mrb[0].mxu0
  %864 = vmatprep.mubr.bf16.mxu0 0
  %865 = vmatmul.mubr.bf16.gmra.mrb[0].mxu0 %v307
  %v866 = vpop.f32.mrb[0].mxu0
  %v867 = vadd.f32 %v770, %v866
  %v868 = vpop.f32.mrb[0].mxu0
  %v869 = vpop.f32.mrb[0].mxu0
  %v870 = vadd.f32 %v773, %v869
  %v871 = vpop.f32.mrb[0].mxu0
  %872 = vmatprep.mubr.bf16.mxu0 0
  %873 = vmatmul.mubr.bf16.gmra.mrb[0].mxu0 %v312
  %v874 = vpop.f32.mrb[0].mxu0
  %v875 = vadd.f32 %v778, %v874
  %v876 = vpop.f32.mrb[0].mxu0
  %v877 = vpop.f32.mrb[0].mxu0
  %v878 = vadd.f32 %v781, %v877
  %v879 = vpop.f32.mrb[0].mxu0
  %880 = vmatprep.mubr.bf16.mxu0 0
  %881 = vmatmul.mubr.bf16.gmra.mrb[0].mxu0 %v317
  %v882 = vpop.f32.mrb[0].mxu0
  %v883 = vadd.f32 %v786, %v882
  %v884 = vpop.f32.mrb[0].mxu0
  %v885 = vpop.f32.mrb[0].mxu0
  %v886 = vadd.f32 %v789, %v885
  %v887 = vpop.f32.mrb[0].mxu0
  %888 = vdwg.mxu0
  %v889 = vmax.f32 %v827, 0.0
  %v890 = vmax.f32 %v830, 0.0
  %v891 = vmax.f32 %v835, 0.0
  %v892 = vmax.f32 %v838, 0.0
  %v893 = vmax.f32 %v843, 0.0
  %v894 = vmax.f32 %v846, 0.0
  %v895 = vmax.f32 %v851, 0.0
  %v896 = vmax.f32 %v854, 0.0
  %v897 = vmax.f32 %v859, 0.0
  %v898 = vmax.f32 %v862, 0.0
  %v899 = vmax.f32 %v867, 0.0
  %v900 = vmax.f32 %v870, 0.0
  %v901 = vmax.f32 %v875, 0.0
  %v902 = vmax.f32 %v878, 0.0
  %v903 = vmax.f32 %v883, 0.0
  %v904 = vmax.f32 %v886, 0.0
  %v905 = vpack.c.bf16 %v890, %v889
  %v906 = vpack.c.bf16 %v892, %v891
  %v907 = vpack.c.bf16 %v894, %v893
  %v908 = vpack.c.bf16 %v896, %v895
  %v909 = vpack.c.bf16 %v898, %v897
  %v910 = vpack.c.bf16 %v900, %v899
  %v911 = vpack.c.bf16 %v902, %v901
  %v912 = vpack.c.bf16 %v904, %v903
  %v921 = vunpack.c.l.b16 %v905
  %v922 = vunpack.c.h.b16 %v905
  %v923 = vunpack.c.l.b16 %v906
  %v924 = vunpack.c.h.b16 %v906
  %v925 = vunpack.c.l.b16 %v907
  %v926 = vunpack.c.h.b16 %v907
  %v927 = vunpack.c.l.b16 %v908
  %v928 = vunpack.c.h.b16 %v908
  %v929 = vunpack.c.l.b16 %v909
  %v930 = vunpack.c.h.b16 %v909
  %v931 = vunpack.c.l.b16 %v910
  %v932 = vunpack.c.h.b16 %v910
  %v933 = vunpack.c.l.b16 %v911
  %v934 = vunpack.c.h.b16 %v911
  %v935 = vunpack.c.l.b16 %v912
  %v936 = vunpack.c.h.b16 %v912
  %v937 = vpack.c.b16 %v921, %v921
  %v938 = vpack.c.b16 %v922, %v922
  %v939 = vpack.c.b16 %v923, %v923
  %v940 = vpack.c.b16 %v924, %v924
  %v941 = vpack.c.b16 %v925, %v925
  %v942 = vpack.c.b16 %v926, %v926
  %v943 = vpack.c.b16 %v927, %v927
  %v944 = vpack.c.b16 %v928, %v928
  %v945 = vpack.c.b16 %v929, %v929
  %v946 = vpack.c.b16 %v930, %v930
  %v947 = vpack.c.b16 %v931, %v931
  %v948 = vpack.c.b16 %v932, %v932
  %v949 = vpack.c.b16 %v933, %v933
  %v950 = vpack.c.b16 %v934, %v934
  %v951 = vpack.c.b16 %v935, %v935
  %v952 = vpack.c.b16 %v936, %v936
  %969 = vst [vmem:[%s3] sm:$0xf] %v937
  %970 = vst [vmem:[%s3 + $0x4] sm:$0xf] %v938
  %971 = vst [vmem:[%s3 + $0x8] sm:$0xf] %v939
  %972 = vst [vmem:[%s3 + $0xc] sm:$0xf] %v940
  %973 = vst [vmem:[%s3 + $0x10] sm:$0xf] %v941
  %974 = vst [vmem:[%s3 + $0x14] sm:$0xf] %v942
  %975 = vst [vmem:[%s3 + $0x18] sm:$0xf] %v943
  %976 = vst [vmem:[%s3 + $0x1c] sm:$0xf] %v944
  %977 = vst [vmem:[%s3 + $0x20] sm:$0xf] %v945
  %978 = vst [vmem:[%s3 + $0x24] sm:$0xf] %v946
  %979 = vst [vmem:[%s3 + $0x28] sm:$0xf] %v947
  %980 = vst [vmem:[%s3 + $0x2c] sm:$0xf] %v948
  %981 = vst [vmem:[%s3 + $0x30] sm:$0xf] %v949
  %982 = vst [vmem:[%s3 + $0x34] sm:$0xf] %v950
  %983 = vst [vmem:[%s3 + $0x38] sm:$0xf] %v951
  %984 = vst [vmem:[%s3 + $0x3c] sm:$0xf] %v952
  // Predicated region
  $region14: #{cnnbase_forward.6} parent=0 // pred_check
    _
  $region15: #{cnnbase_forward.6} parent=0 // pred_check_branch
    %986 = sbr.rel (0) target = $region17
  $region16: #{cnnbase_forward.6} parent=0 // pred_region
    _
  $region17: #{cnnbase_forward.6} parent=0 // pred_fallthru
    _
  // Predicated region
  $region18: #{cnnbase_forward.6} parent=0 // pred_check
    _
  $region19: #{cnnbase_forward.6} parent=0 // pred_check_branch
    %988 = sbr.rel (0) target = $region21
  $region20: #{cnnbase_forward.6} parent=0 // pred_region
    _
  $region21: #{cnnbase_forward.6} parent=0 // pred_fallthru
    _

// kernel: cnnbase_forward.7
$region0: #{cnnbase_forward.7}
  #allocation0 [shape = 'u32[]', space=smem, size = 0x4, offset = 0x4, fixed_abs, tag = 'smem constant byte address 0x4 - core index']
  #allocation1 [shape = 'u32[144,128]{1,0:T(1,128)}', space=vmem, size = 0x12000, scoped, tag = 'internal scratch']
  %s0 = inlined_call_operand.vmem [shape: bf16[128,1664], index: 0, kind: input, shape index: {}]
  %s1 = inlined_call_operand.vmem [shape: bf16[1664,512], index: 1, kind: input, shape index: {}]
  %s2 = inlined_call_operand.vmem [shape: f32[1,512], index: 2, kind: input, shape index: {}]
  %s3 = inlined_call_operand.vmem [shape: f32[512,128], index: 3, kind: input, shape index: {}]
  %s4 = inlined_call_operand.vmem [shape: f32[1,128], index: 4, kind: input, shape index: {}]
  %s5 = inlined_call_operand.vmem [shape: f32[128,512], index: 5, kind: output, shape index: {0}]
  %s6 = inlined_call_operand.vmem [shape: f32[128,128], index: 6, kind: output, shape index: {1}]
  %7 = xla_tuple %s5, %s6
  %s8 = sld [smem:[#allocation0]]
  $region38: #{cnnbase_forward.7} parent=0
    _
  %s10 = ssub.s32 1, %s8
  %s11 = scalar_select 0, %s10, %s8
  // Predicated region
  $region2: #{cnnbase_forward.7} parent=0 // pred_check
    _
  $region3: #{cnnbase_forward.7} parent=0 // pred_check_branch
    %13 = sbr.rel (0) target = $region5
  $region4: #{cnnbase_forward.7} parent=0 // pred_region
    _
  $region5: #{cnnbase_forward.7} parent=0 // pred_fallthru
    _
  // Predicated region
  $region6: #{cnnbase_forward.7} parent=0 // pred_check
    _
  $region7: #{cnnbase_forward.7} parent=0 // pred_check_branch
    %15 = sbr.rel (0) target = $region9
  $region8: #{cnnbase_forward.7} parent=0 // pred_region
    _
  $region9: #{cnnbase_forward.7} parent=0 // pred_fallthru
    _
  // Predicated region
  $region10: #{cnnbase_forward.7} parent=0 // pred_check
    _
  $region11: #{cnnbase_forward.7} parent=0 // pred_check_branch
    %17 = sbr.rel (0) target = $region13
  $region12: #{cnnbase_forward.7} parent=0 // pred_region
    _
  $region13: #{cnnbase_forward.7} parent=0 // pred_fallthru
    _
  // Predicated region
  $region14: #{cnnbase_forward.7} parent=0 // pred_check
    _
  $region15: #{cnnbase_forward.7} parent=0 // pred_check_branch
    %19 = sbr.rel (0) target = $region17
  $region16: #{cnnbase_forward.7} parent=0 // pred_region
    _
  $region17: #{cnnbase_forward.7} parent=0 // pred_fallthru
    _
  // Predicated region
  $region18: #{cnnbase_forward.7} parent=0 // pred_check
    _
  $region19: #{cnnbase_forward.7} parent=0 // pred_check_branch
    %21 = sbr.rel (0) target = $region21
  $region20: #{cnnbase_forward.7} parent=0 // pred_region
    _
  $region21: #{cnnbase_forward.7} parent=0 // pred_fallthru
    _
  %v23 = vld [vmem:[%s0] sm:$0xff]
  %v24 = vld [vmem:[%s0 + $0x8] sm:$0xff]
  %v25 = vld [vmem:[%s0 + $0x10] sm:$0xff]
  %v26 = vld [vmem:[%s0 + $0x18] sm:$0xff]
  %v27 = vld [vmem:[%s0 + $0x20] sm:$0xff]
  %v28 = vld [vmem:[%s0 + $0x28] sm:$0xff]
  %v29 = vld [vmem:[%s0 + $0x30] sm:$0xf]
  %v30 = vld [vmem:[%s0 + $0x34] sm:$0xff]
  %v31 = vld [vmem:[%s0 + $0x3c] sm:$0xff]
  %v32 = vld [vmem:[%s0 + $0x44] sm:$0xff]
  %v33 = vld [vmem:[%s0 + $0x4c] sm:$0xff]
  %v34 = vld [vmem:[%s0 + $0x54] sm:$0xff]
  %v35 = vld [vmem:[%s0 + $0x5c] sm:$0xff]
  %v36 = vld [vmem:[%s0 + $0x64] sm:$0xf]
  %v37 = vld [vmem:[%s0 + $0x68] sm:$0xff]
  %v38 = vld [vmem:[%s0 + $0x70] sm:$0xff]
  %v39 = vld [vmem:[%s0 + $0x78] sm:$0xff]
  %v40 = vld [vmem:[%s0 + $0x80] sm:$0xff]
  %v41 = vld [vmem:[%s0 + $0x88] sm:$0xff]
  %v42 = vld [vmem:[%s0 + $0x90] sm:$0xff]
  %v43 = vld [vmem:[%s0 + $0x98] sm:$0xf]
  %v44 = vld [vmem:[%s0 + $0x9c] sm:$0xff]
  %v45 = vld [vmem:[%s0 + $0xa4] sm:$0xff]
  %v46 = vld [vmem:[%s0 + $0xac] sm:$0xff]
  %v47 = vld [vmem:[%s0 + $0xb4] sm:$0xff]
  %v48 = vld [vmem:[%s0 + $0xbc] sm:$0xff]
  %v49 = vld [vmem:[%s0 + $0xc4] sm:$0xff]
  %v50 = vld [vmem:[%s0 + $0xcc] sm:$0xf]
  %v51 = vld [vmem:[%s0 + $0xd0] sm:$0xff]
  %v52 = vld [vmem:[%s0 + $0xd8] sm:$0xff]
  %v53 = vld [vmem:[%s0 + $0xe0] sm:$0xff]
  %v54 = vld [vmem:[%s0 + $0xe8] sm:$0xff]
  %v55 = vld [vmem:[%s0 + $0xf0] sm:$0xff]
  %v56 = vld [vmem:[%s0 + $0xf8] sm:$0xff]
  %v57 = vld [vmem:[%s0 + $0x100] sm:$0xf]
  %v58 = vld [vmem:[%s0 + $0x104] sm:$0xff]
  %v59 = vld [vmem:[%s0 + $0x10c] sm:$0xff]
  %v60 = vld [vmem:[%s0 + $0x114] sm:$0xff]
  %v61 = vld [vmem:[%s0 + $0x11c] sm:$0xff]
  %v62 = vld [vmem:[%s0 + $0x124] sm:$0xff]
  %v63 = vld [vmem:[%s0 + $0x12c] sm:$0xff]
  %v64 = vld [vmem:[%s0 + $0x134] sm:$0xf]
  %v65 = vld [vmem:[%s0 + $0x138] sm:$0xff]
  %v66 = vld [vmem:[%s0 + $0x140] sm:$0xff]
  %v67 = vld [vmem:[%s0 + $0x148] sm:$0xff]
  %v68 = vld [vmem:[%s0 + $0x150] sm:$0xff]
  %v69 = vld [vmem:[%s0 + $0x158] sm:$0xff]
  %v70 = vld [vmem:[%s0 + $0x160] sm:$0xff]
  %v71 = vld [vmem:[%s0 + $0x168] sm:$0xf]
  %v72 = vld [vmem:[%s0 + $0x16c] sm:$0xff]
  %v73 = vld [vmem:[%s0 + $0x174] sm:$0xff]
  %v74 = vld [vmem:[%s0 + $0x17c] sm:$0xff]
  %v75 = vld [vmem:[%s0 + $0x184] sm:$0xff]
  %v76 = vld [vmem:[%s0 + $0x18c] sm:$0xff]
  %v77 = vld [vmem:[%s0 + $0x194] sm:$0xff]
  %v78 = vld [vmem:[%s0 + $0x19c] sm:$0xf]
  %v79 = vld [vmem:[%s0 + $0x1a0] sm:$0xff]
  %v80 = vld [vmem:[%s0 + $0x1a8] sm:$0xff]
  %v81 = vld [vmem:[%s0 + $0x1b0] sm:$0xff]
  %v82 = vld [vmem:[%s0 + $0x1b8] sm:$0xff]
  %v83 = vld [vmem:[%s0 + $0x1c0] sm:$0xff]
  %v84 = vld [vmem:[%s0 + $0x1c8] sm:$0xff]
  %v85 = vld [vmem:[%s0 + $0x1d0] sm:$0xf]
  %v86 = vld [vmem:[%s0 + $0x1d4] sm:$0xff]
  %v87 = vld [vmem:[%s0 + $0x1dc] sm:$0xff]
  %v88 = vld [vmem:[%s0 + $0x1e4] sm:$0xff]
  %v89 = vld [vmem:[%s0 + $0x1ec] sm:$0xff]
  %v90 = vld [vmem:[%s0 + $0x1f4] sm:$0xff]
  %v91 = vld [vmem:[%s0 + $0x1fc] sm:$0xff]
  %v92 = vld [vmem:[%s0 + $0x204] sm:$0xf]
  %v93 = vld [vmem:[%s0 + $0x208] sm:$0xff]
  %v94 = vld [vmem:[%s0 + $0x210] sm:$0xff]
  %v95 = vld [vmem:[%s0 + $0x218] sm:$0xff]
  %v96 = vld [vmem:[%s0 + $0x220] sm:$0xff]
  %v97 = vld [vmem:[%s0 + $0x228] sm:$0xff]
  %v98 = vld [vmem:[%s0 + $0x230] sm:$0xff]
  %v99 = vld [vmem:[%s0 + $0x238] sm:$0xf]
  %v100 = vld [vmem:[%s0 + $0x23c] sm:$0xff]
  %v101 = vld [vmem:[%s0 + $0x244] sm:$0xff]
  %v102 = vld [vmem:[%s0 + $0x24c] sm:$0xff]
  %v103 = vld [vmem:[%s0 + $0x254] sm:$0xff]
  %v104 = vld [vmem:[%s0 + $0x25c] sm:$0xff]
  %v105 = vld [vmem:[%s0 + $0x264] sm:$0xff]
  %v106 = vld [vmem:[%s0 + $0x26c] sm:$0xf]
  %v107 = vld [vmem:[%s0 + $0x270] sm:$0xff]
  %v108 = vld [vmem:[%s0 + $0x278] sm:$0xff]
  %v109 = vld [vmem:[%s0 + $0x280] sm:$0xff]
  %v110 = vld [vmem:[%s0 + $0x288] sm:$0xff]
  %v111 = vld [vmem:[%s0 + $0x290] sm:$0xff]
  %v112 = vld [vmem:[%s0 + $0x298] sm:$0xff]
  %v113 = vld [vmem:[%s0 + $0x2a0] sm:$0xf]
  %v114 = vld [vmem:[%s0 + $0x2a4] sm:$0xff]
  %v115 = vld [vmem:[%s0 + $0x2ac] sm:$0xff]
  %v116 = vld [vmem:[%s0 + $0x2b4] sm:$0xff]
  %v117 = vld [vmem:[%s0 + $0x2bc] sm:$0xff]
  %v118 = vld [vmem:[%s0 + $0x2c4] sm:$0xff]
  %v119 = vld [vmem:[%s0 + $0x2cc] sm:$0xff]
  %v120 = vld [vmem:[%s0 + $0x2d4] sm:$0xf]
  %v121 = vld [vmem:[%s0 + $0x2d8] sm:$0xff]
  %v122 = vld [vmem:[%s0 + $0x2e0] sm:$0xff]
  %v123 = vld [vmem:[%s0 + $0x2e8] sm:$0xff]
  %v124 = vld [vmem:[%s0 + $0x2f0] sm:$0xff]
  %v125 = vld [vmem:[%s0 + $0x2f8] sm:$0xff]
  %v126 = vld [vmem:[%s0 + $0x300] sm:$0xff]
  %v127 = vld [vmem:[%s0 + $0x308] sm:$0xf]
  %v128 = vld [vmem:[%s0 + $0x30c] sm:$0xff]
  %v129 = vld [vmem:[%s0 + $0x314] sm:$0xff]
  %v130 = vld [vmem:[%s0 + $0x31c] sm:$0xff]
  %v131 = vld [vmem:[%s0 + $0x324] sm:$0xff]
  %v132 = vld [vmem:[%s0 + $0x32c] sm:$0xff]
  %v133 = vld [vmem:[%s0 + $0x334] sm:$0xff]
  %v134 = vld [vmem:[%s0 + $0x33c] sm:$0xf]
  %v135 = vld [vmem:[%s1] sm:$0xff]
  %v136 = vld [vmem:[%s1 + $0x8] sm:$0xff]
  %v137 = vld [vmem:[%s1 + $0x10] sm:$0xff]
  %v138 = vld [vmem:[%s1 + $0x18] sm:$0xff]
  %v139 = vld [vmem:[%s1 + $0x20] sm:$0xff]
  %v140 = vld [vmem:[%s1 + $0x28] sm:$0xff]
  %v141 = vld [vmem:[%s1 + $0x30] sm:$0xff]
  %v142 = vld [vmem:[%s1 + $0x38] sm:$0xff]
  %v143 = vld [vmem:[%s1 + $0x40] sm:$0xff]
  %v144 = vld [vmem:[%s1 + $0x48] sm:$0xff]
  %v145 = vld [vmem:[%s1 + $0x50] sm:$0xff]
  %v146 = vld [vmem:[%s1 + $0x58] sm:$0xff]
  %v147 = vld [vmem:[%s1 + $0x60] sm:$0xff]
  %v148 = vld [vmem:[%s1 + $0x68] sm:$0xff]
  %v149 = vld [vmem:[%s1 + $0x70] sm:$0xff]
  %v150 = vld [vmem:[%s1 + $0x78] sm:$0xff]
  %v151 = vld [vmem:[%s1 + $0x80] sm:$0xff]
  %v152 = vld [vmem:[%s1 + $0x88] sm:$0xff]
  %v153 = vld [vmem:[%s1 + $0x90] sm:$0xff]
  %v154 = vld [vmem:[%s1 + $0x98] sm:$0xff]
  %v155 = vld [vmem:[%s1 + $0xa0] sm:$0xff]
  %v156 = vld [vmem:[%s1 + $0xa8] sm:$0xff]
  %v157 = vld [vmem:[%s1 + $0xb0] sm:$0xff]
  %v158 = vld [vmem:[%s1 + $0xb8] sm:$0xff]
  %v159 = vld [vmem:[%s1 + $0xc0] sm:$0xff]
  %v160 = vld [vmem:[%s1 + $0xc8] sm:$0xff]
  %v161 = vld [vmem:[%s1 + $0xd0] sm:$0xff]
  %v162 = vld [vmem:[%s1 + $0xd8] sm:$0xff]
  %v163 = vld [vmem:[%s1 + $0xe0] sm:$0xff]
  %v164 = vld [vmem:[%s1 + $0xe8] sm:$0xff]
  %v165 = vld [vmem:[%s1 + $0xf0] sm:$0xff]
  %v166 = vld [vmem:[%s1 + $0xf8] sm:$0xff]
  %v167 = vld [vmem:[%s1 + $0x100] sm:$0xff]
  %v168 = vld [vmem:[%s1 + $0x108] sm:$0xff]
  %v169 = vld [vmem:[%s1 + $0x110] sm:$0xff]
  %v170 = vld [vmem:[%s1 + $0x118] sm:$0xff]
  %v171 = vld [vmem:[%s1 + $0x120] sm:$0xff]
  %v172 = vld [vmem:[%s1 + $0x128] sm:$0xff]
  %v173 = vld [vmem:[%s1 + $0x130] sm:$0xff]
  %v174 = vld [vmem:[%s1 + $0x138] sm:$0xff]
  %v175 = vld [vmem:[%s1 + $0x140] sm:$0xff]
  %v176 = vld [vmem:[%s1 + $0x148] sm:$0xff]
  %v177 = vld [vmem:[%s1 + $0x150] sm:$0xff]
  %v178 = vld [vmem:[%s1 + $0x158] sm:$0xff]
  %v179 = vld [vmem:[%s1 + $0x160] sm:$0xff]
  %v180 = vld [vmem:[%s1 + $0x168] sm:$0xff]
  %v181 = vld [vmem:[%s1 + $0x170] sm:$0xff]
  %v182 = vld [vmem:[%s1 + $0x178] sm:$0xff]
  %v183 = vld [vmem:[%s1 + $0x180] sm:$0xff]
  %v184 = vld [vmem:[%s1 + $0x188] sm:$0xff]
  %v185 = vld [vmem:[%s1 + $0x190] sm:$0xff]
  %v186 = vld [vmem:[%s1 + $0x198] sm:$0xff]
  %v187 = vld [vmem:[%s1 + $0x1a0] sm:$0xff]
  %v188 = vld [vmem:[%s1 + $0x1a8] sm:$0xff]
  %v189 = vld [vmem:[%s1 + $0x1b0] sm:$0xff]
  %v190 = vld [vmem:[%s1 + $0x1b8] sm:$0xff]
  %v191 = vld [vmem:[%s1 + $0x1c0] sm:$0xff]
  %v192 = vld [vmem:[%s1 + $0x1c8] sm:$0xff]
  %v193 = vld [vmem:[%s1 + $0x1d0] sm:$0xff]
  %v194 = vld [vmem:[%s1 + $0x1d8] sm:$0xff]
  %v195 = vld [vmem:[%s1 + $0x1e0] sm:$0xff]
  %v196 = vld [vmem:[%s1 + $0x1e8] sm:$0xff]
  %v197 = vld [vmem:[%s1 + $0x1f0] sm:$0xff]
  %v198 = vld [vmem:[%s1 + $0x1f8] sm:$0xff]
  %v199 = vld [vmem:[%s1 + $0x200] sm:$0xff]
  %v200 = vld [vmem:[%s1 + $0x208] sm:$0xff]
  %v201 = vld [vmem:[%s1 + $0x210] sm:$0xff]
  %v202 = vld [vmem:[%s1 + $0x218] sm:$0xff]
  %v203 = vld [vmem:[%s1 + $0x220] sm:$0xff]
  %v204 = vld [vmem:[%s1 + $0x228] sm:$0xff]
  %v205 = vld [vmem:[%s1 + $0x230] sm:$0xff]
  %v206 = vld [vmem:[%s1 + $0x238] sm:$0xff]
  %v207 = vld [vmem:[%s1 + $0x240] sm:$0xff]
  %v208 = vld [vmem:[%s1 + $0x248] sm:$0xff]
  %v209 = vld [vmem:[%s1 + $0x250] sm:$0xff]
  %v210 = vld [vmem:[%s1 + $0x258] sm:$0xff]
  %v211 = vld [vmem:[%s1 + $0x260] sm:$0xff]
  %v212 = vld [vmem:[%s1 + $0x268] sm:$0xff]
  %v213 = vld [vmem:[%s1 + $0x270] sm:$0xff]
  %v214 = vld [vmem:[%s1 + $0x278] sm:$0xff]
  %v215 = vld [vmem:[%s1 + $0x280] sm:$0xff]
  %v216 = vld [vmem:[%s1 + $0x288] sm:$0xff]
  %v217 = vld [vmem:[%s1 + $0x290] sm:$0xff]
  %v218 = vld [vmem:[%s1 + $0x298] sm:$0xff]
  %v219 = vld [vmem:[%s1 + $0x2a0] sm:$0xff]
  %v220 = vld [vmem:[%s1 + $0x2a8] sm:$0xff]
  %v221 = vld [vmem:[%s1 + $0x2b0] sm:$0xff]
  %v222 = vld [vmem:[%s1 + $0x2b8] sm:$0xff]
  %v223 = vld [vmem:[%s1 + $0x2c0] sm:$0xff]
  %v224 = vld [vmem:[%s1 + $0x2c8] sm:$0xff]
  %v225 = vld [vmem:[%s1 + $0x2d0] sm:$0xff]
  %v226 = vld [vmem:[%s1 + $0x2d8] sm:$0xff]
  %v227 = vld [vmem:[%s1 + $0x2e0] sm:$0xff]
  %v228 = vld [vmem:[%s1 + $0x2e8] sm:$0xff]
  %v229 = vld [vmem:[%s1 + $0x2f0] sm:$0xff]
  %v230 = vld [vmem:[%s1 + $0x2f8] sm:$0xff]
  %v231 = vld [vmem:[%s1 + $0x300] sm:$0xff]
  %v232 = vld [vmem:[%s1 + $0x308] sm:$0xff]
  %v233 = vld [vmem:[%s1 + $0x310] sm:$0xff]
  %v234 = vld [vmem:[%s1 + $0x318] sm:$0xff]
  %v235 = vld [vmem:[%s1 + $0x320] sm:$0xff]
  %v236 = vld [vmem:[%s1 + $0x328] sm:$0xff]
  %v237 = vld [vmem:[%s1 + $0x330] sm:$0xff]
  %v238 = vld [vmem:[%s1 + $0x338] sm:$0xff]
  %v239 = vld [vmem:[%s1 + $0x340] sm:$0xff]
  %v240 = vld [vmem:[%s1 + $0x348] sm:$0xff]
  %v241 = vld [vmem:[%s1 + $0x350] sm:$0xff]
  %v242 = vld [vmem:[%s1 + $0x358] sm:$0xff]
  %v243 = vld [vmem:[%s1 + $0x360] sm:$0xff]
  %v244 = vld [vmem:[%s1 + $0x368] sm:$0xff]
  %v245 = vld [vmem:[%s1 + $0x370] sm:$0xff]
  %v246 = vld [vmem:[%s1 + $0x378] sm:$0xff]
  %v247 = vld [vmem:[%s1 + $0x380] sm:$0xff]
  %v248 = vld [vmem:[%s1 + $0x388] sm:$0xff]
  %v249 = vld [vmem:[%s1 + $0x390] sm:$0xff]
  %v250 = vld [vmem:[%s1 + $0x398] sm:$0xff]
  %v251 = vld [vmem:[%s1 + $0x3a0] sm:$0xff]
  %v252 = vld [vmem:[%s1 + $0x3a8] sm:$0xff]
  %v253 = vld [vmem:[%s1 + $0x3b0] sm:$0xff]
  %v254 = vld [vmem:[%s1 + $0x3b8] sm:$0xff]
  %v255 = vld [vmem:[%s1 + $0x3c0] sm:$0xff]
  %v256 = vld [vmem:[%s1 + $0x3c8] sm:$0xff]
  %v257 = vld [vmem:[%s1 + $0x3d0] sm:$0xff]
  %v258 = vld [vmem:[%s1 + $0x3d8] sm:$0xff]
  %v259 = vld [vmem:[%s1 + $0x3e0] sm:$0xff]
  %v260 = vld [vmem:[%s1 + $0x3e8] sm:$0xff]
  %v261 = vld [vmem:[%s1 + $0x3f0] sm:$0xff]
  %v262 = vld [vmem:[%s1 + $0x3f8] sm:$0xff]
  %v263 = vld [vmem:[%s1 + $0x400] sm:$0xff]
  %v264 = vld [vmem:[%s1 + $0x408] sm:$0xff]
  %v265 = vld [vmem:[%s1 + $0x410] sm:$0xff]
  %v266 = vld [vmem:[%s1 + $0x418] sm:$0xff]
  %v267 = vld [vmem:[%s1 + $0x420] sm:$0xff]
  %v268 = vld [vmem:[%s1 + $0x428] sm:$0xff]
  %v269 = vld [vmem:[%s1 + $0x430] sm:$0xff]
  %v270 = vld [vmem:[%s1 + $0x438] sm:$0xff]
  %v271 = vld [vmem:[%s1 + $0x440] sm:$0xff]
  %v272 = vld [vmem:[%s1 + $0x448] sm:$0xff]
  %v273 = vld [vmem:[%s1 + $0x450] sm:$0xff]
  %v274 = vld [vmem:[%s1 + $0x458] sm:$0xff]
  %v275 = vld [vmem:[%s1 + $0x460] sm:$0xff]
  %v276 = vld [vmem:[%s1 + $0x468] sm:$0xff]
  %v277 = vld [vmem:[%s1 + $0x470] sm:$0xff]
  %v278 = vld [vmem:[%s1 + $0x478] sm:$0xff]
  %v279 = vld [vmem:[%s1 + $0x480] sm:$0xff]
  %v280 = vld [vmem:[%s1 + $0x488] sm:$0xff]
  %v281 = vld [vmem:[%s1 + $0x490] sm:$0xff]
  %v282 = vld [vmem:[%s1 + $0x498] sm:$0xff]
  %v283 = vld [vmem:[%s1 + $0x4a0] sm:$0xff]
  %v284 = vld [vmem:[%s1 + $0x4a8] sm:$0xff]
  %v285 = vld [vmem:[%s1 + $0x4b0] sm:$0xff]
  %v286 = vld [vmem:[%s1 + $0x4b8] sm:$0xff]
  %v287 = vld [vmem:[%s1 + $0x4c0] sm:$0xff]
  %v288 = vld [vmem:[%s1 + $0x4c8] sm:$0xff]
  %v289 = vld [vmem:[%s1 + $0x4d0] sm:$0xff]
  %v290 = vld [vmem:[%s1 + $0x4d8] sm:$0xff]
  %v291 = vld [vmem:[%s1 + $0x4e0] sm:$0xff]
  %v292 = vld [vmem:[%s1 + $0x4e8] sm:$0xff]
  %v293 = vld [vmem:[%s1 + $0x4f0] sm:$0xff]
  %v294 = vld [vmem:[%s1 + $0x4f8] sm:$0xff]
  %v295 = vld [vmem:[%s1 + $0x500] sm:$0xff]
  %v296 = vld [vmem:[%s1 + $0x508] sm:$0xff]
  %v297 = vld [vmem:[%s1 + $0x510] sm:$0xff]
  %v298 = vld [vmem:[%s1 + $0x518] sm:$0xff]
  %v299 = vld [vmem:[%s1 + $0x520] sm:$0xff]
  %v300 = vld [vmem:[%s1 + $0x528] sm:$0xff]
  %v301 = vld [vmem:[%s1 + $0x530] sm:$0xff]
  %v302 = vld [vmem:[%s1 + $0x538] sm:$0xff]
  %v303 = vld [vmem:[%s1 + $0x540] sm:$0xff]
  %v304 = vld [vmem:[%s1 + $0x548] sm:$0xff]
  %v305 = vld [vmem:[%s1 + $0x550] sm:$0xff]
  %v306 = vld [vmem:[%s1 + $0x558] sm:$0xff]
  %v307 = vld [vmem:[%s1 + $0x560] sm:$0xff]
  %v308 = vld [vmem:[%s1 + $0x568] sm:$0xff]
  %v309 = vld [vmem:[%s1 + $0x570] sm:$0xff]
  %v310 = vld [vmem:[%s1 + $0x578] sm:$0xff]
  %v311 = vld [vmem:[%s1 + $0x580] sm:$0xff]
  %v312 = vld [vmem:[%s1 + $0x588] sm:$0xff]
  %v313 = vld [vmem:[%s1 + $0x590] sm:$0xff]
  %v314 = vld [vmem:[%s1 + $0x598] sm:$0xff]
  %v315 = vld [vmem:[%s1 + $0x5a0] sm:$0xff]
  %v316 = vld [vmem:[%s1 + $0x5a8] sm:$0xff]
  %v317 = vld [vmem:[%s1 + $0x5b0] sm:$0xff]
  %v318 = vld [vmem:[%s1 + $0x5b8] sm:$0xff]
  %v319 = vld [vmem:[%s1 + $0x5c0] sm:$0xff]
  %v320 = vld [vmem:[%s1 + $0x5c8] sm:$0xff]
  %v321 = vld [vmem:[%s1 + $0x5d0] sm:$0xff]
  %v322 = vld [vmem:[%s1 + $0x5d8] sm:$0xff]
  %v323 = vld [vmem:[%s1 + $0x5e0] sm:$0xff]
  %v324 = vld [vmem:[%s1 + $0x5e8] sm:$0xff]
  %v325 = vld [vmem:[%s1 + $0x5f0] sm:$0xff]
  %v326 = vld [vmem:[%s1 + $0x5f8] sm:$0xff]
  %v327 = vld [vmem:[%s1 + $0x600] sm:$0xff]
  %v328 = vld [vmem:[%s1 + $0x608] sm:$0xff]
  %v329 = vld [vmem:[%s1 + $0x610] sm:$0xff]
  %v330 = vld [vmem:[%s1 + $0x618] sm:$0xff]
  %v331 = vld [vmem:[%s1 + $0x620] sm:$0xff]
  %v332 = vld [vmem:[%s1 + $0x628] sm:$0xff]
  %v333 = vld [vmem:[%s1 + $0x630] sm:$0xff]
  %v334 = vld [vmem:[%s1 + $0x638] sm:$0xff]
  %v335 = vld [vmem:[%s1 + $0x640] sm:$0xff]
  %v336 = vld [vmem:[%s1 + $0x648] sm:$0xff]
  %v337 = vld [vmem:[%s1 + $0x650] sm:$0xff]
  %v338 = vld [vmem:[%s1 + $0x658] sm:$0xff]
  %v339 = vld [vmem:[%s1 + $0x660] sm:$0xff]
  %v340 = vld [vmem:[%s1 + $0x668] sm:$0xff]
  %v341 = vld [vmem:[%s1 + $0x670] sm:$0xff]
  %v342 = vld [vmem:[%s1 + $0x678] sm:$0xff]
  %v343 = vld [vmem:[%s1 + $0x680] sm:$0xff]
  %v344 = vld [vmem:[%s1 + $0x688] sm:$0xff]
  %v345 = vld [vmem:[%s1 + $0x690] sm:$0xff]
  %v346 = vld [vmem:[%s1 + $0x698] sm:$0xff]
  %v347 = vld [vmem:[%s1 + $0x6a0] sm:$0xff]
  %v348 = vld [vmem:[%s1 + $0x6a8] sm:$0xff]
  %v349 = vld [vmem:[%s1 + $0x6b0] sm:$0xff]
  %v350 = vld [vmem:[%s1 + $0x6b8] sm:$0xff]
  %v351 = vld [vmem:[%s1 + $0x6c0] sm:$0xff]
  %v352 = vld [vmem:[%s1 + $0x6c8] sm:$0xff]
  %v353 = vld [vmem:[%s1 + $0x6d0] sm:$0xff]
  %v354 = vld [vmem:[%s1 + $0x6d8] sm:$0xff]
  %v355 = vld [vmem:[%s1 + $0x6e0] sm:$0xff]
  %v356 = vld [vmem:[%s1 + $0x6e8] sm:$0xff]
  %v357 = vld [vmem:[%s1 + $0x6f0] sm:$0xff]
  %v358 = vld [vmem:[%s1 + $0x6f8] sm:$0xff]
  %v359 = vld [vmem:[%s1 + $0x700] sm:$0xff]
  %v360 = vld [vmem:[%s1 + $0x708] sm:$0xff]
  %v361 = vld [vmem:[%s1 + $0x710] sm:$0xff]
  %v362 = vld [vmem:[%s1 + $0x718] sm:$0xff]
  %v363 = vld [vmem:[%s1 + $0x720] sm:$0xff]
  %v364 = vld [vmem:[%s1 + $0x728] sm:$0xff]
  %v365 = vld [vmem:[%s1 + $0x730] sm:$0xff]
  %v366 = vld [vmem:[%s1 + $0x738] sm:$0xff]
  %v367 = vld [vmem:[%s1 + $0x740] sm:$0xff]
  %v368 = vld [vmem:[%s1 + $0x748] sm:$0xff]
  %v369 = vld [vmem:[%s1 + $0x750] sm:$0xff]
  %v370 = vld [vmem:[%s1 + $0x758] sm:$0xff]
  %v371 = vld [vmem:[%s1 + $0x760] sm:$0xff]
  %v372 = vld [vmem:[%s1 + $0x768] sm:$0xff]
  %v373 = vld [vmem:[%s1 + $0x770] sm:$0xff]
  %v374 = vld [vmem:[%s1 + $0x778] sm:$0xff]
  %v375 = vld [vmem:[%s1 + $0x780] sm:$0xff]
  %v376 = vld [vmem:[%s1 + $0x788] sm:$0xff]
  %v377 = vld [vmem:[%s1 + $0x790] sm:$0xff]
  %v378 = vld [vmem:[%s1 + $0x798] sm:$0xff]
  %v379 = vld [vmem:[%s1 + $0x7a0] sm:$0xff]
  %v380 = vld [vmem:[%s1 + $0x7a8] sm:$0xff]
  %v381 = vld [vmem:[%s1 + $0x7b0] sm:$0xff]
  %v382 = vld [vmem:[%s1 + $0x7b8] sm:$0xff]
  %v383 = vld [vmem:[%s1 + $0x7c0] sm:$0xff]
  %v384 = vld [vmem:[%s1 + $0x7c8] sm:$0xff]
  %v385 = vld [vmem:[%s1 + $0x7d0] sm:$0xff]
  %v386 = vld [vmem:[%s1 + $0x7d8] sm:$0xff]
  %v387 = vld [vmem:[%s1 + $0x7e0] sm:$0xff]
  %v388 = vld [vmem:[%s1 + $0x7e8] sm:$0xff]
  %v389 = vld [vmem:[%s1 + $0x7f0] sm:$0xff]
  %v390 = vld [vmem:[%s1 + $0x7f8] sm:$0xff]
  %v391 = vld [vmem:[%s1 + $0x800] sm:$0xff]
  %v392 = vld [vmem:[%s1 + $0x808] sm:$0xff]
  %v393 = vld [vmem:[%s1 + $0x810] sm:$0xff]
  %v394 = vld [vmem:[%s1 + $0x818] sm:$0xff]
  %v395 = vld [vmem:[%s1 + $0x820] sm:$0xff]
  %v396 = vld [vmem:[%s1 + $0x828] sm:$0xff]
  %v397 = vld [vmem:[%s1 + $0x830] sm:$0xff]
  %v398 = vld [vmem:[%s1 + $0x838] sm:$0xff]
  %v399 = vld [vmem:[%s1 + $0x840] sm:$0xff]
  %v400 = vld [vmem:[%s1 + $0x848] sm:$0xff]
  %v401 = vld [vmem:[%s1 + $0x850] sm:$0xff]
  %v402 = vld [vmem:[%s1 + $0x858] sm:$0xff]
  %v403 = vld [vmem:[%s1 + $0x860] sm:$0xff]
  %v404 = vld [vmem:[%s1 + $0x868] sm:$0xff]
  %v405 = vld [vmem:[%s1 + $0x870] sm:$0xff]
  %v406 = vld [vmem:[%s1 + $0x878] sm:$0xff]
  %v407 = vld [vmem:[%s1 + $0x880] sm:$0xff]
  %v408 = vld [vmem:[%s1 + $0x888] sm:$0xff]
  %v409 = vld [vmem:[%s1 + $0x890] sm:$0xff]
  %v410 = vld [vmem:[%s1 + $0x898] sm:$0xff]
  %v411 = vld [vmem:[%s1 + $0x8a0] sm:$0xff]
  %v412 = vld [vmem:[%s1 + $0x8a8] sm:$0xff]
  %v413 = vld [vmem:[%s1 + $0x8b0] sm:$0xff]
  %v414 = vld [vmem:[%s1 + $0x8b8] sm:$0xff]
  %v415 = vld [vmem:[%s1 + $0x8c0] sm:$0xff]
  %v416 = vld [vmem:[%s1 + $0x8c8] sm:$0xff]
  %v417 = vld [vmem:[%s1 + $0x8d0] sm:$0xff]
  %v418 = vld [vmem:[%s1 + $0x8d8] sm:$0xff]
  %v419 = vld [vmem:[%s1 + $0x8e0] sm:$0xff]
  %v420 = vld [vmem:[%s1 + $0x8e8] sm:$0xff]
  %v421 = vld [vmem:[%s1 + $0x8f0] sm:$0xff]
  %v422 = vld [vmem:[%s1 + $0x8f8] sm:$0xff]
  %v423 = vld [vmem:[%s1 + $0x900] sm:$0xff]
  %v424 = vld [vmem:[%s1 + $0x908] sm:$0xff]
  %v425 = vld [vmem:[%s1 + $0x910] sm:$0xff]
  %v426 = vld [vmem:[%s1 + $0x918] sm:$0xff]
  %v427 = vld [vmem:[%s1 + $0x920] sm:$0xff]
  %v428 = vld [vmem:[%s1 + $0x928] sm:$0xff]
  %v429 = vld [vmem:[%s1 + $0x930] sm:$0xff]
  %v430 = vld [vmem:[%s1 + $0x938] sm:$0xff]
  %v431 = vld [vmem:[%s1 + $0x940] sm:$0xff]
  %v432 = vld [vmem:[%s1 + $0x948] sm:$0xff]
  %v433 = vld [vmem:[%s1 + $0x950] sm:$0xff]
  %v434 = vld [vmem:[%s1 + $0x958] sm:$0xff]
  %v435 = vld [vmem:[%s1 + $0x960] sm:$0xff]
  %v436 = vld [vmem:[%s1 + $0x968] sm:$0xff]
  %v437 = vld [vmem:[%s1 + $0x970] sm:$0xff]
  %v438 = vld [vmem:[%s1 + $0x978] sm:$0xff]
  %v439 = vld [vmem:[%s1 + $0x980] sm:$0xff]
  %v440 = vld [vmem:[%s1 + $0x988] sm:$0xff]
  %v441 = vld [vmem:[%s1 + $0x990] sm:$0xff]
  %v442 = vld [vmem:[%s1 + $0x998] sm:$0xff]
  %v443 = vld [vmem:[%s1 + $0x9a0] sm:$0xff]
  %v444 = vld [vmem:[%s1 + $0x9a8] sm:$0xff]
  %v445 = vld [vmem:[%s1 + $0x9b0] sm:$0xff]
  %v446 = vld [vmem:[%s1 + $0x9b8] sm:$0xff]
  %v447 = vld [vmem:[%s1 + $0x9c0] sm:$0xff]
  %v448 = vld [vmem:[%s1 + $0x9c8] sm:$0xff]
  %v449 = vld [vmem:[%s1 + $0x9d0] sm:$0xff]
  %v450 = vld [vmem:[%s1 + $0x9d8] sm:$0xff]
  %v451 = vld [vmem:[%s1 + $0x9e0] sm:$0xff]
  %v452 = vld [vmem:[%s1 + $0x9e8] sm:$0xff]
  %v453 = vld [vmem:[%s1 + $0x9f0] sm:$0xff]
  %v454 = vld [vmem:[%s1 + $0x9f8] sm:$0xff]
  %v455 = vld [vmem:[%s1 + $0xa00] sm:$0xff]
  %v456 = vld [vmem:[%s1 + $0xa08] sm:$0xff]
  %v457 = vld [vmem:[%s1 + $0xa10] sm:$0xff]
  %v458 = vld [vmem:[%s1 + $0xa18] sm:$0xff]
  %v459 = vld [vmem:[%s1 + $0xa20] sm:$0xff]
  %v460 = vld [vmem:[%s1 + $0xa28] sm:$0xff]
  %v461 = vld [vmem:[%s1 + $0xa30] sm:$0xff]
  %v462 = vld [vmem:[%s1 + $0xa38] sm:$0xff]
  %v463 = vld [vmem:[%s1 + $0xa40] sm:$0xff]
  %v464 = vld [vmem:[%s1 + $0xa48] sm:$0xff]
  %v465 = vld [vmem:[%s1 + $0xa50] sm:$0xff]
  %v466 = vld [vmem:[%s1 + $0xa58] sm:$0xff]
  %v467 = vld [vmem:[%s1 + $0xa60] sm:$0xff]
  %v468 = vld [vmem:[%s1 + $0xa68] sm:$0xff]
  %v469 = vld [vmem:[%s1 + $0xa70] sm:$0xff]
  %v470 = vld [vmem:[%s1 + $0xa78] sm:$0xff]
  %v471 = vld [vmem:[%s1 + $0xa80] sm:$0xff]
  %v472 = vld [vmem:[%s1 + $0xa88] sm:$0xff]
  %v473 = vld [vmem:[%s1 + $0xa90] sm:$0xff]
  %v474 = vld [vmem:[%s1 + $0xa98] sm:$0xff]
  %v475 = vld [vmem:[%s1 + $0xaa0] sm:$0xff]
  %v476 = vld [vmem:[%s1 + $0xaa8] sm:$0xff]
  %v477 = vld [vmem:[%s1 + $0xab0] sm:$0xff]
  %v478 = vld [vmem:[%s1 + $0xab8] sm:$0xff]
  %v479 = vld [vmem:[%s1 + $0xac0] sm:$0xff]
  %v480 = vld [vmem:[%s1 + $0xac8] sm:$0xff]
  %v481 = vld [vmem:[%s1 + $0xad0] sm:$0xff]
  %v482 = vld [vmem:[%s1 + $0xad8] sm:$0xff]
  %v483 = vld [vmem:[%s1 + $0xae0] sm:$0xff]
  %v484 = vld [vmem:[%s1 + $0xae8] sm:$0xff]
  %v485 = vld [vmem:[%s1 + $0xaf0] sm:$0xff]
  %v486 = vld [vmem:[%s1 + $0xaf8] sm:$0xff]
  %v487 = vld [vmem:[%s1 + $0xb00] sm:$0xff]
  %v488 = vld [vmem:[%s1 + $0xb08] sm:$0xff]
  %v489 = vld [vmem:[%s1 + $0xb10] sm:$0xff]
  %v490 = vld [vmem:[%s1 + $0xb18] sm:$0xff]
  %v491 = vld [vmem:[%s1 + $0xb20] sm:$0xff]
  %v492 = vld [vmem:[%s1 + $0xb28] sm:$0xff]
  %v493 = vld [vmem:[%s1 + $0xb30] sm:$0xff]
  %v494 = vld [vmem:[%s1 + $0xb38] sm:$0xff]
  %v495 = vld [vmem:[%s1 + $0xb40] sm:$0xff]
  %v496 = vld [vmem:[%s1 + $0xb48] sm:$0xff]
  %v497 = vld [vmem:[%s1 + $0xb50] sm:$0xff]
  %v498 = vld [vmem:[%s1 + $0xb58] sm:$0xff]
  %v499 = vld [vmem:[%s1 + $0xb60] sm:$0xff]
  %v500 = vld [vmem:[%s1 + $0xb68] sm:$0xff]
  %v501 = vld [vmem:[%s1 + $0xb70] sm:$0xff]
  %v502 = vld [vmem:[%s1 + $0xb78] sm:$0xff]
  %v503 = vld [vmem:[%s1 + $0xb80] sm:$0xff]
  %v504 = vld [vmem:[%s1 + $0xb88] sm:$0xff]
  %v505 = vld [vmem:[%s1 + $0xb90] sm:$0xff]
  %v506 = vld [vmem:[%s1 + $0xb98] sm:$0xff]
  %v507 = vld [vmem:[%s1 + $0xba0] sm:$0xff]
  %v508 = vld [vmem:[%s1 + $0xba8] sm:$0xff]
  %v509 = vld [vmem:[%s1 + $0xbb0] sm:$0xff]
  %v510 = vld [vmem:[%s1 + $0xbb8] sm:$0xff]
  %v511 = vld [vmem:[%s1 + $0xbc0] sm:$0xff]
  %v512 = vld [vmem:[%s1 + $0xbc8] sm:$0xff]
  %v513 = vld [vmem:[%s1 + $0xbd0] sm:$0xff]
  %v514 = vld [vmem:[%s1 + $0xbd8] sm:$0xff]
  %v515 = vld [vmem:[%s1 + $0xbe0] sm:$0xff]
  %v516 = vld [vmem:[%s1 + $0xbe8] sm:$0xff]
  %v517 = vld [vmem:[%s1 + $0xbf0] sm:$0xff]
  %v518 = vld [vmem:[%s1 + $0xbf8] sm:$0xff]
  %v519 = vld [vmem:[%s1 + $0xc00] sm:$0xff]
  %v520 = vld [vmem:[%s1 + $0xc08] sm:$0xff]
  %v521 = vld [vmem:[%s1 + $0xc10] sm:$0xff]
  %v522 = vld [vmem:[%s1 + $0xc18] sm:$0xff]
  %v523 = vld [vmem:[%s1 + $0xc20] sm:$0xff]
  %v524 = vld [vmem:[%s1 + $0xc28] sm:$0xff]
  %v525 = vld [vmem:[%s1 + $0xc30] sm:$0xff]
  %v526 = vld [vmem:[%s1 + $0xc38] sm:$0xff]
  %v527 = vld [vmem:[%s1 + $0xc40] sm:$0xff]
  %v528 = vld [vmem:[%s1 + $0xc48] sm:$0xff]
  %v529 = vld [vmem:[%s1 + $0xc50] sm:$0xff]
  %v530 = vld [vmem:[%s1 + $0xc58] sm:$0xff]
  %v531 = vld [vmem:[%s1 + $0xc60] sm:$0xff]
  %v532 = vld [vmem:[%s1 + $0xc68] sm:$0xff]
  %v533 = vld [vmem:[%s1 + $0xc70] sm:$0xff]
  %v534 = vld [vmem:[%s1 + $0xc78] sm:$0xff]
  %v535 = vld [vmem:[%s1 + $0xc80] sm:$0xff]
  %v536 = vld [vmem:[%s1 + $0xc88] sm:$0xff]
  %v537 = vld [vmem:[%s1 + $0xc90] sm:$0xff]
  %v538 = vld [vmem:[%s1 + $0xc98] sm:$0xff]
  %v539 = vld [vmem:[%s1 + $0xca0] sm:$0xff]
  %v540 = vld [vmem:[%s1 + $0xca8] sm:$0xff]
  %v541 = vld [vmem:[%s1 + $0xcb0] sm:$0xff]
  %v542 = vld [vmem:[%s1 + $0xcb8] sm:$0xff]
  %v543 = vld [vmem:[%s1 + $0xcc0] sm:$0xff]
  %v544 = vld [vmem:[%s1 + $0xcc8] sm:$0xff]
  %v545 = vld [vmem:[%s1 + $0xcd0] sm:$0xff]
  %v546 = vld [vmem:[%s1 + $0xcd8] sm:$0xff]
  %v547 = vld [vmem:[%s1 + $0xce0] sm:$0xff]
  %v548 = vld [vmem:[%s1 + $0xce8] sm:$0xff]
  %v549 = vld [vmem:[%s1 + $0xcf0] sm:$0xff]
  %v550 = vld [vmem:[%s1 + $0xcf8] sm:$0xff]
  %v551 = vld [vmem:[%s2] sm:$0xf]
  %v553 = vlaneseq
  %v554 = vshrl.u32 %v553, 7
  %v555 = vsub.s32 0, %v554
  %v556 = vrot.slane %v551, %v555
  %v557 = vlaneseq
  %v558 = vshrl.u32 %v557, 7
  %v559 = vsub.s32 1, %v558
  %v560 = vrot.slane %v551, %v559
  %v561 = vlaneseq
  %v562 = vshrl.u32 %v561, 7
  %v563 = vsub.s32 2, %v562
  %v564 = vrot.slane %v551, %v563
  %v565 = vlaneseq
  %v566 = vshrl.u32 %v565, 7
  %v567 = vsub.s32 3, %v566
  %v568 = vrot.slane %v551, %v567
  %v685 = vunpack.c.l.b16 %v23
  %v686 = vunpack.c.h.b16 %v23
  %v687 = vunpack.c.l.b16 %v24
  %v688 = vunpack.c.h.b16 %v24
  %v689 = vunpack.c.l.b16 %v25
  %v690 = vunpack.c.h.b16 %v25
  %v691 = vunpack.c.l.b16 %v26
  %v692 = vunpack.c.h.b16 %v26
  %v693 = vunpack.c.l.b16 %v27
  %v694 = vunpack.c.h.b16 %v27
  %v695 = vunpack.c.l.b16 %v28
  %v696 = vunpack.c.h.b16 %v28
  %v697 = vunpack.c.l.b16 %v29
  %v698 = vunpack.c.l.b16 %v30
  %v699 = vunpack.c.h.b16 %v30
  %v700 = vunpack.c.l.b16 %v31
  %v701 = vunpack.c.h.b16 %v31
  %v702 = vunpack.c.l.b16 %v32
  %v703 = vunpack.c.h.b16 %v32
  %v704 = vunpack.c.l.b16 %v33
  %v705 = vunpack.c.h.b16 %v33
  %v706 = vunpack.c.l.b16 %v34
  %v707 = vunpack.c.h.b16 %v34
  %v708 = vunpack.c.l.b16 %v35
  %v709 = vunpack.c.h.b16 %v35
  %v710 = vunpack.c.l.b16 %v36
  %v711 = vunpack.c.l.b16 %v37
  %v712 = vunpack.c.h.b16 %v37
  %v713 = vunpack.c.l.b16 %v38
  %v714 = vunpack.c.h.b16 %v38
  %v715 = vunpack.c.l.b16 %v39
  %v716 = vunpack.c.h.b16 %v39
  %v717 = vunpack.c.l.b16 %v40
  %v718 = vunpack.c.h.b16 %v40
  %v719 = vunpack.c.l.b16 %v41
  %v720 = vunpack.c.h.b16 %v41
  %v721 = vunpack.c.l.b16 %v42
  %v722 = vunpack.c.h.b16 %v42
  %v723 = vunpack.c.l.b16 %v43
  %v724 = vunpack.c.l.b16 %v44
  %v725 = vunpack.c.h.b16 %v44
  %v726 = vunpack.c.l.b16 %v45
  %v727 = vunpack.c.h.b16 %v45
  %v728 = vunpack.c.l.b16 %v46
  %v729 = vunpack.c.h.b16 %v46
  %v730 = vunpack.c.l.b16 %v47
  %v731 = vunpack.c.h.b16 %v47
  %v732 = vunpack.c.l.b16 %v48
  %v733 = vunpack.c.h.b16 %v48
  %v734 = vunpack.c.l.b16 %v49
  %v735 = vunpack.c.h.b16 %v49
  %v736 = vunpack.c.l.b16 %v50
  %v737 = vunpack.c.l.b16 %v51
  %v738 = vunpack.c.h.b16 %v51
  %v739 = vunpack.c.l.b16 %v52
  %v740 = vunpack.c.h.b16 %v52
  %v741 = vunpack.c.l.b16 %v53
  %v742 = vunpack.c.h.b16 %v53
  %v743 = vunpack.c.l.b16 %v54
  %v744 = vunpack.c.h.b16 %v54
  %v745 = vunpack.c.l.b16 %v55
  %v746 = vunpack.c.h.b16 %v55
  %v747 = vunpack.c.l.b16 %v56
  %v748 = vunpack.c.h.b16 %v56
  %v749 = vunpack.c.l.b16 %v57
  %v750 = vunpack.c.l.b16 %v58
  %v751 = vunpack.c.h.b16 %v58
  %v752 = vunpack.c.l.b16 %v59
  %v753 = vunpack.c.h.b16 %v59
  %v754 = vunpack.c.l.b16 %v60
  %v755 = vunpack.c.h.b16 %v60
  %v756 = vunpack.c.l.b16 %v61
  %v757 = vunpack.c.h.b16 %v61
  %v758 = vunpack.c.l.b16 %v62
  %v759 = vunpack.c.h.b16 %v62
  %v760 = vunpack.c.l.b16 %v63
  %v761 = vunpack.c.h.b16 %v63
  %v762 = vunpack.c.l.b16 %v64
  %v763 = vunpack.c.l.b16 %v65
  %v764 = vunpack.c.h.b16 %v65
  %v765 = vunpack.c.l.b16 %v66
  %v766 = vunpack.c.h.b16 %v66
  %v767 = vunpack.c.l.b16 %v67
  %v768 = vunpack.c.h.b16 %v67
  %v769 = vunpack.c.l.b16 %v68
  %v770 = vunpack.c.h.b16 %v68
  %v771 = vunpack.c.l.b16 %v69
  %v772 = vunpack.c.h.b16 %v69
  %v773 = vunpack.c.l.b16 %v70
  %v774 = vunpack.c.h.b16 %v70
  %v775 = vunpack.c.l.b16 %v71
  %v776 = vunpack.c.l.b16 %v72
  %v777 = vunpack.c.h.b16 %v72
  %v778 = vunpack.c.l.b16 %v73
  %v779 = vunpack.c.h.b16 %v73
  %v780 = vunpack.c.l.b16 %v74
  %v781 = vunpack.c.h.b16 %v74
  %v782 = vunpack.c.l.b16 %v75
  %v783 = vunpack.c.h.b16 %v75
  %v784 = vunpack.c.l.b16 %v76
  %v785 = vunpack.c.h.b16 %v76
  %v786 = vunpack.c.l.b16 %v77
  %v787 = vunpack.c.h.b16 %v77
  %v788 = vunpack.c.l.b16 %v78
  %v789 = vunpack.c.l.b16 %v79
  %v790 = vunpack.c.h.b16 %v79
  %v791 = vunpack.c.l.b16 %v80
  %v792 = vunpack.c.h.b16 %v80
  %v793 = vunpack.c.l.b16 %v81
  %v794 = vunpack.c.h.b16 %v81
  %v795 = vunpack.c.l.b16 %v82
  %v796 = vunpack.c.h.b16 %v82
  %v797 = vunpack.c.l.b16 %v83
  %v798 = vunpack.c.h.b16 %v83
  %v799 = vunpack.c.l.b16 %v84
  %v800 = vunpack.c.h.b16 %v84
  %v801 = vunpack.c.l.b16 %v85
  %v802 = vunpack.c.l.b16 %v86
  %v803 = vunpack.c.h.b16 %v86
  %v804 = vunpack.c.l.b16 %v87
  %v805 = vunpack.c.h.b16 %v87
  %v806 = vunpack.c.l.b16 %v88
  %v807 = vunpack.c.h.b16 %v88
  %v808 = vunpack.c.l.b16 %v89
  %v809 = vunpack.c.h.b16 %v89
  %v810 = vunpack.c.l.b16 %v90
  %v811 = vunpack.c.h.b16 %v90
  %v812 = vunpack.c.l.b16 %v91
  %v813 = vunpack.c.h.b16 %v91
  %v814 = vunpack.c.l.b16 %v92
  %v815 = vunpack.c.l.b16 %v93
  %v816 = vunpack.c.h.b16 %v93
  %v817 = vunpack.c.l.b16 %v94
  %v818 = vunpack.c.h.b16 %v94
  %v819 = vunpack.c.l.b16 %v95
  %v820 = vunpack.c.h.b16 %v95
  %v821 = vunpack.c.l.b16 %v96
  %v822 = vunpack.c.h.b16 %v96
  %v823 = vunpack.c.l.b16 %v97
  %v824 = vunpack.c.h.b16 %v97
  %v825 = vunpack.c.l.b16 %v98
  %v826 = vunpack.c.h.b16 %v98
  %v827 = vunpack.c.l.b16 %v99
  %v828 = vunpack.c.l.b16 %v100
  %v829 = vunpack.c.h.b16 %v100
  %v830 = vunpack.c.l.b16 %v101
  %v831 = vunpack.c.h.b16 %v101
  %v832 = vunpack.c.l.b16 %v102
  %v833 = vunpack.c.h.b16 %v102
  %v834 = vunpack.c.l.b16 %v103
  %v835 = vunpack.c.h.b16 %v103
  %v836 = vunpack.c.l.b16 %v104
  %v837 = vunpack.c.h.b16 %v104
  %v838 = vunpack.c.l.b16 %v105
  %v839 = vunpack.c.h.b16 %v105
  %v840 = vunpack.c.l.b16 %v106
  %v841 = vunpack.c.l.b16 %v107
  %v842 = vunpack.c.h.b16 %v107
  %v843 = vunpack.c.l.b16 %v108
  %v844 = vunpack.c.h.b16 %v108
  %v845 = vunpack.c.l.b16 %v109
  %v846 = vunpack.c.h.b16 %v109
  %v847 = vunpack.c.l.b16 %v110
  %v848 = vunpack.c.h.b16 %v110
  %v849 = vunpack.c.l.b16 %v111
  %v850 = vunpack.c.h.b16 %v111
  %v851 = vunpack.c.l.b16 %v112
  %v852 = vunpack.c.h.b16 %v112
  %v853 = vunpack.c.l.b16 %v113
  %v854 = vunpack.c.l.b16 %v114
  %v855 = vunpack.c.h.b16 %v114
  %v856 = vunpack.c.l.b16 %v115
  %v857 = vunpack.c.h.b16 %v115
  %v858 = vunpack.c.l.b16 %v116
  %v859 = vunpack.c.h.b16 %v116
  %v860 = vunpack.c.l.b16 %v117
  %v861 = vunpack.c.h.b16 %v117
  %v862 = vunpack.c.l.b16 %v118
  %v863 = vunpack.c.h.b16 %v118
  %v864 = vunpack.c.l.b16 %v119
  %v865 = vunpack.c.h.b16 %v119
  %v866 = vunpack.c.l.b16 %v120
  %v867 = vunpack.c.l.b16 %v121
  %v868 = vunpack.c.h.b16 %v121
  %v869 = vunpack.c.l.b16 %v122
  %v870 = vunpack.c.h.b16 %v122
  %v871 = vunpack.c.l.b16 %v123
  %v872 = vunpack.c.h.b16 %v123
  %v873 = vunpack.c.l.b16 %v124
  %v874 = vunpack.c.h.b16 %v124
  %v875 = vunpack.c.l.b16 %v125
  %v876 = vunpack.c.h.b16 %v125
  %v877 = vunpack.c.l.b16 %v126
  %v878 = vunpack.c.h.b16 %v126
  %v879 = vunpack.c.l.b16 %v127
  %v880 = vunpack.c.l.b16 %v128
  %v881 = vunpack.c.h.b16 %v128
  %v882 = vunpack.c.l.b16 %v129
  %v883 = vunpack.c.h.b16 %v129
  %v884 = vunpack.c.l.b16 %v130
  %v885 = vunpack.c.h.b16 %v130
  %v886 = vunpack.c.l.b16 %v131
  %v887 = vunpack.c.h.b16 %v131
  %v888 = vunpack.c.l.b16 %v132
  %v889 = vunpack.c.h.b16 %v132
  %v890 = vunpack.c.l.b16 %v133
  %v891 = vunpack.c.h.b16 %v133
  %v892 = vunpack.c.l.b16 %v134
  %v893 = vpack.c.b16 %v698, %v685
  %v894 = vpack.c.b16 %v699, %v686
  %v895 = vpack.c.b16 %v700, %v687
  %v896 = vpack.c.b16 %v701, %v688
  %v897 = vpack.c.b16 %v702, %v689
  %v898 = vpack.c.b16 %v703, %v690
  %v899 = vpack.c.b16 %v704, %v691
  %v900 = vpack.c.b16 %v705, %v692
  %v901 = vpack.c.b16 %v706, %v693
  %v902 = vpack.c.b16 %v707, %v694
  %v903 = vpack.c.b16 %v708, %v695
  %v904 = vpack.c.b16 %v709, %v696
  %v905 = vpack.c.b16 %v710, %v697
  %v906 = vpack.c.b16 %v724, %v711
  %v907 = vpack.c.b16 %v725, %v712
  %v908 = vpack.c.b16 %v726, %v713
  %v909 = vpack.c.b16 %v727, %v714
  %v910 = vpack.c.b16 %v728, %v715
  %v911 = vpack.c.b16 %v729, %v716
  %v912 = vpack.c.b16 %v730, %v717
  %v913 = vpack.c.b16 %v731, %v718
  %v914 = vpack.c.b16 %v732, %v719
  %v915 = vpack.c.b16 %v733, %v720
  %v916 = vpack.c.b16 %v734, %v721
  %v917 = vpack.c.b16 %v735, %v722
  %v918 = vpack.c.b16 %v736, %v723
  %v919 = vpack.c.b16 %v750, %v737
  %v920 = vpack.c.b16 %v751, %v738
  %v921 = vpack.c.b16 %v752, %v739
  %v922 = vpack.c.b16 %v753, %v740
  %v923 = vpack.c.b16 %v754, %v741
  %v924 = vpack.c.b16 %v755, %v742
  %v925 = vpack.c.b16 %v756, %v743
  %v926 = vpack.c.b16 %v757, %v744
  %v927 = vpack.c.b16 %v758, %v745
  %v928 = vpack.c.b16 %v759, %v746
  %v929 = vpack.c.b16 %v760, %v747
  %v930 = vpack.c.b16 %v761, %v748
  %v931 = vpack.c.b16 %v762, %v749
  %v932 = vpack.c.b16 %v776, %v763
  %v933 = vpack.c.b16 %v777, %v764
  %v934 = vpack.c.b16 %v778, %v765
  %v935 = vpack.c.b16 %v779, %v766
  %v936 = vpack.c.b16 %v780, %v767
  %v937 = vpack.c.b16 %v781, %v768
  %v938 = vpack.c.b16 %v782, %v769
  %v939 = vpack.c.b16 %v783, %v770
  %v940 = vpack.c.b16 %v784, %v771
  %v941 = vpack.c.b16 %v785, %v772
  %v942 = vpack.c.b16 %v786, %v773
  %v943 = vpack.c.b16 %v787, %v774
  %v944 = vpack.c.b16 %v788, %v775
  %v945 = vpack.c.b16 %v802, %v789
  %v946 = vpack.c.b16 %v803, %v790
  %v947 = vpack.c.b16 %v804, %v791
  %v948 = vpack.c.b16 %v805, %v792
  %v949 = vpack.c.b16 %v806, %v793
  %v950 = vpack.c.b16 %v807, %v794
  %v951 = vpack.c.b16 %v808, %v795
  %v952 = vpack.c.b16 %v809, %v796
  %v953 = vpack.c.b16 %v810, %v797
  %v954 = vpack.c.b16 %v811, %v798
  %v955 = vpack.c.b16 %v812, %v799
  %v956 = vpack.c.b16 %v813, %v800
  %v957 = vpack.c.b16 %v814, %v801
  %v958 = vpack.c.b16 %v828, %v815
  %v959 = vpack.c.b16 %v829, %v816
  %v960 = vpack.c.b16 %v830, %v817
  %v961 = vpack.c.b16 %v831, %v818
  %v962 = vpack.c.b16 %v832, %v819
  %v963 = vpack.c.b16 %v833, %v820
  %v964 = vpack.c.b16 %v834, %v821
  %v965 = vpack.c.b16 %v835, %v822
  %v966 = vpack.c.b16 %v836, %v823
  %v967 = vpack.c.b16 %v837, %v824
  %v968 = vpack.c.b16 %v838, %v825
  %v969 = vpack.c.b16 %v839, %v826
  %v970 = vpack.c.b16 %v840, %v827
  %v971 = vpack.c.b16 %v854, %v841
  %v972 = vpack.c.b16 %v855, %v842
  %v973 = vpack.c.b16 %v856, %v843
  %v974 = vpack.c.b16 %v857, %v844
  %v975 = vpack.c.b16 %v858, %v845
  %v976 = vpack.c.b16 %v859, %v846
  %v977 = vpack.c.b16 %v860, %v847
  %v978 = vpack.c.b16 %v861, %v848
  %v979 = vpack.c.b16 %v862, %v849
  %v980 = vpack.c.b16 %v863, %v850
  %v981 = vpack.c.b16 %v864, %v851
  %v982 = vpack.c.b16 %v865, %v852
  %v983 = vpack.c.b16 %v866, %v853
  %v984 = vpack.c.b16 %v880, %v867
  %v985 = vpack.c.b16 %v881, %v868
  %v986 = vpack.c.b16 %v882, %v869
  %v987 = vpack.c.b16 %v883, %v870
  %v988 = vpack.c.b16 %v884, %v871
  %v989 = vpack.c.b16 %v885, %v872
  %v990 = vpack.c.b16 %v886, %v873
  %v991 = vpack.c.b16 %v887, %v874
  %v992 = vpack.c.b16 %v888, %v875
  %v993 = vpack.c.b16 %v889, %v876
  %v994 = vpack.c.b16 %v890, %v877
  %v995 = vpack.c.b16 %v891, %v878
  %v996 = vpack.c.b16 %v892, %v879
  %v1517 = vunpack.c.l.b16 %v135
  %v1518 = vunpack.c.h.b16 %v135
  %v1519 = vunpack.c.l.b16 %v136
  %v1520 = vunpack.c.h.b16 %v136
  %v1521 = vunpack.c.l.b16 %v137
  %v1522 = vunpack.c.h.b16 %v137
  %v1523 = vunpack.c.l.b16 %v138
  %v1524 = vunpack.c.h.b16 %v138
  %v1525 = vunpack.c.l.b16 %v139
  %v1526 = vunpack.c.h.b16 %v139
  %v1527 = vunpack.c.l.b16 %v140
  %v1528 = vunpack.c.h.b16 %v140
  %v1529 = vunpack.c.l.b16 %v141
  %v1530 = vunpack.c.h.b16 %v141
  %v1531 = vunpack.c.l.b16 %v142
  %v1532 = vunpack.c.h.b16 %v142
  %v1533 = vunpack.c.l.b16 %v143
  %v1534 = vunpack.c.h.b16 %v143
  %v1535 = vunpack.c.l.b16 %v144
  %v1536 = vunpack.c.h.b16 %v144
  %v1537 = vunpack.c.l.b16 %v145
  %v1538 = vunpack.c.h.b16 %v145
  %v1539 = vunpack.c.l.b16 %v146
  %v1540 = vunpack.c.h.b16 %v146
  %v1541 = vunpack.c.l.b16 %v147
  %v1542 = vunpack.c.h.b16 %v147
  %v1543 = vunpack.c.l.b16 %v148
  %v1544 = vunpack.c.h.b16 %v148
  %v1545 = vunpack.c.l.b16 %v149
  %v1546 = vunpack.c.h.b16 %v149
  %v1547 = vunpack.c.l.b16 %v150
  %v1548 = vunpack.c.h.b16 %v150
  %v1549 = vunpack.c.l.b16 %v151
  %v1550 = vunpack.c.h.b16 %v151
  %v1551 = vunpack.c.l.b16 %v152
  %v1552 = vunpack.c.h.b16 %v152
  %v1553 = vunpack.c.l.b16 %v153
  %v1554 = vunpack.c.h.b16 %v153
  %v1555 = vunpack.c.l.b16 %v154
  %v1556 = vunpack.c.h.b16 %v154
  %v1557 = vunpack.c.l.b16 %v155
  %v1558 = vunpack.c.h.b16 %v155
  %v1559 = vunpack.c.l.b16 %v156
  %v1560 = vunpack.c.h.b16 %v156
  %v1561 = vunpack.c.l.b16 %v157
  %v1562 = vunpack.c.h.b16 %v157
  %v1563 = vunpack.c.l.b16 %v158
  %v1564 = vunpack.c.h.b16 %v158
  %v1565 = vunpack.c.l.b16 %v159
  %v1566 = vunpack.c.h.b16 %v159
  %v1567 = vunpack.c.l.b16 %v160
  %v1568 = vunpack.c.h.b16 %v160
  %v1569 = vunpack.c.l.b16 %v161
  %v1570 = vunpack.c.h.b16 %v161
  %v1571 = vunpack.c.l.b16 %v162
  %v1572 = vunpack.c.h.b16 %v162
  %v1573 = vunpack.c.l.b16 %v163
  %v1574 = vunpack.c.h.b16 %v163
  %v1575 = vunpack.c.l.b16 %v164
  %v1576 = vunpack.c.h.b16 %v164
  %v1577 = vunpack.c.l.b16 %v165
  %v1578 = vunpack.c.h.b16 %v165
  %v1579 = vunpack.c.l.b16 %v166
  %v1580 = vunpack.c.h.b16 %v166
  %v1581 = vunpack.c.l.b16 %v167
  %v1582 = vunpack.c.h.b16 %v167
  %v1583 = vunpack.c.l.b16 %v168
  %v1584 = vunpack.c.h.b16 %v168
  %v1585 = vunpack.c.l.b16 %v169
  %v1586 = vunpack.c.h.b16 %v169
  %v1587 = vunpack.c.l.b16 %v170
  %v1588 = vunpack.c.h.b16 %v170
  %v1589 = vunpack.c.l.b16 %v171
  %v1590 = vunpack.c.h.b16 %v171
  %v1591 = vunpack.c.l.b16 %v172
  %v1592 = vunpack.c.h.b16 %v172
  %v1593 = vunpack.c.l.b16 %v173
  %v1594 = vunpack.c.h.b16 %v173
  %v1595 = vunpack.c.l.b16 %v174
  %v1596 = vunpack.c.h.b16 %v174
  %v1597 = vunpack.c.l.b16 %v175
  %v1598 = vunpack.c.h.b16 %v175
  %v1599 = vunpack.c.l.b16 %v176
  %v1600 = vunpack.c.h.b16 %v176
  %v1601 = vunpack.c.l.b16 %v177
  %v1602 = vunpack.c.h.b16 %v177
  %v1603 = vunpack.c.l.b16 %v178
  %v1604 = vunpack.c.h.b16 %v178
  %v1605 = vunpack.c.l.b16 %v179
  %v1606 = vunpack.c.h.b16 %v179
  %v1607 = vunpack.c.l.b16 %v180
  %v1608 = vunpack.c.h.b16 %v180
  %v1609 = vunpack.c.l.b16 %v181
  %v1610 = vunpack.c.h.b16 %v181
  %v1611 = vunpack.c.l.b16 %v182
  %v1612 = vunpack.c.h.b16 %v182
  %v1613 = vunpack.c.l.b16 %v183
  %v1614 = vunpack.c.h.b16 %v183
  %v1615 = vunpack.c.l.b16 %v184
  %v1616 = vunpack.c.h.b16 %v184
  %v1617 = vunpack.c.l.b16 %v185
  %v1618 = vunpack.c.h.b16 %v185
  %v1619 = vunpack.c.l.b16 %v186
  %v1620 = vunpack.c.h.b16 %v186
  %v1621 = vunpack.c.l.b16 %v187
  %v1622 = vunpack.c.h.b16 %v187
  %v1623 = vunpack.c.l.b16 %v188
  %v1624 = vunpack.c.h.b16 %v188
  %v1625 = vunpack.c.l.b16 %v189
  %v1626 = vunpack.c.h.b16 %v189
  %v1627 = vunpack.c.l.b16 %v190
  %v1628 = vunpack.c.h.b16 %v190
  %v1629 = vunpack.c.l.b16 %v191
  %v1630 = vunpack.c.h.b16 %v191
  %v1631 = vunpack.c.l.b16 %v192
  %v1632 = vunpack.c.h.b16 %v192
  %v1633 = vunpack.c.l.b16 %v193
  %v1634 = vunpack.c.h.b16 %v193
  %v1635 = vunpack.c.l.b16 %v194
  %v1636 = vunpack.c.h.b16 %v194
  %v1637 = vunpack.c.l.b16 %v195
  %v1638 = vunpack.c.h.b16 %v195
  %v1639 = vunpack.c.l.b16 %v196
  %v1640 = vunpack.c.h.b16 %v196
  %v1641 = vunpack.c.l.b16 %v197
  %v1642 = vunpack.c.h.b16 %v197
  %v1643 = vunpack.c.l.b16 %v198
  %v1644 = vunpack.c.h.b16 %v198
  %v1645 = vunpack.c.l.b16 %v199
  %v1646 = vunpack.c.h.b16 %v199
  %v1647 = vunpack.c.l.b16 %v200
  %v1648 = vunpack.c.h.b16 %v200
  %v1649 = vunpack.c.l.b16 %v201
  %v1650 = vunpack.c.h.b16 %v201
  %v1651 = vunpack.c.l.b16 %v202
  %v1652 = vunpack.c.h.b16 %v202
  %v1653 = vunpack.c.l.b16 %v203
  %v1654 = vunpack.c.h.b16 %v203
  %v1655 = vunpack.c.l.b16 %v204
  %v1656 = vunpack.c.h.b16 %v204
  %v1657 = vunpack.c.l.b16 %v205
  %v1658 = vunpack.c.h.b16 %v205
  %v1659 = vunpack.c.l.b16 %v206
  %v1660 = vunpack.c.h.b16 %v206
  %v1661 = vunpack.c.l.b16 %v207
  %v1662 = vunpack.c.h.b16 %v207
  %v1663 = vunpack.c.l.b16 %v208
  %v1664 = vunpack.c.h.b16 %v208
  %v1665 = vunpack.c.l.b16 %v209
  %v1666 = vunpack.c.h.b16 %v209
  %v1667 = vunpack.c.l.b16 %v210
  %v1668 = vunpack.c.h.b16 %v210
  %v1669 = vunpack.c.l.b16 %v211
  %v1670 = vunpack.c.h.b16 %v211
  %v1671 = vunpack.c.l.b16 %v212
  %v1672 = vunpack.c.h.b16 %v212
  %v1673 = vunpack.c.l.b16 %v213
  %v1674 = vunpack.c.h.b16 %v213
  %v1675 = vunpack.c.l.b16 %v214
  %v1676 = vunpack.c.h.b16 %v214
  %v1677 = vunpack.c.l.b16 %v215
  %v1678 = vunpack.c.h.b16 %v215
  %v1679 = vunpack.c.l.b16 %v216
  %v1680 = vunpack.c.h.b16 %v216
  %v1681 = vunpack.c.l.b16 %v217
  %v1682 = vunpack.c.h.b16 %v217
  %v1683 = vunpack.c.l.b16 %v218
  %v1684 = vunpack.c.h.b16 %v218
  %v1685 = vunpack.c.l.b16 %v219
  %v1686 = vunpack.c.h.b16 %v219
  %v1687 = vunpack.c.l.b16 %v220
  %v1688 = vunpack.c.h.b16 %v220
  %v1689 = vunpack.c.l.b16 %v221
  %v1690 = vunpack.c.h.b16 %v221
  %v1691 = vunpack.c.l.b16 %v222
  %v1692 = vunpack.c.h.b16 %v222
  %v1693 = vunpack.c.l.b16 %v223
  %v1694 = vunpack.c.h.b16 %v223
  %v1695 = vunpack.c.l.b16 %v224
  %v1696 = vunpack.c.h.b16 %v224
  %v1697 = vunpack.c.l.b16 %v225
  %v1698 = vunpack.c.h.b16 %v225
  %v1699 = vunpack.c.l.b16 %v226
  %v1700 = vunpack.c.h.b16 %v226
  %v1701 = vunpack.c.l.b16 %v227
  %v1702 = vunpack.c.h.b16 %v227
  %v1703 = vunpack.c.l.b16 %v228
  %v1704 = vunpack.c.h.b16 %v228
  %v1705 = vunpack.c.l.b16 %v229
  %v1706 = vunpack.c.h.b16 %v229
  %v1707 = vunpack.c.l.b16 %v230
  %v1708 = vunpack.c.h.b16 %v230
  %v1709 = vunpack.c.l.b16 %v231
  %v1710 = vunpack.c.h.b16 %v231
  %v1711 = vunpack.c.l.b16 %v232
  %v1712 = vunpack.c.h.b16 %v232
  %v1713 = vunpack.c.l.b16 %v233
  %v1714 = vunpack.c.h.b16 %v233
  %v1715 = vunpack.c.l.b16 %v234
  %v1716 = vunpack.c.h.b16 %v234
  %v1717 = vunpack.c.l.b16 %v235
  %v1718 = vunpack.c.h.b16 %v235
  %v1719 = vunpack.c.l.b16 %v236
  %v1720 = vunpack.c.h.b16 %v236
  %v1721 = vunpack.c.l.b16 %v237
  %v1722 = vunpack.c.h.b16 %v237
  %v1723 = vunpack.c.l.b16 %v238
  %v1724 = vunpack.c.h.b16 %v238
  %v1725 = vunpack.c.l.b16 %v239
  %v1726 = vunpack.c.h.b16 %v239
  %v1727 = vunpack.c.l.b16 %v240
  %v1728 = vunpack.c.h.b16 %v240
  %v1729 = vunpack.c.l.b16 %v241
  %v1730 = vunpack.c.h.b16 %v241
  %v1731 = vunpack.c.l.b16 %v242
  %v1732 = vunpack.c.h.b16 %v242
  %v1733 = vunpack.c.l.b16 %v243
  %v1734 = vunpack.c.h.b16 %v243
  %v1735 = vunpack.c.l.b16 %v244
  %v1736 = vunpack.c.h.b16 %v244
  %v1737 = vunpack.c.l.b16 %v245
  %v1738 = vunpack.c.h.b16 %v245
  %v1739 = vunpack.c.l.b16 %v246
  %v1740 = vunpack.c.h.b16 %v246
  %v1741 = vunpack.c.l.b16 %v247
  %v1742 = vunpack.c.h.b16 %v247
  %v1743 = vunpack.c.l.b16 %v248
  %v1744 = vunpack.c.h.b16 %v248
  %v1745 = vunpack.c.l.b16 %v249
  %v1746 = vunpack.c.h.b16 %v249
  %v1747 = vunpack.c.l.b16 %v250
  %v1748 = vunpack.c.h.b16 %v250
  %v1749 = vunpack.c.l.b16 %v251
  %v1750 = vunpack.c.h.b16 %v251
  %v1751 = vunpack.c.l.b16 %v252
  %v1752 = vunpack.c.h.b16 %v252
  %v1753 = vunpack.c.l.b16 %v253
  %v1754 = vunpack.c.h.b16 %v253
  %v1755 = vunpack.c.l.b16 %v254
  %v1756 = vunpack.c.h.b16 %v254
  %v1757 = vunpack.c.l.b16 %v255
  %v1758 = vunpack.c.h.b16 %v255
  %v1759 = vunpack.c.l.b16 %v256
  %v1760 = vunpack.c.h.b16 %v256
  %v1761 = vunpack.c.l.b16 %v257
  %v1762 = vunpack.c.h.b16 %v257
  %v1763 = vunpack.c.l.b16 %v258
  %v1764 = vunpack.c.h.b16 %v258
  %v1765 = vunpack.c.l.b16 %v259
  %v1766 = vunpack.c.h.b16 %v259
  %v1767 = vunpack.c.l.b16 %v260
  %v1768 = vunpack.c.h.b16 %v260
  %v1769 = vunpack.c.l.b16 %v261
  %v1770 = vunpack.c.h.b16 %v261
  %v1771 = vunpack.c.l.b16 %v262
  %v1772 = vunpack.c.h.b16 %v262
  %v1773 = vunpack.c.l.b16 %v263
  %v1774 = vunpack.c.h.b16 %v263
  %v1775 = vunpack.c.l.b16 %v264
  %v1776 = vunpack.c.h.b16 %v264
  %v1777 = vunpack.c.l.b16 %v265
  %v1778 = vunpack.c.h.b16 %v265
  %v1779 = vunpack.c.l.b16 %v266
  %v1780 = vunpack.c.h.b16 %v266
  %v1781 = vunpack.c.l.b16 %v267
  %v1782 = vunpack.c.h.b16 %v267
  %v1783 = vunpack.c.l.b16 %v268
  %v1784 = vunpack.c.h.b16 %v268
  %v1785 = vunpack.c.l.b16 %v269
  %v1786 = vunpack.c.h.b16 %v269
  %v1787 = vunpack.c.l.b16 %v270
  %v1788 = vunpack.c.h.b16 %v270
  %v1789 = vunpack.c.l.b16 %v271
  %v1790 = vunpack.c.h.b16 %v271
  %v1791 = vunpack.c.l.b16 %v272
  %v1792 = vunpack.c.h.b16 %v272
  %v1793 = vunpack.c.l.b16 %v273
  %v1794 = vunpack.c.h.b16 %v273
  %v1795 = vunpack.c.l.b16 %v274
  %v1796 = vunpack.c.h.b16 %v274
  %v1797 = vunpack.c.l.b16 %v275
  %v1798 = vunpack.c.h.b16 %v275
  %v1799 = vunpack.c.l.b16 %v276
  %v1800 = vunpack.c.h.b16 %v276
  %v1801 = vunpack.c.l.b16 %v277
  %v1802 = vunpack.c.h.b16 %v277
  %v1803 = vunpack.c.l.b16 %v278
  %v1804 = vunpack.c.h.b16 %v278
  %v1805 = vunpack.c.l.b16 %v279
  %v1806 = vunpack.c.h.b16 %v279
  %v1807 = vunpack.c.l.b16 %v280
  %v1808 = vunpack.c.h.b16 %v280
  %v1809 = vunpack.c.l.b16 %v281
  %v1810 = vunpack.c.h.b16 %v281
  %v1811 = vunpack.c.l.b16 %v282
  %v1812 = vunpack.c.h.b16 %v282
  %v1813 = vunpack.c.l.b16 %v283
  %v1814 = vunpack.c.h.b16 %v283
  %v1815 = vunpack.c.l.b16 %v284
  %v1816 = vunpack.c.h.b16 %v284
  %v1817 = vunpack.c.l.b16 %v285
  %v1818 = vunpack.c.h.b16 %v285
  %v1819 = vunpack.c.l.b16 %v286
  %v1820 = vunpack.c.h.b16 %v286
  %v1821 = vunpack.c.l.b16 %v287
  %v1822 = vunpack.c.h.b16 %v287
  %v1823 = vunpack.c.l.b16 %v288
  %v1824 = vunpack.c.h.b16 %v288
  %v1825 = vunpack.c.l.b16 %v289
  %v1826 = vunpack.c.h.b16 %v289
  %v1827 = vunpack.c.l.b16 %v290
  %v1828 = vunpack.c.h.b16 %v290
  %v1829 = vunpack.c.l.b16 %v291
  %v1830 = vunpack.c.h.b16 %v291
  %v1831 = vunpack.c.l.b16 %v292
  %v1832 = vunpack.c.h.b16 %v292
  %v1833 = vunpack.c.l.b16 %v293
  %v1834 = vunpack.c.h.b16 %v293
  %v1835 = vunpack.c.l.b16 %v294
  %v1836 = vunpack.c.h.b16 %v294
  %v1837 = vunpack.c.l.b16 %v295
  %v1838 = vunpack.c.h.b16 %v295
  %v1839 = vunpack.c.l.b16 %v296
  %v1840 = vunpack.c.h.b16 %v296
  %v1841 = vunpack.c.l.b16 %v297
  %v1842 = vunpack.c.h.b16 %v297
  %v1843 = vunpack.c.l.b16 %v298
  %v1844 = vunpack.c.h.b16 %v298
  %v1845 = vunpack.c.l.b16 %v299
  %v1846 = vunpack.c.h.b16 %v299
  %v1847 = vunpack.c.l.b16 %v300
  %v1848 = vunpack.c.h.b16 %v300
  %v1849 = vunpack.c.l.b16 %v301
  %v1850 = vunpack.c.h.b16 %v301
  %v1851 = vunpack.c.l.b16 %v302
  %v1852 = vunpack.c.h.b16 %v302
  %v1853 = vunpack.c.l.b16 %v303
  %v1854 = vunpack.c.h.b16 %v303
  %v1855 = vunpack.c.l.b16 %v304
  %v1856 = vunpack.c.h.b16 %v304
  %v1857 = vunpack.c.l.b16 %v305
  %v1858 = vunpack.c.h.b16 %v305
  %v1859 = vunpack.c.l.b16 %v306
  %v1860 = vunpack.c.h.b16 %v306
  %v1861 = vunpack.c.l.b16 %v307
  %v1862 = vunpack.c.h.b16 %v307
  %v1863 = vunpack.c.l.b16 %v308
  %v1864 = vunpack.c.h.b16 %v308
  %v1865 = vunpack.c.l.b16 %v309
  %v1866 = vunpack.c.h.b16 %v309
  %v1867 = vunpack.c.l.b16 %v310
  %v1868 = vunpack.c.h.b16 %v310
  %v1869 = vunpack.c.l.b16 %v311
  %v1870 = vunpack.c.h.b16 %v311
  %v1871 = vunpack.c.l.b16 %v312
  %v1872 = vunpack.c.h.b16 %v312
  %v1873 = vunpack.c.l.b16 %v313
  %v1874 = vunpack.c.h.b16 %v313
  %v1875 = vunpack.c.l.b16 %v314
  %v1876 = vunpack.c.h.b16 %v314
  %v1877 = vunpack.c.l.b16 %v315
  %v1878 = vunpack.c.h.b16 %v315
  %v1879 = vunpack.c.l.b16 %v316
  %v1880 = vunpack.c.h.b16 %v316
  %v1881 = vunpack.c.l.b16 %v317
  %v1882 = vunpack.c.h.b16 %v317
  %v1883 = vunpack.c.l.b16 %v318
  %v1884 = vunpack.c.h.b16 %v318
  %v1885 = vunpack.c.l.b16 %v319
  %v1886 = vunpack.c.h.b16 %v319
  %v1887 = vunpack.c.l.b16 %v320
  %v1888 = vunpack.c.h.b16 %v320
  %v1889 = vunpack.c.l.b16 %v321
  %v1890 = vunpack.c.h.b16 %v321
  %v1891 = vunpack.c.l.b16 %v322
  %v1892 = vunpack.c.h.b16 %v322
  %v1893 = vunpack.c.l.b16 %v323
  %v1894 = vunpack.c.h.b16 %v323
  %v1895 = vunpack.c.l.b16 %v324
  %v1896 = vunpack.c.h.b16 %v324
  %v1897 = vunpack.c.l.b16 %v325
  %v1898 = vunpack.c.h.b16 %v325
  %v1899 = vunpack.c.l.b16 %v326
  %v1900 = vunpack.c.h.b16 %v326
  %v1901 = vunpack.c.l.b16 %v327
  %v1902 = vunpack.c.h.b16 %v327
  %v1903 = vunpack.c.l.b16 %v328
  %v1904 = vunpack.c.h.b16 %v328
  %v1905 = vunpack.c.l.b16 %v329
  %v1906 = vunpack.c.h.b16 %v329
  %v1907 = vunpack.c.l.b16 %v330
  %v1908 = vunpack.c.h.b16 %v330
  %v1909 = vunpack.c.l.b16 %v331
  %v1910 = vunpack.c.h.b16 %v331
  %v1911 = vunpack.c.l.b16 %v332
  %v1912 = vunpack.c.h.b16 %v332
  %v1913 = vunpack.c.l.b16 %v333
  %v1914 = vunpack.c.h.b16 %v333
  %v1915 = vunpack.c.l.b16 %v334
  %v1916 = vunpack.c.h.b16 %v334
  %v1917 = vunpack.c.l.b16 %v335
  %v1918 = vunpack.c.h.b16 %v335
  %v1919 = vunpack.c.l.b16 %v336
  %v1920 = vunpack.c.h.b16 %v336
  %v1921 = vunpack.c.l.b16 %v337
  %v1922 = vunpack.c.h.b16 %v337
  %v1923 = vunpack.c.l.b16 %v338
  %v1924 = vunpack.c.h.b16 %v338
  %v1925 = vunpack.c.l.b16 %v339
  %v1926 = vunpack.c.h.b16 %v339
  %v1927 = vunpack.c.l.b16 %v340
  %v1928 = vunpack.c.h.b16 %v340
  %v1929 = vunpack.c.l.b16 %v341
  %v1930 = vunpack.c.h.b16 %v341
  %v1931 = vunpack.c.l.b16 %v342
  %v1932 = vunpack.c.h.b16 %v342
  %v1933 = vunpack.c.l.b16 %v343
  %v1934 = vunpack.c.h.b16 %v343
  %v1935 = vunpack.c.l.b16 %v344
  %v1936 = vunpack.c.h.b16 %v344
  %v1937 = vunpack.c.l.b16 %v345
  %v1938 = vunpack.c.h.b16 %v345
  %v1939 = vunpack.c.l.b16 %v346
  %v1940 = vunpack.c.h.b16 %v346
  %v1941 = vunpack.c.l.b16 %v347
  %v1942 = vunpack.c.h.b16 %v347
  %v1943 = vunpack.c.l.b16 %v348
  %v1944 = vunpack.c.h.b16 %v348
  %v1945 = vunpack.c.l.b16 %v349
  %v1946 = vunpack.c.h.b16 %v349
  %v1947 = vunpack.c.l.b16 %v350
  %v1948 = vunpack.c.h.b16 %v350
  %v1949 = vunpack.c.l.b16 %v351
  %v1950 = vunpack.c.h.b16 %v351
  %v1951 = vunpack.c.l.b16 %v352
  %v1952 = vunpack.c.h.b16 %v352
  %v1953 = vunpack.c.l.b16 %v353
  %v1954 = vunpack.c.h.b16 %v353
  %v1955 = vunpack.c.l.b16 %v354
  %v1956 = vunpack.c.h.b16 %v354
  %v1957 = vunpack.c.l.b16 %v355
  %v1958 = vunpack.c.h.b16 %v355
  %v1959 = vunpack.c.l.b16 %v356
  %v1960 = vunpack.c.h.b16 %v356
  %v1961 = vunpack.c.l.b16 %v357
  %v1962 = vunpack.c.h.b16 %v357
  %v1963 = vunpack.c.l.b16 %v358
  %v1964 = vunpack.c.h.b16 %v358
  %v1965 = vunpack.c.l.b16 %v359
  %v1966 = vunpack.c.h.b16 %v359
  %v1967 = vunpack.c.l.b16 %v360
  %v1968 = vunpack.c.h.b16 %v360
  %v1969 = vunpack.c.l.b16 %v361
  %v1970 = vunpack.c.h.b16 %v361
  %v1971 = vunpack.c.l.b16 %v362
  %v1972 = vunpack.c.h.b16 %v362
  %v1973 = vunpack.c.l.b16 %v363
  %v1974 = vunpack.c.h.b16 %v363
  %v1975 = vunpack.c.l.b16 %v364
  %v1976 = vunpack.c.h.b16 %v364
  %v1977 = vunpack.c.l.b16 %v365
  %v1978 = vunpack.c.h.b16 %v365
  %v1979 = vunpack.c.l.b16 %v366
  %v1980 = vunpack.c.h.b16 %v366
  %v1981 = vunpack.c.l.b16 %v367
  %v1982 = vunpack.c.h.b16 %v367
  %v1983 = vunpack.c.l.b16 %v368
  %v1984 = vunpack.c.h.b16 %v368
  %v1985 = vunpack.c.l.b16 %v369
  %v1986 = vunpack.c.h.b16 %v369
  %v1987 = vunpack.c.l.b16 %v370
  %v1988 = vunpack.c.h.b16 %v370
  %v1989 = vunpack.c.l.b16 %v371
  %v1990 = vunpack.c.h.b16 %v371
  %v1991 = vunpack.c.l.b16 %v372
  %v1992 = vunpack.c.h.b16 %v372
  %v1993 = vunpack.c.l.b16 %v373
  %v1994 = vunpack.c.h.b16 %v373
  %v1995 = vunpack.c.l.b16 %v374
  %v1996 = vunpack.c.h.b16 %v374
  %v1997 = vunpack.c.l.b16 %v375
  %v1998 = vunpack.c.h.b16 %v375
  %v1999 = vunpack.c.l.b16 %v376
  %v2000 = vunpack.c.h.b16 %v376
  %v2001 = vunpack.c.l.b16 %v377
  %v2002 = vunpack.c.h.b16 %v377
  %v2003 = vunpack.c.l.b16 %v378
  %v2004 = vunpack.c.h.b16 %v378
  %v2005 = vunpack.c.l.b16 %v379
  %v2006 = vunpack.c.h.b16 %v379
  %v2007 = vunpack.c.l.b16 %v380
  %v2008 = vunpack.c.h.b16 %v380
  %v2009 = vunpack.c.l.b16 %v381
  %v2010 = vunpack.c.h.b16 %v381
  %v2011 = vunpack.c.l.b16 %v382
  %v2012 = vunpack.c.h.b16 %v382
  %v2013 = vunpack.c.l.b16 %v383
  %v2014 = vunpack.c.h.b16 %v383
  %v2015 = vunpack.c.l.b16 %v384
  %v2016 = vunpack.c.h.b16 %v384
  %v2017 = vunpack.c.l.b16 %v385
  %v2018 = vunpack.c.h.b16 %v385
  %v2019 = vunpack.c.l.b16 %v386
  %v2020 = vunpack.c.h.b16 %v386
  %v2021 = vunpack.c.l.b16 %v387
  %v2022 = vunpack.c.h.b16 %v387
  %v2023 = vunpack.c.l.b16 %v388
  %v2024 = vunpack.c.h.b16 %v388
  %v2025 = vunpack.c.l.b16 %v389
  %v2026 = vunpack.c.h.b16 %v389
  %v2027 = vunpack.c.l.b16 %v390
  %v2028 = vunpack.c.h.b16 %v390
  %v2029 = vunpack.c.l.b16 %v391
  %v2030 = vunpack.c.h.b16 %v391
  %v2031 = vunpack.c.l.b16 %v392
  %v2032 = vunpack.c.h.b16 %v392
  %v2033 = vunpack.c.l.b16 %v393
  %v2034 = vunpack.c.h.b16 %v393
  %v2035 = vunpack.c.l.b16 %v394
  %v2036 = vunpack.c.h.b16 %v394
  %v2037 = vunpack.c.l.b16 %v395
  %v2038 = vunpack.c.h.b16 %v395
  %v2039 = vunpack.c.l.b16 %v396
  %v2040 = vunpack.c.h.b16 %v396
  %v2041 = vunpack.c.l.b16 %v397
  %v2042 = vunpack.c.h.b16 %v397
  %v2043 = vunpack.c.l.b16 %v398
  %v2044 = vunpack.c.h.b16 %v398
  %v2045 = vunpack.c.l.b16 %v399
  %v2046 = vunpack.c.h.b16 %v399
  %v2047 = vunpack.c.l.b16 %v400
  %v2048 = vunpack.c.h.b16 %v400
  %v2049 = vunpack.c.l.b16 %v401
  %v2050 = vunpack.c.h.b16 %v401
  %v2051 = vunpack.c.l.b16 %v402
  %v2052 = vunpack.c.h.b16 %v402
  %v2053 = vunpack.c.l.b16 %v403
  %v2054 = vunpack.c.h.b16 %v403
  %v2055 = vunpack.c.l.b16 %v404
  %v2056 = vunpack.c.h.b16 %v404
  %v2057 = vunpack.c.l.b16 %v405
  %v2058 = vunpack.c.h.b16 %v405
  %v2059 = vunpack.c.l.b16 %v406
  %v2060 = vunpack.c.h.b16 %v406
  %v2061 = vunpack.c.l.b16 %v407
  %v2062 = vunpack.c.h.b16 %v407
  %v2063 = vunpack.c.l.b16 %v408
  %v2064 = vunpack.c.h.b16 %v408
  %v2065 = vunpack.c.l.b16 %v409
  %v2066 = vunpack.c.h.b16 %v409
  %v2067 = vunpack.c.l.b16 %v410
  %v2068 = vunpack.c.h.b16 %v410
  %v2069 = vunpack.c.l.b16 %v411
  %v2070 = vunpack.c.h.b16 %v411
  %v2071 = vunpack.c.l.b16 %v412
  %v2072 = vunpack.c.h.b16 %v412
  %v2073 = vunpack.c.l.b16 %v413
  %v2074 = vunpack.c.h.b16 %v413
  %v2075 = vunpack.c.l.b16 %v414
  %v2076 = vunpack.c.h.b16 %v414
  %v2077 = vunpack.c.l.b16 %v415
  %v2078 = vunpack.c.h.b16 %v415
  %v2079 = vunpack.c.l.b16 %v416
  %v2080 = vunpack.c.h.b16 %v416
  %v2081 = vunpack.c.l.b16 %v417
  %v2082 = vunpack.c.h.b16 %v417
  %v2083 = vunpack.c.l.b16 %v418
  %v2084 = vunpack.c.h.b16 %v418
  %v2085 = vunpack.c.l.b16 %v419
  %v2086 = vunpack.c.h.b16 %v419
  %v2087 = vunpack.c.l.b16 %v420
  %v2088 = vunpack.c.h.b16 %v420
  %v2089 = vunpack.c.l.b16 %v421
  %v2090 = vunpack.c.h.b16 %v421
  %v2091 = vunpack.c.l.b16 %v422
  %v2092 = vunpack.c.h.b16 %v422
  %v2093 = vunpack.c.l.b16 %v423
  %v2094 = vunpack.c.h.b16 %v423
  %v2095 = vunpack.c.l.b16 %v424
  %v2096 = vunpack.c.h.b16 %v424
  %v2097 = vunpack.c.l.b16 %v425
  %v2098 = vunpack.c.h.b16 %v425
  %v2099 = vunpack.c.l.b16 %v426
  %v2100 = vunpack.c.h.b16 %v426
  %v2101 = vunpack.c.l.b16 %v427
  %v2102 = vunpack.c.h.b16 %v427
  %v2103 = vunpack.c.l.b16 %v428
  %v2104 = vunpack.c.h.b16 %v428
  %v2105 = vunpack.c.l.b16 %v429
  %v2106 = vunpack.c.h.b16 %v429
  %v2107 = vunpack.c.l.b16 %v430
  %v2108 = vunpack.c.h.b16 %v430
  %v2109 = vunpack.c.l.b16 %v431
  %v2110 = vunpack.c.h.b16 %v431
  %v2111 = vunpack.c.l.b16 %v432
  %v2112 = vunpack.c.h.b16 %v432
  %v2113 = vunpack.c.l.b16 %v433
  %v2114 = vunpack.c.h.b16 %v433
  %v2115 = vunpack.c.l.b16 %v434
  %v2116 = vunpack.c.h.b16 %v434
  %v2117 = vunpack.c.l.b16 %v435
  %v2118 = vunpack.c.h.b16 %v435
  %v2119 = vunpack.c.l.b16 %v436
  %v2120 = vunpack.c.h.b16 %v436
  %v2121 = vunpack.c.l.b16 %v437
  %v2122 = vunpack.c.h.b16 %v437
  %v2123 = vunpack.c.l.b16 %v438
  %v2124 = vunpack.c.h.b16 %v438
  %v2125 = vunpack.c.l.b16 %v439
  %v2126 = vunpack.c.h.b16 %v439
  %v2127 = vunpack.c.l.b16 %v440
  %v2128 = vunpack.c.h.b16 %v440
  %v2129 = vunpack.c.l.b16 %v441
  %v2130 = vunpack.c.h.b16 %v441
  %v2131 = vunpack.c.l.b16 %v442
  %v2132 = vunpack.c.h.b16 %v442
  %v2133 = vunpack.c.l.b16 %v443
  %v2134 = vunpack.c.h.b16 %v443
  %v2135 = vunpack.c.l.b16 %v444
  %v2136 = vunpack.c.h.b16 %v444
  %v2137 = vunpack.c.l.b16 %v445
  %v2138 = vunpack.c.h.b16 %v445
  %v2139 = vunpack.c.l.b16 %v446
  %v2140 = vunpack.c.h.b16 %v446
  %v2141 = vunpack.c.l.b16 %v447
  %v2142 = vunpack.c.h.b16 %v447
  %v2143 = vunpack.c.l.b16 %v448
  %v2144 = vunpack.c.h.b16 %v448
  %v2145 = vunpack.c.l.b16 %v449
  %v2146 = vunpack.c.h.b16 %v449
  %v2147 = vunpack.c.l.b16 %v450
  %v2148 = vunpack.c.h.b16 %v450
  %v2149 = vunpack.c.l.b16 %v451
  %v2150 = vunpack.c.h.b16 %v451
  %v2151 = vunpack.c.l.b16 %v452
  %v2152 = vunpack.c.h.b16 %v452
  %v2153 = vunpack.c.l.b16 %v453
  %v2154 = vunpack.c.h.b16 %v453
  %v2155 = vunpack.c.l.b16 %v454
  %v2156 = vunpack.c.h.b16 %v454
  %v2157 = vunpack.c.l.b16 %v455
  %v2158 = vunpack.c.h.b16 %v455
  %v2159 = vunpack.c.l.b16 %v456
  %v2160 = vunpack.c.h.b16 %v456
  %v2161 = vunpack.c.l.b16 %v457
  %v2162 = vunpack.c.h.b16 %v457
  %v2163 = vunpack.c.l.b16 %v458
  %v2164 = vunpack.c.h.b16 %v458
  %v2165 = vunpack.c.l.b16 %v459
  %v2166 = vunpack.c.h.b16 %v459
  %v2167 = vunpack.c.l.b16 %v460
  %v2168 = vunpack.c.h.b16 %v460
  %v2169 = vunpack.c.l.b16 %v461
  %v2170 = vunpack.c.h.b16 %v461
  %v2171 = vunpack.c.l.b16 %v462
  %v2172 = vunpack.c.h.b16 %v462
  %v2173 = vunpack.c.l.b16 %v463
  %v2174 = vunpack.c.h.b16 %v463
  %v2175 = vunpack.c.l.b16 %v464
  %v2176 = vunpack.c.h.b16 %v464
  %v2177 = vunpack.c.l.b16 %v465
  %v2178 = vunpack.c.h.b16 %v465
  %v2179 = vunpack.c.l.b16 %v466
  %v2180 = vunpack.c.h.b16 %v466
  %v2181 = vunpack.c.l.b16 %v467
  %v2182 = vunpack.c.h.b16 %v467
  %v2183 = vunpack.c.l.b16 %v468
  %v2184 = vunpack.c.h.b16 %v468
  %v2185 = vunpack.c.l.b16 %v469
  %v2186 = vunpack.c.h.b16 %v469
  %v2187 = vunpack.c.l.b16 %v470
  %v2188 = vunpack.c.h.b16 %v470
  %v2189 = vunpack.c.l.b16 %v471
  %v2190 = vunpack.c.h.b16 %v471
  %v2191 = vunpack.c.l.b16 %v472
  %v2192 = vunpack.c.h.b16 %v472
  %v2193 = vunpack.c.l.b16 %v473
  %v2194 = vunpack.c.h.b16 %v473
  %v2195 = vunpack.c.l.b16 %v474
  %v2196 = vunpack.c.h.b16 %v474
  %v2197 = vunpack.c.l.b16 %v475
  %v2198 = vunpack.c.h.b16 %v475
  %v2199 = vunpack.c.l.b16 %v476
  %v2200 = vunpack.c.h.b16 %v476
  %v2201 = vunpack.c.l.b16 %v477
  %v2202 = vunpack.c.h.b16 %v477
  %v2203 = vunpack.c.l.b16 %v478
  %v2204 = vunpack.c.h.b16 %v478
  %v2205 = vunpack.c.l.b16 %v479
  %v2206 = vunpack.c.h.b16 %v479
  %v2207 = vunpack.c.l.b16 %v480
  %v2208 = vunpack.c.h.b16 %v480
  %v2209 = vunpack.c.l.b16 %v481
  %v2210 = vunpack.c.h.b16 %v481
  %v2211 = vunpack.c.l.b16 %v482
  %v2212 = vunpack.c.h.b16 %v482
  %v2213 = vunpack.c.l.b16 %v483
  %v2214 = vunpack.c.h.b16 %v483
  %v2215 = vunpack.c.l.b16 %v484
  %v2216 = vunpack.c.h.b16 %v484
  %v2217 = vunpack.c.l.b16 %v485
  %v2218 = vunpack.c.h.b16 %v485
  %v2219 = vunpack.c.l.b16 %v486
  %v2220 = vunpack.c.h.b16 %v486
  %v2221 = vunpack.c.l.b16 %v487
  %v2222 = vunpack.c.h.b16 %v487
  %v2223 = vunpack.c.l.b16 %v488
  %v2224 = vunpack.c.h.b16 %v488
  %v2225 = vunpack.c.l.b16 %v489
  %v2226 = vunpack.c.h.b16 %v489
  %v2227 = vunpack.c.l.b16 %v490
  %v2228 = vunpack.c.h.b16 %v490
  %v2229 = vunpack.c.l.b16 %v491
  %v2230 = vunpack.c.h.b16 %v491
  %v2231 = vunpack.c.l.b16 %v492
  %v2232 = vunpack.c.h.b16 %v492
  %v2233 = vunpack.c.l.b16 %v493
  %v2234 = vunpack.c.h.b16 %v493
  %v2235 = vunpack.c.l.b16 %v494
  %v2236 = vunpack.c.h.b16 %v494
  %v2237 = vunpack.c.l.b16 %v495
  %v2238 = vunpack.c.h.b16 %v495
  %v2239 = vunpack.c.l.b16 %v496
  %v2240 = vunpack.c.h.b16 %v496
  %v2241 = vunpack.c.l.b16 %v497
  %v2242 = vunpack.c.h.b16 %v497
  %v2243 = vunpack.c.l.b16 %v498
  %v2244 = vunpack.c.h.b16 %v498
  %v2245 = vunpack.c.l.b16 %v499
  %v2246 = vunpack.c.h.b16 %v499
  %v2247 = vunpack.c.l.b16 %v500
  %v2248 = vunpack.c.h.b16 %v500
  %v2249 = vunpack.c.l.b16 %v501
  %v2250 = vunpack.c.h.b16 %v501
  %v2251 = vunpack.c.l.b16 %v502
  %v2252 = vunpack.c.h.b16 %v502
  %v2253 = vunpack.c.l.b16 %v503
  %v2254 = vunpack.c.h.b16 %v503
  %v2255 = vunpack.c.l.b16 %v504
  %v2256 = vunpack.c.h.b16 %v504
  %v2257 = vunpack.c.l.b16 %v505
  %v2258 = vunpack.c.h.b16 %v505
  %v2259 = vunpack.c.l.b16 %v506
  %v2260 = vunpack.c.h.b16 %v506
  %v2261 = vunpack.c.l.b16 %v507
  %v2262 = vunpack.c.h.b16 %v507
  %v2263 = vunpack.c.l.b16 %v508
  %v2264 = vunpack.c.h.b16 %v508
  %v2265 = vunpack.c.l.b16 %v509
  %v2266 = vunpack.c.h.b16 %v509
  %v2267 = vunpack.c.l.b16 %v510
  %v2268 = vunpack.c.h.b16 %v510
  %v2269 = vunpack.c.l.b16 %v511
  %v2270 = vunpack.c.h.b16 %v511
  %v2271 = vunpack.c.l.b16 %v512
  %v2272 = vunpack.c.h.b16 %v512
  %v2273 = vunpack.c.l.b16 %v513
  %v2274 = vunpack.c.h.b16 %v513
  %v2275 = vunpack.c.l.b16 %v514
  %v2276 = vunpack.c.h.b16 %v514
  %v2277 = vunpack.c.l.b16 %v515
  %v2278 = vunpack.c.h.b16 %v515
  %v2279 = vunpack.c.l.b16 %v516
  %v2280 = vunpack.c.h.b16 %v516
  %v2281 = vunpack.c.l.b16 %v517
  %v2282 = vunpack.c.h.b16 %v517
  %v2283 = vunpack.c.l.b16 %v518
  %v2284 = vunpack.c.h.b16 %v518
  %v2285 = vunpack.c.l.b16 %v519
  %v2286 = vunpack.c.h.b16 %v519
  %v2287 = vunpack.c.l.b16 %v520
  %v2288 = vunpack.c.h.b16 %v520
  %v2289 = vunpack.c.l.b16 %v521
  %v2290 = vunpack.c.h.b16 %v521
  %v2291 = vunpack.c.l.b16 %v522
  %v2292 = vunpack.c.h.b16 %v522
  %v2293 = vunpack.c.l.b16 %v523
  %v2294 = vunpack.c.h.b16 %v523
  %v2295 = vunpack.c.l.b16 %v524
  %v2296 = vunpack.c.h.b16 %v524
  %v2297 = vunpack.c.l.b16 %v525
  %v2298 = vunpack.c.h.b16 %v525
  %v2299 = vunpack.c.l.b16 %v526
  %v2300 = vunpack.c.h.b16 %v526
  %v2301 = vunpack.c.l.b16 %v527
  %v2302 = vunpack.c.h.b16 %v527
  %v2303 = vunpack.c.l.b16 %v528
  %v2304 = vunpack.c.h.b16 %v528
  %v2305 = vunpack.c.l.b16 %v529
  %v2306 = vunpack.c.h.b16 %v529
  %v2307 = vunpack.c.l.b16 %v530
  %v2308 = vunpack.c.h.b16 %v530
  %v2309 = vunpack.c.l.b16 %v531
  %v2310 = vunpack.c.h.b16 %v531
  %v2311 = vunpack.c.l.b16 %v532
  %v2312 = vunpack.c.h.b16 %v532
  %v2313 = vunpack.c.l.b16 %v533
  %v2314 = vunpack.c.h.b16 %v533
  %v2315 = vunpack.c.l.b16 %v534
  %v2316 = vunpack.c.h.b16 %v534
  %v2317 = vunpack.c.l.b16 %v535
  %v2318 = vunpack.c.h.b16 %v535
  %v2319 = vunpack.c.l.b16 %v536
  %v2320 = vunpack.c.h.b16 %v536
  %v2321 = vunpack.c.l.b16 %v537
  %v2322 = vunpack.c.h.b16 %v537
  %v2323 = vunpack.c.l.b16 %v538
  %v2324 = vunpack.c.h.b16 %v538
  %v2325 = vunpack.c.l.b16 %v539
  %v2326 = vunpack.c.h.b16 %v539
  %v2327 = vunpack.c.l.b16 %v540
  %v2328 = vunpack.c.h.b16 %v540
  %v2329 = vunpack.c.l.b16 %v541
  %v2330 = vunpack.c.h.b16 %v541
  %v2331 = vunpack.c.l.b16 %v542
  %v2332 = vunpack.c.h.b16 %v542
  %v2333 = vunpack.c.l.b16 %v543
  %v2334 = vunpack.c.h.b16 %v543
  %v2335 = vunpack.c.l.b16 %v544
  %v2336 = vunpack.c.h.b16 %v544
  %v2337 = vunpack.c.l.b16 %v545
  %v2338 = vunpack.c.h.b16 %v545
  %v2339 = vunpack.c.l.b16 %v546
  %v2340 = vunpack.c.h.b16 %v546
  %v2341 = vunpack.c.l.b16 %v547
  %v2342 = vunpack.c.h.b16 %v547
  %v2343 = vunpack.c.l.b16 %v548
  %v2344 = vunpack.c.h.b16 %v548
  %v2345 = vunpack.c.l.b16 %v549
  %v2346 = vunpack.c.h.b16 %v549
  %v2347 = vunpack.c.l.b16 %v550
  %v2348 = vunpack.c.h.b16 %v550
  %v2349 = vpack.c.b16 %v1521, %v1517
  %v2350 = vpack.c.b16 %v1522, %v1518
  %v2351 = vpack.c.b16 %v1523, %v1519
  %v2352 = vpack.c.b16 %v1524, %v1520
  %v2353 = vpack.c.b16 %v1529, %v1525
  %v2354 = vpack.c.b16 %v1530, %v1526
  %v2355 = vpack.c.b16 %v1531, %v1527
  %v2356 = vpack.c.b16 %v1532, %v1528
  %v2357 = vpack.c.b16 %v1537, %v1533
  %v2358 = vpack.c.b16 %v1538, %v1534
  %v2359 = vpack.c.b16 %v1539, %v1535
  %v2360 = vpack.c.b16 %v1540, %v1536
  %v2361 = vpack.c.b16 %v1545, %v1541
  %v2362 = vpack.c.b16 %v1546, %v1542
  %v2363 = vpack.c.b16 %v1547, %v1543
  %v2364 = vpack.c.b16 %v1548, %v1544
  %v2365 = vpack.c.b16 %v1553, %v1549
  %v2366 = vpack.c.b16 %v1554, %v1550
  %v2367 = vpack.c.b16 %v1555, %v1551
  %v2368 = vpack.c.b16 %v1556, %v1552
  %v2369 = vpack.c.b16 %v1561, %v1557
  %v2370 = vpack.c.b16 %v1562, %v1558
  %v2371 = vpack.c.b16 %v1563, %v1559
  %v2372 = vpack.c.b16 %v1564, %v1560
  %v2373 = vpack.c.b16 %v1569, %v1565
  %v2374 = vpack.c.b16 %v1570, %v1566
  %v2375 = vpack.c.b16 %v1571, %v1567
  %v2376 = vpack.c.b16 %v1572, %v1568
  %v2377 = vpack.c.b16 %v1577, %v1573
  %v2378 = vpack.c.b16 %v1578, %v1574
  %v2379 = vpack.c.b16 %v1579, %v1575
  %v2380 = vpack.c.b16 %v1580, %v1576
  %v2381 = vpack.c.b16 %v1585, %v1581
  %v2382 = vpack.c.b16 %v1586, %v1582
  %v2383 = vpack.c.b16 %v1587, %v1583
  %v2384 = vpack.c.b16 %v1588, %v1584
  %v2385 = vpack.c.b16 %v1593, %v1589
  %v2386 = vpack.c.b16 %v1594, %v1590
  %v2387 = vpack.c.b16 %v1595, %v1591
  %v2388 = vpack.c.b16 %v1596, %v1592
  %v2389 = vpack.c.b16 %v1601, %v1597
  %v2390 = vpack.c.b16 %v1602, %v1598
  %v2391 = vpack.c.b16 %v1603, %v1599
  %v2392 = vpack.c.b16 %v1604, %v1600
  %v2393 = vpack.c.b16 %v1609, %v1605
  %v2394 = vpack.c.b16 %v1610, %v1606
  %v2395 = vpack.c.b16 %v1611, %v1607
  %v2396 = vpack.c.b16 %v1612, %v1608
  %v2397 = vpack.c.b16 %v1617, %v1613
  %v2398 = vpack.c.b16 %v1618, %v1614
  %v2399 = vpack.c.b16 %v1619, %v1615
  %v2400 = vpack.c.b16 %v1620, %v1616
  %v2401 = vpack.c.b16 %v1625, %v1621
  %v2402 = vpack.c.b16 %v1626, %v1622
  %v2403 = vpack.c.b16 %v1627, %v1623
  %v2404 = vpack.c.b16 %v1628, %v1624
  %v2405 = vpack.c.b16 %v1633, %v1629
  %v2406 = vpack.c.b16 %v1634, %v1630
  %v2407 = vpack.c.b16 %v1635, %v1631
  %v2408 = vpack.c.b16 %v1636, %v1632
  %v2409 = vpack.c.b16 %v1641, %v1637
  %v2410 = vpack.c.b16 %v1642, %v1638
  %v2411 = vpack.c.b16 %v1643, %v1639
  %v2412 = vpack.c.b16 %v1644, %v1640
  %v2413 = vpack.c.b16 %v1649, %v1645
  %v2414 = vpack.c.b16 %v1650, %v1646
  %v2415 = vpack.c.b16 %v1651, %v1647
  %v2416 = vpack.c.b16 %v1652, %v1648
  %v2417 = vpack.c.b16 %v1657, %v1653
  %v2418 = vpack.c.b16 %v1658, %v1654
  %v2419 = vpack.c.b16 %v1659, %v1655
  %v2420 = vpack.c.b16 %v1660, %v1656
  %v2421 = vpack.c.b16 %v1665, %v1661
  %v2422 = vpack.c.b16 %v1666, %v1662
  %v2423 = vpack.c.b16 %v1667, %v1663
  %v2424 = vpack.c.b16 %v1668, %v1664
  %v2425 = vpack.c.b16 %v1673, %v1669
  %v2426 = vpack.c.b16 %v1674, %v1670
  %v2427 = vpack.c.b16 %v1675, %v1671
  %v2428 = vpack.c.b16 %v1676, %v1672
  %v2429 = vpack.c.b16 %v1681, %v1677
  %v2430 = vpack.c.b16 %v1682, %v1678
  %v2431 = vpack.c.b16 %v1683, %v1679
  %v2432 = vpack.c.b16 %v1684, %v1680
  %v2433 = vpack.c.b16 %v1689, %v1685
  %v2434 = vpack.c.b16 %v1690, %v1686
  %v2435 = vpack.c.b16 %v1691, %v1687
  %v2436 = vpack.c.b16 %v1692, %v1688
  %v2437 = vpack.c.b16 %v1697, %v1693
  %v2438 = vpack.c.b16 %v1698, %v1694
  %v2439 = vpack.c.b16 %v1699, %v1695
  %v2440 = vpack.c.b16 %v1700, %v1696
  %v2441 = vpack.c.b16 %v1705, %v1701
  %v2442 = vpack.c.b16 %v1706, %v1702
  %v2443 = vpack.c.b16 %v1707, %v1703
  %v2444 = vpack.c.b16 %v1708, %v1704
  %v2445 = vpack.c.b16 %v1713, %v1709
  %v2446 = vpack.c.b16 %v1714, %v1710
  %v2447 = vpack.c.b16 %v1715, %v1711
  %v2448 = vpack.c.b16 %v1716, %v1712
  %v2449 = vpack.c.b16 %v1721, %v1717
  %v2450 = vpack.c.b16 %v1722, %v1718
  %v2451 = vpack.c.b16 %v1723, %v1719
  %v2452 = vpack.c.b16 %v1724, %v1720
  %v2453 = vpack.c.b16 %v1729, %v1725
  %v2454 = vpack.c.b16 %v1730, %v1726
  %v2455 = vpack.c.b16 %v1731, %v1727
  %v2456 = vpack.c.b16 %v1732, %v1728
  %v2457 = vpack.c.b16 %v1737, %v1733
  %v2458 = vpack.c.b16 %v1738, %v1734
  %v2459 = vpack.c.b16 %v1739, %v1735
  %v2460 = vpack.c.b16 %v1740, %v1736
  %v2461 = vpack.c.b16 %v1745, %v1741
  %v2462 = vpack.c.b16 %v1746, %v1742
  %v2463 = vpack.c.b16 %v1747, %v1743
  %v2464 = vpack.c.b16 %v1748, %v1744
  %v2465 = vpack.c.b16 %v1753, %v1749
  %v2466 = vpack.c.b16 %v1754, %v1750
  %v2467 = vpack.c.b16 %v1755, %v1751
  %v2468 = vpack.c.b16 %v1756, %v1752
  %v2469 = vpack.c.b16 %v1761, %v1757
  %v2470 = vpack.c.b16 %v1762, %v1758
  %v2471 = vpack.c.b16 %v1763, %v1759
  %v2472 = vpack.c.b16 %v1764, %v1760
  %v2473 = vpack.c.b16 %v1769, %v1765
  %v2474 = vpack.c.b16 %v1770, %v1766
  %v2475 = vpack.c.b16 %v1771, %v1767
  %v2476 = vpack.c.b16 %v1772, %v1768
  %v2477 = vpack.c.b16 %v1777, %v1773
  %v2478 = vpack.c.b16 %v1778, %v1774
  %v2479 = vpack.c.b16 %v1779, %v1775
  %v2480 = vpack.c.b16 %v1780, %v1776
  %v2481 = vpack.c.b16 %v1785, %v1781
  %v2482 = vpack.c.b16 %v1786, %v1782
  %v2483 = vpack.c.b16 %v1787, %v1783
  %v2484 = vpack.c.b16 %v1788, %v1784
  %v2485 = vpack.c.b16 %v1793, %v1789
  %v2486 = vpack.c.b16 %v1794, %v1790
  %v2487 = vpack.c.b16 %v1795, %v1791
  %v2488 = vpack.c.b16 %v1796, %v1792
  %v2489 = vpack.c.b16 %v1801, %v1797
  %v2490 = vpack.c.b16 %v1802, %v1798
  %v2491 = vpack.c.b16 %v1803, %v1799
  %v2492 = vpack.c.b16 %v1804, %v1800
  %v2493 = vpack.c.b16 %v1809, %v1805
  %v2494 = vpack.c.b16 %v1810, %v1806
  %v2495 = vpack.c.b16 %v1811, %v1807
  %v2496 = vpack.c.b16 %v1812, %v1808
  %v2497 = vpack.c.b16 %v1817, %v1813
  %v2498 = vpack.c.b16 %v1818, %v1814
  %v2499 = vpack.c.b16 %v1819, %v1815
  %v2500 = vpack.c.b16 %v1820, %v1816
  %v2501 = vpack.c.b16 %v1825, %v1821
  %v2502 = vpack.c.b16 %v1826, %v1822
  %v2503 = vpack.c.b16 %v1827, %v1823
  %v2504 = vpack.c.b16 %v1828, %v1824
  %v2505 = vpack.c.b16 %v1833, %v1829
  %v2506 = vpack.c.b16 %v1834, %v1830
  %v2507 = vpack.c.b16 %v1835, %v1831
  %v2508 = vpack.c.b16 %v1836, %v1832
  %v2509 = vpack.c.b16 %v1841, %v1837
  %v2510 = vpack.c.b16 %v1842, %v1838
  %v2511 = vpack.c.b16 %v1843, %v1839
  %v2512 = vpack.c.b16 %v1844, %v1840
  %v2513 = vpack.c.b16 %v1849, %v1845
  %v2514 = vpack.c.b16 %v1850, %v1846
  %v2515 = vpack.c.b16 %v1851, %v1847
  %v2516 = vpack.c.b16 %v1852, %v1848
  %v2517 = vpack.c.b16 %v1857, %v1853
  %v2518 = vpack.c.b16 %v1858, %v1854
  %v2519 = vpack.c.b16 %v1859, %v1855
  %v2520 = vpack.c.b16 %v1860, %v1856
  %v2521 = vpack.c.b16 %v1865, %v1861
  %v2522 = vpack.c.b16 %v1866, %v1862
  %v2523 = vpack.c.b16 %v1867, %v1863
  %v2524 = vpack.c.b16 %v1868, %v1864
  %v2525 = vpack.c.b16 %v1873, %v1869
  %v2526 = vpack.c.b16 %v1874, %v1870
  %v2527 = vpack.c.b16 %v1875, %v1871
  %v2528 = vpack.c.b16 %v1876, %v1872
  %v2529 = vpack.c.b16 %v1881, %v1877
  %v2530 = vpack.c.b16 %v1882, %v1878
  %v2531 = vpack.c.b16 %v1883, %v1879
  %v2532 = vpack.c.b16 %v1884, %v1880
  %v2533 = vpack.c.b16 %v1889, %v1885
  %v2534 = vpack.c.b16 %v1890, %v1886
  %v2535 = vpack.c.b16 %v1891, %v1887
  %v2536 = vpack.c.b16 %v1892, %v1888
  %v2537 = vpack.c.b16 %v1897, %v1893
  %v2538 = vpack.c.b16 %v1898, %v1894
  %v2539 = vpack.c.b16 %v1899, %v1895
  %v2540 = vpack.c.b16 %v1900, %v1896
  %v2541 = vpack.c.b16 %v1905, %v1901
  %v2542 = vpack.c.b16 %v1906, %v1902
  %v2543 = vpack.c.b16 %v1907, %v1903
  %v2544 = vpack.c.b16 %v1908, %v1904
  %v2545 = vpack.c.b16 %v1913, %v1909
  %v2546 = vpack.c.b16 %v1914, %v1910
  %v2547 = vpack.c.b16 %v1915, %v1911
  %v2548 = vpack.c.b16 %v1916, %v1912
  %v2549 = vpack.c.b16 %v1921, %v1917
  %v2550 = vpack.c.b16 %v1922, %v1918
  %v2551 = vpack.c.b16 %v1923, %v1919
  %v2552 = vpack.c.b16 %v1924, %v1920
  %v2553 = vpack.c.b16 %v1929, %v1925
  %v2554 = vpack.c.b16 %v1930, %v1926
  %v2555 = vpack.c.b16 %v1931, %v1927
  %v2556 = vpack.c.b16 %v1932, %v1928
  %v2557 = vpack.c.b16 %v1937, %v1933
  %v2558 = vpack.c.b16 %v1938, %v1934
  %v2559 = vpack.c.b16 %v1939, %v1935
  %v2560 = vpack.c.b16 %v1940, %v1936
  %v2561 = vpack.c.b16 %v1945, %v1941
  %v2562 = vpack.c.b16 %v1946, %v1942
  %v2563 = vpack.c.b16 %v1947, %v1943
  %v2564 = vpack.c.b16 %v1948, %v1944
  %v2565 = vpack.c.b16 %v1953, %v1949
  %v2566 = vpack.c.b16 %v1954, %v1950
  %v2567 = vpack.c.b16 %v1955, %v1951
  %v2568 = vpack.c.b16 %v1956, %v1952
  %v2569 = vpack.c.b16 %v1961, %v1957
  %v2570 = vpack.c.b16 %v1962, %v1958
  %v2571 = vpack.c.b16 %v1963, %v1959
  %v2572 = vpack.c.b16 %v1964, %v1960
  %v2573 = vpack.c.b16 %v1969, %v1965
  %v2574 = vpack.c.b16 %v1970, %v1966
  %v2575 = vpack.c.b16 %v1971, %v1967
  %v2576 = vpack.c.b16 %v1972, %v1968
  %v2577 = vpack.c.b16 %v1977, %v1973
  %v2578 = vpack.c.b16 %v1978, %v1974
  %v2579 = vpack.c.b16 %v1979, %v1975
  %v2580 = vpack.c.b16 %v1980, %v1976
  %v2581 = vpack.c.b16 %v1985, %v1981
  %v2582 = vpack.c.b16 %v1986, %v1982
  %v2583 = vpack.c.b16 %v1987, %v1983
  %v2584 = vpack.c.b16 %v1988, %v1984
  %v2585 = vpack.c.b16 %v1993, %v1989
  %v2586 = vpack.c.b16 %v1994, %v1990
  %v2587 = vpack.c.b16 %v1995, %v1991
  %v2588 = vpack.c.b16 %v1996, %v1992
  %v2589 = vpack.c.b16 %v2001, %v1997
  %v2590 = vpack.c.b16 %v2002, %v1998
  %v2591 = vpack.c.b16 %v2003, %v1999
  %v2592 = vpack.c.b16 %v2004, %v2000
  %v2593 = vpack.c.b16 %v2009, %v2005
  %v2594 = vpack.c.b16 %v2010, %v2006
  %v2595 = vpack.c.b16 %v2011, %v2007
  %v2596 = vpack.c.b16 %v2012, %v2008
  %v2597 = vpack.c.b16 %v2017, %v2013
  %v2598 = vpack.c.b16 %v2018, %v2014
  %v2599 = vpack.c.b16 %v2019, %v2015
  %v2600 = vpack.c.b16 %v2020, %v2016
  %v2601 = vpack.c.b16 %v2025, %v2021
  %v2602 = vpack.c.b16 %v2026, %v2022
  %v2603 = vpack.c.b16 %v2027, %v2023
  %v2604 = vpack.c.b16 %v2028, %v2024
  %v2605 = vpack.c.b16 %v2033, %v2029
  %v2606 = vpack.c.b16 %v2034, %v2030
  %v2607 = vpack.c.b16 %v2035, %v2031
  %v2608 = vpack.c.b16 %v2036, %v2032
  %v2609 = vpack.c.b16 %v2041, %v2037
  %v2610 = vpack.c.b16 %v2042, %v2038
  %v2611 = vpack.c.b16 %v2043, %v2039
  %v2612 = vpack.c.b16 %v2044, %v2040
  %v2613 = vpack.c.b16 %v2049, %v2045
  %v2614 = vpack.c.b16 %v2050, %v2046
  %v2615 = vpack.c.b16 %v2051, %v2047
  %v2616 = vpack.c.b16 %v2052, %v2048
  %v2617 = vpack.c.b16 %v2057, %v2053
  %v2618 = vpack.c.b16 %v2058, %v2054
  %v2619 = vpack.c.b16 %v2059, %v2055
  %v2620 = vpack.c.b16 %v2060, %v2056
  %v2621 = vpack.c.b16 %v2065, %v2061
  %v2622 = vpack.c.b16 %v2066, %v2062
  %v2623 = vpack.c.b16 %v2067, %v2063
  %v2624 = vpack.c.b16 %v2068, %v2064
  %v2625 = vpack.c.b16 %v2073, %v2069
  %v2626 = vpack.c.b16 %v2074, %v2070
  %v2627 = vpack.c.b16 %v2075, %v2071
  %v2628 = vpack.c.b16 %v2076, %v2072
  %v2629 = vpack.c.b16 %v2081, %v2077
  %v2630 = vpack.c.b16 %v2082, %v2078
  %v2631 = vpack.c.b16 %v2083, %v2079
  %v2632 = vpack.c.b16 %v2084, %v2080
  %v2633 = vpack.c.b16 %v2089, %v2085
  %v2634 = vpack.c.b16 %v2090, %v2086
  %v2635 = vpack.c.b16 %v2091, %v2087
  %v2636 = vpack.c.b16 %v2092, %v2088
  %v2637 = vpack.c.b16 %v2097, %v2093
  %v2638 = vpack.c.b16 %v2098, %v2094
  %v2639 = vpack.c.b16 %v2099, %v2095
  %v2640 = vpack.c.b16 %v2100, %v2096
  %v2641 = vpack.c.b16 %v2105, %v2101
  %v2642 = vpack.c.b16 %v2106, %v2102
  %v2643 = vpack.c.b16 %v2107, %v2103
  %v2644 = vpack.c.b16 %v2108, %v2104
  %v2645 = vpack.c.b16 %v2113, %v2109
  %v2646 = vpack.c.b16 %v2114, %v2110
  %v2647 = vpack.c.b16 %v2115, %v2111
  %v2648 = vpack.c.b16 %v2116, %v2112
  %v2649 = vpack.c.b16 %v2121, %v2117
  %v2650 = vpack.c.b16 %v2122, %v2118
  %v2651 = vpack.c.b16 %v2123, %v2119
  %v2652 = vpack.c.b16 %v2124, %v2120
  %v2653 = vpack.c.b16 %v2129, %v2125
  %v2654 = vpack.c.b16 %v2130, %v2126
  %v2655 = vpack.c.b16 %v2131, %v2127
  %v2656 = vpack.c.b16 %v2132, %v2128
  %v2657 = vpack.c.b16 %v2137, %v2133
  %v2658 = vpack.c.b16 %v2138, %v2134
  %v2659 = vpack.c.b16 %v2139, %v2135
  %v2660 = vpack.c.b16 %v2140, %v2136
  %v2661 = vpack.c.b16 %v2145, %v2141
  %v2662 = vpack.c.b16 %v2146, %v2142
  %v2663 = vpack.c.b16 %v2147, %v2143
  %v2664 = vpack.c.b16 %v2148, %v2144
  %v2665 = vpack.c.b16 %v2153, %v2149
  %v2666 = vpack.c.b16 %v2154, %v2150
  %v2667 = vpack.c.b16 %v2155, %v2151
  %v2668 = vpack.c.b16 %v2156, %v2152
  %v2669 = vpack.c.b16 %v2161, %v2157
  %v2670 = vpack.c.b16 %v2162, %v2158
  %v2671 = vpack.c.b16 %v2163, %v2159
  %v2672 = vpack.c.b16 %v2164, %v2160
  %v2673 = vpack.c.b16 %v2169, %v2165
  %v2674 = vpack.c.b16 %v2170, %v2166
  %v2675 = vpack.c.b16 %v2171, %v2167
  %v2676 = vpack.c.b16 %v2172, %v2168
  %v2677 = vpack.c.b16 %v2177, %v2173
  %v2678 = vpack.c.b16 %v2178, %v2174
  %v2679 = vpack.c.b16 %v2179, %v2175
  %v2680 = vpack.c.b16 %v2180, %v2176
  %v2681 = vpack.c.b16 %v2185, %v2181
  %v2682 = vpack.c.b16 %v2186, %v2182
  %v2683 = vpack.c.b16 %v2187, %v2183
  %v2684 = vpack.c.b16 %v2188, %v2184
  %v2685 = vpack.c.b16 %v2193, %v2189
  %v2686 = vpack.c.b16 %v2194, %v2190
  %v2687 = vpack.c.b16 %v2195, %v2191
  %v2688 = vpack.c.b16 %v2196, %v2192
  %v2689 = vpack.c.b16 %v2201, %v2197
  %v2690 = vpack.c.b16 %v2202, %v2198
  %v2691 = vpack.c.b16 %v2203, %v2199
  %v2692 = vpack.c.b16 %v2204, %v2200
  %v2693 = vpack.c.b16 %v2209, %v2205
  %v2694 = vpack.c.b16 %v2210, %v2206
  %v2695 = vpack.c.b16 %v2211, %v2207
  %v2696 = vpack.c.b16 %v2212, %v2208
  %v2697 = vpack.c.b16 %v2217, %v2213
  %v2698 = vpack.c.b16 %v2218, %v2214
  %v2699 = vpack.c.b16 %v2219, %v2215
  %v2700 = vpack.c.b16 %v2220, %v2216
  %v2701 = vpack.c.b16 %v2225, %v2221
  %v2702 = vpack.c.b16 %v2226, %v2222
  %v2703 = vpack.c.b16 %v2227, %v2223
  %v2704 = vpack.c.b16 %v2228, %v2224
  %v2705 = vpack.c.b16 %v2233, %v2229
  %v2706 = vpack.c.b16 %v2234, %v2230
  %v2707 = vpack.c.b16 %v2235, %v2231
  %v2708 = vpack.c.b16 %v2236, %v2232
  %v2709 = vpack.c.b16 %v2241, %v2237
  %v2710 = vpack.c.b16 %v2242, %v2238
  %v2711 = vpack.c.b16 %v2243, %v2239
  %v2712 = vpack.c.b16 %v2244, %v2240
  %v2713 = vpack.c.b16 %v2249, %v2245
  %v2714 = vpack.c.b16 %v2250, %v2246
  %v2715 = vpack.c.b16 %v2251, %v2247
  %v2716 = vpack.c.b16 %v2252, %v2248
  %v2717 = vpack.c.b16 %v2257, %v2253
  %v2718 = vpack.c.b16 %v2258, %v2254
  %v2719 = vpack.c.b16 %v2259, %v2255
  %v2720 = vpack.c.b16 %v2260, %v2256
  %v2721 = vpack.c.b16 %v2265, %v2261
  %v2722 = vpack.c.b16 %v2266, %v2262
  %v2723 = vpack.c.b16 %v2267, %v2263
  %v2724 = vpack.c.b16 %v2268, %v2264
  %v2725 = vpack.c.b16 %v2273, %v2269
  %v2726 = vpack.c.b16 %v2274, %v2270
  %v2727 = vpack.c.b16 %v2275, %v2271
  %v2728 = vpack.c.b16 %v2276, %v2272
  %v2729 = vpack.c.b16 %v2281, %v2277
  %v2730 = vpack.c.b16 %v2282, %v2278
  %v2731 = vpack.c.b16 %v2283, %v2279
  %v2732 = vpack.c.b16 %v2284, %v2280
  %v2733 = vpack.c.b16 %v2289, %v2285
  %v2734 = vpack.c.b16 %v2290, %v2286
  %v2735 = vpack.c.b16 %v2291, %v2287
  %v2736 = vpack.c.b16 %v2292, %v2288
  %v2737 = vpack.c.b16 %v2297, %v2293
  %v2738 = vpack.c.b16 %v2298, %v2294
  %v2739 = vpack.c.b16 %v2299, %v2295
  %v2740 = vpack.c.b16 %v2300, %v2296
  %v2741 = vpack.c.b16 %v2305, %v2301
  %v2742 = vpack.c.b16 %v2306, %v2302
  %v2743 = vpack.c.b16 %v2307, %v2303
  %v2744 = vpack.c.b16 %v2308, %v2304
  %v2745 = vpack.c.b16 %v2313, %v2309
  %v2746 = vpack.c.b16 %v2314, %v2310
  %v2747 = vpack.c.b16 %v2315, %v2311
  %v2748 = vpack.c.b16 %v2316, %v2312
  %v2749 = vpack.c.b16 %v2321, %v2317
  %v2750 = vpack.c.b16 %v2322, %v2318
  %v2751 = vpack.c.b16 %v2323, %v2319
  %v2752 = vpack.c.b16 %v2324, %v2320
  %v2753 = vpack.c.b16 %v2329, %v2325
  %v2754 = vpack.c.b16 %v2330, %v2326
  %v2755 = vpack.c.b16 %v2331, %v2327
  %v2756 = vpack.c.b16 %v2332, %v2328
  %v2757 = vpack.c.b16 %v2337, %v2333
  %v2758 = vpack.c.b16 %v2338, %v2334
  %v2759 = vpack.c.b16 %v2339, %v2335
  %v2760 = vpack.c.b16 %v2340, %v2336
  %v2761 = vpack.c.b16 %v2345, %v2341
  %v2762 = vpack.c.b16 %v2346, %v2342
  %v2763 = vpack.c.b16 %v2347, %v2343
  %v2764 = vpack.c.b16 %v2348, %v2344
  %3181 = vmatprep.subr.bf16.mxu0 %v2350
  %3182 = vmatpush1.bf16.msra.mxu0 %v2349
  %3183 = vmatprep.subr.bf16.mxu0 %v2354
  %3184 = vmatpush1.bf16.msra.mxu0 %v2353
  %3185 = vmatprep.subr.bf16.mxu0 %v2358
  %3186 = vmatpush1.bf16.msra.mxu0 %v2357
  %3187 = vmatprep.subr.bf16.mxu0 %v2362
  %3188 = vmatpush1.bf16.msra.mxu0 %v2361
  %3189 = vmatprep.subr.bf16.mxu0 %v2366
  %3190 = vmatpush1.bf16.msra.mxu0 %v2365
  %3191 = vmatprep.subr.bf16.mxu0 %v2370
  %3192 = vmatpush1.bf16.msra.mxu0 %v2369
  %3193 = vmatprep.subr.bf16.mxu0 %v2374
  %3194 = vmatpush1.bf16.msra.mxu0 %v2373
  %3195 = vmatprep.subr.bf16.mxu0 %v2378
  %3196 = vmatpush1.bf16.msra.mxu0 %v2377
  %3197 = vmatprep.subr.bf16.mxu0 %v2382
  %3198 = vmatpush1.bf16.msra.mxu0 %v2381
  %3199 = vmatprep.subr.bf16.mxu0 %v2386
  %3200 = vmatpush1.bf16.msra.mxu0 %v2385
  %3201 = vmatprep.subr.bf16.mxu0 %v2390
  %3202 = vmatpush1.bf16.msra.mxu0 %v2389
  %3203 = vmatprep.subr.bf16.mxu0 %v2394
  %3204 = vmatpush1.bf16.msra.mxu0 %v2393
  %3205 = vmatprep.subr.bf16.mxu0 %v2398
  %3206 = vmatpush1.bf16.msra.mxu0 %v2397
  %3207 = vmatprep.subr.bf16.mxu0 %v2402
  %3208 = vmatpush1.bf16.msra.mxu0 %v2401
  %3209 = vmatprep.subr.bf16.mxu0 %v2406
  %3210 = vmatpush1.bf16.msra.mxu0 %v2405
  %3211 = vmatprep.subr.bf16.mxu0 %v2410
  %3212 = vmatpush1.bf16.msra.mxu0 %v2409
  %3213 = vmatprep.mubr.bf16.mxu0 %v894
  %3214 = vmatmul.mubr.bf16.gmra.mrb[0].mxu0 %v893
  %v3215 = vpop.f32.mrb[0].mxu0
  %v3216 = vadd.f32 %v556, %v3215
  %v3217 = vpop.f32.mrb[0].mxu0
  %v3218 = vadd.f32 %v560, %v3217
  %v3219 = vpop.f32.mrb[0].mxu0
  %v3220 = vadd.f32 %v556, %v3219
  %v3221 = vpop.f32.mrb[0].mxu0
  %v3222 = vadd.f32 %v560, %v3221
  %3223 = vmatprep.mubr.bf16.mxu0 %v907
  %3224 = vmatmul.mubr.bf16.gmra.mrb[0].mxu0 %v906
  %v3225 = vpop.f32.mrb[0].mxu0
  %v3226 = vadd.f32 %v556, %v3225
  %v3227 = vpop.f32.mrb[0].mxu0
  %v3228 = vadd.f32 %v560, %v3227
  %v3229 = vpop.f32.mrb[0].mxu0
  %v3230 = vadd.f32 %v556, %v3229
  %v3231 = vpop.f32.mrb[0].mxu0
  %v3232 = vadd.f32 %v560, %v3231
  %3233 = vmatprep.mubr.bf16.mxu0 %v920
  %3234 = vmatmul.mubr.bf16.gmra.mrb[0].mxu0 %v919
  %v3235 = vpop.f32.mrb[0].mxu0
  %v3236 = vadd.f32 %v556, %v3235
  %v3237 = vpop.f32.mrb[0].mxu0
  %v3238 = vadd.f32 %v560, %v3237
  %v3239 = vpop.f32.mrb[0].mxu0
  %v3240 = vadd.f32 %v556, %v3239
  %v3241 = vpop.f32.mrb[0].mxu0
  %v3242 = vadd.f32 %v560, %v3241
  %3243 = vmatprep.mubr.bf16.mxu0 %v933
  %3244 = vmatmul.mubr.bf16.gmra.mrb[0].mxu0 %v932
  %v3245 = vpop.f32.mrb[0].mxu0
  %v3246 = vadd.f32 %v556, %v3245
  %v3247 = vpop.f32.mrb[0].mxu0
  %v3248 = vadd.f32 %v560, %v3247
  %v3249 = vpop.f32.mrb[0].mxu0
  %v3250 = vadd.f32 %v556, %v3249
  %v3251 = vpop.f32.mrb[0].mxu0
  %v3252 = vadd.f32 %v560, %v3251
  %3253 = vmatprep.mubr.bf16.mxu0 %v946
  %3254 = vmatmul.mubr.bf16.gmra.mrb[0].mxu0 %v945
  %v3255 = vpop.f32.mrb[0].mxu0
  %v3256 = vadd.f32 %v556, %v3255
  %v3257 = vpop.f32.mrb[0].mxu0
  %v3258 = vadd.f32 %v560, %v3257
  %v3259 = vpop.f32.mrb[0].mxu0
  %v3260 = vadd.f32 %v556, %v3259
  %v3261 = vpop.f32.mrb[0].mxu0
  %v3262 = vadd.f32 %v560, %v3261
  %3263 = vmatprep.mubr.bf16.mxu0 %v959
  %3264 = vmatmul.mubr.bf16.gmra.mrb[0].mxu0 %v958
  %v3265 = vpop.f32.mrb[0].mxu0
  %v3266 = vadd.f32 %v556, %v3265
  %v3267 = vpop.f32.mrb[0].mxu0
  %v3268 = vadd.f32 %v560, %v3267
  %v3269 = vpop.f32.mrb[0].mxu0
  %v3270 = vadd.f32 %v556, %v3269
  %v3271 = vpop.f32.mrb[0].mxu0
  %v3272 = vadd.f32 %v560, %v3271
  %3273 = vmatprep.mubr.bf16.mxu0 %v972
  %3274 = vmatmul.mubr.bf16.gmra.mrb[0].mxu0 %v971
  %v3275 = vpop.f32.mrb[0].mxu0
  %v3276 = vadd.f32 %v556, %v3275
  %v3277 = vpop.f32.mrb[0].mxu0
  %v3278 = vadd.f32 %v560, %v3277
  %v3279 = vpop.f32.mrb[0].mxu0
  %v3280 = vadd.f32 %v556, %v3279
  %v3281 = vpop.f32.mrb[0].mxu0
  %v3282 = vadd.f32 %v560, %v3281
  %3283 = vmatprep.mubr.bf16.mxu0 %v985
  %3284 = vmatmul.mubr.bf16.gmra.mrb[0].mxu0 %v984
  %v3285 = vpop.f32.mrb[0].mxu0
  %v3286 = vadd.f32 %v556, %v3285
  %v3287 = vpop.f32.mrb[0].mxu0
  %v3288 = vadd.f32 %v560, %v3287
  %v3289 = vpop.f32.mrb[0].mxu0
  %v3290 = vadd.f32 %v556, %v3289
  %v3291 = vpop.f32.mrb[0].mxu0
  %v3292 = vadd.f32 %v560, %v3291
  %3293 = vdwg.mxu0
  %3294 = vmatprep.subr.bf16.mxu0 %v2414
  %3295 = vmatpush1.bf16.msra.mxu0 %v2413
  %3296 = vmatprep.subr.bf16.mxu0 %v2418
  %3297 = vmatpush1.bf16.msra.mxu0 %v2417
  %3298 = vmatprep.subr.bf16.mxu0 %v2422
  %3299 = vmatpush1.bf16.msra.mxu0 %v2421
  %3300 = vmatprep.subr.bf16.mxu0 %v2426
  %3301 = vmatpush1.bf16.msra.mxu0 %v2425
  %3302 = vmatprep.subr.bf16.mxu0 %v2430
  %3303 = vmatpush1.bf16.msra.mxu0 %v2429
  %3304 = vmatprep.subr.bf16.mxu0 %v2434
  %3305 = vmatpush1.bf16.msra.mxu0 %v2433
  %3306 = vmatprep.subr.bf16.mxu0 %v2438
  %3307 = vmatpush1.bf16.msra.mxu0 %v2437
  %3308 = vmatprep.subr.bf16.mxu0 %v2442
  %3309 = vmatpush1.bf16.msra.mxu0 %v2441
  %3310 = vmatprep.subr.bf16.mxu0 %v2446
  %3311 = vmatpush1.bf16.msra.mxu0 %v2445
  %3312 = vmatprep.subr.bf16.mxu0 %v2450
  %3313 = vmatpush1.bf16.msra.mxu0 %v2449
  %3314 = vmatprep.subr.bf16.mxu0 %v2454
  %3315 = vmatpush1.bf16.msra.mxu0 %v2453
  %3316 = vmatprep.subr.bf16.mxu0 %v2458
  %3317 = vmatpush1.bf16.msra.mxu0 %v2457
  %3318 = vmatprep.subr.bf16.mxu0 %v2462
  %3319 = vmatpush1.bf16.msra.mxu0 %v2461
  %3320 = vmatprep.subr.bf16.mxu0 %v2466
  %3321 = vmatpush1.bf16.msra.mxu0 %v2465
  %3322 = vmatprep.subr.bf16.mxu0 %v2470
  %3323 = vmatpush1.bf16.msra.mxu0 %v2469
  %3324 = vmatprep.subr.bf16.mxu0 %v2474
  %3325 = vmatpush1.bf16.msra.mxu0 %v2473
  %3326 = vmatprep.mubr.bf16.mxu0 %v896
  %3327 = vmatmul.mubr.bf16.gmra.mrb[0].mxu0 %v895
  %v3328 = vpop.f32.mrb[0].mxu0
  %v3329 = vadd.f32 %v3216, %v3328
  %v3330 = vpop.f32.mrb[0].mxu0
  %v3331 = vadd.f32 %v3218, %v3330
  %v3332 = vpop.f32.mrb[0].mxu0
  %v3333 = vadd.f32 %v3220, %v3332
  %v3334 = vpop.f32.mrb[0].mxu0
  %v3335 = vadd.f32 %v3222, %v3334
  %3336 = vmatprep.mubr.bf16.mxu0 %v909
  %3337 = vmatmul.mubr.bf16.gmra.mrb[0].mxu0 %v908
  %v3338 = vpop.f32.mrb[0].mxu0
  %v3339 = vadd.f32 %v3226, %v3338
  %v3340 = vpop.f32.mrb[0].mxu0
  %v3341 = vadd.f32 %v3228, %v3340
  %v3342 = vpop.f32.mrb[0].mxu0
  %v3343 = vadd.f32 %v3230, %v3342
  %v3344 = vpop.f32.mrb[0].mxu0
  %v3345 = vadd.f32 %v3232, %v3344
  %3346 = vmatprep.mubr.bf16.mxu0 %v922
  %3347 = vmatmul.mubr.bf16.gmra.mrb[0].mxu0 %v921
  %v3348 = vpop.f32.mrb[0].mxu0
  %v3349 = vadd.f32 %v3236, %v3348
  %v3350 = vpop.f32.mrb[0].mxu0
  %v3351 = vadd.f32 %v3238, %v3350
  %v3352 = vpop.f32.mrb[0].mxu0
  %v3353 = vadd.f32 %v3240, %v3352
  %v3354 = vpop.f32.mrb[0].mxu0
  %v3355 = vadd.f32 %v3242, %v3354
  %3356 = vmatprep.mubr.bf16.mxu0 %v935
  %3357 = vmatmul.mubr.bf16.gmra.mrb[0].mxu0 %v934
  %v3358 = vpop.f32.mrb[0].mxu0
  %v3359 = vadd.f32 %v3246, %v3358
  %v3360 = vpop.f32.mrb[0].mxu0
  %v3361 = vadd.f32 %v3248, %v3360
  %v3362 = vpop.f32.mrb[0].mxu0
  %v3363 = vadd.f32 %v3250, %v3362
  %v3364 = vpop.f32.mrb[0].mxu0
  %v3365 = vadd.f32 %v3252, %v3364
  %3366 = vmatprep.mubr.bf16.mxu0 %v948
  %3367 = vmatmul.mubr.bf16.gmra.mrb[0].mxu0 %v947
  %v3368 = vpop.f32.mrb[0].mxu0
  %v3369 = vadd.f32 %v3256, %v3368
  %v3370 = vpop.f32.mrb[0].mxu0
  %v3371 = vadd.f32 %v3258, %v3370
  %v3372 = vpop.f32.mrb[0].mxu0
  %v3373 = vadd.f32 %v3260, %v3372
  %v3374 = vpop.f32.mrb[0].mxu0
  %v3375 = vadd.f32 %v3262, %v3374
  %3376 = vmatprep.mubr.bf16.mxu0 %v961
  %3377 = vmatmul.mubr.bf16.gmra.mrb[0].mxu0 %v960
  %v3378 = vpop.f32.mrb[0].mxu0
  %v3379 = vadd.f32 %v3266, %v3378
  %v3380 = vpop.f32.mrb[0].mxu0
  %v3381 = vadd.f32 %v3268, %v3380
  %v3382 = vpop.f32.mrb[0].mxu0
  %v3383 = vadd.f32 %v3270, %v3382
  %v3384 = vpop.f32.mrb[0].mxu0
  %v3385 = vadd.f32 %v3272, %v3384
  %3386 = vmatprep.mubr.bf16.mxu0 %v974
  %3387 = vmatmul.mubr.bf16.gmra.mrb[0].mxu0 %v973
  %v3388 = vpop.f32.mrb[0].mxu0
  %v3389 = vadd.f32 %v3276, %v3388
  %v3390 = vpop.f32.mrb[0].mxu0
  %v3391 = vadd.f32 %v3278, %v3390
  %v3392 = vpop.f32.mrb[0].mxu0
  %v3393 = vadd.f32 %v3280, %v3392
  %v3394 = vpop.f32.mrb[0].mxu0
  %v3395 = vadd.f32 %v3282, %v3394
  %3396 = vmatprep.mubr.bf16.mxu0 %v987
  %3397 = vmatmul.mubr.bf16.gmra.mrb[0].mxu0 %v986
  %v3398 = vpop.f32.mrb[0].mxu0
  %v3399 = vadd.f32 %v3286, %v3398
  %v3400 = vpop.f32.mrb[0].mxu0
  %v3401 = vadd.f32 %v3288, %v3400
  %v3402 = vpop.f32.mrb[0].mxu0
  %v3403 = vadd.f32 %v3290, %v3402
  %v3404 = vpop.f32.mrb[0].mxu0
  %v3405 = vadd.f32 %v3292, %v3404
  %3406 = vdwg.mxu0
  %3407 = vmatprep.subr.bf16.mxu0 %v2478
  %3408 = vmatpush1.bf16.msra.mxu0 %v2477
  %3409 = vmatprep.subr.bf16.mxu0 %v2482
  %3410 = vmatpush1.bf16.msra.mxu0 %v2481
  %3411 = vmatprep.subr.bf16.mxu0 %v2486
  %3412 = vmatpush1.bf16.msra.mxu0 %v2485
  %3413 = vmatprep.subr.bf16.mxu0 %v2490
  %3414 = vmatpush1.bf16.msra.mxu0 %v2489
  %3415 = vmatprep.subr.bf16.mxu0 %v2494
  %3416 = vmatpush1.bf16.msra.mxu0 %v2493
  %3417 = vmatprep.subr.bf16.mxu0 %v2498
  %3418 = vmatpush1.bf16.msra.mxu0 %v2497
  %3419 = vmatprep.subr.bf16.mxu0 %v2502
  %3420 = vmatpush1.bf16.msra.mxu0 %v2501
  %3421 = vmatprep.subr.bf16.mxu0 %v2506
  %3422 = vmatpush1.bf16.msra.mxu0 %v2505
  %3423 = vmatprep.subr.bf16.mxu0 %v2510
  %3424 = vmatpush1.bf16.msra.mxu0 %v2509
  %3425 = vmatprep.subr.bf16.mxu0 %v2514
  %3426 = vmatpush1.bf16.msra.mxu0 %v2513
  %3427 = vmatprep.subr.bf16.mxu0 %v2518
  %3428 = vmatpush1.bf16.msra.mxu0 %v2517
  %3429 = vmatprep.subr.bf16.mxu0 %v2522
  %3430 = vmatpush1.bf16.msra.mxu0 %v2521
  %3431 = vmatprep.subr.bf16.mxu0 %v2526
  %3432 = vmatpush1.bf16.msra.mxu0 %v2525
  %3433 = vmatprep.subr.bf16.mxu0 %v2530
  %3434 = vmatpush1.bf16.msra.mxu0 %v2529
  %3435 = vmatprep.subr.bf16.mxu0 %v2534
  %3436 = vmatpush1.bf16.msra.mxu0 %v2533
  %3437 = vmatprep.subr.bf16.mxu0 %v2538
  %3438 = vmatpush1.bf16.msra.mxu0 %v2537
  %3439 = vmatprep.mubr.bf16.mxu0 %v898
  %3440 = vmatmul.mubr.bf16.gmra.mrb[0].mxu0 %v897
  %v3441 = vpop.f32.mrb[0].mxu0
  %v3442 = vadd.f32 %v3329, %v3441
  %v3443 = vpop.f32.mrb[0].mxu0
  %v3444 = vadd.f32 %v3331, %v3443
  %v3445 = vpop.f32.mrb[0].mxu0
  %v3446 = vadd.f32 %v3333, %v3445
  %v3447 = vpop.f32.mrb[0].mxu0
  %v3448 = vadd.f32 %v3335, %v3447
  %3449 = vmatprep.mubr.bf16.mxu0 %v911
  %3450 = vmatmul.mubr.bf16.gmra.mrb[0].mxu0 %v910
  %v3451 = vpop.f32.mrb[0].mxu0
  %v3452 = vadd.f32 %v3339, %v3451
  %v3453 = vpop.f32.mrb[0].mxu0
  %v3454 = vadd.f32 %v3341, %v3453
  %v3455 = vpop.f32.mrb[0].mxu0
  %v3456 = vadd.f32 %v3343, %v3455
  %v3457 = vpop.f32.mrb[0].mxu0
  %v3458 = vadd.f32 %v3345, %v3457
  %3459 = vmatprep.mubr.bf16.mxu0 %v924
  %3460 = vmatmul.mubr.bf16.gmra.mrb[0].mxu0 %v923
  %v3461 = vpop.f32.mrb[0].mxu0
  %v3462 = vadd.f32 %v3349, %v3461
  %v3463 = vpop.f32.mrb[0].mxu0
  %v3464 = vadd.f32 %v3351, %v3463
  %v3465 = vpop.f32.mrb[0].mxu0
  %v3466 = vadd.f32 %v3353, %v3465
  %v3467 = vpop.f32.mrb[0].mxu0
  %v3468 = vadd.f32 %v3355, %v3467
  %3469 = vmatprep.mubr.bf16.mxu0 %v937
  %3470 = vmatmul.mubr.bf16.gmra.mrb[0].mxu0 %v936
  %v3471 = vpop.f32.mrb[0].mxu0
  %v3472 = vadd.f32 %v3359, %v3471
  %v3473 = vpop.f32.mrb[0].mxu0
  %v3474 = vadd.f32 %v3361, %v3473
  %v3475 = vpop.f32.mrb[0].mxu0
  %v3476 = vadd.f32 %v3363, %v3475
  %v3477 = vpop.f32.mrb[0].mxu0
  %v3478 = vadd.f32 %v3365, %v3477
  %3479 = vmatprep.mubr.bf16.mxu0 %v950
  %3480 = vmatmul.mubr.bf16.gmra.mrb[0].mxu0 %v949
  %v3481 = vpop.f32.mrb[0].mxu0
  %v3482 = vadd.f32 %v3369, %v3481
  %v3483 = vpop.f32.mrb[0].mxu0
  %v3484 = vadd.f32 %v3371, %v3483
  %v3485 = vpop.f32.mrb[0].mxu0
  %v3486 = vadd.f32 %v3373, %v3485
  %v3487 = vpop.f32.mrb[0].mxu0
  %v3488 = vadd.f32 %v3375, %v3487
  %3489 = vmatprep.mubr.bf16.mxu0 %v963
  %3490 = vmatmul.mubr.bf16.gmra.mrb[0].mxu0 %v962
  %v3491 = vpop.f32.mrb[0].mxu0
  %v3492 = vadd.f32 %v3379, %v3491
  %v3493 = vpop.f32.mrb[0].mxu0
  %v3494 = vadd.f32 %v3381, %v3493
  %v3495 = vpop.f32.mrb[0].mxu0
  %v3496 = vadd.f32 %v3383, %v3495
  %v3497 = vpop.f32.mrb[0].mxu0
  %v3498 = vadd.f32 %v3385, %v3497
  %3499 = vmatprep.mubr.bf16.mxu0 %v976
  %3500 = vmatmul.mubr.bf16.gmra.mrb[0].mxu0 %v975
  %v3501 = vpop.f32.mrb[0].mxu0
  %v3502 = vadd.f32 %v3389, %v3501
  %v3503 = vpop.f32.mrb[0].mxu0
  %v3504 = vadd.f32 %v3391, %v3503
  %v3505 = vpop.f32.mrb[0].mxu0
  %v3506 = vadd.f32 %v3393, %v3505
  %v3507 = vpop.f32.mrb[0].mxu0
  %v3508 = vadd.f32 %v3395, %v3507
  %3509 = vmatprep.mubr.bf16.mxu0 %v989
  %3510 = vmatmul.mubr.bf16.gmra.mrb[0].mxu0 %v988
  %v3511 = vpop.f32.mrb[0].mxu0
  %v3512 = vadd.f32 %v3399, %v3511
  %v3513 = vpop.f32.mrb[0].mxu0
  %v3514 = vadd.f32 %v3401, %v3513
  %v3515 = vpop.f32.mrb[0].mxu0
  %v3516 = vadd.f32 %v3403, %v3515
  %v3517 = vpop.f32.mrb[0].mxu0
  %v3518 = vadd.f32 %v3405, %v3517
  %3519 = vdwg.mxu0
  %3520 = vmatprep.subr.bf16.mxu0 %v2542
  %3521 = vmatpush1.bf16.msra.mxu0 %v2541
  %3522 = vmatprep.subr.bf16.mxu0 %v2546
  %3523 = vmatpush1.bf16.msra.mxu0 %v2545
  %3524 = vmatprep.subr.bf16.mxu0 %v2550
  %3525 = vmatpush1.bf16.msra.mxu0 %v2549
  %3526 = vmatprep.subr.bf16.mxu0 %v2554
  %3527 = vmatpush1.bf16.msra.mxu0 %v2553
  %3528 = vmatprep.subr.bf16.mxu0 %v2558
  %3529 = vmatpush1.bf16.msra.mxu0 %v2557
  %3530 = vmatprep.subr.bf16.mxu0 %v2562
  %3531 = vmatpush1.bf16.msra.mxu0 %v2561
  %3532 = vmatprep.subr.bf16.mxu0 %v2566
  %3533 = vmatpush1.bf16.msra.mxu0 %v2565
  %3534 = vmatprep.subr.bf16.mxu0 %v2570
  %3535 = vmatpush1.bf16.msra.mxu0 %v2569
  %3536 = vmatprep.subr.bf16.mxu0 %v2574
  %3537 = vmatpush1.bf16.msra.mxu0 %v2573
  %3538 = vmatprep.subr.bf16.mxu0 %v2578
  %3539 = vmatpush1.bf16.msra.mxu0 %v2577
  %3540 = vmatprep.subr.bf16.mxu0 %v2582
  %3541 = vmatpush1.bf16.msra.mxu0 %v2581
  %3542 = vmatprep.subr.bf16.mxu0 %v2586
  %3543 = vmatpush1.bf16.msra.mxu0 %v2585
  %3544 = vmatprep.subr.bf16.mxu0 %v2590
  %3545 = vmatpush1.bf16.msra.mxu0 %v2589
  %3546 = vmatprep.subr.bf16.mxu0 %v2594
  %3547 = vmatpush1.bf16.msra.mxu0 %v2593
  %3548 = vmatprep.subr.bf16.mxu0 %v2598
  %3549 = vmatpush1.bf16.msra.mxu0 %v2597
  %3550 = vmatprep.subr.bf16.mxu0 %v2602
  %3551 = vmatpush1.bf16.msra.mxu0 %v2601
  %3552 = vmatprep.mubr.bf16.mxu0 %v900
  %3553 = vmatmul.mubr.bf16.gmra.mrb[0].mxu0 %v899
  %v3554 = vpop.f32.mrb[0].mxu0
  %v3555 = vadd.f32 %v3442, %v3554
  %v3556 = vpop.f32.mrb[0].mxu0
  %v3557 = vadd.f32 %v3444, %v3556
  %v3558 = vpop.f32.mrb[0].mxu0
  %v3559 = vadd.f32 %v3446, %v3558
  %v3560 = vpop.f32.mrb[0].mxu0
  %v3561 = vadd.f32 %v3448, %v3560
  %3562 = vmatprep.mubr.bf16.mxu0 %v913
  %3563 = vmatmul.mubr.bf16.gmra.mrb[0].mxu0 %v912
  %v3564 = vpop.f32.mrb[0].mxu0
  %v3565 = vadd.f32 %v3452, %v3564
  %v3566 = vpop.f32.mrb[0].mxu0
  %v3567 = vadd.f32 %v3454, %v3566
  %v3568 = vpop.f32.mrb[0].mxu0
  %v3569 = vadd.f32 %v3456, %v3568
  %v3570 = vpop.f32.mrb[0].mxu0
  %v3571 = vadd.f32 %v3458, %v3570
  %3572 = vmatprep.mubr.bf16.mxu0 %v926
  %3573 = vmatmul.mubr.bf16.gmra.mrb[0].mxu0 %v925
  %v3574 = vpop.f32.mrb[0].mxu0
  %v3575 = vadd.f32 %v3462, %v3574
  %v3576 = vpop.f32.mrb[0].mxu0
  %v3577 = vadd.f32 %v3464, %v3576
  %v3578 = vpop.f32.mrb[0].mxu0
  %v3579 = vadd.f32 %v3466, %v3578
  %v3580 = vpop.f32.mrb[0].mxu0
  %v3581 = vadd.f32 %v3468, %v3580
  %3582 = vmatprep.mubr.bf16.mxu0 %v939
  %3583 = vmatmul.mubr.bf16.gmra.mrb[0].mxu0 %v938
  %v3584 = vpop.f32.mrb[0].mxu0
  %v3585 = vadd.f32 %v3472, %v3584
  %v3586 = vpop.f32.mrb[0].mxu0
  %v3587 = vadd.f32 %v3474, %v3586
  %v3588 = vpop.f32.mrb[0].mxu0
  %v3589 = vadd.f32 %v3476, %v3588
  %v3590 = vpop.f32.mrb[0].mxu0
  %v3591 = vadd.f32 %v3478, %v3590
  %3592 = vmatprep.mubr.bf16.mxu0 %v952
  %3593 = vmatmul.mubr.bf16.gmra.mrb[0].mxu0 %v951
  %v3594 = vpop.f32.mrb[0].mxu0
  %v3595 = vadd.f32 %v3482, %v3594
  %v3596 = vpop.f32.mrb[0].mxu0
  %v3597 = vadd.f32 %v3484, %v3596
  %v3598 = vpop.f32.mrb[0].mxu0
  %v3599 = vadd.f32 %v3486, %v3598
  %v3600 = vpop.f32.mrb[0].mxu0
  %v3601 = vadd.f32 %v3488, %v3600
  %3602 = vmatprep.mubr.bf16.mxu0 %v965
  %3603 = vmatmul.mubr.bf16.gmra.mrb[0].mxu0 %v964
  %v3604 = vpop.f32.mrb[0].mxu0
  %v3605 = vadd.f32 %v3492, %v3604
  %v3606 = vpop.f32.mrb[0].mxu0
  %v3607 = vadd.f32 %v3494, %v3606
  %v3608 = vpop.f32.mrb[0].mxu0
  %v3609 = vadd.f32 %v3496, %v3608
  %v3610 = vpop.f32.mrb[0].mxu0
  %v3611 = vadd.f32 %v3498, %v3610
  %3612 = vmatprep.mubr.bf16.mxu0 %v978
  %3613 = vmatmul.mubr.bf16.gmra.mrb[0].mxu0 %v977
  %v3614 = vpop.f32.mrb[0].mxu0
  %v3615 = vadd.f32 %v3502, %v3614
  %v3616 = vpop.f32.mrb[0].mxu0
  %v3617 = vadd.f32 %v3504, %v3616
  %v3618 = vpop.f32.mrb[0].mxu0
  %v3619 = vadd.f32 %v3506, %v3618
  %v3620 = vpop.f32.mrb[0].mxu0
  %v3621 = vadd.f32 %v3508, %v3620
  %3622 = vmatprep.mubr.bf16.mxu0 %v991
  %3623 = vmatmul.mubr.bf16.gmra.mrb[0].mxu0 %v990
  %v3624 = vpop.f32.mrb[0].mxu0
  %v3625 = vadd.f32 %v3512, %v3624
  %v3626 = vpop.f32.mrb[0].mxu0
  %v3627 = vadd.f32 %v3514, %v3626
  %v3628 = vpop.f32.mrb[0].mxu0
  %v3629 = vadd.f32 %v3516, %v3628
  %v3630 = vpop.f32.mrb[0].mxu0
  %v3631 = vadd.f32 %v3518, %v3630
  %3632 = vdwg.mxu0
  %3633 = vmatprep.subr.bf16.mxu0 %v2606
  %3634 = vmatpush1.bf16.msra.mxu0 %v2605
  %3635 = vmatprep.subr.bf16.mxu0 %v2610
  %3636 = vmatpush1.bf16.msra.mxu0 %v2609
  %3637 = vmatprep.subr.bf16.mxu0 %v2614
  %3638 = vmatpush1.bf16.msra.mxu0 %v2613
  %3639 = vmatprep.subr.bf16.mxu0 %v2618
  %3640 = vmatpush1.bf16.msra.mxu0 %v2617
  %3641 = vmatprep.subr.bf16.mxu0 %v2622
  %3642 = vmatpush1.bf16.msra.mxu0 %v2621
  %3643 = vmatprep.subr.bf16.mxu0 %v2626
  %3644 = vmatpush1.bf16.msra.mxu0 %v2625
  %3645 = vmatprep.subr.bf16.mxu0 %v2630
  %3646 = vmatpush1.bf16.msra.mxu0 %v2629
  %3647 = vmatprep.subr.bf16.mxu0 %v2634
  %3648 = vmatpush1.bf16.msra.mxu0 %v2633
  %3649 = vmatprep.subr.bf16.mxu0 %v2638
  %3650 = vmatpush1.bf16.msra.mxu0 %v2637
  %3651 = vmatprep.subr.bf16.mxu0 %v2642
  %3652 = vmatpush1.bf16.msra.mxu0 %v2641
  %3653 = vmatprep.subr.bf16.mxu0 %v2646
  %3654 = vmatpush1.bf16.msra.mxu0 %v2645
  %3655 = vmatprep.subr.bf16.mxu0 %v2650
  %3656 = vmatpush1.bf16.msra.mxu0 %v2649
  %3657 = vmatprep.subr.bf16.mxu0 %v2654
  %3658 = vmatpush1.bf16.msra.mxu0 %v2653
  %3659 = vmatprep.subr.bf16.mxu0 %v2658
  %3660 = vmatpush1.bf16.msra.mxu0 %v2657
  %3661 = vmatprep.subr.bf16.mxu0 %v2662
  %3662 = vmatpush1.bf16.msra.mxu0 %v2661
  %3663 = vmatprep.subr.bf16.mxu0 %v2666
  %3664 = vmatpush1.bf16.msra.mxu0 %v2665
  %3665 = vmatprep.mubr.bf16.mxu0 %v902
  %3666 = vmatmul.mubr.bf16.gmra.mrb[0].mxu0 %v901
  %v3667 = vpop.f32.mrb[0].mxu0
  %v3668 = vadd.f32 %v3555, %v3667
  %v3669 = vpop.f32.mrb[0].mxu0
  %v3670 = vadd.f32 %v3557, %v3669
  %v3671 = vpop.f32.mrb[0].mxu0
  %v3672 = vadd.f32 %v3559, %v3671
  %v3673 = vpop.f32.mrb[0].mxu0
  %v3674 = vadd.f32 %v3561, %v3673
  %3675 = vmatprep.mubr.bf16.mxu0 %v915
  %3676 = vmatmul.mubr.bf16.gmra.mrb[0].mxu0 %v914
  %v3677 = vpop.f32.mrb[0].mxu0
  %v3678 = vadd.f32 %v3565, %v3677
  %v3679 = vpop.f32.mrb[0].mxu0
  %v3680 = vadd.f32 %v3567, %v3679
  %v3681 = vpop.f32.mrb[0].mxu0
  %v3682 = vadd.f32 %v3569, %v3681
  %v3683 = vpop.f32.mrb[0].mxu0
  %v3684 = vadd.f32 %v3571, %v3683
  %3685 = vmatprep.mubr.bf16.mxu0 %v928
  %3686 = vmatmul.mubr.bf16.gmra.mrb[0].mxu0 %v927
  %v3687 = vpop.f32.mrb[0].mxu0
  %v3688 = vadd.f32 %v3575, %v3687
  %v3689 = vpop.f32.mrb[0].mxu0
  %v3690 = vadd.f32 %v3577, %v3689
  %v3691 = vpop.f32.mrb[0].mxu0
  %v3692 = vadd.f32 %v3579, %v3691
  %v3693 = vpop.f32.mrb[0].mxu0
  %v3694 = vadd.f32 %v3581, %v3693
  %3695 = vmatprep.mubr.bf16.mxu0 %v941
  %3696 = vmatmul.mubr.bf16.gmra.mrb[0].mxu0 %v940
  %v3697 = vpop.f32.mrb[0].mxu0
  %v3698 = vadd.f32 %v3585, %v3697
  %v3699 = vpop.f32.mrb[0].mxu0
  %v3700 = vadd.f32 %v3587, %v3699
  %v3701 = vpop.f32.mrb[0].mxu0
  %v3702 = vadd.f32 %v3589, %v3701
  %v3703 = vpop.f32.mrb[0].mxu0
  %v3704 = vadd.f32 %v3591, %v3703
  %3705 = vmatprep.mubr.bf16.mxu0 %v954
  %3706 = vmatmul.mubr.bf16.gmra.mrb[0].mxu0 %v953
  %v3707 = vpop.f32.mrb[0].mxu0
  %v3708 = vadd.f32 %v3595, %v3707
  %v3709 = vpop.f32.mrb[0].mxu0
  %v3710 = vadd.f32 %v3597, %v3709
  %v3711 = vpop.f32.mrb[0].mxu0
  %v3712 = vadd.f32 %v3599, %v3711
  %v3713 = vpop.f32.mrb[0].mxu0
  %v3714 = vadd.f32 %v3601, %v3713
  %3715 = vmatprep.mubr.bf16.mxu0 %v967
  %3716 = vmatmul.mubr.bf16.gmra.mrb[0].mxu0 %v966
  %v3717 = vpop.f32.mrb[0].mxu0
  %v3718 = vadd.f32 %v3605, %v3717
  %v3719 = vpop.f32.mrb[0].mxu0
  %v3720 = vadd.f32 %v3607, %v3719
  %v3721 = vpop.f32.mrb[0].mxu0
  %v3722 = vadd.f32 %v3609, %v3721
  %v3723 = vpop.f32.mrb[0].mxu0
  %v3724 = vadd.f32 %v3611, %v3723
  %3725 = vmatprep.mubr.bf16.mxu0 %v980
  %3726 = vmatmul.mubr.bf16.gmra.mrb[0].mxu0 %v979
  %v3727 = vpop.f32.mrb[0].mxu0
  %v3728 = vadd.f32 %v3615, %v3727
  %v3729 = vpop.f32.mrb[0].mxu0
  %v3730 = vadd.f32 %v3617, %v3729
  %v3731 = vpop.f32.mrb[0].mxu0
  %v3732 = vadd.f32 %v3619, %v3731
  %v3733 = vpop.f32.mrb[0].mxu0
  %v3734 = vadd.f32 %v3621, %v3733
  %3735 = vmatprep.mubr.bf16.mxu0 %v993
  %3736 = vmatmul.mubr.bf16.gmra.mrb[0].mxu0 %v992
  %v3737 = vpop.f32.mrb[0].mxu0
  %v3738 = vadd.f32 %v3625, %v3737
  %v3739 = vpop.f32.mrb[0].mxu0
  %v3740 = vadd.f32 %v3627, %v3739
  %v3741 = vpop.f32.mrb[0].mxu0
  %v3742 = vadd.f32 %v3629, %v3741
  %v3743 = vpop.f32.mrb[0].mxu0
  %v3744 = vadd.f32 %v3631, %v3743
  %3745 = vdwg.mxu0
  %3746 = vmatprep.subr.bf16.mxu0 %v2670
  %3747 = vmatpush1.bf16.msra.mxu0 %v2669
  %3748 = vmatprep.subr.bf16.mxu0 %v2674
  %3749 = vmatpush1.bf16.msra.mxu0 %v2673
  %3750 = vmatprep.subr.bf16.mxu0 %v2678
  %3751 = vmatpush1.bf16.msra.mxu0 %v2677
  %3752 = vmatprep.subr.bf16.mxu0 %v2682
  %3753 = vmatpush1.bf16.msra.mxu0 %v2681
  %3754 = vmatprep.subr.bf16.mxu0 %v2686
  %3755 = vmatpush1.bf16.msra.mxu0 %v2685
  %3756 = vmatprep.subr.bf16.mxu0 %v2690
  %3757 = vmatpush1.bf16.msra.mxu0 %v2689
  %3758 = vmatprep.subr.bf16.mxu0 %v2694
  %3759 = vmatpush1.bf16.msra.mxu0 %v2693
  %3760 = vmatprep.subr.bf16.mxu0 %v2698
  %3761 = vmatpush1.bf16.msra.mxu0 %v2697
  %3762 = vmatprep.subr.bf16.mxu0 %v2702
  %3763 = vmatpush1.bf16.msra.mxu0 %v2701
  %3764 = vmatprep.subr.bf16.mxu0 %v2706
  %3765 = vmatpush1.bf16.msra.mxu0 %v2705
  %3766 = vmatprep.subr.bf16.mxu0 %v2710
  %3767 = vmatpush1.bf16.msra.mxu0 %v2709
  %3768 = vmatprep.subr.bf16.mxu0 %v2714
  %3769 = vmatpush1.bf16.msra.mxu0 %v2713
  %3770 = vmatprep.subr.bf16.mxu0 %v2718
  %3771 = vmatpush1.bf16.msra.mxu0 %v2717
  %3772 = vmatprep.subr.bf16.mxu0 %v2722
  %3773 = vmatpush1.bf16.msra.mxu0 %v2721
  %3774 = vmatprep.subr.bf16.mxu0 %v2726
  %3775 = vmatpush1.bf16.msra.mxu0 %v2725
  %3776 = vmatprep.subr.bf16.mxu0 %v2730
  %3777 = vmatpush1.bf16.msra.mxu0 %v2729
  %3778 = vmatprep.mubr.bf16.mxu0 %v904
  %3779 = vmatmul.mubr.bf16.gmra.mrb[0].mxu0 %v903
  %v3780 = vpop.f32.mrb[0].mxu0
  %v3781 = vadd.f32 %v3668, %v3780
  %v3782 = vpop.f32.mrb[0].mxu0
  %v3783 = vadd.f32 %v3670, %v3782
  %v3784 = vpop.f32.mrb[0].mxu0
  %v3785 = vadd.f32 %v3672, %v3784
  %v3786 = vpop.f32.mrb[0].mxu0
  %v3787 = vadd.f32 %v3674, %v3786
  %3788 = vmatprep.mubr.bf16.mxu0 %v917
  %3789 = vmatmul.mubr.bf16.gmra.mrb[0].mxu0 %v916
  %v3790 = vpop.f32.mrb[0].mxu0
  %v3791 = vadd.f32 %v3678, %v3790
  %v3792 = vpop.f32.mrb[0].mxu0
  %v3793 = vadd.f32 %v3680, %v3792
  %v3794 = vpop.f32.mrb[0].mxu0
  %v3795 = vadd.f32 %v3682, %v3794
  %v3796 = vpop.f32.mrb[0].mxu0
  %v3797 = vadd.f32 %v3684, %v3796
  %3798 = vmatprep.mubr.bf16.mxu0 %v930
  %3799 = vmatmul.mubr.bf16.gmra.mrb[0].mxu0 %v929
  %v3800 = vpop.f32.mrb[0].mxu0
  %v3801 = vadd.f32 %v3688, %v3800
  %v3802 = vpop.f32.mrb[0].mxu0
  %v3803 = vadd.f32 %v3690, %v3802
  %v3804 = vpop.f32.mrb[0].mxu0
  %v3805 = vadd.f32 %v3692, %v3804
  %v3806 = vpop.f32.mrb[0].mxu0
  %v3807 = vadd.f32 %v3694, %v3806
  %3808 = vmatprep.mubr.bf16.mxu0 %v943
  %3809 = vmatmul.mubr.bf16.gmra.mrb[0].mxu0 %v942
  %v3810 = vpop.f32.mrb[0].mxu0
  %v3811 = vadd.f32 %v3698, %v3810
  %v3812 = vpop.f32.mrb[0].mxu0
  %v3813 = vadd.f32 %v3700, %v3812
  %v3814 = vpop.f32.mrb[0].mxu0
  %v3815 = vadd.f32 %v3702, %v3814
  %v3816 = vpop.f32.mrb[0].mxu0
  %v3817 = vadd.f32 %v3704, %v3816
  %3818 = vmatprep.mubr.bf16.mxu0 %v956
  %3819 = vmatmul.mubr.bf16.gmra.mrb[0].mxu0 %v955
  %v3820 = vpop.f32.mrb[0].mxu0
  %v3821 = vadd.f32 %v3708, %v3820
  %v3822 = vpop.f32.mrb[0].mxu0
  %v3823 = vadd.f32 %v3710, %v3822
  %v3824 = vpop.f32.mrb[0].mxu0
  %v3825 = vadd.f32 %v3712, %v3824
  %v3826 = vpop.f32.mrb[0].mxu0
  %v3827 = vadd.f32 %v3714, %v3826
  %3828 = vmatprep.mubr.bf16.mxu0 %v969
  %3829 = vmatmul.mubr.bf16.gmra.mrb[0].mxu0 %v968
  %v3830 = vpop.f32.mrb[0].mxu0
  %v3831 = vadd.f32 %v3718, %v3830
  %v3832 = vpop.f32.mrb[0].mxu0
  %v3833 = vadd.f32 %v3720, %v3832
  %v3834 = vpop.f32.mrb[0].mxu0
  %v3835 = vadd.f32 %v3722, %v3834
  %v3836 = vpop.f32.mrb[0].mxu0
  %v3837 = vadd.f32 %v3724, %v3836
  %3838 = vmatprep.mubr.bf16.mxu0 %v982
  %3839 = vmatmul.mubr.bf16.gmra.mrb[0].mxu0 %v981
  %v3840 = vpop.f32.mrb[0].mxu0
  %v3841 = vadd.f32 %v3728, %v3840
  %v3842 = vpop.f32.mrb[0].mxu0
  %v3843 = vadd.f32 %v3730, %v3842
  %v3844 = vpop.f32.mrb[0].mxu0
  %v3845 = vadd.f32 %v3732, %v3844
  %v3846 = vpop.f32.mrb[0].mxu0
  %v3847 = vadd.f32 %v3734, %v3846
  %3848 = vmatprep.mubr.bf16.mxu0 %v995
  %3849 = vmatmul.mubr.bf16.gmra.mrb[0].mxu0 %v994
  %v3850 = vpop.f32.mrb[0].mxu0
  %v3851 = vadd.f32 %v3738, %v3850
  %v3852 = vpop.f32.mrb[0].mxu0
  %v3853 = vadd.f32 %v3740, %v3852
  %v3854 = vpop.f32.mrb[0].mxu0
  %v3855 = vadd.f32 %v3742, %v3854
  %v3856 = vpop.f32.mrb[0].mxu0
  %v3857 = vadd.f32 %v3744, %v3856
  %3858 = vdwg.mxu0
  %3859 = vmatprep.subr.bf16.mxu0 %v2734
  %3860 = vmatpush1.bf16.msra.mxu0 %v2733
  %3861 = vmatprep.subr.bf16.mxu0 %v2738
  %3862 = vmatpush1.bf16.msra.mxu0 %v2737
  %3863 = vmatprep.subr.bf16.mxu0 %v2742
  %3864 = vmatpush1.bf16.msra.mxu0 %v2741
  %3865 = vmatprep.subr.bf16.mxu0 %v2746
  %3866 = vmatpush1.bf16.msra.mxu0 %v2745
  %3867 = vmatprep.subr.bf16.mxu0 %v2750
  %3868 = vmatpush1.bf16.msra.mxu0 %v2749
  %3869 = vmatprep.subr.bf16.mxu0 %v2754
  %3870 = vmatpush1.bf16.msra.mxu0 %v2753
  %3871 = vmatprep.subr.bf16.mxu0 %v2758
  %3872 = vmatpush1.bf16.msra.mxu0 %v2757
  %3873 = vmatprep.subr.bf16.mxu0 %v2762
  %3874 = vmatpush1.bf16.msra.mxu0 %v2761
  %3875 = vmatprep.subr.bf16.mxu0 0
  %3876 = vmatpush1.bf16.msra.mxu0 0
  %3877 = vmatprep.subr.bf16.mxu0 0
  %3878 = vmatpush1.bf16.msra.mxu0 0
  %3879 = vmatprep.subr.bf16.mxu0 0
  %3880 = vmatpush1.bf16.msra.mxu0 0
  %3881 = vmatprep.subr.bf16.mxu0 0
  %3882 = vmatpush1.bf16.msra.mxu0 0
  %3883 = vmatprep.subr.bf16.mxu0 0
  %3884 = vmatpush1.bf16.msra.mxu0 0
  %3885 = vmatprep.subr.bf16.mxu0 0
  %3886 = vmatpush1.bf16.msra.mxu0 0
  %3887 = vmatprep.subr.bf16.mxu0 0
  %3888 = vmatpush1.bf16.msra.mxu0 0
  %3889 = vmatprep.subr.bf16.mxu0 0
  %3890 = vmatpush1.bf16.msra.mxu0 0
  %3891 = vmatprep.mubr.bf16.mxu0 0
  %3892 = vmatmul.mubr.bf16.gmra.mrb[0].mxu0 %v905
  %v3893 = vpop.f32.mrb[0].mxu0
  %v3894 = vadd.f32 %v3781, %v3893
  %v3895 = vpop.f32.mrb[0].mxu0
  %v3896 = vadd.f32 %v3783, %v3895
  %v3897 = vpop.f32.mrb[0].mxu0
  %v3898 = vadd.f32 %v3785, %v3897
  %v3899 = vpop.f32.mrb[0].mxu0
  %v3900 = vadd.f32 %v3787, %v3899
  %3901 = vmatprep.mubr.bf16.mxu0 0
  %3902 = vmatmul.mubr.bf16.gmra.mrb[0].mxu0 %v918
  %v3903 = vpop.f32.mrb[0].mxu0
  %v3904 = vadd.f32 %v3791, %v3903
  %v3905 = vpop.f32.mrb[0].mxu0
  %v3906 = vadd.f32 %v3793, %v3905
  %v3907 = vpop.f32.mrb[0].mxu0
  %v3908 = vadd.f32 %v3795, %v3907
  %v3909 = vpop.f32.mrb[0].mxu0
  %v3910 = vadd.f32 %v3797, %v3909
  %3911 = vmatprep.mubr.bf16.mxu0 0
  %3912 = vmatmul.mubr.bf16.gmra.mrb[0].mxu0 %v931
  %v3913 = vpop.f32.mrb[0].mxu0
  %v3914 = vadd.f32 %v3801, %v3913
  %v3915 = vpop.f32.mrb[0].mxu0
  %v3916 = vadd.f32 %v3803, %v3915
  %v3917 = vpop.f32.mrb[0].mxu0
  %v3918 = vadd.f32 %v3805, %v3917
  %v3919 = vpop.f32.mrb[0].mxu0
  %v3920 = vadd.f32 %v3807, %v3919
  %3921 = vmatprep.mubr.bf16.mxu0 0
  %3922 = vmatmul.mubr.bf16.gmra.mrb[0].mxu0 %v944
  %v3923 = vpop.f32.mrb[0].mxu0
  %v3924 = vadd.f32 %v3811, %v3923
  %v3925 = vpop.f32.mrb[0].mxu0
  %v3926 = vadd.f32 %v3813, %v3925
  %v3927 = vpop.f32.mrb[0].mxu0
  %v3928 = vadd.f32 %v3815, %v3927
  %v3929 = vpop.f32.mrb[0].mxu0
  %v3930 = vadd.f32 %v3817, %v3929
  %3931 = vmatprep.mubr.bf16.mxu0 0
  %3932 = vmatmul.mubr.bf16.gmra.mrb[0].mxu0 %v957
  %v3933 = vpop.f32.mrb[0].mxu0
  %v3934 = vadd.f32 %v3821, %v3933
  %v3935 = vpop.f32.mrb[0].mxu0
  %v3936 = vadd.f32 %v3823, %v3935
  %v3937 = vpop.f32.mrb[0].mxu0
  %v3938 = vadd.f32 %v3825, %v3937
  %v3939 = vpop.f32.mrb[0].mxu0
  %v3940 = vadd.f32 %v3827, %v3939
  %3941 = vmatprep.mubr.bf16.mxu0 0
  %3942 = vmatmul.mubr.bf16.gmra.mrb[0].mxu0 %v970
  %v3943 = vpop.f32.mrb[0].mxu0
  %v3944 = vadd.f32 %v3831, %v3943
  %v3945 = vpop.f32.mrb[0].mxu0
  %v3946 = vadd.f32 %v3833, %v3945
  %v3947 = vpop.f32.mrb[0].mxu0
  %v3948 = vadd.f32 %v3835, %v3947
  %v3949 = vpop.f32.mrb[0].mxu0
  %v3950 = vadd.f32 %v3837, %v3949
  %3951 = vmatprep.mubr.bf16.mxu0 0
  %3952 = vmatmul.mubr.bf16.gmra.mrb[0].mxu0 %v983
  %v3953 = vpop.f32.mrb[0].mxu0
  %v3954 = vadd.f32 %v3841, %v3953
  %v3955 = vpop.f32.mrb[0].mxu0
  %v3956 = vadd.f32 %v3843, %v3955
  %v3957 = vpop.f32.mrb[0].mxu0
  %v3958 = vadd.f32 %v3845, %v3957
  %v3959 = vpop.f32.mrb[0].mxu0
  %v3960 = vadd.f32 %v3847, %v3959
  %3961 = vmatprep.mubr.bf16.mxu0 0
  %3962 = vmatmul.mubr.bf16.gmra.mrb[0].mxu0 %v996
  %v3963 = vpop.f32.mrb[0].mxu0
  %v3964 = vadd.f32 %v3851, %v3963
  %v3965 = vpop.f32.mrb[0].mxu0
  %v3966 = vadd.f32 %v3853, %v3965
  %v3967 = vpop.f32.mrb[0].mxu0
  %v3968 = vadd.f32 %v3855, %v3967
  %v3969 = vpop.f32.mrb[0].mxu0
  %v3970 = vadd.f32 %v3857, %v3969
  %3971 = vdwg.mxu0
  %3972 = vmatprep.subr.bf16.mxu0 %v2352
  %3973 = vmatpush1.bf16.msra.mxu0 %v2351
  %3974 = vmatprep.subr.bf16.mxu0 %v2356
  %3975 = vmatpush1.bf16.msra.mxu0 %v2355
  %3976 = vmatprep.subr.bf16.mxu0 %v2360
  %3977 = vmatpush1.bf16.msra.mxu0 %v2359
  %3978 = vmatprep.subr.bf16.mxu0 %v2364
  %3979 = vmatpush1.bf16.msra.mxu0 %v2363
  %3980 = vmatprep.subr.bf16.mxu0 %v2368
  %3981 = vmatpush1.bf16.msra.mxu0 %v2367
  %3982 = vmatprep.subr.bf16.mxu0 %v2372
  %3983 = vmatpush1.bf16.msra.mxu0 %v2371
  %3984 = vmatprep.subr.bf16.mxu0 %v2376
  %3985 = vmatpush1.bf16.msra.mxu0 %v2375
  %3986 = vmatprep.subr.bf16.mxu0 %v2380
  %3987 = vmatpush1.bf16.msra.mxu0 %v2379
  %3988 = vmatprep.subr.bf16.mxu0 %v2384
  %3989 = vmatpush1.bf16.msra.mxu0 %v2383
  %3990 = vmatprep.subr.bf16.mxu0 %v2388
  %3991 = vmatpush1.bf16.msra.mxu0 %v2387
  %3992 = vmatprep.subr.bf16.mxu0 %v2392
  %3993 = vmatpush1.bf16.msra.mxu0 %v2391
  %3994 = vmatprep.subr.bf16.mxu0 %v2396
  %3995 = vmatpush1.bf16.msra.mxu0 %v2395
  %3996 = vmatprep.subr.bf16.mxu0 %v2400
  %3997 = vmatpush1.bf16.msra.mxu0 %v2399
  %3998 = vmatprep.subr.bf16.mxu0 %v2404
  %3999 = vmatpush1.bf16.msra.mxu0 %v2403
  %4000 = vmatprep.subr.bf16.mxu0 %v2408
  %4001 = vmatpush1.bf16.msra.mxu0 %v2407
  %4002 = vmatprep.subr.bf16.mxu0 %v2412
  %4003 = vmatpush1.bf16.msra.mxu0 %v2411
  %4004 = vmatprep.mubr.bf16.mxu0 %v894
  %4005 = vmatmul.mubr.bf16.gmra.mrb[0].mxu0 %v893
  %v4006 = vpop.f32.mrb[0].mxu0
  %v4007 = vadd.f32 %v564, %v4006
  %v4008 = vpop.f32.mrb[0].mxu0
  %v4009 = vadd.f32 %v568, %v4008
  %v4010 = vpop.f32.mrb[0].mxu0
  %v4011 = vadd.f32 %v564, %v4010
  %v4012 = vpop.f32.mrb[0].mxu0
  %v4013 = vadd.f32 %v568, %v4012
  %4014 = vmatprep.mubr.bf16.mxu0 %v907
  %4015 = vmatmul.mubr.bf16.gmra.mrb[0].mxu0 %v906
  %v4016 = vpop.f32.mrb[0].mxu0
  %v4017 = vadd.f32 %v564, %v4016
  %v4018 = vpop.f32.mrb[0].mxu0
  %v4019 = vadd.f32 %v568, %v4018
  %v4020 = vpop.f32.mrb[0].mxu0
  %v4021 = vadd.f32 %v564, %v4020
  %v4022 = vpop.f32.mrb[0].mxu0
  %v4023 = vadd.f32 %v568, %v4022
  %4024 = vmatprep.mubr.bf16.mxu0 %v920
  %4025 = vmatmul.mubr.bf16.gmra.mrb[0].mxu0 %v919
  %v4026 = vpop.f32.mrb[0].mxu0
  %v4027 = vadd.f32 %v564, %v4026
  %v4028 = vpop.f32.mrb[0].mxu0
  %v4029 = vadd.f32 %v568, %v4028
  %v4030 = vpop.f32.mrb[0].mxu0
  %v4031 = vadd.f32 %v564, %v4030
  %v4032 = vpop.f32.mrb[0].mxu0
  %v4033 = vadd.f32 %v568, %v4032
  %4034 = vmatprep.mubr.bf16.mxu0 %v933
  %4035 = vmatmul.mubr.bf16.gmra.mrb[0].mxu0 %v932
  %v4036 = vpop.f32.mrb[0].mxu0
  %v4037 = vadd.f32 %v564, %v4036
  %v4038 = vpop.f32.mrb[0].mxu0
  %v4039 = vadd.f32 %v568, %v4038
  %v4040 = vpop.f32.mrb[0].mxu0
  %v4041 = vadd.f32 %v564, %v4040
  %v4042 = vpop.f32.mrb[0].mxu0
  %v4043 = vadd.f32 %v568, %v4042
  %4044 = vmatprep.mubr.bf16.mxu0 %v946
  %4045 = vmatmul.mubr.bf16.gmra.mrb[0].mxu0 %v945
  %v4046 = vpop.f32.mrb[0].mxu0
  %v4047 = vadd.f32 %v564, %v4046
  %v4048 = vpop.f32.mrb[0].mxu0
  %v4049 = vadd.f32 %v568, %v4048
  %v4050 = vpop.f32.mrb[0].mxu0
  %v4051 = vadd.f32 %v564, %v4050
  %v4052 = vpop.f32.mrb[0].mxu0
  %v4053 = vadd.f32 %v568, %v4052
  %4054 = vmatprep.mubr.bf16.mxu0 %v959
  %4055 = vmatmul.mubr.bf16.gmra.mrb[0].mxu0 %v958
  %v4056 = vpop.f32.mrb[0].mxu0
  %v4057 = vadd.f32 %v564, %v4056
  %v4058 = vpop.f32.mrb[0].mxu0
  %v4059 = vadd.f32 %v568, %v4058
  %v4060 = vpop.f32.mrb[0].mxu0
  %v4061 = vadd.f32 %v564, %v4060
  %v4062 = vpop.f32.mrb[0].mxu0
  %v4063 = vadd.f32 %v568, %v4062
  %4064 = vmatprep.mubr.bf16.mxu0 %v972
  %4065 = vmatmul.mubr.bf16.gmra.mrb[0].mxu0 %v971
  %v4066 = vpop.f32.mrb[0].mxu0
  %v4067 = vadd.f32 %v564, %v4066
  %v4068 = vpop.f32.mrb[0].mxu0
  %v4069 = vadd.f32 %v568, %v4068
  %v4070 = vpop.f32.mrb[0].mxu0
  %v4071 = vadd.f32 %v564, %v4070
  %v4072 = vpop.f32.mrb[0].mxu0
  %v4073 = vadd.f32 %v568, %v4072
  %4074 = vmatprep.mubr.bf16.mxu0 %v985
  %4075 = vmatmul.mubr.bf16.gmra.mrb[0].mxu0 %v984
  %v4076 = vpop.f32.mrb[0].mxu0
  %v4077 = vadd.f32 %v564, %v4076
  %v4078 = vpop.f32.mrb[0].mxu0
  %v4079 = vadd.f32 %v568, %v4078
  %v4080 = vpop.f32.mrb[0].mxu0
  %v4081 = vadd.f32 %v564, %v4080
  %v4082 = vpop.f32.mrb[0].mxu0
  %v4083 = vadd.f32 %v568, %v4082
  %4084 = vdwg.mxu0
  %4085 = vmatprep.subr.bf16.mxu0 %v2416
  %4086 = vmatpush1.bf16.msra.mxu0 %v2415
  %4087 = vmatprep.subr.bf16.mxu0 %v2420
  %4088 = vmatpush1.bf16.msra.mxu0 %v2419
  %4089 = vmatprep.subr.bf16.mxu0 %v2424
  %4090 = vmatpush1.bf16.msra.mxu0 %v2423
  %4091 = vmatprep.subr.bf16.mxu0 %v2428
  %4092 = vmatpush1.bf16.msra.mxu0 %v2427
  %4093 = vmatprep.subr.bf16.mxu0 %v2432
  %4094 = vmatpush1.bf16.msra.mxu0 %v2431
  %4095 = vmatprep.subr.bf16.mxu0 %v2436
  %4096 = vmatpush1.bf16.msra.mxu0 %v2435
  %4097 = vmatprep.subr.bf16.mxu0 %v2440
  %4098 = vmatpush1.bf16.msra.mxu0 %v2439
  %4099 = vmatprep.subr.bf16.mxu0 %v2444
  %4100 = vmatpush1.bf16.msra.mxu0 %v2443
  %4101 = vmatprep.subr.bf16.mxu0 %v2448
  %4102 = vmatpush1.bf16.msra.mxu0 %v2447
  %4103 = vmatprep.subr.bf16.mxu0 %v2452
  %4104 = vmatpush1.bf16.msra.mxu0 %v2451
  %4105 = vmatprep.subr.bf16.mxu0 %v2456
  %4106 = vmatpush1.bf16.msra.mxu0 %v2455
  %4107 = vmatprep.subr.bf16.mxu0 %v2460
  %4108 = vmatpush1.bf16.msra.mxu0 %v2459
  %4109 = vmatprep.subr.bf16.mxu0 %v2464
  %4110 = vmatpush1.bf16.msra.mxu0 %v2463
  %4111 = vmatprep.subr.bf16.mxu0 %v2468
  %4112 = vmatpush1.bf16.msra.mxu0 %v2467
  %4113 = vmatprep.subr.bf16.mxu0 %v2472
  %4114 = vmatpush1.bf16.msra.mxu0 %v2471
  %4115 = vmatprep.subr.bf16.mxu0 %v2476
  %4116 = vmatpush1.bf16.msra.mxu0 %v2475
  %4117 = vmatprep.mubr.bf16.mxu0 %v896
  %4118 = vmatmul.mubr.bf16.gmra.mrb[0].mxu0 %v895
  %v4119 = vpop.f32.mrb[0].mxu0
  %v4120 = vadd.f32 %v4007, %v4119
  %v4121 = vpop.f32.mrb[0].mxu0
  %v4122 = vadd.f32 %v4009, %v4121
  %v4123 = vpop.f32.mrb[0].mxu0
  %v4124 = vadd.f32 %v4011, %v4123
  %v4125 = vpop.f32.mrb[0].mxu0
  %v4126 = vadd.f32 %v4013, %v4125
  %4127 = vmatprep.mubr.bf16.mxu0 %v909
  %4128 = vmatmul.mubr.bf16.gmra.mrb[0].mxu0 %v908
  %v4129 = vpop.f32.mrb[0].mxu0
  %v4130 = vadd.f32 %v4017, %v4129
  %v4131 = vpop.f32.mrb[0].mxu0
  %v4132 = vadd.f32 %v4019, %v4131
  %v4133 = vpop.f32.mrb[0].mxu0
  %v4134 = vadd.f32 %v4021, %v4133
  %v4135 = vpop.f32.mrb[0].mxu0
  %v4136 = vadd.f32 %v4023, %v4135
  %4137 = vmatprep.mubr.bf16.mxu0 %v922
  %4138 = vmatmul.mubr.bf16.gmra.mrb[0].mxu0 %v921
  %v4139 = vpop.f32.mrb[0].mxu0
  %v4140 = vadd.f32 %v4027, %v4139
  %v4141 = vpop.f32.mrb[0].mxu0
  %v4142 = vadd.f32 %v4029, %v4141
  %v4143 = vpop.f32.mrb[0].mxu0
  %v4144 = vadd.f32 %v4031, %v4143
  %v4145 = vpop.f32.mrb[0].mxu0
  %v4146 = vadd.f32 %v4033, %v4145
  %4147 = vmatprep.mubr.bf16.mxu0 %v935
  %4148 = vmatmul.mubr.bf16.gmra.mrb[0].mxu0 %v934
  %v4149 = vpop.f32.mrb[0].mxu0
  %v4150 = vadd.f32 %v4037, %v4149
  %v4151 = vpop.f32.mrb[0].mxu0
  %v4152 = vadd.f32 %v4039, %v4151
  %v4153 = vpop.f32.mrb[0].mxu0
  %v4154 = vadd.f32 %v4041, %v4153
  %v4155 = vpop.f32.mrb[0].mxu0
  %v4156 = vadd.f32 %v4043, %v4155
  %4157 = vmatprep.mubr.bf16.mxu0 %v948
  %4158 = vmatmul.mubr.bf16.gmra.mrb[0].mxu0 %v947
  %v4159 = vpop.f32.mrb[0].mxu0
  %v4160 = vadd.f32 %v4047, %v4159
  %v4161 = vpop.f32.mrb[0].mxu0
  %v4162 = vadd.f32 %v4049, %v4161
  %v4163 = vpop.f32.mrb[0].mxu0
  %v4164 = vadd.f32 %v4051, %v4163
  %v4165 = vpop.f32.mrb[0].mxu0
  %v4166 = vadd.f32 %v4053, %v4165
  %4167 = vmatprep.mubr.bf16.mxu0 %v961
  %4168 = vmatmul.mubr.bf16.gmra.mrb[0].mxu0 %v960
  %v4169 = vpop.f32.mrb[0].mxu0
  %v4170 = vadd.f32 %v4057, %v4169
  %v4171 = vpop.f32.mrb[0].mxu0
  %v4172 = vadd.f32 %v4059, %v4171
  %v4173 = vpop.f32.mrb[0].mxu0
  %v4174 = vadd.f32 %v4061, %v4173
  %v4175 = vpop.f32.mrb[0].mxu0
  %v4176 = vadd.f32 %v4063, %v4175
  %4177 = vmatprep.mubr.bf16.mxu0 %v974
  %4178 = vmatmul.mubr.bf16.gmra.mrb[0].mxu0 %v973
  %v4179 = vpop.f32.mrb[0].mxu0
  %v4180 = vadd.f32 %v4067, %v4179
  %v4181 = vpop.f32.mrb[0].mxu0
  %v4182 = vadd.f32 %v4069, %v4181
  %v4183 = vpop.f32.mrb[0].mxu0
  %v4184 = vadd.f32 %v4071, %v4183
  %v4185 = vpop.f32.mrb[0].mxu0
  %v4186 = vadd.f32 %v4073, %v4185
  %4187 = vmatprep.mubr.bf16.mxu0 %v987
  %4188 = vmatmul.mubr.bf16.gmra.mrb[0].mxu0 %v986
  %v4189 = vpop.f32.mrb[0].mxu0
  %v4190 = vadd.f32 %v4077, %v4189
  %v4191 = vpop.f32.mrb[0].mxu0
  %v4192 = vadd.f32 %v4079, %v4191
  %v4193 = vpop.f32.mrb[0].mxu0
  %v4194 = vadd.f32 %v4081, %v4193
  %v4195 = vpop.f32.mrb[0].mxu0
  %v4196 = vadd.f32 %v4083, %v4195
  %4197 = vdwg.mxu0
  %4198 = vmatprep.subr.bf16.mxu0 %v2480
  %4199 = vmatpush1.bf16.msra.mxu0 %v2479
  %4200 = vmatprep.subr.bf16.mxu0 %v2484
  %4201 = vmatpush1.bf16.msra.mxu0 %v2483
  %4202 = vmatprep.subr.bf16.mxu0 %v2488
  %4203 = vmatpush1.bf16.msra.mxu0 %v2487
  %4204 = vmatprep.subr.bf16.mxu0 %v2492
  %4205 = vmatpush1.bf16.msra.mxu0 %v2491
  %4206 = vmatprep.subr.bf16.mxu0 %v2496
  %4207 = vmatpush1.bf16.msra.mxu0 %v2495
  %4208 = vmatprep.subr.bf16.mxu0 %v2500
  %4209 = vmatpush1.bf16.msra.mxu0 %v2499
  %4210 = vmatprep.subr.bf16.mxu0 %v2504
  %4211 = vmatpush1.bf16.msra.mxu0 %v2503
  %4212 = vmatprep.subr.bf16.mxu0 %v2508
  %4213 = vmatpush1.bf16.msra.mxu0 %v2507
  %4214 = vmatprep.subr.bf16.mxu0 %v2512
  %4215 = vmatpush1.bf16.msra.mxu0 %v2511
  %4216 = vmatprep.subr.bf16.mxu0 %v2516
  %4217 = vmatpush1.bf16.msra.mxu0 %v2515
  %4218 = vmatprep.subr.bf16.mxu0 %v2520
  %4219 = vmatpush1.bf16.msra.mxu0 %v2519
  %4220 = vmatprep.subr.bf16.mxu0 %v2524
  %4221 = vmatpush1.bf16.msra.mxu0 %v2523
  %4222 = vmatprep.subr.bf16.mxu0 %v2528
  %4223 = vmatpush1.bf16.msra.mxu0 %v2527
  %4224 = vmatprep.subr.bf16.mxu0 %v2532
  %4225 = vmatpush1.bf16.msra.mxu0 %v2531
  %4226 = vmatprep.subr.bf16.mxu0 %v2536
  %4227 = vmatpush1.bf16.msra.mxu0 %v2535
  %4228 = vmatprep.subr.bf16.mxu0 %v2540
  %4229 = vmatpush1.bf16.msra.mxu0 %v2539
  %4230 = vmatprep.mubr.bf16.mxu0 %v898
  %4231 = vmatmul.mubr.bf16.gmra.mrb[0].mxu0 %v897
  %v4232 = vpop.f32.mrb[0].mxu0
  %v4233 = vadd.f32 %v4120, %v4232
  %v4234 = vpop.f32.mrb[0].mxu0
  %v4235 = vadd.f32 %v4122, %v4234
  %v4236 = vpop.f32.mrb[0].mxu0
  %v4237 = vadd.f32 %v4124, %v4236
  %v4238 = vpop.f32.mrb[0].mxu0
  %v4239 = vadd.f32 %v4126, %v4238
  %4240 = vmatprep.mubr.bf16.mxu0 %v911
  %4241 = vmatmul.mubr.bf16.gmra.mrb[0].mxu0 %v910
  %v4242 = vpop.f32.mrb[0].mxu0
  %v4243 = vadd.f32 %v4130, %v4242
  %v4244 = vpop.f32.mrb[0].mxu0
  %v4245 = vadd.f32 %v4132, %v4244
  %v4246 = vpop.f32.mrb[0].mxu0
  %v4247 = vadd.f32 %v4134, %v4246
  %v4248 = vpop.f32.mrb[0].mxu0
  %v4249 = vadd.f32 %v4136, %v4248
  %4250 = vmatprep.mubr.bf16.mxu0 %v924
  %4251 = vmatmul.mubr.bf16.gmra.mrb[0].mxu0 %v923
  %v4252 = vpop.f32.mrb[0].mxu0
  %v4253 = vadd.f32 %v4140, %v4252
  %v4254 = vpop.f32.mrb[0].mxu0
  %v4255 = vadd.f32 %v4142, %v4254
  %v4256 = vpop.f32.mrb[0].mxu0
  %v4257 = vadd.f32 %v4144, %v4256
  %v4258 = vpop.f32.mrb[0].mxu0
  %v4259 = vadd.f32 %v4146, %v4258
  %4260 = vmatprep.mubr.bf16.mxu0 %v937
  %4261 = vmatmul.mubr.bf16.gmra.mrb[0].mxu0 %v936
  %v4262 = vpop.f32.mrb[0].mxu0
  %v4263 = vadd.f32 %v4150, %v4262
  %v4264 = vpop.f32.mrb[0].mxu0
  %v4265 = vadd.f32 %v4152, %v4264
  %v4266 = vpop.f32.mrb[0].mxu0
  %v4267 = vadd.f32 %v4154, %v4266
  %v4268 = vpop.f32.mrb[0].mxu0
  %v4269 = vadd.f32 %v4156, %v4268
  %4270 = vmatprep.mubr.bf16.mxu0 %v950
  %4271 = vmatmul.mubr.bf16.gmra.mrb[0].mxu0 %v949
  %v4272 = vpop.f32.mrb[0].mxu0
  %v4273 = vadd.f32 %v4160, %v4272
  %v4274 = vpop.f32.mrb[0].mxu0
  %v4275 = vadd.f32 %v4162, %v4274
  %v4276 = vpop.f32.mrb[0].mxu0
  %v4277 = vadd.f32 %v4164, %v4276
  %v4278 = vpop.f32.mrb[0].mxu0
  %v4279 = vadd.f32 %v4166, %v4278
  %4280 = vmatprep.mubr.bf16.mxu0 %v963
  %4281 = vmatmul.mubr.bf16.gmra.mrb[0].mxu0 %v962
  %v4282 = vpop.f32.mrb[0].mxu0
  %v4283 = vadd.f32 %v4170, %v4282
  %v4284 = vpop.f32.mrb[0].mxu0
  %v4285 = vadd.f32 %v4172, %v4284
  %v4286 = vpop.f32.mrb[0].mxu0
  %v4287 = vadd.f32 %v4174, %v4286
  %v4288 = vpop.f32.mrb[0].mxu0
  %v4289 = vadd.f32 %v4176, %v4288
  %4290 = vmatprep.mubr.bf16.mxu0 %v976
  %4291 = vmatmul.mubr.bf16.gmra.mrb[0].mxu0 %v975
  %v4292 = vpop.f32.mrb[0].mxu0
  %v4293 = vadd.f32 %v4180, %v4292
  %v4294 = vpop.f32.mrb[0].mxu0
  %v4295 = vadd.f32 %v4182, %v4294
  %v4296 = vpop.f32.mrb[0].mxu0
  %v4297 = vadd.f32 %v4184, %v4296
  %v4298 = vpop.f32.mrb[0].mxu0
  %v4299 = vadd.f32 %v4186, %v4298
  %4300 = vmatprep.mubr.bf16.mxu0 %v989
  %4301 = vmatmul.mubr.bf16.gmra.mrb[0].mxu0 %v988
  %v4302 = vpop.f32.mrb[0].mxu0
  %v4303 = vadd.f32 %v4190, %v4302
  %v4304 = vpop.f32.mrb[0].mxu0
  %v4305 = vadd.f32 %v4192, %v4304
  %v4306 = vpop.f32.mrb[0].mxu0
  %v4307 = vadd.f32 %v4194, %v4306
  %v4308 = vpop.f32.mrb[0].mxu0
  %v4309 = vadd.f32 %v4196, %v4308
  %4310 = vdwg.mxu0
  %4311 = vmatprep.subr.bf16.mxu0 %v2544
  %4312 = vmatpush1.bf16.msra.mxu0 %v2543
  %4313 = vmatprep.subr.bf16.mxu0 %v2548
  %4314 = vmatpush1.bf16.msra.mxu0 %v2547
  %4315 = vmatprep.subr.bf16.mxu0 %v2552
  %4316 = vmatpush1.bf16.msra.mxu0 %v2551
  %4317 = vmatprep.subr.bf16.mxu0 %v2556
  %4318 = vmatpush1.bf16.msra.mxu0 %v2555
  %4319 = vmatprep.subr.bf16.mxu0 %v2560
  %4320 = vmatpush1.bf16.msra.mxu0 %v2559
  %4321 = vmatprep.subr.bf16.mxu0 %v2564
  %4322 = vmatpush1.bf16.msra.mxu0 %v2563
  %4323 = vmatprep.subr.bf16.mxu0 %v2568
  %4324 = vmatpush1.bf16.msra.mxu0 %v2567
  %4325 = vmatprep.subr.bf16.mxu0 %v2572
  %4326 = vmatpush1.bf16.msra.mxu0 %v2571
  %4327 = vmatprep.subr.bf16.mxu0 %v2576
  %4328 = vmatpush1.bf16.msra.mxu0 %v2575
  %4329 = vmatprep.subr.bf16.mxu0 %v2580
  %4330 = vmatpush1.bf16.msra.mxu0 %v2579
  %4331 = vmatprep.subr.bf16.mxu0 %v2584
  %4332 = vmatpush1.bf16.msra.mxu0 %v2583
  %4333 = vmatprep.subr.bf16.mxu0 %v2588
  %4334 = vmatpush1.bf16.msra.mxu0 %v2587
  %4335 = vmatprep.subr.bf16.mxu0 %v2592
  %4336 = vmatpush1.bf16.msra.mxu0 %v2591
  %4337 = vmatprep.subr.bf16.mxu0 %v2596
  %4338 = vmatpush1.bf16.msra.mxu0 %v2595
  %4339 = vmatprep.subr.bf16.mxu0 %v2600
  %4340 = vmatpush1.bf16.msra.mxu0 %v2599
  %4341 = vmatprep.subr.bf16.mxu0 %v2604
  %4342 = vmatpush1.bf16.msra.mxu0 %v2603
  %4343 = vmatprep.mubr.bf16.mxu0 %v900
  %4344 = vmatmul.mubr.bf16.gmra.mrb[0].mxu0 %v899
  %v4345 = vpop.f32.mrb[0].mxu0
  %v4346 = vadd.f32 %v4233, %v4345
  %v4347 = vpop.f32.mrb[0].mxu0
  %v4348 = vadd.f32 %v4235, %v4347
  %v4349 = vpop.f32.mrb[0].mxu0
  %v4350 = vadd.f32 %v4237, %v4349
  %v4351 = vpop.f32.mrb[0].mxu0
  %v4352 = vadd.f32 %v4239, %v4351
  %4353 = vmatprep.mubr.bf16.mxu0 %v913
  %4354 = vmatmul.mubr.bf16.gmra.mrb[0].mxu0 %v912
  %v4355 = vpop.f32.mrb[0].mxu0
  %v4356 = vadd.f32 %v4243, %v4355
  %v4357 = vpop.f32.mrb[0].mxu0
  %v4358 = vadd.f32 %v4245, %v4357
  %v4359 = vpop.f32.mrb[0].mxu0
  %v4360 = vadd.f32 %v4247, %v4359
  %v4361 = vpop.f32.mrb[0].mxu0
  %v4362 = vadd.f32 %v4249, %v4361
  %4363 = vmatprep.mubr.bf16.mxu0 %v926
  %4364 = vmatmul.mubr.bf16.gmra.mrb[0].mxu0 %v925
  %v4365 = vpop.f32.mrb[0].mxu0
  %v4366 = vadd.f32 %v4253, %v4365
  %v4367 = vpop.f32.mrb[0].mxu0
  %v4368 = vadd.f32 %v4255, %v4367
  %v4369 = vpop.f32.mrb[0].mxu0
  %v4370 = vadd.f32 %v4257, %v4369
  %v4371 = vpop.f32.mrb[0].mxu0
  %v4372 = vadd.f32 %v4259, %v4371
  %4373 = vmatprep.mubr.bf16.mxu0 %v939
  %4374 = vmatmul.mubr.bf16.gmra.mrb[0].mxu0 %v938
  %v4375 = vpop.f32.mrb[0].mxu0
  %v4376 = vadd.f32 %v4263, %v4375
  %v4377 = vpop.f32.mrb[0].mxu0
  %v4378 = vadd.f32 %v4265, %v4377
  %v4379 = vpop.f32.mrb[0].mxu0
  %v4380 = vadd.f32 %v4267, %v4379
  %v4381 = vpop.f32.mrb[0].mxu0
  %v4382 = vadd.f32 %v4269, %v4381
  %4383 = vmatprep.mubr.bf16.mxu0 %v952
  %4384 = vmatmul.mubr.bf16.gmra.mrb[0].mxu0 %v951
  %v4385 = vpop.f32.mrb[0].mxu0
  %v4386 = vadd.f32 %v4273, %v4385
  %v4387 = vpop.f32.mrb[0].mxu0
  %v4388 = vadd.f32 %v4275, %v4387
  %v4389 = vpop.f32.mrb[0].mxu0
  %v4390 = vadd.f32 %v4277, %v4389
  %v4391 = vpop.f32.mrb[0].mxu0
  %v4392 = vadd.f32 %v4279, %v4391
  %4393 = vmatprep.mubr.bf16.mxu0 %v965
  %4394 = vmatmul.mubr.bf16.gmra.mrb[0].mxu0 %v964
  %v4395 = vpop.f32.mrb[0].mxu0
  %v4396 = vadd.f32 %v4283, %v4395
  %v4397 = vpop.f32.mrb[0].mxu0
  %v4398 = vadd.f32 %v4285, %v4397
  %v4399 = vpop.f32.mrb[0].mxu0
  %v4400 = vadd.f32 %v4287, %v4399
  %v4401 = vpop.f32.mrb[0].mxu0
  %v4402 = vadd.f32 %v4289, %v4401
  %4403 = vmatprep.mubr.bf16.mxu0 %v978
  %4404 = vmatmul.mubr.bf16.gmra.mrb[0].mxu0 %v977
  %v4405 = vpop.f32.mrb[0].mxu0
  %v4406 = vadd.f32 %v4293, %v4405
  %v4407 = vpop.f32.mrb[0].mxu0
  %v4408 = vadd.f32 %v4295, %v4407
  %v4409 = vpop.f32.mrb[0].mxu0
  %v4410 = vadd.f32 %v4297, %v4409
  %v4411 = vpop.f32.mrb[0].mxu0
  %v4412 = vadd.f32 %v4299, %v4411
  %4413 = vmatprep.mubr.bf16.mxu0 %v991
  %4414 = vmatmul.mubr.bf16.gmra.mrb[0].mxu0 %v990
  %v4415 = vpop.f32.mrb[0].mxu0
  %v4416 = vadd.f32 %v4303, %v4415
  %v4417 = vpop.f32.mrb[0].mxu0
  %v4418 = vadd.f32 %v4305, %v4417
  %v4419 = vpop.f32.mrb[0].mxu0
  %v4420 = vadd.f32 %v4307, %v4419
  %v4421 = vpop.f32.mrb[0].mxu0
  %v4422 = vadd.f32 %v4309, %v4421
  %4423 = vdwg.mxu0
  %4424 = vmatprep.subr.bf16.mxu0 %v2608
  %4425 = vmatpush1.bf16.msra.mxu0 %v2607
  %4426 = vmatprep.subr.bf16.mxu0 %v2612
  %4427 = vmatpush1.bf16.msra.mxu0 %v2611
  %4428 = vmatprep.subr.bf16.mxu0 %v2616
  %4429 = vmatpush1.bf16.msra.mxu0 %v2615
  %4430 = vmatprep.subr.bf16.mxu0 %v2620
  %4431 = vmatpush1.bf16.msra.mxu0 %v2619
  %4432 = vmatprep.subr.bf16.mxu0 %v2624
  %4433 = vmatpush1.bf16.msra.mxu0 %v2623
  %4434 = vmatprep.subr.bf16.mxu0 %v2628
  %4435 = vmatpush1.bf16.msra.mxu0 %v2627
  %4436 = vmatprep.subr.bf16.mxu0 %v2632
  %4437 = vmatpush1.bf16.msra.mxu0 %v2631
  %4438 = vmatprep.subr.bf16.mxu0 %v2636
  %4439 = vmatpush1.bf16.msra.mxu0 %v2635
  %4440 = vmatprep.subr.bf16.mxu0 %v2640
  %4441 = vmatpush1.bf16.msra.mxu0 %v2639
  %4442 = vmatprep.subr.bf16.mxu0 %v2644
  %4443 = vmatpush1.bf16.msra.mxu0 %v2643
  %4444 = vmatprep.subr.bf16.mxu0 %v2648
  %4445 = vmatpush1.bf16.msra.mxu0 %v2647
  %4446 = vmatprep.subr.bf16.mxu0 %v2652
  %4447 = vmatpush1.bf16.msra.mxu0 %v2651
  %4448 = vmatprep.subr.bf16.mxu0 %v2656
  %4449 = vmatpush1.bf16.msra.mxu0 %v2655
  %4450 = vmatprep.subr.bf16.mxu0 %v2660
  %4451 = vmatpush1.bf16.msra.mxu0 %v2659
  %4452 = vmatprep.subr.bf16.mxu0 %v2664
  %4453 = vmatpush1.bf16.msra.mxu0 %v2663
  %4454 = vmatprep.subr.bf16.mxu0 %v2668
  %4455 = vmatpush1.bf16.msra.mxu0 %v2667
  %4456 = vmatprep.mubr.bf16.mxu0 %v902
  %4457 = vmatmul.mubr.bf16.gmra.mrb[0].mxu0 %v901
  %v4458 = vpop.f32.mrb[0].mxu0
  %v4459 = vadd.f32 %v4346, %v4458
  %v4460 = vpop.f32.mrb[0].mxu0
  %v4461 = vadd.f32 %v4348, %v4460
  %v4462 = vpop.f32.mrb[0].mxu0
  %v4463 = vadd.f32 %v4350, %v4462
  %v4464 = vpop.f32.mrb[0].mxu0
  %v4465 = vadd.f32 %v4352, %v4464
  %4466 = vmatprep.mubr.bf16.mxu0 %v915
  %4467 = vmatmul.mubr.bf16.gmra.mrb[0].mxu0 %v914
  %v4468 = vpop.f32.mrb[0].mxu0
  %v4469 = vadd.f32 %v4356, %v4468
  %v4470 = vpop.f32.mrb[0].mxu0
  %v4471 = vadd.f32 %v4358, %v4470
  %v4472 = vpop.f32.mrb[0].mxu0
  %v4473 = vadd.f32 %v4360, %v4472
  %v4474 = vpop.f32.mrb[0].mxu0
  %v4475 = vadd.f32 %v4362, %v4474
  %4476 = vmatprep.mubr.bf16.mxu0 %v928
  %4477 = vmatmul.mubr.bf16.gmra.mrb[0].mxu0 %v927
  %v4478 = vpop.f32.mrb[0].mxu0
  %v4479 = vadd.f32 %v4366, %v4478
  %v4480 = vpop.f32.mrb[0].mxu0
  %v4481 = vadd.f32 %v4368, %v4480
  %v4482 = vpop.f32.mrb[0].mxu0
  %v4483 = vadd.f32 %v4370, %v4482
  %v4484 = vpop.f32.mrb[0].mxu0
  %v4485 = vadd.f32 %v4372, %v4484
  %4486 = vmatprep.mubr.bf16.mxu0 %v941
  %4487 = vmatmul.mubr.bf16.gmra.mrb[0].mxu0 %v940
  %v4488 = vpop.f32.mrb[0].mxu0
  %v4489 = vadd.f32 %v4376, %v4488
  %v4490 = vpop.f32.mrb[0].mxu0
  %v4491 = vadd.f32 %v4378, %v4490
  %v4492 = vpop.f32.mrb[0].mxu0
  %v4493 = vadd.f32 %v4380, %v4492
  %v4494 = vpop.f32.mrb[0].mxu0
  %v4495 = vadd.f32 %v4382, %v4494
  %4496 = vmatprep.mubr.bf16.mxu0 %v954
  %4497 = vmatmul.mubr.bf16.gmra.mrb[0].mxu0 %v953
  %v4498 = vpop.f32.mrb[0].mxu0
  %v4499 = vadd.f32 %v4386, %v4498
  %v4500 = vpop.f32.mrb[0].mxu0
  %v4501 = vadd.f32 %v4388, %v4500
  %v4502 = vpop.f32.mrb[0].mxu0
  %v4503 = vadd.f32 %v4390, %v4502
  %v4504 = vpop.f32.mrb[0].mxu0
  %v4505 = vadd.f32 %v4392, %v4504
  %4506 = vmatprep.mubr.bf16.mxu0 %v967
  %4507 = vmatmul.mubr.bf16.gmra.mrb[0].mxu0 %v966
  %v4508 = vpop.f32.mrb[0].mxu0
  %v4509 = vadd.f32 %v4396, %v4508
  %v4510 = vpop.f32.mrb[0].mxu0
  %v4511 = vadd.f32 %v4398, %v4510
  %v4512 = vpop.f32.mrb[0].mxu0
  %v4513 = vadd.f32 %v4400, %v4512
  %v4514 = vpop.f32.mrb[0].mxu0
  %v4515 = vadd.f32 %v4402, %v4514
  %4516 = vmatprep.mubr.bf16.mxu0 %v980
  %4517 = vmatmul.mubr.bf16.gmra.mrb[0].mxu0 %v979
  %v4518 = vpop.f32.mrb[0].mxu0
  %v4519 = vadd.f32 %v4406, %v4518
  %v4520 = vpop.f32.mrb[0].mxu0
  %v4521 = vadd.f32 %v4408, %v4520
  %v4522 = vpop.f32.mrb[0].mxu0
  %v4523 = vadd.f32 %v4410, %v4522
  %v4524 = vpop.f32.mrb[0].mxu0
  %v4525 = vadd.f32 %v4412, %v4524
  %4526 = vmatprep.mubr.bf16.mxu0 %v993
  %4527 = vmatmul.mubr.bf16.gmra.mrb[0].mxu0 %v992
  %v4528 = vpop.f32.mrb[0].mxu0
  %v4529 = vadd.f32 %v4416, %v4528
  %v4530 = vpop.f32.mrb[0].mxu0
  %v4531 = vadd.f32 %v4418, %v4530
  %v4532 = vpop.f32.mrb[0].mxu0
  %v4533 = vadd.f32 %v4420, %v4532
  %v4534 = vpop.f32.mrb[0].mxu0
  %v4535 = vadd.f32 %v4422, %v4534
  %4536 = vdwg.mxu0
  %4537 = vmatprep.subr.bf16.mxu0 %v2672
  %4538 = vmatpush1.bf16.msra.mxu0 %v2671
  %4539 = vmatprep.subr.bf16.mxu0 %v2676
  %4540 = vmatpush1.bf16.msra.mxu0 %v2675
  %4541 = vmatprep.subr.bf16.mxu0 %v2680
  %4542 = vmatpush1.bf16.msra.mxu0 %v2679
  %4543 = vmatprep.subr.bf16.mxu0 %v2684
  %4544 = vmatpush1.bf16.msra.mxu0 %v2683
  %4545 = vmatprep.subr.bf16.mxu0 %v2688
  %4546 = vmatpush1.bf16.msra.mxu0 %v2687
  %4547 = vmatprep.subr.bf16.mxu0 %v2692
  %4548 = vmatpush1.bf16.msra.mxu0 %v2691
  %4549 = vmatprep.subr.bf16.mxu0 %v2696
  %4550 = vmatpush1.bf16.msra.mxu0 %v2695
  %4551 = vmatprep.subr.bf16.mxu0 %v2700
  %4552 = vmatpush1.bf16.msra.mxu0 %v2699
  %4553 = vmatprep.subr.bf16.mxu0 %v2704
  %4554 = vmatpush1.bf16.msra.mxu0 %v2703
  %4555 = vmatprep.subr.bf16.mxu0 %v2708
  %4556 = vmatpush1.bf16.msra.mxu0 %v2707
  %4557 = vmatprep.subr.bf16.mxu0 %v2712
  %4558 = vmatpush1.bf16.msra.mxu0 %v2711
  %4559 = vmatprep.subr.bf16.mxu0 %v2716
  %4560 = vmatpush1.bf16.msra.mxu0 %v2715
  %4561 = vmatprep.subr.bf16.mxu0 %v2720
  %4562 = vmatpush1.bf16.msra.mxu0 %v2719
  %4563 = vmatprep.subr.bf16.mxu0 %v2724
  %4564 = vmatpush1.bf16.msra.mxu0 %v2723
  %4565 = vmatprep.subr.bf16.mxu0 %v2728
  %4566 = vmatpush1.bf16.msra.mxu0 %v2727
  %4567 = vmatprep.subr.bf16.mxu0 %v2732
  %4568 = vmatpush1.bf16.msra.mxu0 %v2731
  %4569 = vmatprep.mubr.bf16.mxu0 %v904
  %4570 = vmatmul.mubr.bf16.gmra.mrb[0].mxu0 %v903
  %v4571 = vpop.f32.mrb[0].mxu0
  %v4572 = vadd.f32 %v4459, %v4571
  %v4573 = vpop.f32.mrb[0].mxu0
  %v4574 = vadd.f32 %v4461, %v4573
  %v4575 = vpop.f32.mrb[0].mxu0
  %v4576 = vadd.f32 %v4463, %v4575
  %v4577 = vpop.f32.mrb[0].mxu0
  %v4578 = vadd.f32 %v4465, %v4577
  %4579 = vmatprep.mubr.bf16.mxu0 %v917
  %4580 = vmatmul.mubr.bf16.gmra.mrb[0].mxu0 %v916
  %v4581 = vpop.f32.mrb[0].mxu0
  %v4582 = vadd.f32 %v4469, %v4581
  %v4583 = vpop.f32.mrb[0].mxu0
  %v4584 = vadd.f32 %v4471, %v4583
  %v4585 = vpop.f32.mrb[0].mxu0
  %v4586 = vadd.f32 %v4473, %v4585
  %v4587 = vpop.f32.mrb[0].mxu0
  %v4588 = vadd.f32 %v4475, %v4587
  %4589 = vmatprep.mubr.bf16.mxu0 %v930
  %4590 = vmatmul.mubr.bf16.gmra.mrb[0].mxu0 %v929
  %v4591 = vpop.f32.mrb[0].mxu0
  %v4592 = vadd.f32 %v4479, %v4591
  %v4593 = vpop.f32.mrb[0].mxu0
  %v4594 = vadd.f32 %v4481, %v4593
  %v4595 = vpop.f32.mrb[0].mxu0
  %v4596 = vadd.f32 %v4483, %v4595
  %v4597 = vpop.f32.mrb[0].mxu0
  %v4598 = vadd.f32 %v4485, %v4597
  %4599 = vmatprep.mubr.bf16.mxu0 %v943
  %4600 = vmatmul.mubr.bf16.gmra.mrb[0].mxu0 %v942
  %v4601 = vpop.f32.mrb[0].mxu0
  %v4602 = vadd.f32 %v4489, %v4601
  %v4603 = vpop.f32.mrb[0].mxu0
  %v4604 = vadd.f32 %v4491, %v4603
  %v4605 = vpop.f32.mrb[0].mxu0
  %v4606 = vadd.f32 %v4493, %v4605
  %v4607 = vpop.f32.mrb[0].mxu0
  %v4608 = vadd.f32 %v4495, %v4607
  %4609 = vmatprep.mubr.bf16.mxu0 %v956
  %4610 = vmatmul.mubr.bf16.gmra.mrb[0].mxu0 %v955
  %v4611 = vpop.f32.mrb[0].mxu0
  %v4612 = vadd.f32 %v4499, %v4611
  %v4613 = vpop.f32.mrb[0].mxu0
  %v4614 = vadd.f32 %v4501, %v4613
  %v4615 = vpop.f32.mrb[0].mxu0
  %v4616 = vadd.f32 %v4503, %v4615
  %v4617 = vpop.f32.mrb[0].mxu0
  %v4618 = vadd.f32 %v4505, %v4617
  %4619 = vmatprep.mubr.bf16.mxu0 %v969
  %4620 = vmatmul.mubr.bf16.gmra.mrb[0].mxu0 %v968
  %v4621 = vpop.f32.mrb[0].mxu0
  %v4622 = vadd.f32 %v4509, %v4621
  %v4623 = vpop.f32.mrb[0].mxu0
  %v4624 = vadd.f32 %v4511, %v4623
  %v4625 = vpop.f32.mrb[0].mxu0
  %v4626 = vadd.f32 %v4513, %v4625
  %v4627 = vpop.f32.mrb[0].mxu0
  %v4628 = vadd.f32 %v4515, %v4627
  %4629 = vmatprep.mubr.bf16.mxu0 %v982
  %4630 = vmatmul.mubr.bf16.gmra.mrb[0].mxu0 %v981
  %v4631 = vpop.f32.mrb[0].mxu0
  %v4632 = vadd.f32 %v4519, %v4631
  %v4633 = vpop.f32.mrb[0].mxu0
  %v4634 = vadd.f32 %v4521, %v4633
  %v4635 = vpop.f32.mrb[0].mxu0
  %v4636 = vadd.f32 %v4523, %v4635
  %v4637 = vpop.f32.mrb[0].mxu0
  %v4638 = vadd.f32 %v4525, %v4637
  %4639 = vmatprep.mubr.bf16.mxu0 %v995
  %4640 = vmatmul.mubr.bf16.gmra.mrb[0].mxu0 %v994
  %v4641 = vpop.f32.mrb[0].mxu0
  %v4642 = vadd.f32 %v4529, %v4641
  %v4643 = vpop.f32.mrb[0].mxu0
  %v4644 = vadd.f32 %v4531, %v4643
  %v4645 = vpop.f32.mrb[0].mxu0
  %v4646 = vadd.f32 %v4533, %v4645
  %v4647 = vpop.f32.mrb[0].mxu0
  %v4648 = vadd.f32 %v4535, %v4647
  %4649 = vdwg.mxu0
  %4650 = vmatprep.subr.bf16.mxu0 %v2736
  %4651 = vmatpush1.bf16.msra.mxu0 %v2735
  %4652 = vmatprep.subr.bf16.mxu0 %v2740
  %4653 = vmatpush1.bf16.msra.mxu0 %v2739
  %4654 = vmatprep.subr.bf16.mxu0 %v2744
  %4655 = vmatpush1.bf16.msra.mxu0 %v2743
  %4656 = vmatprep.subr.bf16.mxu0 %v2748
  %4657 = vmatpush1.bf16.msra.mxu0 %v2747
  %4658 = vmatprep.subr.bf16.mxu0 %v2752
  %4659 = vmatpush1.bf16.msra.mxu0 %v2751
  %4660 = vmatprep.subr.bf16.mxu0 %v2756
  %4661 = vmatpush1.bf16.msra.mxu0 %v2755
  %4662 = vmatprep.subr.bf16.mxu0 %v2760
  %4663 = vmatpush1.bf16.msra.mxu0 %v2759
  %4664 = vmatprep.subr.bf16.mxu0 %v2764
  %4665 = vmatpush1.bf16.msra.mxu0 %v2763
  %4666 = vmatprep.subr.bf16.mxu0 0
  %4667 = vmatpush1.bf16.msra.mxu0 0
  %4668 = vmatprep.subr.bf16.mxu0 0
  %4669 = vmatpush1.bf16.msra.mxu0 0
  %4670 = vmatprep.subr.bf16.mxu0 0
  %4671 = vmatpush1.bf16.msra.mxu0 0
  %4672 = vmatprep.subr.bf16.mxu0 0
  %4673 = vmatpush1.bf16.msra.mxu0 0
  %4674 = vmatprep.subr.bf16.mxu0 0
  %4675 = vmatpush1.bf16.msra.mxu0 0
  %4676 = vmatprep.subr.bf16.mxu0 0
  %4677 = vmatpush1.bf16.msra.mxu0 0
  %4678 = vmatprep.subr.bf16.mxu0 0
  %4679 = vmatpush1.bf16.msra.mxu0 0
  %4680 = vmatprep.subr.bf16.mxu0 0
  %4681 = vmatpush1.bf16.msra.mxu0 0
  %4682 = vmatprep.mubr.bf16.mxu0 0
  %4683 = vmatmul.mubr.bf16.gmra.mrb[0].mxu0 %v905
  %v4684 = vpop.f32.mrb[0].mxu0
  %v4685 = vadd.f32 %v4572, %v4684
  %v4686 = vpop.f32.mrb[0].mxu0
  %v4687 = vadd.f32 %v4574, %v4686
  %v4688 = vpop.f32.mrb[0].mxu0
  %v4689 = vadd.f32 %v4576, %v4688
  %v4690 = vpop.f32.mrb[0].mxu0
  %v4691 = vadd.f32 %v4578, %v4690
  %4692 = vmatprep.mubr.bf16.mxu0 0
  %4693 = vmatmul.mubr.bf16.gmra.mrb[0].mxu0 %v918
  %v4694 = vpop.f32.mrb[0].mxu0
  %v4695 = vadd.f32 %v4582, %v4694
  %v4696 = vpop.f32.mrb[0].mxu0
  %v4697 = vadd.f32 %v4584, %v4696
  %v4698 = vpop.f32.mrb[0].mxu0
  %v4699 = vadd.f32 %v4586, %v4698
  %v4700 = vpop.f32.mrb[0].mxu0
  %v4701 = vadd.f32 %v4588, %v4700
  %4702 = vmatprep.mubr.bf16.mxu0 0
  %4703 = vmatmul.mubr.bf16.gmra.mrb[0].mxu0 %v931
  %v4704 = vpop.f32.mrb[0].mxu0
  %v4705 = vadd.f32 %v4592, %v4704
  %v4706 = vpop.f32.mrb[0].mxu0
  %v4707 = vadd.f32 %v4594, %v4706
  %v4708 = vpop.f32.mrb[0].mxu0
  %v4709 = vadd.f32 %v4596, %v4708
  %v4710 = vpop.f32.mrb[0].mxu0
  %v4711 = vadd.f32 %v4598, %v4710
  %4712 = vmatprep.mubr.bf16.mxu0 0
  %4713 = vmatmul.mubr.bf16.gmra.mrb[0].mxu0 %v944
  %v4714 = vpop.f32.mrb[0].mxu0
  %v4715 = vadd.f32 %v4602, %v4714
  %v4716 = vpop.f32.mrb[0].mxu0
  %v4717 = vadd.f32 %v4604, %v4716
  %v4718 = vpop.f32.mrb[0].mxu0
  %v4719 = vadd.f32 %v4606, %v4718
  %v4720 = vpop.f32.mrb[0].mxu0
  %v4721 = vadd.f32 %v4608, %v4720
  %4722 = vmatprep.mubr.bf16.mxu0 0
  %4723 = vmatmul.mubr.bf16.gmra.mrb[0].mxu0 %v957
  %v4724 = vpop.f32.mrb[0].mxu0
  %v4725 = vadd.f32 %v4612, %v4724
  %v4726 = vpop.f32.mrb[0].mxu0
  %v4727 = vadd.f32 %v4614, %v4726
  %v4728 = vpop.f32.mrb[0].mxu0
  %v4729 = vadd.f32 %v4616, %v4728
  %v4730 = vpop.f32.mrb[0].mxu0
  %v4731 = vadd.f32 %v4618, %v4730
  %4732 = vmatprep.mubr.bf16.mxu0 0
  %4733 = vmatmul.mubr.bf16.gmra.mrb[0].mxu0 %v970
  %v4734 = vpop.f32.mrb[0].mxu0
  %v4735 = vadd.f32 %v4622, %v4734
  %v4736 = vpop.f32.mrb[0].mxu0
  %v4737 = vadd.f32 %v4624, %v4736
  %v4738 = vpop.f32.mrb[0].mxu0
  %v4739 = vadd.f32 %v4626, %v4738
  %v4740 = vpop.f32.mrb[0].mxu0
  %v4741 = vadd.f32 %v4628, %v4740
  %4742 = vmatprep.mubr.bf16.mxu0 0
  %4743 = vmatmul.mubr.bf16.gmra.mrb[0].mxu0 %v983
  %v4744 = vpop.f32.mrb[0].mxu0
  %v4745 = vadd.f32 %v4632, %v4744
  %v4746 = vpop.f32.mrb[0].mxu0
  %v4747 = vadd.f32 %v4634, %v4746
  %v4748 = vpop.f32.mrb[0].mxu0
  %v4749 = vadd.f32 %v4636, %v4748
  %v4750 = vpop.f32.mrb[0].mxu0
  %v4751 = vadd.f32 %v4638, %v4750
  %4752 = vmatprep.mubr.bf16.mxu0 0
  %4753 = vmatmul.mubr.bf16.gmra.mrb[0].mxu0 %v996
  %v4754 = vpop.f32.mrb[0].mxu0
  %v4755 = vadd.f32 %v4642, %v4754
  %v4756 = vpop.f32.mrb[0].mxu0
  %v4757 = vadd.f32 %v4644, %v4756
  %v4758 = vpop.f32.mrb[0].mxu0
  %v4759 = vadd.f32 %v4646, %v4758
  %v4760 = vpop.f32.mrb[0].mxu0
  %v4761 = vadd.f32 %v4648, %v4760
  %4762 = vdwg.mxu0
  %v4763 = vmax.f32 %v3894, 0.0
  %v4764 = vmax.f32 %v3896, 0.0
  %v4765 = vmax.f32 %v4685, 0.0
  %v4766 = vmax.f32 %v4687, 0.0
  %v4767 = vmax.f32 %v3898, 0.0
  %v4768 = vmax.f32 %v3900, 0.0
  %v4769 = vmax.f32 %v4689, 0.0
  %v4770 = vmax.f32 %v4691, 0.0
  %v4771 = vmax.f32 %v3904, 0.0
  %v4772 = vmax.f32 %v3906, 0.0
  %v4773 = vmax.f32 %v4695, 0.0
  %v4774 = vmax.f32 %v4697, 0.0
  %v4775 = vmax.f32 %v3908, 0.0
  %v4776 = vmax.f32 %v3910, 0.0
  %v4777 = vmax.f32 %v4699, 0.0
  %v4778 = vmax.f32 %v4701, 0.0
  %v4779 = vmax.f32 %v3914, 0.0
  %v4780 = vmax.f32 %v3916, 0.0
  %v4781 = vmax.f32 %v4705, 0.0
  %v4782 = vmax.f32 %v4707, 0.0
  %v4783 = vmax.f32 %v3918, 0.0
  %v4784 = vmax.f32 %v3920, 0.0
  %v4785 = vmax.f32 %v4709, 0.0
  %v4786 = vmax.f32 %v4711, 0.0
  %v4787 = vmax.f32 %v3924, 0.0
  %v4788 = vmax.f32 %v3926, 0.0
  %v4789 = vmax.f32 %v4715, 0.0
  %v4790 = vmax.f32 %v4717, 0.0
  %v4791 = vmax.f32 %v3928, 0.0
  %v4792 = vmax.f32 %v3930, 0.0
  %v4793 = vmax.f32 %v4719, 0.0
  %v4794 = vmax.f32 %v4721, 0.0
  %v4795 = vmax.f32 %v3934, 0.0
  %v4796 = vmax.f32 %v3936, 0.0
  %v4797 = vmax.f32 %v4725, 0.0
  %v4798 = vmax.f32 %v4727, 0.0
  %v4799 = vmax.f32 %v3938, 0.0
  %v4800 = vmax.f32 %v3940, 0.0
  %v4801 = vmax.f32 %v4729, 0.0
  %v4802 = vmax.f32 %v4731, 0.0
  %v4803 = vmax.f32 %v3944, 0.0
  %v4804 = vmax.f32 %v3946, 0.0
  %v4805 = vmax.f32 %v4735, 0.0
  %v4806 = vmax.f32 %v4737, 0.0
  %v4807 = vmax.f32 %v3948, 0.0
  %v4808 = vmax.f32 %v3950, 0.0
  %v4809 = vmax.f32 %v4739, 0.0
  %v4810 = vmax.f32 %v4741, 0.0
  %v4811 = vmax.f32 %v3954, 0.0
  %v4812 = vmax.f32 %v3956, 0.0
  %v4813 = vmax.f32 %v4745, 0.0
  %v4814 = vmax.f32 %v4747, 0.0
  %v4815 = vmax.f32 %v3958, 0.0
  %v4816 = vmax.f32 %v3960, 0.0
  %v4817 = vmax.f32 %v4749, 0.0
  %v4818 = vmax.f32 %v4751, 0.0
  %v4819 = vmax.f32 %v3964, 0.0
  %v4820 = vmax.f32 %v3966, 0.0
  %v4821 = vmax.f32 %v4755, 0.0
  %v4822 = vmax.f32 %v4757, 0.0
  %v4823 = vmax.f32 %v3968, 0.0
  %v4824 = vmax.f32 %v3970, 0.0
  %v4825 = vmax.f32 %v4759, 0.0
  %v4826 = vmax.f32 %v4761, 0.0
  %4827 = vst [vmem:[%s5] sm:$0xff] %v4763
  %4828 = vst [vmem:[%s5 + $0x8] sm:$0xff] %v4764
  %4829 = vst [vmem:[%s5 + $0x10] sm:$0xff] %v4765
  %4830 = vst [vmem:[%s5 + $0x18] sm:$0xff] %v4766
  %4831 = vst [vmem:[%s5 + $0x20] sm:$0xff] %v4767
  %4832 = vst [vmem:[%s5 + $0x28] sm:$0xff] %v4768
  %4833 = vst [vmem:[%s5 + $0x30] sm:$0xff] %v4769
  %4834 = vst [vmem:[%s5 + $0x38] sm:$0xff] %v4770
  %4835 = vst [vmem:[%s5 + $0x40] sm:$0xff] %v4771
  %4836 = vst [vmem:[%s5 + $0x48] sm:$0xff] %v4772
  %4837 = vst [vmem:[%s5 + $0x50] sm:$0xff] %v4773
  %4838 = vst [vmem:[%s5 + $0x58] sm:$0xff] %v4774
  %4839 = vst [vmem:[%s5 + $0x60] sm:$0xff] %v4775
  %4840 = vst [vmem:[%s5 + $0x68] sm:$0xff] %v4776
  %4841 = vst [vmem:[%s5 + $0x70] sm:$0xff] %v4777
  %4842 = vst [vmem:[%s5 + $0x78] sm:$0xff] %v4778
  %4843 = vst [vmem:[%s5 + $0x80] sm:$0xff] %v4779
  %4844 = vst [vmem:[%s5 + $0x88] sm:$0xff] %v4780
  %4845 = vst [vmem:[%s5 + $0x90] sm:$0xff] %v4781
  %4846 = vst [vmem:[%s5 + $0x98] sm:$0xff] %v4782
  %4847 = vst [vmem:[%s5 + $0xa0] sm:$0xff] %v4783
  %4848 = vst [vmem:[%s5 + $0xa8] sm:$0xff] %v4784
  %4849 = vst [vmem:[%s5 + $0xb0] sm:$0xff] %v4785
  %4850 = vst [vmem:[%s5 + $0xb8] sm:$0xff] %v4786
  %4851 = vst [vmem:[%s5 + $0xc0] sm:$0xff] %v4787
  %4852 = vst [vmem:[%s5 + $0xc8] sm:$0xff] %v4788
  %4853 = vst [vmem:[%s5 + $0xd0] sm:$0xff] %v4789
  %4854 = vst [vmem:[%s5 + $0xd8] sm:$0xff] %v4790
  %4855 = vst [vmem:[%s5 + $0xe0] sm:$0xff] %v4791
  %4856 = vst [vmem:[%s5 + $0xe8] sm:$0xff] %v4792
  %4857 = vst [vmem:[%s5 + $0xf0] sm:$0xff] %v4793
  %4858 = vst [vmem:[%s5 + $0xf8] sm:$0xff] %v4794
  %4859 = vst [vmem:[%s5 + $0x100] sm:$0xff] %v4795
  %4860 = vst [vmem:[%s5 + $0x108] sm:$0xff] %v4796
  %4861 = vst [vmem:[%s5 + $0x110] sm:$0xff] %v4797
  %4862 = vst [vmem:[%s5 + $0x118] sm:$0xff] %v4798
  %4863 = vst [vmem:[%s5 + $0x120] sm:$0xff] %v4799
  %4864 = vst [vmem:[%s5 + $0x128] sm:$0xff] %v4800
  %4865 = vst [vmem:[%s5 + $0x130] sm:$0xff] %v4801
  %4866 = vst [vmem:[%s5 + $0x138] sm:$0xff] %v4802
  %4867 = vst [vmem:[%s5 + $0x140] sm:$0xff] %v4803
  %4868 = vst [vmem:[%s5 + $0x148] sm:$0xff] %v4804
  %4869 = vst [vmem:[%s5 + $0x150] sm:$0xff] %v4805
  %4870 = vst [vmem:[%s5 + $0x158] sm:$0xff] %v4806
  %4871 = vst [vmem:[%s5 + $0x160] sm:$0xff] %v4807
  %4872 = vst [vmem:[%s5 + $0x168] sm:$0xff] %v4808
  %4873 = vst [vmem:[%s5 + $0x170] sm:$0xff] %v4809
  %4874 = vst [vmem:[%s5 + $0x178] sm:$0xff] %v4810
  %4875 = vst [vmem:[%s5 + $0x180] sm:$0xff] %v4811
  %4876 = vst [vmem:[%s5 + $0x188] sm:$0xff] %v4812
  %4877 = vst [vmem:[%s5 + $0x190] sm:$0xff] %v4813
  %4878 = vst [vmem:[%s5 + $0x198] sm:$0xff] %v4814
  %4879 = vst [vmem:[%s5 + $0x1a0] sm:$0xff] %v4815
  %4880 = vst [vmem:[%s5 + $0x1a8] sm:$0xff] %v4816
  %4881 = vst [vmem:[%s5 + $0x1b0] sm:$0xff] %v4817
  %4882 = vst [vmem:[%s5 + $0x1b8] sm:$0xff] %v4818
  %4883 = vst [vmem:[%s5 + $0x1c0] sm:$0xff] %v4819
  %4884 = vst [vmem:[%s5 + $0x1c8] sm:$0xff] %v4820
  %4885 = vst [vmem:[%s5 + $0x1d0] sm:$0xff] %v4821
  %4886 = vst [vmem:[%s5 + $0x1d8] sm:$0xff] %v4822
  %4887 = vst [vmem:[%s5 + $0x1e0] sm:$0xff] %v4823
  %4888 = vst [vmem:[%s5 + $0x1e8] sm:$0xff] %v4824
  %4889 = vst [vmem:[%s5 + $0x1f0] sm:$0xff] %v4825
  %4890 = vst [vmem:[%s5 + $0x1f8] sm:$0xff] %v4826
  %v4891 = vld [vmem:[%s3] sm:$0xff]
  %v4892 = vld [vmem:[%s3 + $0x8] sm:$0xff]
  %v4893 = vld [vmem:[%s3 + $0x10] sm:$0xff]
  %v4894 = vld [vmem:[%s3 + $0x18] sm:$0xff]
  %v4895 = vld [vmem:[%s3 + $0x20] sm:$0xff]
  %v4896 = vld [vmem:[%s3 + $0x28] sm:$0xff]
  %v4897 = vld [vmem:[%s3 + $0x30] sm:$0xff]
  %v4898 = vld [vmem:[%s3 + $0x38] sm:$0xff]
  %v4899 = vld [vmem:[%s3 + $0x40] sm:$0xff]
  %v4900 = vld [vmem:[%s3 + $0x48] sm:$0xff]
  %v4901 = vld [vmem:[%s3 + $0x50] sm:$0xff]
  %v4902 = vld [vmem:[%s3 + $0x58] sm:$0xff]
  %v4903 = vld [vmem:[%s3 + $0x60] sm:$0xff]
  %v4904 = vld [vmem:[%s3 + $0x68] sm:$0xff]
  %v4905 = vld [vmem:[%s3 + $0x70] sm:$0xff]
  %v4906 = vld [vmem:[%s3 + $0x78] sm:$0xff]
  %v4907 = vld [vmem:[%s3 + $0x80] sm:$0xff]
  %v4908 = vld [vmem:[%s3 + $0x88] sm:$0xff]
  %v4909 = vld [vmem:[%s3 + $0x90] sm:$0xff]
  %v4910 = vld [vmem:[%s3 + $0x98] sm:$0xff]
  %v4911 = vld [vmem:[%s3 + $0xa0] sm:$0xff]
  %v4912 = vld [vmem:[%s3 + $0xa8] sm:$0xff]
  %v4913 = vld [vmem:[%s3 + $0xb0] sm:$0xff]
  %v4914 = vld [vmem:[%s3 + $0xb8] sm:$0xff]
  %v4915 = vld [vmem:[%s3 + $0xc0] sm:$0xff]
  %v4916 = vld [vmem:[%s3 + $0xc8] sm:$0xff]
  %v4917 = vld [vmem:[%s3 + $0xd0] sm:$0xff]
  %v4918 = vld [vmem:[%s3 + $0xd8] sm:$0xff]
  %v4919 = vld [vmem:[%s3 + $0xe0] sm:$0xff]
  %v4920 = vld [vmem:[%s3 + $0xe8] sm:$0xff]
  %v4921 = vld [vmem:[%s3 + $0xf0] sm:$0xff]
  %v4922 = vld [vmem:[%s3 + $0xf8] sm:$0xff]
  %v4923 = vld [vmem:[%s3 + $0x100] sm:$0xff]
  %v4924 = vld [vmem:[%s3 + $0x108] sm:$0xff]
  %v4925 = vld [vmem:[%s3 + $0x110] sm:$0xff]
  %v4926 = vld [vmem:[%s3 + $0x118] sm:$0xff]
  %v4927 = vld [vmem:[%s3 + $0x120] sm:$0xff]
  %v4928 = vld [vmem:[%s3 + $0x128] sm:$0xff]
  %v4929 = vld [vmem:[%s3 + $0x130] sm:$0xff]
  %v4930 = vld [vmem:[%s3 + $0x138] sm:$0xff]
  %v4931 = vld [vmem:[%s3 + $0x140] sm:$0xff]
  %v4932 = vld [vmem:[%s3 + $0x148] sm:$0xff]
  %v4933 = vld [vmem:[%s3 + $0x150] sm:$0xff]
  %v4934 = vld [vmem:[%s3 + $0x158] sm:$0xff]
  %v4935 = vld [vmem:[%s3 + $0x160] sm:$0xff]
  %v4936 = vld [vmem:[%s3 + $0x168] sm:$0xff]
  %v4937 = vld [vmem:[%s3 + $0x170] sm:$0xff]
  %v4938 = vld [vmem:[%s3 + $0x178] sm:$0xff]
  %v4939 = vld [vmem:[%s3 + $0x180] sm:$0xff]
  %v4940 = vld [vmem:[%s3 + $0x188] sm:$0xff]
  %v4941 = vld [vmem:[%s3 + $0x190] sm:$0xff]
  %v4942 = vld [vmem:[%s3 + $0x198] sm:$0xff]
  %v4943 = vld [vmem:[%s3 + $0x1a0] sm:$0xff]
  %v4944 = vld [vmem:[%s3 + $0x1a8] sm:$0xff]
  %v4945 = vld [vmem:[%s3 + $0x1b0] sm:$0xff]
  %v4946 = vld [vmem:[%s3 + $0x1b8] sm:$0xff]
  %v4947 = vld [vmem:[%s3 + $0x1c0] sm:$0xff]
  %v4948 = vld [vmem:[%s3 + $0x1c8] sm:$0xff]
  %v4949 = vld [vmem:[%s3 + $0x1d0] sm:$0xff]
  %v4950 = vld [vmem:[%s3 + $0x1d8] sm:$0xff]
  %v4951 = vld [vmem:[%s3 + $0x1e0] sm:$0xff]
  %v4952 = vld [vmem:[%s3 + $0x1e8] sm:$0xff]
  %v4953 = vld [vmem:[%s3 + $0x1f0] sm:$0xff]
  %v4954 = vld [vmem:[%s3 + $0x1f8] sm:$0xff]
  %v4955 = vld [vmem:[%s4] sm:$0x1]
  %v4957 = vlaneseq
  %v4958 = vshrl.u32 %v4957, 7
  %v4959 = vsub.s32 0, %v4958
  %v4960 = vrot.slane %v4955, %v4959
  %4962 = vmatprep.subr.mxu0 0.0
  %4963 = vmatpush1.msra.mxu0 %v4891
  %4964 = vmatprep.subr.mxu0 0.0
  %4965 = vmatpush1.msra.mxu0 %v4892
  %4966 = vmatprep.subr.mxu0 0.0
  %4967 = vmatpush1.msra.mxu0 %v4893
  %4968 = vmatprep.subr.mxu0 0.0
  %4969 = vmatpush1.msra.mxu0 %v4894
  %4970 = vmatprep.subr.mxu0 0.0
  %4971 = vmatpush1.msra.mxu0 %v4895
  %4972 = vmatprep.subr.mxu0 0.0
  %4973 = vmatpush1.msra.mxu0 %v4896
  %4974 = vmatprep.subr.mxu0 0.0
  %4975 = vmatpush1.msra.mxu0 %v4897
  %4976 = vmatprep.subr.mxu0 0.0
  %4977 = vmatpush1.msra.mxu0 %v4898
  %4978 = vmatprep.subr.mxu0 0.0
  %4979 = vmatpush1.msra.mxu0 %v4899
  %4980 = vmatprep.subr.mxu0 0.0
  %4981 = vmatpush1.msra.mxu0 %v4900
  %4982 = vmatprep.subr.mxu0 0.0
  %4983 = vmatpush1.msra.mxu0 %v4901
  %4984 = vmatprep.subr.mxu0 0.0
  %4985 = vmatpush1.msra.mxu0 %v4902
  %4986 = vmatprep.subr.mxu0 0.0
  %4987 = vmatpush1.msra.mxu0 %v4903
  %4988 = vmatprep.subr.mxu0 0.0
  %4989 = vmatpush1.msra.mxu0 %v4904
  %4990 = vmatprep.subr.mxu0 0.0
  %4991 = vmatpush1.msra.mxu0 %v4905
  %4992 = vmatprep.subr.mxu0 0.0
  %4993 = vmatpush1.msra.mxu0 %v4906
  %4994 = vmatprep.subr.mxu0 0.0
  %4995 = vmatpush1.msra.mxu0 %v4907
  %4996 = vmatprep.subr.mxu0 0.0
  %4997 = vmatpush1.msra.mxu0 %v4908
  %4998 = vmatprep.subr.mxu0 0.0
  %4999 = vmatpush1.msra.mxu0 %v4909
  %5000 = vmatprep.subr.mxu0 0.0
  %5001 = vmatpush1.msra.mxu0 %v4910
  %5002 = vmatprep.subr.mxu0 0.0
  %5003 = vmatpush1.msra.mxu0 %v4911
  %5004 = vmatprep.subr.mxu0 0.0
  %5005 = vmatpush1.msra.mxu0 %v4912
  %5006 = vmatprep.subr.mxu0 0.0
  %5007 = vmatpush1.msra.mxu0 %v4913
  %5008 = vmatprep.subr.mxu0 0.0
  %5009 = vmatpush1.msra.mxu0 %v4914
  %5010 = vmatprep.subr.mxu0 0.0
  %5011 = vmatpush1.msra.mxu0 %v4915
  %5012 = vmatprep.subr.mxu0 0.0
  %5013 = vmatpush1.msra.mxu0 %v4916
  %5014 = vmatprep.subr.mxu0 0.0
  %5015 = vmatpush1.msra.mxu0 %v4917
  %5016 = vmatprep.subr.mxu0 0.0
  %5017 = vmatpush1.msra.mxu0 %v4918
  %5018 = vmatprep.subr.mxu0 0.0
  %5019 = vmatpush1.msra.mxu0 %v4919
  %5020 = vmatprep.subr.mxu0 0.0
  %5021 = vmatpush1.msra.mxu0 %v4920
  %5022 = vmatprep.subr.mxu0 0.0
  %5023 = vmatpush1.msra.mxu0 %v4921
  %5024 = vmatprep.subr.mxu0 0.0
  %5025 = vmatpush1.msra.mxu0 %v4922
  %5026 = vmatprep.mubr.f32.mxu0 %v4764
  %5027 = vmatmul.mubr.f32.gmra.mrb[0].mxu0 %v4763
  %v5028 = vpop.f32.mrb[0].mxu0
  %v5029 = vadd.f32 %v4960, %v5028
  %v5030 = vpop.f32.mrb[0].mxu0
  %5031 = vmatprep.mubr.f32.mxu0 %v4768
  %5032 = vmatmul.mubr.f32.gmra.mrb[0].mxu0 %v4767
  %v5033 = vpop.f32.mrb[0].mxu0
  %v5034 = vadd.f32 %v4960, %v5033
  %v5035 = vpop.f32.mrb[0].mxu0
  %5036 = vmatprep.mubr.f32.mxu0 %v4772
  %5037 = vmatmul.mubr.f32.gmra.mrb[0].mxu0 %v4771
  %v5038 = vpop.f32.mrb[0].mxu0
  %v5039 = vadd.f32 %v4960, %v5038
  %v5040 = vpop.f32.mrb[0].mxu0
  %5041 = vmatprep.mubr.f32.mxu0 %v4776
  %5042 = vmatmul.mubr.f32.gmra.mrb[0].mxu0 %v4775
  %v5043 = vpop.f32.mrb[0].mxu0
  %v5044 = vadd.f32 %v4960, %v5043
  %v5045 = vpop.f32.mrb[0].mxu0
  %5046 = vmatprep.mubr.f32.mxu0 %v4780
  %5047 = vmatmul.mubr.f32.gmra.mrb[0].mxu0 %v4779
  %v5048 = vpop.f32.mrb[0].mxu0
  %v5049 = vadd.f32 %v4960, %v5048
  %v5050 = vpop.f32.mrb[0].mxu0
  %5051 = vmatprep.mubr.f32.mxu0 %v4784
  %5052 = vmatmul.mubr.f32.gmra.mrb[0].mxu0 %v4783
  %v5053 = vpop.f32.mrb[0].mxu0
  %v5054 = vadd.f32 %v4960, %v5053
  %v5055 = vpop.f32.mrb[0].mxu0
  %5056 = vmatprep.mubr.f32.mxu0 %v4788
  %5057 = vmatmul.mubr.f32.gmra.mrb[0].mxu0 %v4787
  %v5058 = vpop.f32.mrb[0].mxu0
  %v5059 = vadd.f32 %v4960, %v5058
  %v5060 = vpop.f32.mrb[0].mxu0
  %5061 = vmatprep.mubr.f32.mxu0 %v4792
  %5062 = vmatmul.mubr.f32.gmra.mrb[0].mxu0 %v4791
  %v5063 = vpop.f32.mrb[0].mxu0
  %v5064 = vadd.f32 %v4960, %v5063
  %v5065 = vpop.f32.mrb[0].mxu0
  %5066 = vmatprep.mubr.f32.mxu0 %v4796
  %5067 = vmatmul.mubr.f32.gmra.mrb[0].mxu0 %v4795
  %v5068 = vpop.f32.mrb[0].mxu0
  %v5069 = vadd.f32 %v4960, %v5068
  %v5070 = vpop.f32.mrb[0].mxu0
  %5071 = vmatprep.mubr.f32.mxu0 %v4800
  %5072 = vmatmul.mubr.f32.gmra.mrb[0].mxu0 %v4799
  %v5073 = vpop.f32.mrb[0].mxu0
  %v5074 = vadd.f32 %v4960, %v5073
  %v5075 = vpop.f32.mrb[0].mxu0
  %5076 = vmatprep.mubr.f32.mxu0 %v4804
  %5077 = vmatmul.mubr.f32.gmra.mrb[0].mxu0 %v4803
  %v5078 = vpop.f32.mrb[0].mxu0
  %v5079 = vadd.f32 %v4960, %v5078
  %v5080 = vpop.f32.mrb[0].mxu0
  %5081 = vmatprep.mubr.f32.mxu0 %v4808
  %5082 = vmatmul.mubr.f32.gmra.mrb[0].mxu0 %v4807
  %v5083 = vpop.f32.mrb[0].mxu0
  %v5084 = vadd.f32 %v4960, %v5083
  %v5085 = vpop.f32.mrb[0].mxu0
  %5086 = vmatprep.mubr.f32.mxu0 %v4812
  %5087 = vmatmul.mubr.f32.gmra.mrb[0].mxu0 %v4811
  %v5088 = vpop.f32.mrb[0].mxu0
  %v5089 = vadd.f32 %v4960, %v5088
  %v5090 = vpop.f32.mrb[0].mxu0
  %5091 = vmatprep.mubr.f32.mxu0 %v4816
  %5092 = vmatmul.mubr.f32.gmra.mrb[0].mxu0 %v4815
  %v5093 = vpop.f32.mrb[0].mxu0
  %v5094 = vadd.f32 %v4960, %v5093
  %v5095 = vpop.f32.mrb[0].mxu0
  %5096 = vmatprep.mubr.f32.mxu0 %v4820
  %5097 = vmatmul.mubr.f32.gmra.mrb[0].mxu0 %v4819
  %v5098 = vpop.f32.mrb[0].mxu0
  %v5099 = vadd.f32 %v4960, %v5098
  %v5100 = vpop.f32.mrb[0].mxu0
  %5101 = vmatprep.mubr.f32.mxu0 %v4824
  %5102 = vmatmul.mubr.f32.gmra.mrb[0].mxu0 %v4823
  %v5103 = vpop.f32.mrb[0].mxu0
  %v5104 = vadd.f32 %v4960, %v5103
  %v5105 = vpop.f32.mrb[0].mxu0
  %5106 = vdwg.mxu0
  %5107 = vmatprep.subr.mxu0 0.0
  %5108 = vmatpush1.msra.mxu0 %v4923
  %5109 = vmatprep.subr.mxu0 0.0
  %5110 = vmatpush1.msra.mxu0 %v4924
  %5111 = vmatprep.subr.mxu0 0.0
  %5112 = vmatpush1.msra.mxu0 %v4925
  %5113 = vmatprep.subr.mxu0 0.0
  %5114 = vmatpush1.msra.mxu0 %v4926
  %5115 = vmatprep.subr.mxu0 0.0
  %5116 = vmatpush1.msra.mxu0 %v4927
  %5117 = vmatprep.subr.mxu0 0.0
  %5118 = vmatpush1.msra.mxu0 %v4928
  %5119 = vmatprep.subr.mxu0 0.0
  %5120 = vmatpush1.msra.mxu0 %v4929
  %5121 = vmatprep.subr.mxu0 0.0
  %5122 = vmatpush1.msra.mxu0 %v4930
  %5123 = vmatprep.subr.mxu0 0.0
  %5124 = vmatpush1.msra.mxu0 %v4931
  %5125 = vmatprep.subr.mxu0 0.0
  %5126 = vmatpush1.msra.mxu0 %v4932
  %5127 = vmatprep.subr.mxu0 0.0
  %5128 = vmatpush1.msra.mxu0 %v4933
  %5129 = vmatprep.subr.mxu0 0.0
  %5130 = vmatpush1.msra.mxu0 %v4934
  %5131 = vmatprep.subr.mxu0 0.0
  %5132 = vmatpush1.msra.mxu0 %v4935
  %5133 = vmatprep.subr.mxu0 0.0
  %5134 = vmatpush1.msra.mxu0 %v4936
  %5135 = vmatprep.subr.mxu0 0.0
  %5136 = vmatpush1.msra.mxu0 %v4937
  %5137 = vmatprep.subr.mxu0 0.0
  %5138 = vmatpush1.msra.mxu0 %v4938
  %5139 = vmatprep.subr.mxu0 0.0
  %5140 = vmatpush1.msra.mxu0 %v4939
  %5141 = vmatprep.subr.mxu0 0.0
  %5142 = vmatpush1.msra.mxu0 %v4940
  %5143 = vmatprep.subr.mxu0 0.0
  %5144 = vmatpush1.msra.mxu0 %v4941
  %5145 = vmatprep.subr.mxu0 0.0
  %5146 = vmatpush1.msra.mxu0 %v4942
  %5147 = vmatprep.subr.mxu0 0.0
  %5148 = vmatpush1.msra.mxu0 %v4943
  %5149 = vmatprep.subr.mxu0 0.0
  %5150 = vmatpush1.msra.mxu0 %v4944
  %5151 = vmatprep.subr.mxu0 0.0
  %5152 = vmatpush1.msra.mxu0 %v4945
  %5153 = vmatprep.subr.mxu0 0.0
  %5154 = vmatpush1.msra.mxu0 %v4946
  %5155 = vmatprep.subr.mxu0 0.0
  %5156 = vmatpush1.msra.mxu0 %v4947
  %5157 = vmatprep.subr.mxu0 0.0
  %5158 = vmatpush1.msra.mxu0 %v4948
  %5159 = vmatprep.subr.mxu0 0.0
  %5160 = vmatpush1.msra.mxu0 %v4949
  %5161 = vmatprep.subr.mxu0 0.0
  %5162 = vmatpush1.msra.mxu0 %v4950
  %5163 = vmatprep.subr.mxu0 0.0
  %5164 = vmatpush1.msra.mxu0 %v4951
  %5165 = vmatprep.subr.mxu0 0.0
  %5166 = vmatpush1.msra.mxu0 %v4952
  %5167 = vmatprep.subr.mxu0 0.0
  %5168 = vmatpush1.msra.mxu0 %v4953
  %5169 = vmatprep.subr.mxu0 0.0
  %5170 = vmatpush1.msra.mxu0 %v4954
  %5171 = vmatprep.mubr.f32.mxu0 %v4766
  %5172 = vmatmul.mubr.f32.gmra.mrb[0].mxu0 %v4765
  %v5173 = vpop.f32.mrb[0].mxu0
  %v5174 = vadd.f32 %v5029, %v5173
  %v5175 = vpop.f32.mrb[0].mxu0
  %5176 = vmatprep.mubr.f32.mxu0 %v4770
  %5177 = vmatmul.mubr.f32.gmra.mrb[0].mxu0 %v4769
  %v5178 = vpop.f32.mrb[0].mxu0
  %v5179 = vadd.f32 %v5034, %v5178
  %v5180 = vpop.f32.mrb[0].mxu0
  %5181 = vmatprep.mubr.f32.mxu0 %v4774
  %5182 = vmatmul.mubr.f32.gmra.mrb[0].mxu0 %v4773
  %v5183 = vpop.f32.mrb[0].mxu0
  %v5184 = vadd.f32 %v5039, %v5183
  %v5185 = vpop.f32.mrb[0].mxu0
  %5186 = vmatprep.mubr.f32.mxu0 %v4778
  %5187 = vmatmul.mubr.f32.gmra.mrb[0].mxu0 %v4777
  %v5188 = vpop.f32.mrb[0].mxu0
  %v5189 = vadd.f32 %v5044, %v5188
  %v5190 = vpop.f32.mrb[0].mxu0
  %5191 = vmatprep.mubr.f32.mxu0 %v4782
  %5192 = vmatmul.mubr.f32.gmra.mrb[0].mxu0 %v4781
  %v5193 = vpop.f32.mrb[0].mxu0
  %v5194 = vadd.f32 %v5049, %v5193
  %v5195 = vpop.f32.mrb[0].mxu0
  %5196 = vmatprep.mubr.f32.mxu0 %v4786
  %5197 = vmatmul.mubr.f32.gmra.mrb[0].mxu0 %v4785
  %v5198 = vpop.f32.mrb[0].mxu0
  %v5199 = vadd.f32 %v5054, %v5198
  %v5200 = vpop.f32.mrb[0].mxu0
  %5201 = vmatprep.mubr.f32.mxu0 %v4790
  %5202 = vmatmul.mubr.f32.gmra.mrb[0].mxu0 %v4789
  %v5203 = vpop.f32.mrb[0].mxu0
  %v5204 = vadd.f32 %v5059, %v5203
  %v5205 = vpop.f32.mrb[0].mxu0
  %5206 = vmatprep.mubr.f32.mxu0 %v4794
  %5207 = vmatmul.mubr.f32.gmra.mrb[0].mxu0 %v4793
  %v5208 = vpop.f32.mrb[0].mxu0
  %v5209 = vadd.f32 %v5064, %v5208
  %v5210 = vpop.f32.mrb[0].mxu0
  %5211 = vmatprep.mubr.f32.mxu0 %v4798
  %5212 = vmatmul.mubr.f32.gmra.mrb[0].mxu0 %v4797
  %v5213 = vpop.f32.mrb[0].mxu0
  %v5214 = vadd.f32 %v5069, %v5213
  %v5215 = vpop.f32.mrb[0].mxu0
  %5216 = vmatprep.mubr.f32.mxu0 %v4802
  %5217 = vmatmul.mubr.f32.gmra.mrb[0].mxu0 %v4801
  %v5218 = vpop.f32.mrb[0].mxu0
  %v5219 = vadd.f32 %v5074, %v5218
  %v5220 = vpop.f32.mrb[0].mxu0
  %5221 = vmatprep.mubr.f32.mxu0 %v4806
  %5222 = vmatmul.mubr.f32.gmra.mrb[0].mxu0 %v4805
  %v5223 = vpop.f32.mrb[0].mxu0
  %v5224 = vadd.f32 %v5079, %v5223
  %v5225 = vpop.f32.mrb[0].mxu0
  %5226 = vmatprep.mubr.f32.mxu0 %v4810
  %5227 = vmatmul.mubr.f32.gmra.mrb[0].mxu0 %v4809
  %v5228 = vpop.f32.mrb[0].mxu0
  %v5229 = vadd.f32 %v5084, %v5228
  %v5230 = vpop.f32.mrb[0].mxu0
  %5231 = vmatprep.mubr.f32.mxu0 %v4814
  %5232 = vmatmul.mubr.f32.gmra.mrb[0].mxu0 %v4813
  %v5233 = vpop.f32.mrb[0].mxu0
  %v5234 = vadd.f32 %v5089, %v5233
  %v5235 = vpop.f32.mrb[0].mxu0
  %5236 = vmatprep.mubr.f32.mxu0 %v4818
  %5237 = vmatmul.mubr.f32.gmra.mrb[0].mxu0 %v4817
  %v5238 = vpop.f32.mrb[0].mxu0
  %v5239 = vadd.f32 %v5094, %v5238
  %v5240 = vpop.f32.mrb[0].mxu0
  %5241 = vmatprep.mubr.f32.mxu0 %v4822
  %5242 = vmatmul.mubr.f32.gmra.mrb[0].mxu0 %v4821
  %v5243 = vpop.f32.mrb[0].mxu0
  %v5244 = vadd.f32 %v5099, %v5243
  %v5245 = vpop.f32.mrb[0].mxu0
  %5246 = vmatprep.mubr.f32.mxu0 %v4826
  %5247 = vmatmul.mubr.f32.gmra.mrb[0].mxu0 %v4825
  %v5248 = vpop.f32.mrb[0].mxu0
  %v5249 = vadd.f32 %v5104, %v5248
  %v5250 = vpop.f32.mrb[0].mxu0
  %5251 = vdwg.mxu0
  %5252 = vst [vmem:[%s6] sm:$0xff] %v5174
  %5253 = vst [vmem:[%s6 + $0x8] sm:$0xff] %v5179
  %5254 = vst [vmem:[%s6 + $0x10] sm:$0xff] %v5184
  %5255 = vst [vmem:[%s6 + $0x18] sm:$0xff] %v5189
  %5256 = vst [vmem:[%s6 + $0x20] sm:$0xff] %v5194
  %5257 = vst [vmem:[%s6 + $0x28] sm:$0xff] %v5199
  %5258 = vst [vmem:[%s6 + $0x30] sm:$0xff] %v5204
  %5259 = vst [vmem:[%s6 + $0x38] sm:$0xff] %v5209
  %5260 = vst [vmem:[%s6 + $0x40] sm:$0xff] %v5214
  %5261 = vst [vmem:[%s6 + $0x48] sm:$0xff] %v5219
  %5262 = vst [vmem:[%s6 + $0x50] sm:$0xff] %v5224
  %5263 = vst [vmem:[%s6 + $0x58] sm:$0xff] %v5229
  %5264 = vst [vmem:[%s6 + $0x60] sm:$0xff] %v5234
  %5265 = vst [vmem:[%s6 + $0x68] sm:$0xff] %v5239
  %5266 = vst [vmem:[%s6 + $0x70] sm:$0xff] %v5244
  %5267 = vst [vmem:[%s6 + $0x78] sm:$0xff] %v5249
  // Predicated region
  $region22: #{cnnbase_forward.7} parent=0 // pred_check
    _
  $region23: #{cnnbase_forward.7} parent=0 // pred_check_branch
    %5269 = sbr.rel (0) target = $region25
  $region24: #{cnnbase_forward.7} parent=0 // pred_region
    _
  $region25: #{cnnbase_forward.7} parent=0 // pred_fallthru
    _
  // Predicated region
  $region26: #{cnnbase_forward.7} parent=0 // pred_check
    _
  $region27: #{cnnbase_forward.7} parent=0 // pred_check_branch
    %5271 = sbr.rel (0) target = $region29
  $region28: #{cnnbase_forward.7} parent=0 // pred_region
    _
  $region29: #{cnnbase_forward.7} parent=0 // pred_fallthru
    _
  // Predicated region
  $region30: #{cnnbase_forward.7} parent=0 // pred_check
    _
  $region31: #{cnnbase_forward.7} parent=0 // pred_check_branch
    %5273 = sbr.rel (0) target = $region33
  $region32: #{cnnbase_forward.7} parent=0 // pred_region
    _
  $region33: #{cnnbase_forward.7} parent=0 // pred_fallthru
    _
  // Predicated region
  $region34: #{cnnbase_forward.7} parent=0 // pred_check
    _
  $region35: #{cnnbase_forward.7} parent=0 // pred_check_branch
    %5275 = sbr.rel (0) target = $region37
  $region36: #{cnnbase_forward.7} parent=0 // pred_region
    _
  $region37: #{cnnbase_forward.7} parent=0 // pred_fallthru
    _

</llo_original>
